<compile_context>
chip_gen: v7x
topology: tpu7x:2x2x1
jax: 0.10.0
libtpu: 0.0.40
codegen_flags: <defaults>
</compile_context>

<pallas_src>
import functools
import math

import numpy as np
import jax
import jax.numpy as jnp
from jax import lax
from jax.experimental import pallas as pl
from jax.experimental.pallas import tpu as pltpu


_VMEM = pl.BlockSpec(memory_space=pltpu.MemorySpace.VMEM)
_N_GRAPH_MATS = 9      # static graph operator matrices
_PER_LAYER = 30        # arrays per transformer layer passed to the kernel


# ------------------------------ fused kernel ---------------------------------

def _fused_gmat_kernel(*refs, layer_dims, num_heads):
    H = num_heads
    n_layers = len(layer_dims)
    f32 = jnp.float32

    node_x = refs[0][...]
    edge_x = refs[1][...]
    (src_ohT, rowgrp_n, rowgrp_e, nrowf, ncol,
     erowf, ecol, ndsel, lgesel) = [r[...] for r in refs[2:2 + _N_GRAPH_MATS]]

    base = 2 + _N_GRAPH_MATS
    layer_refs = refs[base: base + n_layers * _PER_LAYER]
    bil_w = refs[base + n_layers * _PER_LAYER][...]
    bil_b = refs[base + n_layers * _PER_LAYER + 1][...]
    readout_ref, node_out_ref, edge_out_ref = refs[base + n_layers * _PER_LAYER + 2:]

    def relu_linear(x, w, b):
        return jnp.maximum(jnp.dot(x, w, preferred_element_type=f32) + b, 0.0)

    def layernorm(x, g, b):
        mu = jnp.mean(x, axis=-1, keepdims=True)
        var = jnp.mean((x - mu) * (x - mu), axis=-1, keepdims=True)
        return (x - mu) * lax.rsqrt(var + 1e-5) * g + b

    def grouped_softmax(key, scale, rowgrp):
        # softmax of key*scale over each per-head row block -- this is exactly
        # torch's softmax(dim=1) applied after key.view(num_heads, -1, 1).
        # A single global max is a valid stabiliser (softmax is shift-invariant
        # within each block).
        x = key * scale
        m = jnp.max(jnp.max(x, axis=1, keepdims=True), axis=0, keepdims=True)
        e = jnp.exp(x - m)
        denom = jnp.sum(jnp.dot(rowgrp, e, preferred_element_type=f32),
                        axis=1, keepdims=True)
        return e / denom

    for l, (fn, _, fe, _) in enumerate(layer_dims):
        p = [r[...] for r in layer_refs[l * _PER_LAYER:(l + 1) * _PER_LAYER]]
        (nk1w, nk1b, nk2w, nk2b, nv1w, nv1b, nv2w, nv2b,
         ek1w, ek1b, ek2w, ek2b, ev1w, ev1b, ev2w, ev2b,
         n1g, n1b, e1g, e1b, n_ew, n_eb, e_ew, e_eb,
         n2g, n2b, e2g, e2b, colsel_n, colsel_e) = p

        # two-stage key / value projections (relu after each stage)
        nk = relu_linear(relu_linear(node_x, nk1w, nk1b), nk2w, nk2b)   # [N, H]
        nv = relu_linear(relu_linear(node_x, nv1w, nv1b), nv2w, nv2b)   # [N, H*fn]
        ek = relu_linear(relu_linear(edge_x, ek1w, ek1b), ek2w, ek2b)   # [E, H]
        ev = relu_linear(relu_linear(edge_x, ev1w, ev1b), ev2w, ev2b)   # [E, H*fe]

        # per-head self attention (softmax over the per-head row blocks of the
        # key matrix == torch softmax after the interleaving .view)
        sa_n = grouped_softmax(nk, 1.0 / math.sqrt(fn), rowgrp_n)       # [N, H]
        sa_e = grouped_softmax(ek, 1.0 / math.sqrt(fe), rowgrp_e)       # [E, H]

        # parity-separated column blocks of the value projections
        # (the column interleave of torch's .view(H, -1, F))
        nv_p = [jnp.dot(nv, colsel_n[q], preferred_element_type=f32)
                for q in range(H)]                                       # [N, fn] each
        ev_p = [jnp.dot(ev, colsel_e[q], preferred_element_type=f32)
                for q in range(H)]                                       # [E, fe] each

        node_msg = jnp.zeros(node_x.shape, f32)
        edge_msg = jnp.zeros(edge_x.shape, f32)
        for h in range(H):
            # edge_self_attention[h, a] for every graph edge a
            w_h = jnp.sum(
                jnp.dot(erowf[h], sa_e, preferred_element_type=f32) * ecol,
                axis=1, keepdims=True)                                   # [E, 1]
            # node_self_attention[h, dst[a]]
            nsad_h = jnp.sum(
                jnp.dot(nrowf[h], sa_n, preferred_element_type=f32) * ncol,
                axis=1, keepdims=True)                                   # [E, 1]
            # node_value[h, dst[a], :]  (per-head value rows gathered at dst)
            m_h = sum(jnp.dot(ndsel[h, q], nv_p[q], preferred_element_type=f32)
                      for q in range(H))                                 # [E, fn]
            # (line-graph adjacency) @ edge_value[h]
            lg_ev_h = sum(jnp.dot(lgesel[h, q], ev_p[q], preferred_element_type=f32)
                          for q in range(H))                             # [E, fe]

            # message passing ('sum' aggregation) + head-sum pooling
            node_msg = node_msg + jnp.dot(src_ohT, w_h * m_h,
                                          preferred_element_type=f32)   # [N, fn]
            edge_msg = edge_msg + nsad_h * lg_ev_h                      # [E, fe]

        # dropout p=0 -> identity; long_residual=True
        n_emb = layernorm(node_msg + node_x, n1g, n1b)
        e_emb = layernorm(edge_msg + edge_x, e1g, e1b)
        n_emb = relu_linear(n_emb, n_ew, n_eb)
        e_emb = relu_linear(e_emb, e_ew, e_eb)
        node_x = layernorm(n_emb, n2g, n2b)
        edge_x = layernorm(e_emb, e2g, e2b)

    # readout: dgl SumPooling (single graph) + nn.Bilinear(n_out, e_out, 1) + sigmoid
    npool = jnp.sum(node_x, axis=0, keepdims=True)                       # [1, Fn]
    epool = jnp.sum(edge_x, axis=0, keepdims=True)                       # [1, Fe]
    t = jnp.dot(npool, bil_w, preferred_element_type=f32)                # [1, Fe]
    y = jnp.sum(t * epool, axis=1, keepdims=True) + bil_b                # [1, 1]
    readout_ref[...] = 1.0 / (1.0 + jnp.exp(-y))
    node_out_ref[...] = node_x
    edge_out_ref[...] = edge_x


# ----------------------- static graph / view operators ------------------------

def _onehot(idx, depth):
    m = np.zeros((len(idx), depth), np.float32)
    m[np.arange(len(idx)), np.asarray(idx)] = 1.0
    return m


def _colsel(num_heads, feats):
    """colsel[p][j, c] = 1 iff j == p*feats + c (extracts parity-p column block)."""
    m = np.zeros((num_heads, num_heads * feats, feats), np.float32)
    for p in range(num_heads):
        m[p, p * feats + np.arange(feats), np.arange(feats)] = 1.0
    return jnp.asarray(m)


def build_graph_operators(src, dst, num_nodes, num_edges, num_heads):
    """Static operator matrices encoding the graph scatter/gather and torch's
    interleaving .view(num_heads, -1, ...) semantics."""
    H, N, E = num_heads, num_nodes, num_edges
    assert N % H == 0 and E % H == 0, "head-block decomposition of torch .view"
    src = np.asarray(src, np.int64)
    dst = np.asarray(dst, np.int64)
    # the kernel sums contributions; torch's scatter overwrites duplicates
    assert len({(int(s), int(d)) for s, d in zip(src, dst)}) == E, \
        "distinct (src, dst) pairs required"
    Nh, Eh = N // H, E // H
    ar_n, ar_e = np.arange(N), np.arange(E)

    src_ohT = _onehot(src, N).T.copy()                                 # [N, E]
    dst_oh = _onehot(dst, N)                                           # [E, N]
    lg_adj = (dst[:, None] == src[None, :]).astype(np.float32)         # [E, E] (DGL line graph)

    rowgrp_n = (ar_n[:, None] // Nh == ar_n[None, :] // Nh).astype(np.float32)  # [N, N]
    rowgrp_e = (ar_e[:, None] // Eh == ar_e[None, :] // Eh).astype(np.float32)  # [E, E]

    ncol = _onehot(dst % H, H)                                         # [E, H]
    ecol = _onehot(ar_e % H, H)                                        # [E, H]
    npar = _onehot(ar_n % H, H)                                        # [N, H]

    nrowf = np.stack([_onehot(h * Nh + dst // H, N) for h in range(H)])    # [H, E, N]
    erowf = np.stack([_onehot(h * Eh + ar_e // H, E) for h in range(H)])   # [H, E, E]
    vrowf = np.stack([_onehot(h * Nh + ar_n // H, N) for h in range(H)])   # [H, N, N]

    # ndsel[h, p] @ nv_p[p]  (summed over p) == node_value[h, dst[a], :]
    ndsel = np.stack([np.stack([dst_oh @ (npar[:, p:p + 1] * vrowf[h])
                                for p in range(H)]) for h in range(H)])    # [H, H, E, N]
    # lgesel[h, p] @ ev_p[p] (summed over p) == lg_adj @ edge_value[h]
    lgesel = np.stack([np.stack([lg_adj @ (ecol[:, p:p + 1] * erowf[h])
                                 for p in range(H)]) for h in range(H)])   # [H, H, E, E]

    mats = (src_ohT, rowgrp_n, rowgrp_e, nrowf, ncol, erowf, ecol, ndsel, lgesel)
    return tuple(jnp.asarray(m) for m in mats)


# ----------------------------- parameter handling ------------------------------

def init_linear(key, in_f, out_f):
    kw, kb = jax.random.split(key)
    bound = 1.0 / math.sqrt(in_f)
    return {"w": jax.random.uniform(kw, (in_f, out_f), jnp.float32, -bound, bound),
            "b": jax.random.uniform(kb, (1, out_f), jnp.float32, -bound, bound)}


def init_layernorm(f):
    return {"gamma": jnp.ones((1, f), jnp.float32),
            "beta": jnp.zeros((1, f), jnp.float32)}


def init_head(key, node_in, edge_in, num_heads):
    pf = 4
    ks = jax.random.split(key, 8)
    return {
        "nk1": init_linear(ks[0], node_in, num_heads * pf),
        "nk2": init_linear(ks[1], num_heads * pf, num_heads),
        "nv1": init_linear(ks[2], node_in, num_heads * node_in * pf),
        "nv2": init_linear(ks[3], num_heads * node_in * pf, num_heads * node_in),
        "ek1": init_linear(ks[4], edge_in, num_heads * pf),
        "ek2": init_linear(ks[5], num_heads * pf, num_heads),
        "ev1": init_linear(ks[6], edge_in, num_heads * edge_in * pf),
        "ev2": init_linear(ks[7], num_heads * edge_in * pf, num_heads * edge_in),
    }


def init_layer(key, node_in, node_out, edge_in, edge_out, num_heads):
    k1, k2, k3 = jax.random.split(key, 3)
    return {
        "head": init_head(k1, node_in, edge_in, num_heads),
        "n_norm1": init_layernorm(node_in),
        "e_norm1": init_layernorm(edge_in),
        "n_embed": init_linear(k2, node_in, node_out),
        "e_embed": init_linear(k3, edge_in, edge_out),
        "n_norm2": init_layernorm(node_out),
        "e_norm2": init_layernorm(edge_out),
    }


def _pack_layer(lp, fn, fe, num_heads):
    h = lp["head"]
    return [
        h["nk1"]["w"], h["nk1"]["b"], h["nk2"]["w"], h["nk2"]["b"],
        h["nv1"]["w"], h["nv1"]["b"], h["nv2"]["w"], h["nv2"]["b"],
        h["ek1"]["w"], h["ek1"]["b"], h["ek2"]["w"], h["ek2"]["b"],
        h["ev1"]["w"], h["ev1"]["b"], h["ev2"]["w"], h["ev2"]["b"],
        lp["n_norm1"]["gamma"], lp["n_norm1"]["beta"],
        lp["e_norm1"]["gamma"], lp["e_norm1"]["beta"],
        lp["n_embed"]["w"], lp["n_embed"]["b"],
        lp["e_embed"]["w"], lp["e_embed"]["b"],
        lp["n_norm2"]["gamma"], lp["n_norm2"]["beta"],
        lp["e_norm2"]["gamma"], lp["e_norm2"]["beta"],
        _colsel(num_heads, fn), _colsel(num_heads, fe),
    ]


def gmat_forward(params, node_x, edge_x, graph_ops, layer_dims, num_heads):
    """Single fused pallas_call for the whole model forward."""
    flat = [node_x, edge_x, *graph_ops]
    for lp, (fn, _, fe, _) in zip(params["layers"], layer_dims):
        flat += _pack_layer(lp, fn, fe, num_heads)
    flat += [params["bilinear_w"], params["bilinear_b"]]

    N, E = node_x.shape[0], edge_x.shape[0]
    n_out, e_out = layer_dims[-1][1], layer_dims[-1][3]
    kernel = functools.partial(_fused_gmat_kernel,
                               layer_dims=tuple(tuple(d) for d in layer_dims),
                               num_heads=num_heads)
    return pl.pallas_call(
        kernel,
        out_shape=(jax.ShapeDtypeStruct((1, 1), jnp.float32),
                   jax.ShapeDtypeStruct((N, n_out), jnp.float32),
                   jax.ShapeDtypeStruct((E, e_out), jnp.float32)),
        in_specs=[_VMEM] * len(flat),
        out_specs=(_VMEM, _VMEM, _VMEM),
    )(*flat)


# -------------------------- pure-JAX reference (check) -------------------------

def reference_forward(params, node_x, edge_x, src, dst, lg_src, lg_dst,
                      layer_dims, num_heads):
    """Direct pure-JAX mirror of the PyTorch forward (verification only)."""
    HI = jax.lax.Precision.HIGHEST

    def lin(x, p):
        return jnp.maximum(jnp.dot(x, p["w"], precision=HI) + p["b"], 0.0)

    def ln(x, p):
        mu = jnp.mean(x, axis=-1, keepdims=True)
        var = jnp.mean((x - mu) ** 2, axis=-1, keepdims=True)
        return (x - mu) / jnp.sqrt(var + 1e-5) * p["gamma"] + p["beta"]

    N, E = node_x.shape[0], edge_x.shape[0]
    x_n, x_e = node_x, edge_x
    for lp, (fn, _, fe, _) in zip(params["layers"], layer_dims):
        h = lp["head"]
        nk = lin(lin(x_n, h["nk1"]), h["nk2"]).reshape(num_heads, N)
        nv = lin(lin(x_n, h["nv1"]), h["nv2"]).reshape(num_heads, N, fn)
        ek = lin(lin(x_e, h["ek1"]), h["ek2"]).reshape(num_heads, E)
        ev = lin(lin(x_e, h["ev1"]), h["ev2"]).reshape(num_heads, E, fe)
        sa_n = jax.nn.softmax(nk / math.sqrt(fn), axis=1)
        sa_e = jax.nn.softmax(ek / math.sqrt(fe), axis=1)
        node_proj = jnp.zeros((num_heads, N, N), jnp.float32).at[:, src, dst].set(sa_e)
        conn = dst[lg_src]
        edge_proj = jnp.zeros((num_heads, E, E), jnp.float32).at[:, lg_src, lg_dst].set(
            sa_n[:, conn])
        n_msg = jnp.einsum("hij,hjf->if", node_proj, nv, precision=HI)
        e_msg = jnp.einsum("hij,hjf->if", edge_proj, ev, precision=HI)
        x_n = ln(n_msg + x_n, lp["n_norm1"])
        x_e = ln(e_msg + x_e, lp["e_norm1"])
        x_n = lin(x_n, lp["n_embed"])
        x_e = lin(x_e, lp["e_embed"])
        x_n = ln(x_n, lp["n_norm2"])
        x_e = ln(x_e, lp["e_norm2"])
    npool = jnp.sum(x_n, axis=0, keepdims=True)
    epool = jnp.sum(x_e, axis=0, keepdims=True)
    y = jnp.dot(jnp.dot(npool, params["bilinear_w"], precision=HI), epool.T,
                precision=HI) + params["bilinear_b"]
    return jax.nn.sigmoid(y), x_n, x_e


# ----------------------------------- Main --------------------------------------

if __name__ == "__main__":
    key = jax.random.PRNGKey(0)

    num_heads = 2
    node_in, node_hidden, node_out = 6, 8, 6
    edge_in, edge_hidden, edge_out = 4, 8, 4
    layer_dims = ((node_in, node_hidden, edge_in, edge_hidden),
                  (node_hidden, node_out, edge_hidden, edge_out))

    # Graph g: 8 nodes, 12 edges (distinct (src, dst) pairs).
    src_l = [0, 1, 2, 3, 4, 5, 6, 7, 0, 2, 4, 6]
    dst_l = [1, 2, 3, 4, 5, 6, 7, 0, 3, 5, 7, 1]
    num_nodes, num_edges = 8, len(src_l)
    # Line graph lg (DGL semantics): lg edge (i, j) iff dst(i) == src(j).
    lg_src_l, lg_dst_l = [], []
    for i in range(num_edges):
        for j in range(num_edges):
            if dst_l[i] == src_l[j]:
                lg_src_l.append(i)
                lg_dst_l.append(j)

    src = jnp.array(src_l, jnp.int32)
    dst = jnp.array(dst_l, jnp.int32)
    lg_src = jnp.array(lg_src_l, jnp.int32)
    lg_dst = jnp.array(lg_dst_l, jnp.int32)

    graph_ops = build_graph_operators(src_l, dst_l, num_nodes, num_edges, num_heads)

    kx, ke, kp = jax.random.split(key, 3)
    node_inputs = jax.random.normal(kx, (num_nodes, node_in), jnp.float32)
    edge_inputs = jax.random.normal(ke, (num_edges, edge_in), jnp.float32)

    kl1, kl2, kb1, kb2 = jax.random.split(kp, 4)
    bb = 1.0 / math.sqrt(node_out)
    params = {
        "layers": [
            init_layer(kl1, node_in, node_hidden, edge_in, edge_hidden, num_heads),
            init_layer(kl2, node_hidden, node_out, edge_hidden, edge_out, num_heads),
        ],
        # nn.Bilinear(node_out, edge_out, 1): weight [1, node_out, edge_out]
        "bilinear_w": jax.random.uniform(kb1, (node_out, edge_out), jnp.float32, -bb, bb),
        "bilinear_b": jax.random.uniform(kb2, (1, 1), jnp.float32, -bb, bb),
    }

    out, n_emb, e_emb = gmat_forward(params, node_inputs, edge_inputs,
                                     graph_ops, layer_dims, num_heads)
    jax.block_until_ready((out, n_emb, e_emb))
    assert out.shape == (1, 1)

    # verify against a pure-JAX mirror of the PyTorch forward
    ref_out, ref_n, ref_e = reference_forward(params, node_inputs, edge_inputs,
                                              src, dst, lg_src, lg_dst,
                                              layer_dims, num_heads)
    np.testing.assert_allclose(np.asarray(out), np.asarray(ref_out), rtol=2e-2, atol=2e-2)
    np.testing.assert_allclose(np.asarray(n_emb), np.asarray(ref_n), rtol=2e-2, atol=2e-2)
    np.testing.assert_allclose(np.asarray(e_emb), np.asarray(ref_e), rtol=2e-2, atol=2e-2)

    print("KERNEL_OK")
</pallas_src>

<mosaic_0001>
module attributes {stable_mosaic.version = 11 : i64} {
  func.func @_fused_gmat_kernel(%arg0: memref<8x6xf32, #tpu.memory_space<vmem>>, %arg1: memref<12x4xf32, #tpu.memory_space<vmem>>, %arg2: memref<8x12xf32, #tpu.memory_space<vmem>>, %arg3: memref<8x8xf32, #tpu.memory_space<vmem>>, %arg4: memref<12x12xf32, #tpu.memory_space<vmem>>, %arg5: memref<2x12x8xf32, #tpu.memory_space<vmem>>, %arg6: memref<12x2xf32, #tpu.memory_space<vmem>>, %arg7: memref<2x12x12xf32, #tpu.memory_space<vmem>>, %arg8: memref<12x2xf32, #tpu.memory_space<vmem>>, %arg9: memref<2x2x12x8xf32, #tpu.memory_space<vmem>>, %arg10: memref<2x2x12x12xf32, #tpu.memory_space<vmem>>, %arg11: memref<6x8xf32, #tpu.memory_space<vmem>>, %arg12: memref<1x8xf32, #tpu.memory_space<vmem>>, %arg13: memref<8x2xf32, #tpu.memory_space<vmem>>, %arg14: memref<1x2xf32, #tpu.memory_space<vmem>>, %arg15: memref<6x48xf32, #tpu.memory_space<vmem>>, %arg16: memref<1x48xf32, #tpu.memory_space<vmem>>, %arg17: memref<48x12xf32, #tpu.memory_space<vmem>>, %arg18: memref<1x12xf32, #tpu.memory_space<vmem>>, %arg19: memref<4x8xf32, #tpu.memory_space<vmem>>, %arg20: memref<1x8xf32, #tpu.memory_space<vmem>>, %arg21: memref<8x2xf32, #tpu.memory_space<vmem>>, %arg22: memref<1x2xf32, #tpu.memory_space<vmem>>, %arg23: memref<4x32xf32, #tpu.memory_space<vmem>>, %arg24: memref<1x32xf32, #tpu.memory_space<vmem>>, %arg25: memref<32x8xf32, #tpu.memory_space<vmem>>, %arg26: memref<1x8xf32, #tpu.memory_space<vmem>>, %arg27: memref<1x6xf32, #tpu.memory_space<vmem>>, %arg28: memref<1x6xf32, #tpu.memory_space<vmem>>, %arg29: memref<1x4xf32, #tpu.memory_space<vmem>>, %arg30: memref<1x4xf32, #tpu.memory_space<vmem>>, %arg31: memref<6x8xf32, #tpu.memory_space<vmem>>, %arg32: memref<1x8xf32, #tpu.memory_space<vmem>>, %arg33: memref<4x8xf32, #tpu.memory_space<vmem>>, %arg34: memref<1x8xf32, #tpu.memory_space<vmem>>, %arg35: memref<1x8xf32, #tpu.memory_space<vmem>>, %arg36: memref<1x8xf32, #tpu.memory_space<vmem>>, %arg37: memref<1x8xf32, #tpu.memory_space<vmem>>, %arg38: memref<1x8xf32, #tpu.memory_space<vmem>>, %arg39: memref<2x12x6xf32, #tpu.memory_space<vmem>>, %arg40: memref<2x8x4xf32, #tpu.memory_space<vmem>>, %arg41: memref<8x8xf32, #tpu.memory_space<vmem>>, %arg42: memref<1x8xf32, #tpu.memory_space<vmem>>, %arg43: memref<8x2xf32, #tpu.memory_space<vmem>>, %arg44: memref<1x2xf32, #tpu.memory_space<vmem>>, %arg45: memref<8x64xf32, #tpu.memory_space<vmem>>, %arg46: memref<1x64xf32, #tpu.memory_space<vmem>>, %arg47: memref<64x16xf32, #tpu.memory_space<vmem>>, %arg48: memref<1x16xf32, #tpu.memory_space<vmem>>, %arg49: memref<8x8xf32, #tpu.memory_space<vmem>>, %arg50: memref<1x8xf32, #tpu.memory_space<vmem>>, %arg51: memref<8x2xf32, #tpu.memory_space<vmem>>, %arg52: memref<1x2xf32, #tpu.memory_space<vmem>>, %arg53: memref<8x64xf32, #tpu.memory_space<vmem>>, %arg54: memref<1x64xf32, #tpu.memory_space<vmem>>, %arg55: memref<64x16xf32, #tpu.memory_space<vmem>>, %arg56: memref<1x16xf32, #tpu.memory_space<vmem>>, %arg57: memref<1x8xf32, #tpu.memory_space<vmem>>, %arg58: memref<1x8xf32, #tpu.memory_space<vmem>>, %arg59: memref<1x8xf32, #tpu.memory_space<vmem>>, %arg60: memref<1x8xf32, #tpu.memory_space<vmem>>, %arg61: memref<8x6xf32, #tpu.memory_space<vmem>>, %arg62: memref<1x6xf32, #tpu.memory_space<vmem>>, %arg63: memref<8x4xf32, #tpu.memory_space<vmem>>, %arg64: memref<1x4xf32, #tpu.memory_space<vmem>>, %arg65: memref<1x6xf32, #tpu.memory_space<vmem>>, %arg66: memref<1x6xf32, #tpu.memory_space<vmem>>, %arg67: memref<1x4xf32, #tpu.memory_space<vmem>>, %arg68: memref<1x4xf32, #tpu.memory_space<vmem>>, %arg69: memref<2x16x8xf32, #tpu.memory_space<vmem>>, %arg70: memref<2x16x8xf32, #tpu.memory_space<vmem>>, %arg71: memref<6x4xf32, #tpu.memory_space<vmem>>, %arg72: memref<1x1xf32, #tpu.memory_space<vmem>>, %arg73: memref<1x1xf32, #tpu.memory_space<vmem>>, %arg74: memref<8x6xf32, #tpu.memory_space<vmem>>, %arg75: memref<12x4xf32, #tpu.memory_space<vmem>>) attributes {dimension_semantics = [], scalar_prefetch = 0 : i64, scratch_operands = 0 : i64, tpu.core_type = #tpu.core_type<tc>} {
    %c0 = arith.constant 0 : index
    %c0_0 = arith.constant 0 : index
    %0 = vector.load %arg0[%c0, %c0_0] : memref<8x6xf32, #tpu.memory_space<vmem>>, vector<8x6xf32>
    %c0_1 = arith.constant 0 : index
    %c0_2 = arith.constant 0 : index
    %1 = vector.load %arg1[%c0_1, %c0_2] : memref<12x4xf32, #tpu.memory_space<vmem>>, vector<12x4xf32>
    %c0_3 = arith.constant 0 : index
    %c0_4 = arith.constant 0 : index
    %2 = vector.load %arg2[%c0_3, %c0_4] : memref<8x12xf32, #tpu.memory_space<vmem>>, vector<8x12xf32>
    %c0_5 = arith.constant 0 : index
    %c0_6 = arith.constant 0 : index
    %3 = vector.load %arg3[%c0_5, %c0_6] : memref<8x8xf32, #tpu.memory_space<vmem>>, vector<8x8xf32>
    %c0_7 = arith.constant 0 : index
    %c0_8 = arith.constant 0 : index
    %4 = vector.load %arg4[%c0_7, %c0_8] : memref<12x12xf32, #tpu.memory_space<vmem>>, vector<12x12xf32>
    %c0_9 = arith.constant 0 : index
    %c0_10 = arith.constant 0 : index
    %c0_11 = arith.constant 0 : index
    %5 = vector.load %arg5[%c0_9, %c0_10, %c0_11] : memref<2x12x8xf32, #tpu.memory_space<vmem>>, vector<2x12x8xf32>
    %c0_12 = arith.constant 0 : index
    %c0_13 = arith.constant 0 : index
    %6 = vector.load %arg6[%c0_12, %c0_13] : memref<12x2xf32, #tpu.memory_space<vmem>>, vector<12x2xf32>
    %c0_14 = arith.constant 0 : index
    %c0_15 = arith.constant 0 : index
    %c0_16 = arith.constant 0 : index
    %7 = vector.load %arg7[%c0_14, %c0_15, %c0_16] : memref<2x12x12xf32, #tpu.memory_space<vmem>>, vector<2x12x12xf32>
    %c0_17 = arith.constant 0 : index
    %c0_18 = arith.constant 0 : index
    %8 = vector.load %arg8[%c0_17, %c0_18] : memref<12x2xf32, #tpu.memory_space<vmem>>, vector<12x2xf32>
    %c0_19 = arith.constant 0 : index
    %c0_20 = arith.constant 0 : index
    %c0_21 = arith.constant 0 : index
    %c0_22 = arith.constant 0 : index
    %9 = vector.load %arg9[%c0_19, %c0_20, %c0_21, %c0_22] : memref<2x2x12x8xf32, #tpu.memory_space<vmem>>, vector<2x2x12x8xf32>
    %c0_23 = arith.constant 0 : index
    %c0_24 = arith.constant 0 : index
    %c0_25 = arith.constant 0 : index
    %c0_26 = arith.constant 0 : index
    %10 = vector.load %arg10[%c0_23, %c0_24, %c0_25, %c0_26] : memref<2x2x12x12xf32, #tpu.memory_space<vmem>>, vector<2x2x12x12xf32>
    %c0_27 = arith.constant 0 : index
    %c0_28 = arith.constant 0 : index
    %11 = vector.load %arg71[%c0_27, %c0_28] : memref<6x4xf32, #tpu.memory_space<vmem>>, vector<6x4xf32>
    %c0_29 = arith.constant 0 : index
    %c0_30 = arith.constant 0 : index
    %12 = vector.load %arg72[%c0_29, %c0_30] : memref<1x1xf32, #tpu.memory_space<vmem>>, vector<1x1xf32>
    %c0_31 = arith.constant 0 : index
    %c0_32 = arith.constant 0 : index
    %13 = vector.load %arg11[%c0_31, %c0_32] : memref<6x8xf32, #tpu.memory_space<vmem>>, vector<6x8xf32>
    %c0_33 = arith.constant 0 : index
    %c0_34 = arith.constant 0 : index
    %14 = vector.load %arg12[%c0_33, %c0_34] : memref<1x8xf32, #tpu.memory_space<vmem>>, vector<1x8xf32>
    %c0_35 = arith.constant 0 : index
    %c0_36 = arith.constant 0 : index
    %15 = vector.load %arg13[%c0_35, %c0_36] : memref<8x2xf32, #tpu.memory_space<vmem>>, vector<8x2xf32>
    %c0_37 = arith.constant 0 : index
    %c0_38 = arith.constant 0 : index
    %16 = vector.load %arg14[%c0_37, %c0_38] : memref<1x2xf32, #tpu.memory_space<vmem>>, vector<1x2xf32>
    %c0_39 = arith.constant 0 : index
    %c0_40 = arith.constant 0 : index
    %17 = vector.load %arg15[%c0_39, %c0_40] : memref<6x48xf32, #tpu.memory_space<vmem>>, vector<6x48xf32>
    %c0_41 = arith.constant 0 : index
    %c0_42 = arith.constant 0 : index
    %18 = vector.load %arg16[%c0_41, %c0_42] : memref<1x48xf32, #tpu.memory_space<vmem>>, vector<1x48xf32>
    %c0_43 = arith.constant 0 : index
    %c0_44 = arith.constant 0 : index
    %19 = vector.load %arg17[%c0_43, %c0_44] : memref<48x12xf32, #tpu.memory_space<vmem>>, vector<48x12xf32>
    %c0_45 = arith.constant 0 : index
    %c0_46 = arith.constant 0 : index
    %20 = vector.load %arg18[%c0_45, %c0_46] : memref<1x12xf32, #tpu.memory_space<vmem>>, vector<1x12xf32>
    %c0_47 = arith.constant 0 : index
    %c0_48 = arith.constant 0 : index
    %21 = vector.load %arg19[%c0_47, %c0_48] : memref<4x8xf32, #tpu.memory_space<vmem>>, vector<4x8xf32>
    %c0_49 = arith.constant 0 : index
    %c0_50 = arith.constant 0 : index
    %22 = vector.load %arg20[%c0_49, %c0_50] : memref<1x8xf32, #tpu.memory_space<vmem>>, vector<1x8xf32>
    %c0_51 = arith.constant 0 : index
    %c0_52 = arith.constant 0 : index
    %23 = vector.load %arg21[%c0_51, %c0_52] : memref<8x2xf32, #tpu.memory_space<vmem>>, vector<8x2xf32>
    %c0_53 = arith.constant 0 : index
    %c0_54 = arith.constant 0 : index
    %24 = vector.load %arg22[%c0_53, %c0_54] : memref<1x2xf32, #tpu.memory_space<vmem>>, vector<1x2xf32>
    %c0_55 = arith.constant 0 : index
    %c0_56 = arith.constant 0 : index
    %25 = vector.load %arg23[%c0_55, %c0_56] : memref<4x32xf32, #tpu.memory_space<vmem>>, vector<4x32xf32>
    %c0_57 = arith.constant 0 : index
    %c0_58 = arith.constant 0 : index
    %26 = vector.load %arg24[%c0_57, %c0_58] : memref<1x32xf32, #tpu.memory_space<vmem>>, vector<1x32xf32>
    %c0_59 = arith.constant 0 : index
    %c0_60 = arith.constant 0 : index
    %27 = vector.load %arg25[%c0_59, %c0_60] : memref<32x8xf32, #tpu.memory_space<vmem>>, vector<32x8xf32>
    %c0_61 = arith.constant 0 : index
    %c0_62 = arith.constant 0 : index
    %28 = vector.load %arg26[%c0_61, %c0_62] : memref<1x8xf32, #tpu.memory_space<vmem>>, vector<1x8xf32>
    %c0_63 = arith.constant 0 : index
    %c0_64 = arith.constant 0 : index
    %29 = vector.load %arg27[%c0_63, %c0_64] : memref<1x6xf32, #tpu.memory_space<vmem>>, vector<1x6xf32>
    %c0_65 = arith.constant 0 : index
    %c0_66 = arith.constant 0 : index
    %30 = vector.load %arg28[%c0_65, %c0_66] : memref<1x6xf32, #tpu.memory_space<vmem>>, vector<1x6xf32>
    %c0_67 = arith.constant 0 : index
    %c0_68 = arith.constant 0 : index
    %31 = vector.load %arg29[%c0_67, %c0_68] : memref<1x4xf32, #tpu.memory_space<vmem>>, vector<1x4xf32>
    %c0_69 = arith.constant 0 : index
    %c0_70 = arith.constant 0 : index
    %32 = vector.load %arg30[%c0_69, %c0_70] : memref<1x4xf32, #tpu.memory_space<vmem>>, vector<1x4xf32>
    %c0_71 = arith.constant 0 : index
    %c0_72 = arith.constant 0 : index
    %33 = vector.load %arg31[%c0_71, %c0_72] : memref<6x8xf32, #tpu.memory_space<vmem>>, vector<6x8xf32>
    %c0_73 = arith.constant 0 : index
    %c0_74 = arith.constant 0 : index
    %34 = vector.load %arg32[%c0_73, %c0_74] : memref<1x8xf32, #tpu.memory_space<vmem>>, vector<1x8xf32>
    %c0_75 = arith.constant 0 : index
    %c0_76 = arith.constant 0 : index
    %35 = vector.load %arg33[%c0_75, %c0_76] : memref<4x8xf32, #tpu.memory_space<vmem>>, vector<4x8xf32>
    %c0_77 = arith.constant 0 : index
    %c0_78 = arith.constant 0 : index
    %36 = vector.load %arg34[%c0_77, %c0_78] : memref<1x8xf32, #tpu.memory_space<vmem>>, vector<1x8xf32>
    %c0_79 = arith.constant 0 : index
    %c0_80 = arith.constant 0 : index
    %37 = vector.load %arg35[%c0_79, %c0_80] : memref<1x8xf32, #tpu.memory_space<vmem>>, vector<1x8xf32>
    %c0_81 = arith.constant 0 : index
    %c0_82 = arith.constant 0 : index
    %38 = vector.load %arg36[%c0_81, %c0_82] : memref<1x8xf32, #tpu.memory_space<vmem>>, vector<1x8xf32>
    %c0_83 = arith.constant 0 : index
    %c0_84 = arith.constant 0 : index
    %39 = vector.load %arg37[%c0_83, %c0_84] : memref<1x8xf32, #tpu.memory_space<vmem>>, vector<1x8xf32>
    %c0_85 = arith.constant 0 : index
    %c0_86 = arith.constant 0 : index
    %40 = vector.load %arg38[%c0_85, %c0_86] : memref<1x8xf32, #tpu.memory_space<vmem>>, vector<1x8xf32>
    %c0_87 = arith.constant 0 : index
    %c0_88 = arith.constant 0 : index
    %c0_89 = arith.constant 0 : index
    %41 = vector.load %arg39[%c0_87, %c0_88, %c0_89] : memref<2x12x6xf32, #tpu.memory_space<vmem>>, vector<2x12x6xf32>
    %c0_90 = arith.constant 0 : index
    %c0_91 = arith.constant 0 : index
    %c0_92 = arith.constant 0 : index
    %42 = vector.load %arg40[%c0_90, %c0_91, %c0_92] : memref<2x8x4xf32, #tpu.memory_space<vmem>>, vector<2x8x4xf32>
    %cst = arith.constant dense<0.000000e+00> : vector<8x8xf32>
    %43 = tpu.matmul %0, %13, %cst {dimension_numbers = #tpu.dot_dimension_numbers<[1], [0], [0], [1], [0, 0, 1, 1], [], []>} : vector<8x6xf32>, vector<6x8xf32>, vector<8x8xf32> -> vector<8x8xf32>
    %44 = vector.broadcast %14 : vector<1x8xf32> to vector<8x8xf32>
    %45 = arith.addf %43, %44 : vector<8x8xf32>
    %cst_93 = arith.constant 0.000000e+00 : f32
    %46 = vector.broadcast %cst_93 : f32 to vector<8x8xf32>
    %47 = arith.maximumf %45, %46 : vector<8x8xf32>
    %cst_94 = arith.constant dense<0.000000e+00> : vector<8x2xf32>
    %48 = tpu.matmul %47, %15, %cst_94 {dimension_numbers = #tpu.dot_dimension_numbers<[1], [0], [0], [1], [0, 0, 1, 1], [], []>} : vector<8x8xf32>, vector<8x2xf32>, vector<8x2xf32> -> vector<8x2xf32>
    %49 = vector.broadcast %16 : vector<1x2xf32> to vector<8x2xf32>
    %50 = arith.addf %48, %49 : vector<8x2xf32>
    %cst_95 = arith.constant 0.000000e+00 : f32
    %51 = vector.broadcast %cst_95 : f32 to vector<8x2xf32>
    %52 = arith.maximumf %50, %51 : vector<8x2xf32>
    %cst_96 = arith.constant dense<0.000000e+00> : vector<8x48xf32>
    %53 = tpu.matmul %0, %17, %cst_96 {dimension_numbers = #tpu.dot_dimension_numbers<[1], [0], [0], [1], [0, 0, 1, 1], [], []>} : vector<8x6xf32>, vector<6x48xf32>, vector<8x48xf32> -> vector<8x48xf32>
    %54 = vector.broadcast %18 : vector<1x48xf32> to vector<8x48xf32>
    %55 = arith.addf %53, %54 : vector<8x48xf32>
    %cst_97 = arith.constant 0.000000e+00 : f32
    %56 = vector.broadcast %cst_97 : f32 to vector<8x48xf32>
    %57 = arith.maximumf %55, %56 : vector<8x48xf32>
    %cst_98 = arith.constant dense<0.000000e+00> : vector<8x12xf32>
    %58 = tpu.matmul %57, %19, %cst_98 {dimension_numbers = #tpu.dot_dimension_numbers<[1], [0], [0], [1], [0, 0, 1, 1], [], []>} : vector<8x48xf32>, vector<48x12xf32>, vector<8x12xf32> -> vector<8x12xf32>
    %59 = vector.broadcast %20 : vector<1x12xf32> to vector<8x12xf32>
    %60 = arith.addf %58, %59 : vector<8x12xf32>
    %cst_99 = arith.constant 0.000000e+00 : f32
    %61 = vector.broadcast %cst_99 : f32 to vector<8x12xf32>
    %62 = arith.maximumf %60, %61 : vector<8x12xf32>
    %cst_100 = arith.constant dense<0.000000e+00> : vector<12x8xf32>
    %63 = tpu.matmul %1, %21, %cst_100 {dimension_numbers = #tpu.dot_dimension_numbers<[1], [0], [0], [1], [0, 0, 1, 1], [], []>} : vector<12x4xf32>, vector<4x8xf32>, vector<12x8xf32> -> vector<12x8xf32>
    %64 = vector.broadcast %22 : vector<1x8xf32> to vector<12x8xf32>
    %65 = arith.addf %63, %64 : vector<12x8xf32>
    %cst_101 = arith.constant 0.000000e+00 : f32
    %66 = vector.broadcast %cst_101 : f32 to vector<12x8xf32>
    %67 = arith.maximumf %65, %66 : vector<12x8xf32>
    %cst_102 = arith.constant dense<0.000000e+00> : vector<12x2xf32>
    %68 = tpu.matmul %67, %23, %cst_102 {dimension_numbers = #tpu.dot_dimension_numbers<[1], [0], [0], [1], [0, 0, 1, 1], [], []>} : vector<12x8xf32>, vector<8x2xf32>, vector<12x2xf32> -> vector<12x2xf32>
    %69 = vector.broadcast %24 : vector<1x2xf32> to vector<12x2xf32>
    %70 = arith.addf %68, %69 : vector<12x2xf32>
    %cst_103 = arith.constant 0.000000e+00 : f32
    %71 = vector.broadcast %cst_103 : f32 to vector<12x2xf32>
    %72 = arith.maximumf %70, %71 : vector<12x2xf32>
    %cst_104 = arith.constant dense<0.000000e+00> : vector<12x32xf32>
    %73 = tpu.matmul %1, %25, %cst_104 {dimension_numbers = #tpu.dot_dimension_numbers<[1], [0], [0], [1], [0, 0, 1, 1], [], []>} : vector<12x4xf32>, vector<4x32xf32>, vector<12x32xf32> -> vector<12x32xf32>
    %74 = vector.broadcast %26 : vector<1x32xf32> to vector<12x32xf32>
    %75 = arith.addf %73, %74 : vector<12x32xf32>
    %cst_105 = arith.constant 0.000000e+00 : f32
    %76 = vector.broadcast %cst_105 : f32 to vector<12x32xf32>
    %77 = arith.maximumf %75, %76 : vector<12x32xf32>
    %cst_106 = arith.constant dense<0.000000e+00> : vector<12x8xf32>
    %78 = tpu.matmul %77, %27, %cst_106 {dimension_numbers = #tpu.dot_dimension_numbers<[1], [0], [0], [1], [0, 0, 1, 1], [], []>} : vector<12x32xf32>, vector<32x8xf32>, vector<12x8xf32> -> vector<12x8xf32>
    %79 = vector.broadcast %28 : vector<1x8xf32> to vector<12x8xf32>
    %80 = arith.addf %78, %79 : vector<12x8xf32>
    %cst_107 = arith.constant 0.000000e+00 : f32
    %81 = vector.broadcast %cst_107 : f32 to vector<12x8xf32>
    %82 = arith.maximumf %80, %81 : vector<12x8xf32>
    %cst_108 = arith.constant 0.408248305 : f32
    %83 = vector.broadcast %cst_108 : f32 to vector<8x2xf32>
    %84 = arith.mulf %52, %83 : vector<8x2xf32>
    %cst_109 = arith.constant dense<0xFF800000> : vector<8xf32>
    %85 = vector.multi_reduction <maximumf>, %84, %cst_109 [1] : vector<8x2xf32> to vector<8xf32>
    %86 = vector.shape_cast %85 : vector<8xf32> to vector<8x1xf32>
    %cst_110 = arith.constant dense<0xFF800000> : vector<1xf32>
    %87 = vector.multi_reduction <maximumf>, %86, %cst_110 [0] : vector<8x1xf32> to vector<1xf32>
    %88 = vector.shape_cast %87 : vector<1xf32> to vector<1x1xf32>
    %89 = vector.broadcast %88 : vector<1x1xf32> to vector<8x2xf32>
    %90 = arith.subf %84, %89 : vector<8x2xf32>
    %91 = math.exp %90 : vector<8x2xf32>
    %cst_111 = arith.constant dense<0.000000e+00> : vector<8x2xf32>
    %92 = tpu.matmul %3, %91, %cst_111 {dimension_numbers = #tpu.dot_dimension_numbers<[1], [0], [0], [1], [0, 0, 1, 1], [], []>} : vector<8x8xf32>, vector<8x2xf32>, vector<8x2xf32> -> vector<8x2xf32>
    %cst_112 = arith.constant dense<0.000000e+00> : vector<8xf32>
    %93 = vector.multi_reduction <add>, %92, %cst_112 [1] : vector<8x2xf32> to vector<8xf32>
    %94 = vector.shape_cast %93 : vector<8xf32> to vector<8x1xf32>
    %95 = vector.broadcast %94 : vector<8x1xf32> to vector<8x2xf32>
    %96 = arith.divf %91, %95 : vector<8x2xf32>
    %cst_113 = arith.constant 5.000000e-01 : f32
    %97 = vector.broadcast %cst_113 : f32 to vector<12x2xf32>
    %98 = arith.mulf %72, %97 : vector<12x2xf32>
    %cst_114 = arith.constant dense<0xFF800000> : vector<12xf32>
    %99 = vector.multi_reduction <maximumf>, %98, %cst_114 [1] : vector<12x2xf32> to vector<12xf32>
    %100 = vector.shape_cast %99 : vector<12xf32> to vector<12x1xf32>
    %cst_115 = arith.constant dense<0xFF800000> : vector<1xf32>
    %101 = vector.multi_reduction <maximumf>, %100, %cst_115 [0] : vector<12x1xf32> to vector<1xf32>
    %102 = vector.shape_cast %101 : vector<1xf32> to vector<1x1xf32>
    %103 = vector.broadcast %102 : vector<1x1xf32> to vector<12x2xf32>
    %104 = arith.subf %98, %103 : vector<12x2xf32>
    %105 = math.exp %104 : vector<12x2xf32>
    %cst_116 = arith.constant dense<0.000000e+00> : vector<12x2xf32>
    %106 = tpu.matmul %4, %105, %cst_116 {dimension_numbers = #tpu.dot_dimension_numbers<[1], [0], [0], [1], [0, 0, 1, 1], [], []>} : vector<12x12xf32>, vector<12x2xf32>, vector<12x2xf32> -> vector<12x2xf32>
    %cst_117 = arith.constant dense<0.000000e+00> : vector<12xf32>
    %107 = vector.multi_reduction <add>, %106, %cst_117 [1] : vector<12x2xf32> to vector<12xf32>
    %108 = vector.shape_cast %107 : vector<12xf32> to vector<12x1xf32>
    %109 = vector.broadcast %108 : vector<12x1xf32> to vector<12x2xf32>
    %110 = arith.divf %105, %109 : vector<12x2xf32>
    %111 = vector.extract_strided_slice %41 {offsets = [0, 0, 0], sizes = [1, 12, 6], strides = [1, 1, 1]} : vector<2x12x6xf32> to vector<1x12x6xf32>
    %112 = vector.shape_cast %111 : vector<1x12x6xf32> to vector<12x6xf32>
    %cst_118 = arith.constant dense<0.000000e+00> : vector<8x6xf32>
    %113 = tpu.matmul %62, %112, %cst_118 {dimension_numbers = #tpu.dot_dimension_numbers<[1], [0], [0], [1], [0, 0, 1, 1], [], []>} : vector<8x12xf32>, vector<12x6xf32>, vector<8x6xf32> -> vector<8x6xf32>
    %114 = vector.extract_strided_slice %41 {offsets = [1, 0, 0], sizes = [1, 12, 6], strides = [1, 1, 1]} : vector<2x12x6xf32> to vector<1x12x6xf32>
    %115 = vector.shape_cast %114 : vector<1x12x6xf32> to vector<12x6xf32>
    %cst_119 = arith.constant dense<0.000000e+00> : vector<8x6xf32>
    %116 = tpu.matmul %62, %115, %cst_119 {dimension_numbers = #tpu.dot_dimension_numbers<[1], [0], [0], [1], [0, 0, 1, 1], [], []>} : vector<8x12xf32>, vector<12x6xf32>, vector<8x6xf32> -> vector<8x6xf32>
    %117 = vector.extract_strided_slice %42 {offsets = [0, 0, 0], sizes = [1, 8, 4], strides = [1, 1, 1]} : vector<2x8x4xf32> to vector<1x8x4xf32>
    %118 = vector.shape_cast %117 : vector<1x8x4xf32> to vector<8x4xf32>
    %cst_120 = arith.constant dense<0.000000e+00> : vector<12x4xf32>
    %119 = tpu.matmul %82, %118, %cst_120 {dimension_numbers = #tpu.dot_dimension_numbers<[1], [0], [0], [1], [0, 0, 1, 1], [], []>} : vector<12x8xf32>, vector<8x4xf32>, vector<12x4xf32> -> vector<12x4xf32>
    %120 = vector.extract_strided_slice %42 {offsets = [1, 0, 0], sizes = [1, 8, 4], strides = [1, 1, 1]} : vector<2x8x4xf32> to vector<1x8x4xf32>
    %121 = vector.shape_cast %120 : vector<1x8x4xf32> to vector<8x4xf32>
    %cst_121 = arith.constant dense<0.000000e+00> : vector<12x4xf32>
    %122 = tpu.matmul %82, %121, %cst_121 {dimension_numbers = #tpu.dot_dimension_numbers<[1], [0], [0], [1], [0, 0, 1, 1], [], []>} : vector<12x8xf32>, vector<8x4xf32>, vector<12x4xf32> -> vector<12x4xf32>
    %cst_122 = arith.constant 0.000000e+00 : f32
    %123 = vector.broadcast %cst_122 : f32 to vector<8x6xf32>
    %cst_123 = arith.constant 0.000000e+00 : f32
    %124 = vector.broadcast %cst_123 : f32 to vector<12x4xf32>
    %125 = vector.extract_strided_slice %7 {offsets = [0, 0, 0], sizes = [1, 12, 12], strides = [1, 1, 1]} : vector<2x12x12xf32> to vector<1x12x12xf32>
    %126 = vector.shape_cast %125 : vector<1x12x12xf32> to vector<12x12xf32>
    %cst_124 = arith.constant dense<0.000000e+00> : vector<12x2xf32>
    %127 = tpu.matmul %126, %110, %cst_124 {dimension_numbers = #tpu.dot_dimension_numbers<[1], [0], [0], [1], [0, 0, 1, 1], [], []>} : vector<12x12xf32>, vector<12x2xf32>, vector<12x2xf32> -> vector<12x2xf32>
    %128 = arith.mulf %127, %8 : vector<12x2xf32>
    %cst_125 = arith.constant dense<0.000000e+00> : vector<12xf32>
    %129 = vector.multi_reduction <add>, %128, %cst_125 [1] : vector<12x2xf32> to vector<12xf32>
    %130 = vector.shape_cast %129 : vector<12xf32> to vector<12x1xf32>
    %131 = vector.extract_strided_slice %5 {offsets = [0, 0, 0], sizes = [1, 12, 8], strides = [1, 1, 1]} : vector<2x12x8xf32> to vector<1x12x8xf32>
    %132 = vector.shape_cast %131 : vector<1x12x8xf32> to vector<12x8xf32>
    %cst_126 = arith.constant dense<0.000000e+00> : vector<12x2xf32>
    %133 = tpu.matmul %132, %96, %cst_126 {dimension_numbers = #tpu.dot_dimension_numbers<[1], [0], [0], [1], [0, 0, 1, 1], [], []>} : vector<12x8xf32>, vector<8x2xf32>, vector<12x2xf32> -> vector<12x2xf32>
    %134 = arith.mulf %133, %6 : vector<12x2xf32>
    %cst_127 = arith.constant dense<0.000000e+00> : vector<12xf32>
    %135 = vector.multi_reduction <add>, %134, %cst_127 [1] : vector<12x2xf32> to vector<12xf32>
    %136 = vector.shape_cast %135 : vector<12xf32> to vector<12x1xf32>
    %137 = vector.extract_strided_slice %9 {offsets = [0, 0, 0, 0], sizes = [1, 1, 12, 8], strides = [1, 1, 1, 1]} : vector<2x2x12x8xf32> to vector<1x1x12x8xf32>
    %138 = vector.shape_cast %137 : vector<1x1x12x8xf32> to vector<12x8xf32>
    %cst_128 = arith.constant dense<0.000000e+00> : vector<12x6xf32>
    %139 = tpu.matmul %138, %113, %cst_128 {dimension_numbers = #tpu.dot_dimension_numbers<[1], [0], [0], [1], [0, 0, 1, 1], [], []>} : vector<12x8xf32>, vector<8x6xf32>, vector<12x6xf32> -> vector<12x6xf32>
    %cst_129 = arith.constant 0.000000e+00 : f32
    %140 = vector.broadcast %cst_129 : f32 to vector<12x6xf32>
    %141 = arith.addf %140, %139 : vector<12x6xf32>
    %142 = vector.extract_strided_slice %9 {offsets = [0, 1, 0, 0], sizes = [1, 1, 12, 8], strides = [1, 1, 1, 1]} : vector<2x2x12x8xf32> to vector<1x1x12x8xf32>
    %143 = vector.shape_cast %142 : vector<1x1x12x8xf32> to vector<12x8xf32>
    %cst_130 = arith.constant dense<0.000000e+00> : vector<12x6xf32>
    %144 = tpu.matmul %143, %116, %cst_130 {dimension_numbers = #tpu.dot_dimension_numbers<[1], [0], [0], [1], [0, 0, 1, 1], [], []>} : vector<12x8xf32>, vector<8x6xf32>, vector<12x6xf32> -> vector<12x6xf32>
    %145 = arith.addf %141, %144 : vector<12x6xf32>
    %146 = vector.extract_strided_slice %10 {offsets = [0, 0, 0, 0], sizes = [1, 1, 12, 12], strides = [1, 1, 1, 1]} : vector<2x2x12x12xf32> to vector<1x1x12x12xf32>
    %147 = vector.shape_cast %146 : vector<1x1x12x12xf32> to vector<12x12xf32>
    %cst_131 = arith.constant dense<0.000000e+00> : vector<12x4xf32>
    %148 = tpu.matmul %147, %119, %cst_131 {dimension_numbers = #tpu.dot_dimension_numbers<[1], [0], [0], [1], [0, 0, 1, 1], [], []>} : vector<12x12xf32>, vector<12x4xf32>, vector<12x4xf32> -> vector<12x4xf32>
    %cst_132 = arith.constant 0.000000e+00 : f32
    %149 = vector.broadcast %cst_132 : f32 to vector<12x4xf32>
    %150 = arith.addf %149, %148 : vector<12x4xf32>
    %151 = vector.extract_strided_slice %10 {offsets = [0, 1, 0, 0], sizes = [1, 1, 12, 12], strides = [1, 1, 1, 1]} : vector<2x2x12x12xf32> to vector<1x1x12x12xf32>
    %152 = vector.shape_cast %151 : vector<1x1x12x12xf32> to vector<12x12xf32>
    %cst_133 = arith.constant dense<0.000000e+00> : vector<12x4xf32>
    %153 = tpu.matmul %152, %122, %cst_133 {dimension_numbers = #tpu.dot_dimension_numbers<[1], [0], [0], [1], [0, 0, 1, 1], [], []>} : vector<12x12xf32>, vector<12x4xf32>, vector<12x4xf32> -> vector<12x4xf32>
    %154 = arith.addf %150, %153 : vector<12x4xf32>
    %155 = vector.broadcast %130 : vector<12x1xf32> to vector<12x6xf32>
    %156 = arith.mulf %155, %145 : vector<12x6xf32>
    %cst_134 = arith.constant dense<0.000000e+00> : vector<8x6xf32>
    %157 = tpu.matmul %2, %156, %cst_134 {dimension_numbers = #tpu.dot_dimension_numbers<[1], [0], [0], [1], [0, 0, 1, 1], [], []>} : vector<8x12xf32>, vector<12x6xf32>, vector<8x6xf32> -> vector<8x6xf32>
    %158 = arith.addf %123, %157 : vector<8x6xf32>
    %159 = vector.broadcast %136 : vector<12x1xf32> to vector<12x4xf32>
    %160 = arith.mulf %159, %154 : vector<12x4xf32>
    %161 = arith.addf %124, %160 : vector<12x4xf32>
    %162 = vector.extract_strided_slice %7 {offsets = [1, 0, 0], sizes = [1, 12, 12], strides = [1, 1, 1]} : vector<2x12x12xf32> to vector<1x12x12xf32>
    %163 = vector.shape_cast %162 : vector<1x12x12xf32> to vector<12x12xf32>
    %cst_135 = arith.constant dense<0.000000e+00> : vector<12x2xf32>
    %164 = tpu.matmul %163, %110, %cst_135 {dimension_numbers = #tpu.dot_dimension_numbers<[1], [0], [0], [1], [0, 0, 1, 1], [], []>} : vector<12x12xf32>, vector<12x2xf32>, vector<12x2xf32> -> vector<12x2xf32>
    %165 = arith.mulf %164, %8 : vector<12x2xf32>
    %cst_136 = arith.constant dense<0.000000e+00> : vector<12xf32>
    %166 = vector.multi_reduction <add>, %165, %cst_136 [1] : vector<12x2xf32> to vector<12xf32>
    %167 = vector.shape_cast %166 : vector<12xf32> to vector<12x1xf32>
    %168 = vector.extract_strided_slice %5 {offsets = [1, 0, 0], sizes = [1, 12, 8], strides = [1, 1, 1]} : vector<2x12x8xf32> to vector<1x12x8xf32>
    %169 = vector.shape_cast %168 : vector<1x12x8xf32> to vector<12x8xf32>
    %cst_137 = arith.constant dense<0.000000e+00> : vector<12x2xf32>
    %170 = tpu.matmul %169, %96, %cst_137 {dimension_numbers = #tpu.dot_dimension_numbers<[1], [0], [0], [1], [0, 0, 1, 1], [], []>} : vector<12x8xf32>, vector<8x2xf32>, vector<12x2xf32> -> vector<12x2xf32>
    %171 = arith.mulf %170, %6 : vector<12x2xf32>
    %cst_138 = arith.constant dense<0.000000e+00> : vector<12xf32>
    %172 = vector.multi_reduction <add>, %171, %cst_138 [1] : vector<12x2xf32> to vector<12xf32>
    %173 = vector.shape_cast %172 : vector<12xf32> to vector<12x1xf32>
    %174 = vector.extract_strided_slice %9 {offsets = [1, 0, 0, 0], sizes = [1, 1, 12, 8], strides = [1, 1, 1, 1]} : vector<2x2x12x8xf32> to vector<1x1x12x8xf32>
    %175 = vector.shape_cast %174 : vector<1x1x12x8xf32> to vector<12x8xf32>
    %cst_139 = arith.constant dense<0.000000e+00> : vector<12x6xf32>
    %176 = tpu.matmul %175, %113, %cst_139 {dimension_numbers = #tpu.dot_dimension_numbers<[1], [0], [0], [1], [0, 0, 1, 1], [], []>} : vector<12x8xf32>, vector<8x6xf32>, vector<12x6xf32> -> vector<12x6xf32>
    %cst_140 = arith.constant 0.000000e+00 : f32
    %177 = vector.broadcast %cst_140 : f32 to vector<12x6xf32>
    %178 = arith.addf %177, %176 : vector<12x6xf32>
    %179 = vector.extract_strided_slice %9 {offsets = [1, 1, 0, 0], sizes = [1, 1, 12, 8], strides = [1, 1, 1, 1]} : vector<2x2x12x8xf32> to vector<1x1x12x8xf32>
    %180 = vector.shape_cast %179 : vector<1x1x12x8xf32> to vector<12x8xf32>
    %cst_141 = arith.constant dense<0.000000e+00> : vector<12x6xf32>
    %181 = tpu.matmul %180, %116, %cst_141 {dimension_numbers = #tpu.dot_dimension_numbers<[1], [0], [0], [1], [0, 0, 1, 1], [], []>} : vector<12x8xf32>, vector<8x6xf32>, vector<12x6xf32> -> vector<12x6xf32>
    %182 = arith.addf %178, %181 : vector<12x6xf32>
    %183 = vector.extract_strided_slice %10 {offsets = [1, 0, 0, 0], sizes = [1, 1, 12, 12], strides = [1, 1, 1, 1]} : vector<2x2x12x12xf32> to vector<1x1x12x12xf32>
    %184 = vector.shape_cast %183 : vector<1x1x12x12xf32> to vector<12x12xf32>
    %cst_142 = arith.constant dense<0.000000e+00> : vector<12x4xf32>
    %185 = tpu.matmul %184, %119, %cst_142 {dimension_numbers = #tpu.dot_dimension_numbers<[1], [0], [0], [1], [0, 0, 1, 1], [], []>} : vector<12x12xf32>, vector<12x4xf32>, vector<12x4xf32> -> vector<12x4xf32>
    %cst_143 = arith.constant 0.000000e+00 : f32
    %186 = vector.broadcast %cst_143 : f32 to vector<12x4xf32>
    %187 = arith.addf %186, %185 : vector<12x4xf32>
    %188 = vector.extract_strided_slice %10 {offsets = [1, 1, 0, 0], sizes = [1, 1, 12, 12], strides = [1, 1, 1, 1]} : vector<2x2x12x12xf32> to vector<1x1x12x12xf32>
    %189 = vector.shape_cast %188 : vector<1x1x12x12xf32> to vector<12x12xf32>
    %cst_144 = arith.constant dense<0.000000e+00> : vector<12x4xf32>
    %190 = tpu.matmul %189, %122, %cst_144 {dimension_numbers = #tpu.dot_dimension_numbers<[1], [0], [0], [1], [0, 0, 1, 1], [], []>} : vector<12x12xf32>, vector<12x4xf32>, vector<12x4xf32> -> vector<12x4xf32>
    %191 = arith.addf %187, %190 : vector<12x4xf32>
    %192 = vector.broadcast %167 : vector<12x1xf32> to vector<12x6xf32>
    %193 = arith.mulf %192, %182 : vector<12x6xf32>
    %cst_145 = arith.constant dense<0.000000e+00> : vector<8x6xf32>
    %194 = tpu.matmul %2, %193, %cst_145 {dimension_numbers = #tpu.dot_dimension_numbers<[1], [0], [0], [1], [0, 0, 1, 1], [], []>} : vector<8x12xf32>, vector<12x6xf32>, vector<8x6xf32> -> vector<8x6xf32>
    %195 = arith.addf %158, %194 : vector<8x6xf32>
    %196 = vector.broadcast %173 : vector<12x1xf32> to vector<12x4xf32>
    %197 = arith.mulf %196, %191 : vector<12x4xf32>
    %198 = arith.addf %161, %197 : vector<12x4xf32>
    %199 = arith.addf %195, %0 : vector<8x6xf32>
    %cst_146 = arith.constant dense<0.000000e+00> : vector<8xf32>
    %200 = vector.multi_reduction <add>, %199, %cst_146 [1] : vector<8x6xf32> to vector<8xf32>
    %201 = vector.shape_cast %200 : vector<8xf32> to vector<8x1xf32>
    %cst_147 = arith.constant 6.000000e+00 : f32
    %202 = vector.broadcast %cst_147 : f32 to vector<8x1xf32>
    %203 = arith.divf %201, %202 : vector<8x1xf32>
    %204 = vector.broadcast %203 : vector<8x1xf32> to vector<8x6xf32>
    %205 = arith.subf %199, %204 : vector<8x6xf32>
    %206 = vector.broadcast %203 : vector<8x1xf32> to vector<8x6xf32>
    %207 = arith.subf %199, %206 : vector<8x6xf32>
    %208 = arith.mulf %205, %207 : vector<8x6xf32>
    %cst_148 = arith.constant dense<0.000000e+00> : vector<8xf32>
    %209 = vector.multi_reduction <add>, %208, %cst_148 [1] : vector<8x6xf32> to vector<8xf32>
    %210 = vector.shape_cast %209 : vector<8xf32> to vector<8x1xf32>
    %cst_149 = arith.constant 6.000000e+00 : f32
    %211 = vector.broadcast %cst_149 : f32 to vector<8x1xf32>
    %212 = arith.divf %210, %211 : vector<8x1xf32>
    %213 = vector.broadcast %203 : vector<8x1xf32> to vector<8x6xf32>
    %214 = arith.subf %199, %213 : vector<8x6xf32>
    %cst_150 = arith.constant 9.99999974E-6 : f32
    %215 = vector.broadcast %cst_150 : f32 to vector<8x1xf32>
    %216 = arith.addf %212, %215 : vector<8x1xf32>
    %217 = math.rsqrt %216 : vector<8x1xf32>
    %218 = vector.broadcast %217 : vector<8x1xf32> to vector<8x6xf32>
    %219 = arith.mulf %214, %218 : vector<8x6xf32>
    %220 = vector.broadcast %29 : vector<1x6xf32> to vector<8x6xf32>
    %221 = arith.mulf %219, %220 : vector<8x6xf32>
    %222 = vector.broadcast %30 : vector<1x6xf32> to vector<8x6xf32>
    %223 = arith.addf %221, %222 : vector<8x6xf32>
    %224 = arith.addf %198, %1 : vector<12x4xf32>
    %cst_151 = arith.constant dense<0.000000e+00> : vector<12xf32>
    %225 = vector.multi_reduction <add>, %224, %cst_151 [1] : vector<12x4xf32> to vector<12xf32>
    %226 = vector.shape_cast %225 : vector<12xf32> to vector<12x1xf32>
    %cst_152 = arith.constant 4.000000e+00 : f32
    %227 = vector.broadcast %cst_152 : f32 to vector<12x1xf32>
    %228 = arith.divf %226, %227 : vector<12x1xf32>
    %229 = vector.broadcast %228 : vector<12x1xf32> to vector<12x4xf32>
    %230 = arith.subf %224, %229 : vector<12x4xf32>
    %231 = vector.broadcast %228 : vector<12x1xf32> to vector<12x4xf32>
    %232 = arith.subf %224, %231 : vector<12x4xf32>
    %233 = arith.mulf %230, %232 : vector<12x4xf32>
    %cst_153 = arith.constant dense<0.000000e+00> : vector<12xf32>
    %234 = vector.multi_reduction <add>, %233, %cst_153 [1] : vector<12x4xf32> to vector<12xf32>
    %235 = vector.shape_cast %234 : vector<12xf32> to vector<12x1xf32>
    %cst_154 = arith.constant 4.000000e+00 : f32
    %236 = vector.broadcast %cst_154 : f32 to vector<12x1xf32>
    %237 = arith.divf %235, %236 : vector<12x1xf32>
    %238 = vector.broadcast %228 : vector<12x1xf32> to vector<12x4xf32>
    %239 = arith.subf %224, %238 : vector<12x4xf32>
    %cst_155 = arith.constant 9.99999974E-6 : f32
    %240 = vector.broadcast %cst_155 : f32 to vector<12x1xf32>
    %241 = arith.addf %237, %240 : vector<12x1xf32>
    %242 = math.rsqrt %241 : vector<12x1xf32>
    %243 = vector.broadcast %242 : vector<12x1xf32> to vector<12x4xf32>
    %244 = arith.mulf %239, %243 : vector<12x4xf32>
    %245 = vector.broadcast %31 : vector<1x4xf32> to vector<12x4xf32>
    %246 = arith.mulf %244, %245 : vector<12x4xf32>
    %247 = vector.broadcast %32 : vector<1x4xf32> to vector<12x4xf32>
    %248 = arith.addf %246, %247 : vector<12x4xf32>
    %cst_156 = arith.constant dense<0.000000e+00> : vector<8x8xf32>
    %249 = tpu.matmul %223, %33, %cst_156 {dimension_numbers = #tpu.dot_dimension_numbers<[1], [0], [0], [1], [0, 0, 1, 1], [], []>} : vector<8x6xf32>, vector<6x8xf32>, vector<8x8xf32> -> vector<8x8xf32>
    %250 = vector.broadcast %34 : vector<1x8xf32> to vector<8x8xf32>
    %251 = arith.addf %249, %250 : vector<8x8xf32>
    %cst_157 = arith.constant 0.000000e+00 : f32
    %252 = vector.broadcast %cst_157 : f32 to vector<8x8xf32>
    %253 = arith.maximumf %251, %252 : vector<8x8xf32>
    %cst_158 = arith.constant dense<0.000000e+00> : vector<12x8xf32>
    %254 = tpu.matmul %248, %35, %cst_158 {dimension_numbers = #tpu.dot_dimension_numbers<[1], [0], [0], [1], [0, 0, 1, 1], [], []>} : vector<12x4xf32>, vector<4x8xf32>, vector<12x8xf32> -> vector<12x8xf32>
    %255 = vector.broadcast %36 : vector<1x8xf32> to vector<12x8xf32>
    %256 = arith.addf %254, %255 : vector<12x8xf32>
    %cst_159 = arith.constant 0.000000e+00 : f32
    %257 = vector.broadcast %cst_159 : f32 to vector<12x8xf32>
    %258 = arith.maximumf %256, %257 : vector<12x8xf32>
    %cst_160 = arith.constant dense<0.000000e+00> : vector<8xf32>
    %259 = vector.multi_reduction <add>, %253, %cst_160 [1] : vector<8x8xf32> to vector<8xf32>
    %260 = vector.shape_cast %259 : vector<8xf32> to vector<8x1xf32>
    %cst_161 = arith.constant 8.000000e+00 : f32
    %261 = vector.broadcast %cst_161 : f32 to vector<8x1xf32>
    %262 = arith.divf %260, %261 : vector<8x1xf32>
    %263 = vector.broadcast %262 : vector<8x1xf32> to vector<8x8xf32>
    %264 = arith.subf %253, %263 : vector<8x8xf32>
    %265 = vector.broadcast %262 : vector<8x1xf32> to vector<8x8xf32>
    %266 = arith.subf %253, %265 : vector<8x8xf32>
    %267 = arith.mulf %264, %266 : vector<8x8xf32>
    %cst_162 = arith.constant dense<0.000000e+00> : vector<8xf32>
    %268 = vector.multi_reduction <add>, %267, %cst_162 [1] : vector<8x8xf32> to vector<8xf32>
    %269 = vector.shape_cast %268 : vector<8xf32> to vector<8x1xf32>
    %cst_163 = arith.constant 8.000000e+00 : f32
    %270 = vector.broadcast %cst_163 : f32 to vector<8x1xf32>
    %271 = arith.divf %269, %270 : vector<8x1xf32>
    %272 = vector.broadcast %262 : vector<8x1xf32> to vector<8x8xf32>
    %273 = arith.subf %253, %272 : vector<8x8xf32>
    %cst_164 = arith.constant 9.99999974E-6 : f32
    %274 = vector.broadcast %cst_164 : f32 to vector<8x1xf32>
    %275 = arith.addf %271, %274 : vector<8x1xf32>
    %276 = math.rsqrt %275 : vector<8x1xf32>
    %277 = vector.broadcast %276 : vector<8x1xf32> to vector<8x8xf32>
    %278 = arith.mulf %273, %277 : vector<8x8xf32>
    %279 = vector.broadcast %37 : vector<1x8xf32> to vector<8x8xf32>
    %280 = arith.mulf %278, %279 : vector<8x8xf32>
    %281 = vector.broadcast %38 : vector<1x8xf32> to vector<8x8xf32>
    %282 = arith.addf %280, %281 : vector<8x8xf32>
    %cst_165 = arith.constant dense<0.000000e+00> : vector<12xf32>
    %283 = vector.multi_reduction <add>, %258, %cst_165 [1] : vector<12x8xf32> to vector<12xf32>
    %284 = vector.shape_cast %283 : vector<12xf32> to vector<12x1xf32>
    %cst_166 = arith.constant 8.000000e+00 : f32
    %285 = vector.broadcast %cst_166 : f32 to vector<12x1xf32>
    %286 = arith.divf %284, %285 : vector<12x1xf32>
    %287 = vector.broadcast %286 : vector<12x1xf32> to vector<12x8xf32>
    %288 = arith.subf %258, %287 : vector<12x8xf32>
    %289 = vector.broadcast %286 : vector<12x1xf32> to vector<12x8xf32>
    %290 = arith.subf %258, %289 : vector<12x8xf32>
    %291 = arith.mulf %288, %290 : vector<12x8xf32>
    %cst_167 = arith.constant dense<0.000000e+00> : vector<12xf32>
    %292 = vector.multi_reduction <add>, %291, %cst_167 [1] : vector<12x8xf32> to vector<12xf32>
    %293 = vector.shape_cast %292 : vector<12xf32> to vector<12x1xf32>
    %cst_168 = arith.constant 8.000000e+00 : f32
    %294 = vector.broadcast %cst_168 : f32 to vector<12x1xf32>
    %295 = arith.divf %293, %294 : vector<12x1xf32>
    %296 = vector.broadcast %286 : vector<12x1xf32> to vector<12x8xf32>
    %297 = arith.subf %258, %296 : vector<12x8xf32>
    %cst_169 = arith.constant 9.99999974E-6 : f32
    %298 = vector.broadcast %cst_169 : f32 to vector<12x1xf32>
    %299 = arith.addf %295, %298 : vector<12x1xf32>
    %300 = math.rsqrt %299 : vector<12x1xf32>
    %301 = vector.broadcast %300 : vector<12x1xf32> to vector<12x8xf32>
    %302 = arith.mulf %297, %301 : vector<12x8xf32>
    %303 = vector.broadcast %39 : vector<1x8xf32> to vector<12x8xf32>
    %304 = arith.mulf %302, %303 : vector<12x8xf32>
    %305 = vector.broadcast %40 : vector<1x8xf32> to vector<12x8xf32>
    %306 = arith.addf %304, %305 : vector<12x8xf32>
    %c0_170 = arith.constant 0 : index
    %c0_171 = arith.constant 0 : index
    %307 = vector.load %arg41[%c0_170, %c0_171] : memref<8x8xf32, #tpu.memory_space<vmem>>, vector<8x8xf32>
    %c0_172 = arith.constant 0 : index
    %c0_173 = arith.constant 0 : index
    %308 = vector.load %arg42[%c0_172, %c0_173] : memref<1x8xf32, #tpu.memory_space<vmem>>, vector<1x8xf32>
    %c0_174 = arith.constant 0 : index
    %c0_175 = arith.constant 0 : index
    %309 = vector.load %arg43[%c0_174, %c0_175] : memref<8x2xf32, #tpu.memory_space<vmem>>, vector<8x2xf32>
    %c0_176 = arith.constant 0 : index
    %c0_177 = arith.constant 0 : index
    %310 = vector.load %arg44[%c0_176, %c0_177] : memref<1x2xf32, #tpu.memory_space<vmem>>, vector<1x2xf32>
    %c0_178 = arith.constant 0 : index
    %c0_179 = arith.constant 0 : index
    %311 = vector.load %arg45[%c0_178, %c0_179] : memref<8x64xf32, #tpu.memory_space<vmem>>, vector<8x64xf32>
    %c0_180 = arith.constant 0 : index
    %c0_181 = arith.constant 0 : index
    %312 = vector.load %arg46[%c0_180, %c0_181] : memref<1x64xf32, #tpu.memory_space<vmem>>, vector<1x64xf32>
    %c0_182 = arith.constant 0 : index
    %c0_183 = arith.constant 0 : index
    %313 = vector.load %arg47[%c0_182, %c0_183] : memref<64x16xf32, #tpu.memory_space<vmem>>, vector<64x16xf32>
    %c0_184 = arith.constant 0 : index
    %c0_185 = arith.constant 0 : index
    %314 = vector.load %arg48[%c0_184, %c0_185] : memref<1x16xf32, #tpu.memory_space<vmem>>, vector<1x16xf32>
    %c0_186 = arith.constant 0 : index
    %c0_187 = arith.constant 0 : index
    %315 = vector.load %arg49[%c0_186, %c0_187] : memref<8x8xf32, #tpu.memory_space<vmem>>, vector<8x8xf32>
    %c0_188 = arith.constant 0 : index
    %c0_189 = arith.constant 0 : index
    %316 = vector.load %arg50[%c0_188, %c0_189] : memref<1x8xf32, #tpu.memory_space<vmem>>, vector<1x8xf32>
    %c0_190 = arith.constant 0 : index
    %c0_191 = arith.constant 0 : index
    %317 = vector.load %arg51[%c0_190, %c0_191] : memref<8x2xf32, #tpu.memory_space<vmem>>, vector<8x2xf32>
    %c0_192 = arith.constant 0 : index
    %c0_193 = arith.constant 0 : index
    %318 = vector.load %arg52[%c0_192, %c0_193] : memref<1x2xf32, #tpu.memory_space<vmem>>, vector<1x2xf32>
    %c0_194 = arith.constant 0 : index
    %c0_195 = arith.constant 0 : index
    %319 = vector.load %arg53[%c0_194, %c0_195] : memref<8x64xf32, #tpu.memory_space<vmem>>, vector<8x64xf32>
    %c0_196 = arith.constant 0 : index
    %c0_197 = arith.constant 0 : index
    %320 = vector.load %arg54[%c0_196, %c0_197] : memref<1x64xf32, #tpu.memory_space<vmem>>, vector<1x64xf32>
    %c0_198 = arith.constant 0 : index
    %c0_199 = arith.constant 0 : index
    %321 = vector.load %arg55[%c0_198, %c0_199] : memref<64x16xf32, #tpu.memory_space<vmem>>, vector<64x16xf32>
    %c0_200 = arith.constant 0 : index
    %c0_201 = arith.constant 0 : index
    %322 = vector.load %arg56[%c0_200, %c0_201] : memref<1x16xf32, #tpu.memory_space<vmem>>, vector<1x16xf32>
    %c0_202 = arith.constant 0 : index
    %c0_203 = arith.constant 0 : index
    %323 = vector.load %arg57[%c0_202, %c0_203] : memref<1x8xf32, #tpu.memory_space<vmem>>, vector<1x8xf32>
    %c0_204 = arith.constant 0 : index
    %c0_205 = arith.constant 0 : index
    %324 = vector.load %arg58[%c0_204, %c0_205] : memref<1x8xf32, #tpu.memory_space<vmem>>, vector<1x8xf32>
    %c0_206 = arith.constant 0 : index
    %c0_207 = arith.constant 0 : index
    %325 = vector.load %arg59[%c0_206, %c0_207] : memref<1x8xf32, #tpu.memory_space<vmem>>, vector<1x8xf32>
    %c0_208 = arith.constant 0 : index
    %c0_209 = arith.constant 0 : index
    %326 = vector.load %arg60[%c0_208, %c0_209] : memref<1x8xf32, #tpu.memory_space<vmem>>, vector<1x8xf32>
    %c0_210 = arith.constant 0 : index
    %c0_211 = arith.constant 0 : index
    %327 = vector.load %arg61[%c0_210, %c0_211] : memref<8x6xf32, #tpu.memory_space<vmem>>, vector<8x6xf32>
    %c0_212 = arith.constant 0 : index
    %c0_213 = arith.constant 0 : index
    %328 = vector.load %arg62[%c0_212, %c0_213] : memref<1x6xf32, #tpu.memory_space<vmem>>, vector<1x6xf32>
    %c0_214 = arith.constant 0 : index
    %c0_215 = arith.constant 0 : index
    %329 = vector.load %arg63[%c0_214, %c0_215] : memref<8x4xf32, #tpu.memory_space<vmem>>, vector<8x4xf32>
    %c0_216 = arith.constant 0 : index
    %c0_217 = arith.constant 0 : index
    %330 = vector.load %arg64[%c0_216, %c0_217] : memref<1x4xf32, #tpu.memory_space<vmem>>, vector<1x4xf32>
    %c0_218 = arith.constant 0 : index
    %c0_219 = arith.constant 0 : index
    %331 = vector.load %arg65[%c0_218, %c0_219] : memref<1x6xf32, #tpu.memory_space<vmem>>, vector<1x6xf32>
    %c0_220 = arith.constant 0 : index
    %c0_221 = arith.constant 0 : index
    %332 = vector.load %arg66[%c0_220, %c0_221] : memref<1x6xf32, #tpu.memory_space<vmem>>, vector<1x6xf32>
    %c0_222 = arith.constant 0 : index
    %c0_223 = arith.constant 0 : index
    %333 = vector.load %arg67[%c0_222, %c0_223] : memref<1x4xf32, #tpu.memory_space<vmem>>, vector<1x4xf32>
    %c0_224 = arith.constant 0 : index
    %c0_225 = arith.constant 0 : index
    %334 = vector.load %arg68[%c0_224, %c0_225] : memref<1x4xf32, #tpu.memory_space<vmem>>, vector<1x4xf32>
    %c0_226 = arith.constant 0 : index
    %c0_227 = arith.constant 0 : index
    %c0_228 = arith.constant 0 : index
    %335 = vector.load %arg69[%c0_226, %c0_227, %c0_228] : memref<2x16x8xf32, #tpu.memory_space<vmem>>, vector<2x16x8xf32>
    %c0_229 = arith.constant 0 : index
    %c0_230 = arith.constant 0 : index
    %c0_231 = arith.constant 0 : index
    %336 = vector.load %arg70[%c0_229, %c0_230, %c0_231] : memref<2x16x8xf32, #tpu.memory_space<vmem>>, vector<2x16x8xf32>
    %cst_232 = arith.constant dense<0.000000e+00> : vector<8x8xf32>
    %337 = tpu.matmul %282, %307, %cst_232 {dimension_numbers = #tpu.dot_dimension_numbers<[1], [0], [0], [1], [0, 0, 1, 1], [], []>} : vector<8x8xf32>, vector<8x8xf32>, vector<8x8xf32> -> vector<8x8xf32>
    %338 = vector.broadcast %308 : vector<1x8xf32> to vector<8x8xf32>
    %339 = arith.addf %337, %338 : vector<8x8xf32>
    %cst_233 = arith.constant 0.000000e+00 : f32
    %340 = vector.broadcast %cst_233 : f32 to vector<8x8xf32>
    %341 = arith.maximumf %339, %340 : vector<8x8xf32>
    %cst_234 = arith.constant dense<0.000000e+00> : vector<8x2xf32>
    %342 = tpu.matmul %341, %309, %cst_234 {dimension_numbers = #tpu.dot_dimension_numbers<[1], [0], [0], [1], [0, 0, 1, 1], [], []>} : vector<8x8xf32>, vector<8x2xf32>, vector<8x2xf32> -> vector<8x2xf32>
    %343 = vector.broadcast %310 : vector<1x2xf32> to vector<8x2xf32>
    %344 = arith.addf %342, %343 : vector<8x2xf32>
    %cst_235 = arith.constant 0.000000e+00 : f32
    %345 = vector.broadcast %cst_235 : f32 to vector<8x2xf32>
    %346 = arith.maximumf %344, %345 : vector<8x2xf32>
    %cst_236 = arith.constant dense<0.000000e+00> : vector<8x64xf32>
    %347 = tpu.matmul %282, %311, %cst_236 {dimension_numbers = #tpu.dot_dimension_numbers<[1], [0], [0], [1], [0, 0, 1, 1], [], []>} : vector<8x8xf32>, vector<8x64xf32>, vector<8x64xf32> -> vector<8x64xf32>
    %348 = vector.broadcast %312 : vector<1x64xf32> to vector<8x64xf32>
    %349 = arith.addf %347, %348 : vector<8x64xf32>
    %cst_237 = arith.constant 0.000000e+00 : f32
    %350 = vector.broadcast %cst_237 : f32 to vector<8x64xf32>
    %351 = arith.maximumf %349, %350 : vector<8x64xf32>
    %cst_238 = arith.constant dense<0.000000e+00> : vector<8x16xf32>
    %352 = tpu.matmul %351, %313, %cst_238 {dimension_numbers = #tpu.dot_dimension_numbers<[1], [0], [0], [1], [0, 0, 1, 1], [], []>} : vector<8x64xf32>, vector<64x16xf32>, vector<8x16xf32> -> vector<8x16xf32>
    %353 = vector.broadcast %314 : vector<1x16xf32> to vector<8x16xf32>
    %354 = arith.addf %352, %353 : vector<8x16xf32>
    %cst_239 = arith.constant 0.000000e+00 : f32
    %355 = vector.broadcast %cst_239 : f32 to vector<8x16xf32>
    %356 = arith.maximumf %354, %355 : vector<8x16xf32>
    %cst_240 = arith.constant dense<0.000000e+00> : vector<12x8xf32>
    %357 = tpu.matmul %306, %315, %cst_240 {dimension_numbers = #tpu.dot_dimension_numbers<[1], [0], [0], [1], [0, 0, 1, 1], [], []>} : vector<12x8xf32>, vector<8x8xf32>, vector<12x8xf32> -> vector<12x8xf32>
    %358 = vector.broadcast %316 : vector<1x8xf32> to vector<12x8xf32>
    %359 = arith.addf %357, %358 : vector<12x8xf32>
    %cst_241 = arith.constant 0.000000e+00 : f32
    %360 = vector.broadcast %cst_241 : f32 to vector<12x8xf32>
    %361 = arith.maximumf %359, %360 : vector<12x8xf32>
    %cst_242 = arith.constant dense<0.000000e+00> : vector<12x2xf32>
    %362 = tpu.matmul %361, %317, %cst_242 {dimension_numbers = #tpu.dot_dimension_numbers<[1], [0], [0], [1], [0, 0, 1, 1], [], []>} : vector<12x8xf32>, vector<8x2xf32>, vector<12x2xf32> -> vector<12x2xf32>
    %363 = vector.broadcast %318 : vector<1x2xf32> to vector<12x2xf32>
    %364 = arith.addf %362, %363 : vector<12x2xf32>
    %cst_243 = arith.constant 0.000000e+00 : f32
    %365 = vector.broadcast %cst_243 : f32 to vector<12x2xf32>
    %366 = arith.maximumf %364, %365 : vector<12x2xf32>
    %cst_244 = arith.constant dense<0.000000e+00> : vector<12x64xf32>
    %367 = tpu.matmul %306, %319, %cst_244 {dimension_numbers = #tpu.dot_dimension_numbers<[1], [0], [0], [1], [0, 0, 1, 1], [], []>} : vector<12x8xf32>, vector<8x64xf32>, vector<12x64xf32> -> vector<12x64xf32>
    %368 = vector.broadcast %320 : vector<1x64xf32> to vector<12x64xf32>
    %369 = arith.addf %367, %368 : vector<12x64xf32>
    %cst_245 = arith.constant 0.000000e+00 : f32
    %370 = vector.broadcast %cst_245 : f32 to vector<12x64xf32>
    %371 = arith.maximumf %369, %370 : vector<12x64xf32>
    %cst_246 = arith.constant dense<0.000000e+00> : vector<12x16xf32>
    %372 = tpu.matmul %371, %321, %cst_246 {dimension_numbers = #tpu.dot_dimension_numbers<[1], [0], [0], [1], [0, 0, 1, 1], [], []>} : vector<12x64xf32>, vector<64x16xf32>, vector<12x16xf32> -> vector<12x16xf32>
    %373 = vector.broadcast %322 : vector<1x16xf32> to vector<12x16xf32>
    %374 = arith.addf %372, %373 : vector<12x16xf32>
    %cst_247 = arith.constant 0.000000e+00 : f32
    %375 = vector.broadcast %cst_247 : f32 to vector<12x16xf32>
    %376 = arith.maximumf %374, %375 : vector<12x16xf32>
    %cst_248 = arith.constant 0.353553385 : f32
    %377 = vector.broadcast %cst_248 : f32 to vector<8x2xf32>
    %378 = arith.mulf %346, %377 : vector<8x2xf32>
    %cst_249 = arith.constant dense<0xFF800000> : vector<8xf32>
    %379 = vector.multi_reduction <maximumf>, %378, %cst_249 [1] : vector<8x2xf32> to vector<8xf32>
    %380 = vector.shape_cast %379 : vector<8xf32> to vector<8x1xf32>
    %cst_250 = arith.constant dense<0xFF800000> : vector<1xf32>
    %381 = vector.multi_reduction <maximumf>, %380, %cst_250 [0] : vector<8x1xf32> to vector<1xf32>
    %382 = vector.shape_cast %381 : vector<1xf32> to vector<1x1xf32>
    %383 = vector.broadcast %382 : vector<1x1xf32> to vector<8x2xf32>
    %384 = arith.subf %378, %383 : vector<8x2xf32>
    %385 = math.exp %384 : vector<8x2xf32>
    %cst_251 = arith.constant dense<0.000000e+00> : vector<8x2xf32>
    %386 = tpu.matmul %3, %385, %cst_251 {dimension_numbers = #tpu.dot_dimension_numbers<[1], [0], [0], [1], [0, 0, 1, 1], [], []>} : vector<8x8xf32>, vector<8x2xf32>, vector<8x2xf32> -> vector<8x2xf32>
    %cst_252 = arith.constant dense<0.000000e+00> : vector<8xf32>
    %387 = vector.multi_reduction <add>, %386, %cst_252 [1] : vector<8x2xf32> to vector<8xf32>
    %388 = vector.shape_cast %387 : vector<8xf32> to vector<8x1xf32>
    %389 = vector.broadcast %388 : vector<8x1xf32> to vector<8x2xf32>
    %390 = arith.divf %385, %389 : vector<8x2xf32>
    %cst_253 = arith.constant 0.353553385 : f32
    %391 = vector.broadcast %cst_253 : f32 to vector<12x2xf32>
    %392 = arith.mulf %366, %391 : vector<12x2xf32>
    %cst_254 = arith.constant dense<0xFF800000> : vector<12xf32>
    %393 = vector.multi_reduction <maximumf>, %392, %cst_254 [1] : vector<12x2xf32> to vector<12xf32>
    %394 = vector.shape_cast %393 : vector<12xf32> to vector<12x1xf32>
    %cst_255 = arith.constant dense<0xFF800000> : vector<1xf32>
    %395 = vector.multi_reduction <maximumf>, %394, %cst_255 [0] : vector<12x1xf32> to vector<1xf32>
    %396 = vector.shape_cast %395 : vector<1xf32> to vector<1x1xf32>
    %397 = vector.broadcast %396 : vector<1x1xf32> to vector<12x2xf32>
    %398 = arith.subf %392, %397 : vector<12x2xf32>
    %399 = math.exp %398 : vector<12x2xf32>
    %cst_256 = arith.constant dense<0.000000e+00> : vector<12x2xf32>
    %400 = tpu.matmul %4, %399, %cst_256 {dimension_numbers = #tpu.dot_dimension_numbers<[1], [0], [0], [1], [0, 0, 1, 1], [], []>} : vector<12x12xf32>, vector<12x2xf32>, vector<12x2xf32> -> vector<12x2xf32>
    %cst_257 = arith.constant dense<0.000000e+00> : vector<12xf32>
    %401 = vector.multi_reduction <add>, %400, %cst_257 [1] : vector<12x2xf32> to vector<12xf32>
    %402 = vector.shape_cast %401 : vector<12xf32> to vector<12x1xf32>
    %403 = vector.broadcast %402 : vector<12x1xf32> to vector<12x2xf32>
    %404 = arith.divf %399, %403 : vector<12x2xf32>
    %405 = vector.extract_strided_slice %335 {offsets = [0, 0, 0], sizes = [1, 16, 8], strides = [1, 1, 1]} : vector<2x16x8xf32> to vector<1x16x8xf32>
    %406 = vector.shape_cast %405 : vector<1x16x8xf32> to vector<16x8xf32>
    %cst_258 = arith.constant dense<0.000000e+00> : vector<8x8xf32>
    %407 = tpu.matmul %356, %406, %cst_258 {dimension_numbers = #tpu.dot_dimension_numbers<[1], [0], [0], [1], [0, 0, 1, 1], [], []>} : vector<8x16xf32>, vector<16x8xf32>, vector<8x8xf32> -> vector<8x8xf32>
    %408 = vector.extract_strided_slice %335 {offsets = [1, 0, 0], sizes = [1, 16, 8], strides = [1, 1, 1]} : vector<2x16x8xf32> to vector<1x16x8xf32>
    %409 = vector.shape_cast %408 : vector<1x16x8xf32> to vector<16x8xf32>
    %cst_259 = arith.constant dense<0.000000e+00> : vector<8x8xf32>
    %410 = tpu.matmul %356, %409, %cst_259 {dimension_numbers = #tpu.dot_dimension_numbers<[1], [0], [0], [1], [0, 0, 1, 1], [], []>} : vector<8x16xf32>, vector<16x8xf32>, vector<8x8xf32> -> vector<8x8xf32>
    %411 = vector.extract_strided_slice %336 {offsets = [0, 0, 0], sizes = [1, 16, 8], strides = [1, 1, 1]} : vector<2x16x8xf32> to vector<1x16x8xf32>
    %412 = vector.shape_cast %411 : vector<1x16x8xf32> to vector<16x8xf32>
    %cst_260 = arith.constant dense<0.000000e+00> : vector<12x8xf32>
    %413 = tpu.matmul %376, %412, %cst_260 {dimension_numbers = #tpu.dot_dimension_numbers<[1], [0], [0], [1], [0, 0, 1, 1], [], []>} : vector<12x16xf32>, vector<16x8xf32>, vector<12x8xf32> -> vector<12x8xf32>
    %414 = vector.extract_strided_slice %336 {offsets = [1, 0, 0], sizes = [1, 16, 8], strides = [1, 1, 1]} : vector<2x16x8xf32> to vector<1x16x8xf32>
    %415 = vector.shape_cast %414 : vector<1x16x8xf32> to vector<16x8xf32>
    %cst_261 = arith.constant dense<0.000000e+00> : vector<12x8xf32>
    %416 = tpu.matmul %376, %415, %cst_261 {dimension_numbers = #tpu.dot_dimension_numbers<[1], [0], [0], [1], [0, 0, 1, 1], [], []>} : vector<12x16xf32>, vector<16x8xf32>, vector<12x8xf32> -> vector<12x8xf32>
    %cst_262 = arith.constant 0.000000e+00 : f32
    %417 = vector.broadcast %cst_262 : f32 to vector<8x8xf32>
    %cst_263 = arith.constant 0.000000e+00 : f32
    %418 = vector.broadcast %cst_263 : f32 to vector<12x8xf32>
    %419 = vector.extract_strided_slice %7 {offsets = [0, 0, 0], sizes = [1, 12, 12], strides = [1, 1, 1]} : vector<2x12x12xf32> to vector<1x12x12xf32>
    %420 = vector.shape_cast %419 : vector<1x12x12xf32> to vector<12x12xf32>
    %cst_264 = arith.constant dense<0.000000e+00> : vector<12x2xf32>
    %421 = tpu.matmul %420, %404, %cst_264 {dimension_numbers = #tpu.dot_dimension_numbers<[1], [0], [0], [1], [0, 0, 1, 1], [], []>} : vector<12x12xf32>, vector<12x2xf32>, vector<12x2xf32> -> vector<12x2xf32>
    %422 = arith.mulf %421, %8 : vector<12x2xf32>
    %cst_265 = arith.constant dense<0.000000e+00> : vector<12xf32>
    %423 = vector.multi_reduction <add>, %422, %cst_265 [1] : vector<12x2xf32> to vector<12xf32>
    %424 = vector.shape_cast %423 : vector<12xf32> to vector<12x1xf32>
    %425 = vector.extract_strided_slice %5 {offsets = [0, 0, 0], sizes = [1, 12, 8], strides = [1, 1, 1]} : vector<2x12x8xf32> to vector<1x12x8xf32>
    %426 = vector.shape_cast %425 : vector<1x12x8xf32> to vector<12x8xf32>
    %cst_266 = arith.constant dense<0.000000e+00> : vector<12x2xf32>
    %427 = tpu.matmul %426, %390, %cst_266 {dimension_numbers = #tpu.dot_dimension_numbers<[1], [0], [0], [1], [0, 0, 1, 1], [], []>} : vector<12x8xf32>, vector<8x2xf32>, vector<12x2xf32> -> vector<12x2xf32>
    %428 = arith.mulf %427, %6 : vector<12x2xf32>
    %cst_267 = arith.constant dense<0.000000e+00> : vector<12xf32>
    %429 = vector.multi_reduction <add>, %428, %cst_267 [1] : vector<12x2xf32> to vector<12xf32>
    %430 = vector.shape_cast %429 : vector<12xf32> to vector<12x1xf32>
    %431 = vector.extract_strided_slice %9 {offsets = [0, 0, 0, 0], sizes = [1, 1, 12, 8], strides = [1, 1, 1, 1]} : vector<2x2x12x8xf32> to vector<1x1x12x8xf32>
    %432 = vector.shape_cast %431 : vector<1x1x12x8xf32> to vector<12x8xf32>
    %cst_268 = arith.constant dense<0.000000e+00> : vector<12x8xf32>
    %433 = tpu.matmul %432, %407, %cst_268 {dimension_numbers = #tpu.dot_dimension_numbers<[1], [0], [0], [1], [0, 0, 1, 1], [], []>} : vector<12x8xf32>, vector<8x8xf32>, vector<12x8xf32> -> vector<12x8xf32>
    %cst_269 = arith.constant 0.000000e+00 : f32
    %434 = vector.broadcast %cst_269 : f32 to vector<12x8xf32>
    %435 = arith.addf %434, %433 : vector<12x8xf32>
    %436 = vector.extract_strided_slice %9 {offsets = [0, 1, 0, 0], sizes = [1, 1, 12, 8], strides = [1, 1, 1, 1]} : vector<2x2x12x8xf32> to vector<1x1x12x8xf32>
    %437 = vector.shape_cast %436 : vector<1x1x12x8xf32> to vector<12x8xf32>
    %cst_270 = arith.constant dense<0.000000e+00> : vector<12x8xf32>
    %438 = tpu.matmul %437, %410, %cst_270 {dimension_numbers = #tpu.dot_dimension_numbers<[1], [0], [0], [1], [0, 0, 1, 1], [], []>} : vector<12x8xf32>, vector<8x8xf32>, vector<12x8xf32> -> vector<12x8xf32>
    %439 = arith.addf %435, %438 : vector<12x8xf32>
    %440 = vector.extract_strided_slice %10 {offsets = [0, 0, 0, 0], sizes = [1, 1, 12, 12], strides = [1, 1, 1, 1]} : vector<2x2x12x12xf32> to vector<1x1x12x12xf32>
    %441 = vector.shape_cast %440 : vector<1x1x12x12xf32> to vector<12x12xf32>
    %cst_271 = arith.constant dense<0.000000e+00> : vector<12x8xf32>
    %442 = tpu.matmul %441, %413, %cst_271 {dimension_numbers = #tpu.dot_dimension_numbers<[1], [0], [0], [1], [0, 0, 1, 1], [], []>} : vector<12x12xf32>, vector<12x8xf32>, vector<12x8xf32> -> vector<12x8xf32>
    %cst_272 = arith.constant 0.000000e+00 : f32
    %443 = vector.broadcast %cst_272 : f32 to vector<12x8xf32>
    %444 = arith.addf %443, %442 : vector<12x8xf32>
    %445 = vector.extract_strided_slice %10 {offsets = [0, 1, 0, 0], sizes = [1, 1, 12, 12], strides = [1, 1, 1, 1]} : vector<2x2x12x12xf32> to vector<1x1x12x12xf32>
    %446 = vector.shape_cast %445 : vector<1x1x12x12xf32> to vector<12x12xf32>
    %cst_273 = arith.constant dense<0.000000e+00> : vector<12x8xf32>
    %447 = tpu.matmul %446, %416, %cst_273 {dimension_numbers = #tpu.dot_dimension_numbers<[1], [0], [0], [1], [0, 0, 1, 1], [], []>} : vector<12x12xf32>, vector<12x8xf32>, vector<12x8xf32> -> vector<12x8xf32>
    %448 = arith.addf %444, %447 : vector<12x8xf32>
    %449 = vector.broadcast %424 : vector<12x1xf32> to vector<12x8xf32>
    %450 = arith.mulf %449, %439 : vector<12x8xf32>
    %cst_274 = arith.constant dense<0.000000e+00> : vector<8x8xf32>
    %451 = tpu.matmul %2, %450, %cst_274 {dimension_numbers = #tpu.dot_dimension_numbers<[1], [0], [0], [1], [0, 0, 1, 1], [], []>} : vector<8x12xf32>, vector<12x8xf32>, vector<8x8xf32> -> vector<8x8xf32>
    %452 = arith.addf %417, %451 : vector<8x8xf32>
    %453 = vector.broadcast %430 : vector<12x1xf32> to vector<12x8xf32>
    %454 = arith.mulf %453, %448 : vector<12x8xf32>
    %455 = arith.addf %418, %454 : vector<12x8xf32>
    %456 = vector.extract_strided_slice %7 {offsets = [1, 0, 0], sizes = [1, 12, 12], strides = [1, 1, 1]} : vector<2x12x12xf32> to vector<1x12x12xf32>
    %457 = vector.shape_cast %456 : vector<1x12x12xf32> to vector<12x12xf32>
    %cst_275 = arith.constant dense<0.000000e+00> : vector<12x2xf32>
    %458 = tpu.matmul %457, %404, %cst_275 {dimension_numbers = #tpu.dot_dimension_numbers<[1], [0], [0], [1], [0, 0, 1, 1], [], []>} : vector<12x12xf32>, vector<12x2xf32>, vector<12x2xf32> -> vector<12x2xf32>
    %459 = arith.mulf %458, %8 : vector<12x2xf32>
    %cst_276 = arith.constant dense<0.000000e+00> : vector<12xf32>
    %460 = vector.multi_reduction <add>, %459, %cst_276 [1] : vector<12x2xf32> to vector<12xf32>
    %461 = vector.shape_cast %460 : vector<12xf32> to vector<12x1xf32>
    %462 = vector.extract_strided_slice %5 {offsets = [1, 0, 0], sizes = [1, 12, 8], strides = [1, 1, 1]} : vector<2x12x8xf32> to vector<1x12x8xf32>
    %463 = vector.shape_cast %462 : vector<1x12x8xf32> to vector<12x8xf32>
    %cst_277 = arith.constant dense<0.000000e+00> : vector<12x2xf32>
    %464 = tpu.matmul %463, %390, %cst_277 {dimension_numbers = #tpu.dot_dimension_numbers<[1], [0], [0], [1], [0, 0, 1, 1], [], []>} : vector<12x8xf32>, vector<8x2xf32>, vector<12x2xf32> -> vector<12x2xf32>
    %465 = arith.mulf %464, %6 : vector<12x2xf32>
    %cst_278 = arith.constant dense<0.000000e+00> : vector<12xf32>
    %466 = vector.multi_reduction <add>, %465, %cst_278 [1] : vector<12x2xf32> to vector<12xf32>
    %467 = vector.shape_cast %466 : vector<12xf32> to vector<12x1xf32>
    %468 = vector.extract_strided_slice %9 {offsets = [1, 0, 0, 0], sizes = [1, 1, 12, 8], strides = [1, 1, 1, 1]} : vector<2x2x12x8xf32> to vector<1x1x12x8xf32>
    %469 = vector.shape_cast %468 : vector<1x1x12x8xf32> to vector<12x8xf32>
    %cst_279 = arith.constant dense<0.000000e+00> : vector<12x8xf32>
    %470 = tpu.matmul %469, %407, %cst_279 {dimension_numbers = #tpu.dot_dimension_numbers<[1], [0], [0], [1], [0, 0, 1, 1], [], []>} : vector<12x8xf32>, vector<8x8xf32>, vector<12x8xf32> -> vector<12x8xf32>
    %cst_280 = arith.constant 0.000000e+00 : f32
    %471 = vector.broadcast %cst_280 : f32 to vector<12x8xf32>
    %472 = arith.addf %471, %470 : vector<12x8xf32>
    %473 = vector.extract_strided_slice %9 {offsets = [1, 1, 0, 0], sizes = [1, 1, 12, 8], strides = [1, 1, 1, 1]} : vector<2x2x12x8xf32> to vector<1x1x12x8xf32>
    %474 = vector.shape_cast %473 : vector<1x1x12x8xf32> to vector<12x8xf32>
    %cst_281 = arith.constant dense<0.000000e+00> : vector<12x8xf32>
    %475 = tpu.matmul %474, %410, %cst_281 {dimension_numbers = #tpu.dot_dimension_numbers<[1], [0], [0], [1], [0, 0, 1, 1], [], []>} : vector<12x8xf32>, vector<8x8xf32>, vector<12x8xf32> -> vector<12x8xf32>
    %476 = arith.addf %472, %475 : vector<12x8xf32>
    %477 = vector.extract_strided_slice %10 {offsets = [1, 0, 0, 0], sizes = [1, 1, 12, 12], strides = [1, 1, 1, 1]} : vector<2x2x12x12xf32> to vector<1x1x12x12xf32>
    %478 = vector.shape_cast %477 : vector<1x1x12x12xf32> to vector<12x12xf32>
    %cst_282 = arith.constant dense<0.000000e+00> : vector<12x8xf32>
    %479 = tpu.matmul %478, %413, %cst_282 {dimension_numbers = #tpu.dot_dimension_numbers<[1], [0], [0], [1], [0, 0, 1, 1], [], []>} : vector<12x12xf32>, vector<12x8xf32>, vector<12x8xf32> -> vector<12x8xf32>
    %cst_283 = arith.constant 0.000000e+00 : f32
    %480 = vector.broadcast %cst_283 : f32 to vector<12x8xf32>
    %481 = arith.addf %480, %479 : vector<12x8xf32>
    %482 = vector.extract_strided_slice %10 {offsets = [1, 1, 0, 0], sizes = [1, 1, 12, 12], strides = [1, 1, 1, 1]} : vector<2x2x12x12xf32> to vector<1x1x12x12xf32>
    %483 = vector.shape_cast %482 : vector<1x1x12x12xf32> to vector<12x12xf32>
    %cst_284 = arith.constant dense<0.000000e+00> : vector<12x8xf32>
    %484 = tpu.matmul %483, %416, %cst_284 {dimension_numbers = #tpu.dot_dimension_numbers<[1], [0], [0], [1], [0, 0, 1, 1], [], []>} : vector<12x12xf32>, vector<12x8xf32>, vector<12x8xf32> -> vector<12x8xf32>
    %485 = arith.addf %481, %484 : vector<12x8xf32>
    %486 = vector.broadcast %461 : vector<12x1xf32> to vector<12x8xf32>
    %487 = arith.mulf %486, %476 : vector<12x8xf32>
    %cst_285 = arith.constant dense<0.000000e+00> : vector<8x8xf32>
    %488 = tpu.matmul %2, %487, %cst_285 {dimension_numbers = #tpu.dot_dimension_numbers<[1], [0], [0], [1], [0, 0, 1, 1], [], []>} : vector<8x12xf32>, vector<12x8xf32>, vector<8x8xf32> -> vector<8x8xf32>
    %489 = arith.addf %452, %488 : vector<8x8xf32>
    %490 = vector.broadcast %467 : vector<12x1xf32> to vector<12x8xf32>
    %491 = arith.mulf %490, %485 : vector<12x8xf32>
    %492 = arith.addf %455, %491 : vector<12x8xf32>
    %493 = arith.addf %489, %282 : vector<8x8xf32>
    %cst_286 = arith.constant dense<0.000000e+00> : vector<8xf32>
    %494 = vector.multi_reduction <add>, %493, %cst_286 [1] : vector<8x8xf32> to vector<8xf32>
    %495 = vector.shape_cast %494 : vector<8xf32> to vector<8x1xf32>
    %cst_287 = arith.constant 8.000000e+00 : f32
    %496 = vector.broadcast %cst_287 : f32 to vector<8x1xf32>
    %497 = arith.divf %495, %496 : vector<8x1xf32>
    %498 = vector.broadcast %497 : vector<8x1xf32> to vector<8x8xf32>
    %499 = arith.subf %493, %498 : vector<8x8xf32>
    %500 = vector.broadcast %497 : vector<8x1xf32> to vector<8x8xf32>
    %501 = arith.subf %493, %500 : vector<8x8xf32>
    %502 = arith.mulf %499, %501 : vector<8x8xf32>
    %cst_288 = arith.constant dense<0.000000e+00> : vector<8xf32>
    %503 = vector.multi_reduction <add>, %502, %cst_288 [1] : vector<8x8xf32> to vector<8xf32>
    %504 = vector.shape_cast %503 : vector<8xf32> to vector<8x1xf32>
    %cst_289 = arith.constant 8.000000e+00 : f32
    %505 = vector.broadcast %cst_289 : f32 to vector<8x1xf32>
    %506 = arith.divf %504, %505 : vector<8x1xf32>
    %507 = vector.broadcast %497 : vector<8x1xf32> to vector<8x8xf32>
    %508 = arith.subf %493, %507 : vector<8x8xf32>
    %cst_290 = arith.constant 9.99999974E-6 : f32
    %509 = vector.broadcast %cst_290 : f32 to vector<8x1xf32>
    %510 = arith.addf %506, %509 : vector<8x1xf32>
    %511 = math.rsqrt %510 : vector<8x1xf32>
    %512 = vector.broadcast %511 : vector<8x1xf32> to vector<8x8xf32>
    %513 = arith.mulf %508, %512 : vector<8x8xf32>
    %514 = vector.broadcast %323 : vector<1x8xf32> to vector<8x8xf32>
    %515 = arith.mulf %513, %514 : vector<8x8xf32>
    %516 = vector.broadcast %324 : vector<1x8xf32> to vector<8x8xf32>
    %517 = arith.addf %515, %516 : vector<8x8xf32>
    %518 = arith.addf %492, %306 : vector<12x8xf32>
    %cst_291 = arith.constant dense<0.000000e+00> : vector<12xf32>
    %519 = vector.multi_reduction <add>, %518, %cst_291 [1] : vector<12x8xf32> to vector<12xf32>
    %520 = vector.shape_cast %519 : vector<12xf32> to vector<12x1xf32>
    %cst_292 = arith.constant 8.000000e+00 : f32
    %521 = vector.broadcast %cst_292 : f32 to vector<12x1xf32>
    %522 = arith.divf %520, %521 : vector<12x1xf32>
    %523 = vector.broadcast %522 : vector<12x1xf32> to vector<12x8xf32>
    %524 = arith.subf %518, %523 : vector<12x8xf32>
    %525 = vector.broadcast %522 : vector<12x1xf32> to vector<12x8xf32>
    %526 = arith.subf %518, %525 : vector<12x8xf32>
    %527 = arith.mulf %524, %526 : vector<12x8xf32>
    %cst_293 = arith.constant dense<0.000000e+00> : vector<12xf32>
    %528 = vector.multi_reduction <add>, %527, %cst_293 [1] : vector<12x8xf32> to vector<12xf32>
    %529 = vector.shape_cast %528 : vector<12xf32> to vector<12x1xf32>
    %cst_294 = arith.constant 8.000000e+00 : f32
    %530 = vector.broadcast %cst_294 : f32 to vector<12x1xf32>
    %531 = arith.divf %529, %530 : vector<12x1xf32>
    %532 = vector.broadcast %522 : vector<12x1xf32> to vector<12x8xf32>
    %533 = arith.subf %518, %532 : vector<12x8xf32>
    %cst_295 = arith.constant 9.99999974E-6 : f32
    %534 = vector.broadcast %cst_295 : f32 to vector<12x1xf32>
    %535 = arith.addf %531, %534 : vector<12x1xf32>
    %536 = math.rsqrt %535 : vector<12x1xf32>
    %537 = vector.broadcast %536 : vector<12x1xf32> to vector<12x8xf32>
    %538 = arith.mulf %533, %537 : vector<12x8xf32>
    %539 = vector.broadcast %325 : vector<1x8xf32> to vector<12x8xf32>
    %540 = arith.mulf %538, %539 : vector<12x8xf32>
    %541 = vector.broadcast %326 : vector<1x8xf32> to vector<12x8xf32>
    %542 = arith.addf %540, %541 : vector<12x8xf32>
    %cst_296 = arith.constant dense<0.000000e+00> : vector<8x6xf32>
    %543 = tpu.matmul %517, %327, %cst_296 {dimension_numbers = #tpu.dot_dimension_numbers<[1], [0], [0], [1], [0, 0, 1, 1], [], []>} : vector<8x8xf32>, vector<8x6xf32>, vector<8x6xf32> -> vector<8x6xf32>
    %544 = vector.broadcast %328 : vector<1x6xf32> to vector<8x6xf32>
    %545 = arith.addf %543, %544 : vector<8x6xf32>
    %cst_297 = arith.constant 0.000000e+00 : f32
    %546 = vector.broadcast %cst_297 : f32 to vector<8x6xf32>
    %547 = arith.maximumf %545, %546 : vector<8x6xf32>
    %cst_298 = arith.constant dense<0.000000e+00> : vector<12x4xf32>
    %548 = tpu.matmul %542, %329, %cst_298 {dimension_numbers = #tpu.dot_dimension_numbers<[1], [0], [0], [1], [0, 0, 1, 1], [], []>} : vector<12x8xf32>, vector<8x4xf32>, vector<12x4xf32> -> vector<12x4xf32>
    %549 = vector.broadcast %330 : vector<1x4xf32> to vector<12x4xf32>
    %550 = arith.addf %548, %549 : vector<12x4xf32>
    %cst_299 = arith.constant 0.000000e+00 : f32
    %551 = vector.broadcast %cst_299 : f32 to vector<12x4xf32>
    %552 = arith.maximumf %550, %551 : vector<12x4xf32>
    %cst_300 = arith.constant dense<0.000000e+00> : vector<8xf32>
    %553 = vector.multi_reduction <add>, %547, %cst_300 [1] : vector<8x6xf32> to vector<8xf32>
    %554 = vector.shape_cast %553 : vector<8xf32> to vector<8x1xf32>
    %cst_301 = arith.constant 6.000000e+00 : f32
    %555 = vector.broadcast %cst_301 : f32 to vector<8x1xf32>
    %556 = arith.divf %554, %555 : vector<8x1xf32>
    %557 = vector.broadcast %556 : vector<8x1xf32> to vector<8x6xf32>
    %558 = arith.subf %547, %557 : vector<8x6xf32>
    %559 = vector.broadcast %556 : vector<8x1xf32> to vector<8x6xf32>
    %560 = arith.subf %547, %559 : vector<8x6xf32>
    %561 = arith.mulf %558, %560 : vector<8x6xf32>
    %cst_302 = arith.constant dense<0.000000e+00> : vector<8xf32>
    %562 = vector.multi_reduction <add>, %561, %cst_302 [1] : vector<8x6xf32> to vector<8xf32>
    %563 = vector.shape_cast %562 : vector<8xf32> to vector<8x1xf32>
    %cst_303 = arith.constant 6.000000e+00 : f32
    %564 = vector.broadcast %cst_303 : f32 to vector<8x1xf32>
    %565 = arith.divf %563, %564 : vector<8x1xf32>
    %566 = vector.broadcast %556 : vector<8x1xf32> to vector<8x6xf32>
    %567 = arith.subf %547, %566 : vector<8x6xf32>
    %cst_304 = arith.constant 9.99999974E-6 : f32
    %568 = vector.broadcast %cst_304 : f32 to vector<8x1xf32>
    %569 = arith.addf %565, %568 : vector<8x1xf32>
    %570 = math.rsqrt %569 : vector<8x1xf32>
    %571 = vector.broadcast %570 : vector<8x1xf32> to vector<8x6xf32>
    %572 = arith.mulf %567, %571 : vector<8x6xf32>
    %573 = vector.broadcast %331 : vector<1x6xf32> to vector<8x6xf32>
    %574 = arith.mulf %572, %573 : vector<8x6xf32>
    %575 = vector.broadcast %332 : vector<1x6xf32> to vector<8x6xf32>
    %576 = arith.addf %574, %575 : vector<8x6xf32>
    %cst_305 = arith.constant dense<0.000000e+00> : vector<12xf32>
    %577 = vector.multi_reduction <add>, %552, %cst_305 [1] : vector<12x4xf32> to vector<12xf32>
    %578 = vector.shape_cast %577 : vector<12xf32> to vector<12x1xf32>
    %cst_306 = arith.constant 4.000000e+00 : f32
    %579 = vector.broadcast %cst_306 : f32 to vector<12x1xf32>
    %580 = arith.divf %578, %579 : vector<12x1xf32>
    %581 = vector.broadcast %580 : vector<12x1xf32> to vector<12x4xf32>
    %582 = arith.subf %552, %581 : vector<12x4xf32>
    %583 = vector.broadcast %580 : vector<12x1xf32> to vector<12x4xf32>
    %584 = arith.subf %552, %583 : vector<12x4xf32>
    %585 = arith.mulf %582, %584 : vector<12x4xf32>
    %cst_307 = arith.constant dense<0.000000e+00> : vector<12xf32>
    %586 = vector.multi_reduction <add>, %585, %cst_307 [1] : vector<12x4xf32> to vector<12xf32>
    %587 = vector.shape_cast %586 : vector<12xf32> to vector<12x1xf32>
    %cst_308 = arith.constant 4.000000e+00 : f32
    %588 = vector.broadcast %cst_308 : f32 to vector<12x1xf32>
    %589 = arith.divf %587, %588 : vector<12x1xf32>
    %590 = vector.broadcast %580 : vector<12x1xf32> to vector<12x4xf32>
    %591 = arith.subf %552, %590 : vector<12x4xf32>
    %cst_309 = arith.constant 9.99999974E-6 : f32
    %592 = vector.broadcast %cst_309 : f32 to vector<12x1xf32>
    %593 = arith.addf %589, %592 : vector<12x1xf32>
    %594 = math.rsqrt %593 : vector<12x1xf32>
    %595 = vector.broadcast %594 : vector<12x1xf32> to vector<12x4xf32>
    %596 = arith.mulf %591, %595 : vector<12x4xf32>
    %597 = vector.broadcast %333 : vector<1x4xf32> to vector<12x4xf32>
    %598 = arith.mulf %596, %597 : vector<12x4xf32>
    %599 = vector.broadcast %334 : vector<1x4xf32> to vector<12x4xf32>
    %600 = arith.addf %598, %599 : vector<12x4xf32>
    %cst_310 = arith.constant dense<0.000000e+00> : vector<6xf32>
    %601 = vector.multi_reduction <add>, %576, %cst_310 [0] : vector<8x6xf32> to vector<6xf32>
    %602 = vector.shape_cast %601 : vector<6xf32> to vector<1x6xf32>
    %cst_311 = arith.constant dense<0.000000e+00> : vector<4xf32>
    %603 = vector.multi_reduction <add>, %600, %cst_311 [0] : vector<12x4xf32> to vector<4xf32>
    %604 = vector.shape_cast %603 : vector<4xf32> to vector<1x4xf32>
    %cst_312 = arith.constant dense<0.000000e+00> : vector<1x4xf32>
    %605 = tpu.matmul %602, %11, %cst_312 {dimension_numbers = #tpu.dot_dimension_numbers<[1], [0], [0], [1], [0, 0, 1, 1], [], []>} : vector<1x6xf32>, vector<6x4xf32>, vector<1x4xf32> -> vector<1x4xf32>
    %606 = arith.mulf %605, %604 : vector<1x4xf32>
    %cst_313 = arith.constant dense<0.000000e+00> : vector<1xf32>
    %607 = vector.multi_reduction <add>, %606, %cst_313 [1] : vector<1x4xf32> to vector<1xf32>
    %608 = vector.shape_cast %607 : vector<1xf32> to vector<1x1xf32>
    %609 = arith.addf %608, %12 : vector<1x1xf32>
    %cst_314 = arith.constant 0.000000e+00 : f32
    %610 = vector.broadcast %cst_314 : f32 to vector<1x1xf32>
    %611 = arith.subf %610, %609 : vector<1x1xf32>
    %612 = math.exp %611 : vector<1x1xf32>
    %cst_315 = arith.constant 1.000000e+00 : f32
    %613 = vector.broadcast %cst_315 : f32 to vector<1x1xf32>
    %614 = arith.addf %613, %612 : vector<1x1xf32>
    %cst_316 = arith.constant 1.000000e+00 : f32
    %615 = vector.broadcast %cst_316 : f32 to vector<1x1xf32>
    %616 = arith.divf %615, %614 : vector<1x1xf32>
    %c0_317 = arith.constant 0 : index
    %c0_318 = arith.constant 0 : index
    %617 = vector.load %arg73[%c0_317, %c0_318] : memref<1x1xf32, #tpu.memory_space<vmem>>, vector<1x1xf32>
    tpu.vector_store %arg73[%c0_317, %c0_318], %616 {strides = array<i32>} : memref<1x1xf32, #tpu.memory_space<vmem>>, vector<1x1xf32>,
    %c0_319 = arith.constant 0 : index
    %c0_320 = arith.constant 0 : index
    %618 = vector.load %arg74[%c0_319, %c0_320] : memref<8x6xf32, #tpu.memory_space<vmem>>, vector<8x6xf32>
    tpu.vector_store %arg74[%c0_319, %c0_320], %576 {strides = array<i32>} : memref<8x6xf32, #tpu.memory_space<vmem>>, vector<8x6xf32>,
    %c0_321 = arith.constant 0 : index
    %c0_322 = arith.constant 0 : index
    %619 = vector.load %arg75[%c0_321, %c0_322] : memref<12x4xf32, #tpu.memory_space<vmem>>, vector<12x4xf32>
    tpu.vector_store %arg75[%c0_321, %c0_322], %600 {strides = array<i32>} : memref<12x4xf32, #tpu.memory_space<vmem>>, vector<12x4xf32>,
    return
  }
}

</mosaic_0001>

<llo_original>
// kernel: tpu_custom_call.1
$region0: #{tpu_custom_call.1}
  #allocation0 [shape = 'u32[]', space=smem, size = 0x4, offset = 0x4, fixed_abs, tag = 'smem constant byte address 0x4 - core index']
  #allocation1 [shape = 'u32[144,128]{1,0:T(1,128)}', space=vmem, size = 0x12000, scoped, tag = 'internal scratch']
  #allocation2 [shape = 'f32[1,1]{1,0:T(1,128)S(1)}', space=vmem, size = 0x200, scoped, tag = 'scoped memory for tpu_custom_call.1']
  %s0 = inlined_call_operand.smem [shape: u32[76], index: -1, kind: input, shape index: {}]
  %s1 = sld [smem:[%s0]]
  %s2 = scalar_lea.smem %s0, 1
  %s3 = sld [smem:[%s2]]
  %s4 = scalar_lea.smem %s0, 2
  %s5 = sld [smem:[%s4]]
  %s6 = scalar_lea.smem %s0, 3
  %s7 = sld [smem:[%s6]]
  %s8 = scalar_lea.smem %s0, 4
  %s9 = sld [smem:[%s8]]
  %s10 = scalar_lea.smem %s0, 5
  %s11 = sld [smem:[%s10]]
  %s12 = scalar_lea.smem %s0, 6
  %s13 = sld [smem:[%s12]]
  %s14 = scalar_lea.smem %s0, 7
  %s15 = sld [smem:[%s14]]
  %s16 = scalar_lea.smem %s0, 8
  %s17 = sld [smem:[%s16]]
  %s18 = scalar_lea.smem %s0, 9
  %s19 = sld [smem:[%s18]]
  %s20 = scalar_lea.smem %s0, 10
  %s21 = sld [smem:[%s20]]
  %s22 = scalar_lea.smem %s0, 11
  %s23 = sld [smem:[%s22]]
  %s24 = scalar_lea.smem %s0, 12
  %s25 = sld [smem:[%s24]]
  %s26 = scalar_lea.smem %s0, 13
  %s27 = sld [smem:[%s26]]
  %s28 = scalar_lea.smem %s0, 14
  %s29 = sld [smem:[%s28]]
  %s30 = scalar_lea.smem %s0, 15
  %s31 = sld [smem:[%s30]]
  %s32 = scalar_lea.smem %s0, 16
  %s33 = sld [smem:[%s32]]
  %s34 = scalar_lea.smem %s0, 17
  %s35 = sld [smem:[%s34]]
  %s36 = scalar_lea.smem %s0, 18
  %s37 = sld [smem:[%s36]]
  %s38 = scalar_lea.smem %s0, 19
  %s39 = sld [smem:[%s38]]
  %s40 = scalar_lea.smem %s0, 20
  %s41 = sld [smem:[%s40]]
  %s42 = scalar_lea.smem %s0, 21
  %s43 = sld [smem:[%s42]]
  %s44 = scalar_lea.smem %s0, 22
  %s45 = sld [smem:[%s44]]
  %s46 = scalar_lea.smem %s0, 23
  %s47 = sld [smem:[%s46]]
  %s48 = scalar_lea.smem %s0, 24
  %s49 = sld [smem:[%s48]]
  %s50 = scalar_lea.smem %s0, 25
  %s51 = sld [smem:[%s50]]
  %s52 = scalar_lea.smem %s0, 26
  %s53 = sld [smem:[%s52]]
  %s54 = scalar_lea.smem %s0, 27
  %s55 = sld [smem:[%s54]]
  %s56 = scalar_lea.smem %s0, 28
  %s57 = sld [smem:[%s56]]
  %s58 = scalar_lea.smem %s0, 29
  %s59 = sld [smem:[%s58]]
  %s60 = scalar_lea.smem %s0, 30
  %s61 = sld [smem:[%s60]]
  %s62 = scalar_lea.smem %s0, 31
  %s63 = sld [smem:[%s62]]
  %s64 = scalar_lea.smem %s0, 32
  %s65 = sld [smem:[%s64]]
  %s66 = scalar_lea.smem %s0, 33
  %s67 = sld [smem:[%s66]]
  %s68 = scalar_lea.smem %s0, 34
  %s69 = sld [smem:[%s68]]
  %s70 = scalar_lea.smem %s0, 35
  %s71 = sld [smem:[%s70]]
  %s72 = scalar_lea.smem %s0, 36
  %s73 = sld [smem:[%s72]]
  %s74 = scalar_lea.smem %s0, 37
  %s75 = sld [smem:[%s74]]
  %s76 = scalar_lea.smem %s0, 38
  %s77 = sld [smem:[%s76]]
  %s78 = scalar_lea.smem %s0, 39
  %s79 = sld [smem:[%s78]]
  %s80 = scalar_lea.smem %s0, 40
  %s81 = sld [smem:[%s80]]
  %s82 = scalar_lea.smem %s0, 41
  %s83 = sld [smem:[%s82]]
  %s84 = scalar_lea.smem %s0, 42
  %s85 = sld [smem:[%s84]]
  %s86 = scalar_lea.smem %s0, 43
  %s87 = sld [smem:[%s86]]
  %s88 = scalar_lea.smem %s0, 44
  %s89 = sld [smem:[%s88]]
  %s90 = scalar_lea.smem %s0, 45
  %s91 = sld [smem:[%s90]]
  %s92 = scalar_lea.smem %s0, 46
  %s93 = sld [smem:[%s92]]
  %s94 = scalar_lea.smem %s0, 47
  %s95 = sld [smem:[%s94]]
  %s96 = scalar_lea.smem %s0, 48
  %s97 = sld [smem:[%s96]]
  %s98 = scalar_lea.smem %s0, 49
  %s99 = sld [smem:[%s98]]
  %s100 = scalar_lea.smem %s0, 50
  %s101 = sld [smem:[%s100]]
  %s102 = scalar_lea.smem %s0, 51
  %s103 = sld [smem:[%s102]]
  %s104 = scalar_lea.smem %s0, 52
  %s105 = sld [smem:[%s104]]
  %s106 = scalar_lea.smem %s0, 53
  %s107 = sld [smem:[%s106]]
  %s108 = scalar_lea.smem %s0, 54
  %s109 = sld [smem:[%s108]]
  %s110 = scalar_lea.smem %s0, 55
  %s111 = sld [smem:[%s110]]
  %s112 = scalar_lea.smem %s0, 56
  %s113 = sld [smem:[%s112]]
  %s114 = scalar_lea.smem %s0, 57
  %s115 = sld [smem:[%s114]]
  %s116 = scalar_lea.smem %s0, 58
  %s117 = sld [smem:[%s116]]
  %s118 = scalar_lea.smem %s0, 59
  %s119 = sld [smem:[%s118]]
  %s120 = scalar_lea.smem %s0, 60
  %s121 = sld [smem:[%s120]]
  %s122 = scalar_lea.smem %s0, 61
  %s123 = sld [smem:[%s122]]
  %s124 = scalar_lea.smem %s0, 62
  %s125 = sld [smem:[%s124]]
  %s126 = scalar_lea.smem %s0, 63
  %s127 = sld [smem:[%s126]]
  %s128 = scalar_lea.smem %s0, 64
  %s129 = sld [smem:[%s128]]
  %s130 = scalar_lea.smem %s0, 65
  %s131 = sld [smem:[%s130]]
  %s132 = scalar_lea.smem %s0, 66
  %s133 = sld [smem:[%s132]]
  %s134 = scalar_lea.smem %s0, 67
  %s135 = sld [smem:[%s134]]
  %s136 = scalar_lea.smem %s0, 68
  %s137 = sld [smem:[%s136]]
  %s138 = scalar_lea.smem %s0, 69
  %s139 = sld [smem:[%s138]]
  %s140 = scalar_lea.smem %s0, 70
  %s141 = sld [smem:[%s140]]
  %s142 = scalar_lea.smem %s0, 71
  %s143 = sld [smem:[%s142]]
  %s144 = scalar_lea.smem %s0, 72
  %s145 = sld [smem:[%s144]]
  %s146 = scalar_lea.smem %s0, 73
  %s147 = sld [smem:[%s146]]
  %s148 = scalar_lea.smem %s0, 74
  %s149 = sld [smem:[%s148]]
  %s150 = scalar_lea.smem %s0, 75
  %s151 = sld [smem:[%s150]]
  %152 = xla_tuple %s147, %s149, %s151
  %s153 = sld [smem:[#allocation0]]
  $region374: #{tpu_custom_call.1} parent=0
    _
  %s155 = ssub.s32 1, %s153
  %s156 = scalar_select 0, %s155, %s153
  %v157 = vstv %s145
  %158 = vst [vmem:[#allocation2] sm:$0x1] %v157
  $region1: #{tpu_custom_call.1} parent=0
    #allocation3 [shape = 'u8[512]{0}', space=vmem, size = 0x400, scoped, tag = 'input window, operand 50, single buffered']
    #allocation4 [shape = 's32[1]{0}', space=sflag, size = 0x4, scoped, tag = 'scoped memory for tpu_custom_call.1']
    #allocation5 [shape = 's32[1]{0}', space=sflag, size = 0x4, scoped, tag = 'scoped memory for tpu_custom_call.1']
    #allocation6 [shape = 'u8[512]{0}', space=vmem, size = 0x400, scoped, tag = 'input window, operand 52, single buffered']
    #allocation7 [shape = 's32[1]{0}', space=sflag, size = 0x4, scoped, tag = 'scoped memory for tpu_custom_call.1']
    #allocation8 [shape = 'u8[512]{0}', space=vmem, size = 0x400, scoped, tag = 'input window, operand 54, single buffered']
    #allocation9 [shape = 'u8[512]{0}', space=vmem, size = 0x400, scoped, tag = 'input window, operand 56, single buffered']
    #allocation10 [shape = 's32[1]{0}', space=sflag, size = 0x4, scoped, tag = 'scoped memory for tpu_custom_call.1']
    #allocation11 [shape = 'u8[512]{0}', space=vmem, size = 0x400, scoped, tag = 'input window, operand 57, single buffered']
    #allocation12 [shape = 'u8[512]{0}', space=vmem, size = 0x400, scoped, tag = 'input window, operand 58, single buffered']
    #allocation13 [shape = 's32[1]{0}', space=sflag, size = 0x4, scoped, tag = 'scoped memory for tpu_custom_call.1']
    #allocation14 [shape = 'u8[512]{0}', space=vmem, size = 0x400, scoped, tag = 'input window, operand 59, single buffered']
    #allocation15 [shape = 'u8[512]{0}', space=vmem, size = 0x400, scoped, tag = 'input window, operand 60, single buffered']
    #allocation16 [shape = 's32[1]{0}', space=sflag, size = 0x4, scoped, tag = 'scoped memory for tpu_custom_call.1']
    #allocation17 [shape = 'u8[512]{0}', space=vmem, size = 0x400, scoped, tag = 'input window, operand 62, single buffered']
    #allocation18 [shape = 'u8[512]{0}', space=vmem, size = 0x400, scoped, tag = 'input window, operand 64, single buffered']
    #allocation19 [shape = 's32[1]{0}', space=sflag, size = 0x4, scoped, tag = 'scoped memory for tpu_custom_call.1']
    #allocation20 [shape = 'u8[512]{0}', space=vmem, size = 0x400, scoped, tag = 'input window, operand 65, single buffered']
    #allocation21 [shape = 'u8[512]{0}', space=vmem, size = 0x400, scoped, tag = 'input window, operand 66, single buffered']
    #allocation22 [shape = 's32[1]{0}', space=sflag, size = 0x4, scoped, tag = 'scoped memory for tpu_custom_call.1']
    #allocation23 [shape = 'u8[512]{0}', space=vmem, size = 0x400, scoped, tag = 'input window, operand 67, single buffered']
    #allocation24 [shape = 'u8[512]{0}', space=vmem, size = 0x400, scoped, tag = 'input window, operand 68, single buffered']
    #allocation25 [shape = 's32[1]{0}', space=sflag, size = 0x4, scoped, tag = 'scoped memory for tpu_custom_call.1']
    #allocation26 [shape = 'u8[512]{0}', space=vmem, size = 0x400, scoped, tag = 'output window, operand 0, single buffered']
    #allocation27 [shape = 'u8[4096]{0}', space=vmem, size = 0x1000, scoped, tag = 'output window, operand 1, single buffered']
    #allocation28 [shape = 's32[1]{0}', space=sflag, size = 0x4, scoped, tag = 'scoped memory for tpu_custom_call.1']
    %159 = vsyncpa [#allocation4], 0
    %160 = vsyncpa [#allocation7], 0
    %161 = vsyncpa [#allocation10], 0
    %162 = vsyncpa [#allocation13], 0
    %163 = vsyncpa [#allocation16], 0
    %164 = vsyncpa [#allocation19], 0
    %165 = vsyncpa [#allocation22], 0
    %166 = vsyncpa [#allocation25], 0
    %167 = vsyncpa [#allocation5], 0
    %168 = vsyncpa [#allocation28], 0
    // Predicated region
    $region2: #{tpu_custom_call.1} parent=1 // pred_check
      _
    $region3: #{tpu_custom_call.1} parent=1 // pred_check_branch
      %170 = sbr.rel (0) target = $region5
    $region4: #{tpu_custom_call.1} parent=1 // pred_region
      _
    $region5: #{tpu_custom_call.1} parent=1 // pred_fallthru
      _
    // Predicated region
    $region6: #{tpu_custom_call.1} parent=1 // pred_check
      _
    $region7: #{tpu_custom_call.1} parent=1 // pred_check_branch
      %172 = sbr.rel (0) target = $region9
    $region8: #{tpu_custom_call.1} parent=1 // pred_region
      _
    $region9: #{tpu_custom_call.1} parent=1 // pred_fallthru
      _
    // Predicated region
    $region10: #{tpu_custom_call.1} parent=1 // pred_check
      _
    $region11: #{tpu_custom_call.1} parent=1 // pred_check_branch
      %174 = sbr.rel (0) target = $region13
    $region12: #{tpu_custom_call.1} parent=1 // pred_region
      _
    $region13: #{tpu_custom_call.1} parent=1 // pred_fallthru
      _
    // Predicated region
    $region14: #{tpu_custom_call.1} parent=1 // pred_check
      _
    $region15: #{tpu_custom_call.1} parent=1 // pred_check_branch
      %176 = sbr.rel (0) target = $region17
    $region16: #{tpu_custom_call.1} parent=1 // pred_region
      _
    $region17: #{tpu_custom_call.1} parent=1 // pred_fallthru
      _
    // Predicated region
    $region18: #{tpu_custom_call.1} parent=1 // pred_check
      _
    $region19: #{tpu_custom_call.1} parent=1 // pred_check_branch
      %178 = sbr.rel (0) target = $region21
    $region20: #{tpu_custom_call.1} parent=1 // pred_region
      _
    $region21: #{tpu_custom_call.1} parent=1 // pred_fallthru
      _
    // Predicated region
    $region22: #{tpu_custom_call.1} parent=1 // pred_check
      _
    $region23: #{tpu_custom_call.1} parent=1 // pred_check_branch
      %180 = sbr.rel (0) target = $region25
    $region24: #{tpu_custom_call.1} parent=1 // pred_region
      _
    $region25: #{tpu_custom_call.1} parent=1 // pred_fallthru
      _
    // Predicated region
    $region26: #{tpu_custom_call.1} parent=1 // pred_check
      _
    $region27: #{tpu_custom_call.1} parent=1 // pred_check_branch
      %182 = sbr.rel (0) target = $region29
    $region28: #{tpu_custom_call.1} parent=1 // pred_region
      _
    $region29: #{tpu_custom_call.1} parent=1 // pred_fallthru
      _
    // Predicated region
    $region30: #{tpu_custom_call.1} parent=1 // pred_check
      _
    $region31: #{tpu_custom_call.1} parent=1 // pred_check_branch
      %184 = sbr.rel (0) target = $region33
    $region32: #{tpu_custom_call.1} parent=1 // pred_region
      _
    $region33: #{tpu_custom_call.1} parent=1 // pred_fallthru
      _
    // Predicated region
    $region34: #{tpu_custom_call.1} parent=1 // pred_check
      _
    $region35: #{tpu_custom_call.1} parent=1 // pred_check_branch
      %186 = sbr.rel (0) target = $region37
    $region36: #{tpu_custom_call.1} parent=1 // pred_region
      _
    $region37: #{tpu_custom_call.1} parent=1 // pred_fallthru
      _
    // Predicated region
    $region38: #{tpu_custom_call.1} parent=1 // pred_check
      _
    $region39: #{tpu_custom_call.1} parent=1 // pred_check_branch
      %188 = sbr.rel (0) target = $region41
    $region40: #{tpu_custom_call.1} parent=1 // pred_region
      _
    $region41: #{tpu_custom_call.1} parent=1 // pred_fallthru
      _
    // Predicated region
    $region42: #{tpu_custom_call.1} parent=1 // pred_check
      _
    $region43: #{tpu_custom_call.1} parent=1 // pred_check_branch
      %190 = sbr.rel (0) target = $region45
    $region44: #{tpu_custom_call.1} parent=1 // pred_region
      _
    $region45: #{tpu_custom_call.1} parent=1 // pred_fallthru
      _
    // Predicated region
    $region46: #{tpu_custom_call.1} parent=1 // pred_check
      _
    $region47: #{tpu_custom_call.1} parent=1 // pred_check_branch
      %192 = sbr.rel (0) target = $region49
    $region48: #{tpu_custom_call.1} parent=1 // pred_region
      _
    $region49: #{tpu_custom_call.1} parent=1 // pred_fallthru
      _
    // Predicated region
    $region50: #{tpu_custom_call.1} parent=1 // pred_check
      _
    $region51: #{tpu_custom_call.1} parent=1 // pred_check_branch
      %194 = sbr.rel (0) target = $region53
    $region52: #{tpu_custom_call.1} parent=1 // pred_region
      _
    $region53: #{tpu_custom_call.1} parent=1 // pred_fallthru
      _
    // Predicated region
    $region54: #{tpu_custom_call.1} parent=1 // pred_check
      _
    $region55: #{tpu_custom_call.1} parent=1 // pred_check_branch
      %196 = sbr.rel (0) target = $region57
    $region56: #{tpu_custom_call.1} parent=1 // pred_region
      _
    $region57: #{tpu_custom_call.1} parent=1 // pred_fallthru
      _
    // Predicated region
    $region58: #{tpu_custom_call.1} parent=1 // pred_check
      _
    $region59: #{tpu_custom_call.1} parent=1 // pred_check_branch
      %198 = sbr.rel (0) target = $region61
    $region60: #{tpu_custom_call.1} parent=1 // pred_region
      _
    $region61: #{tpu_custom_call.1} parent=1 // pred_fallthru
      _
    // Predicated region
    $region62: #{tpu_custom_call.1} parent=1 // pred_check
      _
    $region63: #{tpu_custom_call.1} parent=1 // pred_check_branch
      %200 = sbr.rel (0) target = $region65
    $region64: #{tpu_custom_call.1} parent=1 // pred_region
      _
    $region65: #{tpu_custom_call.1} parent=1 // pred_fallthru
      _
    // Predicated region
    $region66: #{tpu_custom_call.1} parent=1 // pred_check
      _
    $region67: #{tpu_custom_call.1} parent=1 // pred_check_branch
      %202 = sbr.rel (0) target = $region69
    $region68: #{tpu_custom_call.1} parent=1 // pred_region
      _
    $region69: #{tpu_custom_call.1} parent=1 // pred_fallthru
      _
    // Predicated region
    $region70: #{tpu_custom_call.1} parent=1 // pred_check
      _
    $region71: #{tpu_custom_call.1} parent=1 // pred_check_branch
      %204 = sbr.rel (0) target = $region73
    $region72: #{tpu_custom_call.1} parent=1 // pred_region
      _
    $region73: #{tpu_custom_call.1} parent=1 // pred_fallthru
      _
    // Predicated region
    $region74: #{tpu_custom_call.1} parent=1 // pred_check
      _
    $region75: #{tpu_custom_call.1} parent=1 // pred_check_branch
      %206 = sbr.rel (0) target = $region77
    $region76: #{tpu_custom_call.1} parent=1 // pred_region
      _
    $region77: #{tpu_custom_call.1} parent=1 // pred_fallthru
      _
    // Predicated region
    $region78: #{tpu_custom_call.1} parent=1 // pred_check
      _
    $region79: #{tpu_custom_call.1} parent=1 // pred_check_branch
      %208 = sbr.rel (0) target = $region81
    $region80: #{tpu_custom_call.1} parent=1 // pred_region
      _
    $region81: #{tpu_custom_call.1} parent=1 // pred_fallthru
      _
    // Predicated region
    $region82: #{tpu_custom_call.1} parent=1 // pred_check
      _
    $region83: #{tpu_custom_call.1} parent=1 // pred_check_branch
      %210 = sbr.rel (0) target = $region85
    $region84: #{tpu_custom_call.1} parent=1 // pred_region
      _
    $region85: #{tpu_custom_call.1} parent=1 // pred_fallthru
      _
    // Predicated region
    $region86: #{tpu_custom_call.1} parent=1 // pred_check
      _
    $region87: #{tpu_custom_call.1} parent=1 // pred_check_branch
      %212 = sbr.rel (0) target = $region89
    $region88: #{tpu_custom_call.1} parent=1 // pred_region
      _
    $region89: #{tpu_custom_call.1} parent=1 // pred_fallthru
      _
    // Predicated region
    $region90: #{tpu_custom_call.1} parent=1 // pred_check
      _
    $region91: #{tpu_custom_call.1} parent=1 // pred_check_branch
      %214 = sbr.rel (0) target = $region93
    $region92: #{tpu_custom_call.1} parent=1 // pred_region
      _
    $region93: #{tpu_custom_call.1} parent=1 // pred_fallthru
      _
    // Predicated region
    $region94: #{tpu_custom_call.1} parent=1 // pred_check
      _
    $region95: #{tpu_custom_call.1} parent=1 // pred_check_branch
      %216 = sbr.rel (0) target = $region97
    $region96: #{tpu_custom_call.1} parent=1 // pred_region
      _
    $region97: #{tpu_custom_call.1} parent=1 // pred_fallthru
      _
    // Predicated region
    $region98: #{tpu_custom_call.1} parent=1 // pred_check
      _
    $region99: #{tpu_custom_call.1} parent=1 // pred_check_branch
      %218 = sbr.rel (0) target = $region101
    $region100: #{tpu_custom_call.1} parent=1 // pred_region
      _
    $region101: #{tpu_custom_call.1} parent=1 // pred_fallthru
      _
    // Predicated region
    $region102: #{tpu_custom_call.1} parent=1 // pred_check
      _
    $region103: #{tpu_custom_call.1} parent=1 // pred_check_branch
      %220 = sbr.rel (0) target = $region105
    $region104: #{tpu_custom_call.1} parent=1 // pred_region
      _
    $region105: #{tpu_custom_call.1} parent=1 // pred_fallthru
      _
    // Predicated region
    $region106: #{tpu_custom_call.1} parent=1 // pred_check
      _
    $region107: #{tpu_custom_call.1} parent=1 // pred_check_branch
      %222 = sbr.rel (0) target = $region109
    $region108: #{tpu_custom_call.1} parent=1 // pred_region
      _
    $region109: #{tpu_custom_call.1} parent=1 // pred_fallthru
      _
    // Predicated region
    $region110: #{tpu_custom_call.1} parent=1 // pred_check
      _
    $region111: #{tpu_custom_call.1} parent=1 // pred_check_branch
      %224 = sbr.rel (0) target = $region113
    $region112: #{tpu_custom_call.1} parent=1 // pred_region
      _
    $region113: #{tpu_custom_call.1} parent=1 // pred_fallthru
      _
    // Predicated region
    $region114: #{tpu_custom_call.1} parent=1 // pred_check
      _
    $region115: #{tpu_custom_call.1} parent=1 // pred_check_branch
      %226 = sbr.rel (0) target = $region117
    $region116: #{tpu_custom_call.1} parent=1 // pred_region
      _
    $region117: #{tpu_custom_call.1} parent=1 // pred_fallthru
      _
    // Predicated region
    $region118: #{tpu_custom_call.1} parent=1 // pred_check
      _
    $region119: #{tpu_custom_call.1} parent=1 // pred_check_branch
      %228 = sbr.rel (0) target = $region121
    $region120: #{tpu_custom_call.1} parent=1 // pred_region
      _
    $region121: #{tpu_custom_call.1} parent=1 // pred_fallthru
      _
    // Predicated region
    $region122: #{tpu_custom_call.1} parent=1 // pred_check
      _
    $region123: #{tpu_custom_call.1} parent=1 // pred_check_branch
      %230 = sbr.rel (0) target = $region125
    $region124: #{tpu_custom_call.1} parent=1 // pred_region
      _
    $region125: #{tpu_custom_call.1} parent=1 // pred_fallthru
      _
    // Predicated region
    $region126: #{tpu_custom_call.1} parent=1 // pred_check
      _
    $region127: #{tpu_custom_call.1} parent=1 // pred_check_branch
      %232 = sbr.rel (0) target = $region129
    $region128: #{tpu_custom_call.1} parent=1 // pred_region
      _
    $region129: #{tpu_custom_call.1} parent=1 // pred_fallthru
      _
    // Predicated region
    $region130: #{tpu_custom_call.1} parent=1 // pred_check
      _
    $region131: #{tpu_custom_call.1} parent=1 // pred_check_branch
      %234 = sbr.rel (0) target = $region133
    $region132: #{tpu_custom_call.1} parent=1 // pred_region
      _
    $region133: #{tpu_custom_call.1} parent=1 // pred_fallthru
      _
    // Predicated region
    $region134: #{tpu_custom_call.1} parent=1 // pred_check
      _
    $region135: #{tpu_custom_call.1} parent=1 // pred_check_branch
      %236 = sbr.rel (0) target = $region137
    $region136: #{tpu_custom_call.1} parent=1 // pred_region
      _
    $region137: #{tpu_custom_call.1} parent=1 // pred_fallthru
      _
    // Predicated region
    $region138: #{tpu_custom_call.1} parent=1 // pred_check
      _
    $region139: #{tpu_custom_call.1} parent=1 // pred_check_branch
      %238 = sbr.rel (0) target = $region141
    $region140: #{tpu_custom_call.1} parent=1 // pred_region
      _
    $region141: #{tpu_custom_call.1} parent=1 // pred_fallthru
      _
    // Predicated region
    $region142: #{tpu_custom_call.1} parent=1 // pred_check
      _
    $region143: #{tpu_custom_call.1} parent=1 // pred_check_branch
      %240 = sbr.rel (0) target = $region145
    $region144: #{tpu_custom_call.1} parent=1 // pred_region
      _
    $region145: #{tpu_custom_call.1} parent=1 // pred_fallthru
      _
    // Predicated region
    $region146: #{tpu_custom_call.1} parent=1 // pred_check
      _
    $region147: #{tpu_custom_call.1} parent=1 // pred_check_branch
      %242 = sbr.rel (0) target = $region149
    $region148: #{tpu_custom_call.1} parent=1 // pred_region
      _
    $region149: #{tpu_custom_call.1} parent=1 // pred_fallthru
      _
    // Predicated region
    $region150: #{tpu_custom_call.1} parent=1 // pred_check
      _
    $region151: #{tpu_custom_call.1} parent=1 // pred_check_branch
      %244 = sbr.rel (0) target = $region153
    $region152: #{tpu_custom_call.1} parent=1 // pred_region
      _
    $region153: #{tpu_custom_call.1} parent=1 // pred_fallthru
      _
    // Predicated region
    $region154: #{tpu_custom_call.1} parent=1 // pred_check
      _
    $region155: #{tpu_custom_call.1} parent=1 // pred_check_branch
      %246 = sbr.rel (0) target = $region157
    $region156: #{tpu_custom_call.1} parent=1 // pred_region
      _
    $region157: #{tpu_custom_call.1} parent=1 // pred_fallthru
      _
    // Predicated region
    $region158: #{tpu_custom_call.1} parent=1 // pred_check
      _
    $region159: #{tpu_custom_call.1} parent=1 // pred_check_branch
      %248 = sbr.rel (0) target = $region161
    $region160: #{tpu_custom_call.1} parent=1 // pred_region
      _
    $region161: #{tpu_custom_call.1} parent=1 // pred_fallthru
      _
    // Predicated region
    $region162: #{tpu_custom_call.1} parent=1 // pred_check
      _
    $region163: #{tpu_custom_call.1} parent=1 // pred_check_branch
      %250 = sbr.rel (0) target = $region165
    $region164: #{tpu_custom_call.1} parent=1 // pred_region
      _
    $region165: #{tpu_custom_call.1} parent=1 // pred_fallthru
      _
    // Predicated region
    $region166: #{tpu_custom_call.1} parent=1 // pred_check
      _
    $region167: #{tpu_custom_call.1} parent=1 // pred_check_branch
      %252 = sbr.rel (0) target = $region169
    $region168: #{tpu_custom_call.1} parent=1 // pred_region
      _
    $region169: #{tpu_custom_call.1} parent=1 // pred_fallthru
      _
    // Predicated region
    $region170: #{tpu_custom_call.1} parent=1 // pred_check
      _
    $region171: #{tpu_custom_call.1} parent=1 // pred_check_branch
      %254 = sbr.rel (0) target = $region173
    $region172: #{tpu_custom_call.1} parent=1 // pred_region
      _
    $region173: #{tpu_custom_call.1} parent=1 // pred_fallthru
      _
    // Predicated region
    $region174: #{tpu_custom_call.1} parent=1 // pred_check
      _
    $region175: #{tpu_custom_call.1} parent=1 // pred_check_branch
      %256 = sbr.rel (0) target = $region177
    $region176: #{tpu_custom_call.1} parent=1 // pred_region
      _
    $region177: #{tpu_custom_call.1} parent=1 // pred_fallthru
      _
    // Predicated region
    $region178: #{tpu_custom_call.1} parent=1 // pred_check
      _
    $region179: #{tpu_custom_call.1} parent=1 // pred_check_branch
      %258 = sbr.rel (0) target = $region181
    $region180: #{tpu_custom_call.1} parent=1 // pred_region
      _
    $region181: #{tpu_custom_call.1} parent=1 // pred_fallthru
      _
    // Predicated region
    $region182: #{tpu_custom_call.1} parent=1 // pred_check
      _
    $region183: #{tpu_custom_call.1} parent=1 // pred_check_branch
      %260 = sbr.rel (0) target = $region185
    $region184: #{tpu_custom_call.1} parent=1 // pred_region
      _
    $region185: #{tpu_custom_call.1} parent=1 // pred_fallthru
      _
    // Predicated region
    $region186: #{tpu_custom_call.1} parent=1 // pred_check
      _
    $region187: #{tpu_custom_call.1} parent=1 // pred_check_branch
      %262 = sbr.rel (0) target = $region189
    $region188: #{tpu_custom_call.1} parent=1 // pred_region
      _
    $region189: #{tpu_custom_call.1} parent=1 // pred_fallthru
      _
    // Predicated region
    $region190: #{tpu_custom_call.1} parent=1 // pred_check
      _
    $region191: #{tpu_custom_call.1} parent=1 // pred_check_branch
      %264 = sbr.rel (0) target = $region193
    $region192: #{tpu_custom_call.1} parent=1 // pred_region
      _
    $region193: #{tpu_custom_call.1} parent=1 // pred_fallthru
      _
    // Predicated region
    $region194: #{tpu_custom_call.1} parent=1 // pred_check
      _
    $region195: #{tpu_custom_call.1} parent=1 // pred_check_branch
      %266 = sbr.rel (0) target = $region197
    $region196: #{tpu_custom_call.1} parent=1 // pred_region
      _
    $region197: #{tpu_custom_call.1} parent=1 // pred_fallthru
      _
    // Predicated region
    $region198: #{tpu_custom_call.1} parent=1 // pred_check
      _
    $region199: #{tpu_custom_call.1} parent=1 // pred_check_branch
      %268 = sbr.rel (0) target = $region201
    $region200: #{tpu_custom_call.1} parent=1 // pred_region
      _
    $region201: #{tpu_custom_call.1} parent=1 // pred_fallthru
      _
    // Predicated region
    $region202: #{tpu_custom_call.1} parent=1 // pred_check
      _
    $region203: #{tpu_custom_call.1} parent=1 // pred_check_branch
      %270 = sbr.rel (0) target = $region205
    $region204: #{tpu_custom_call.1} parent=1 // pred_region
      %s272 = ssub.s32 16, 16
      %273 = vsyncadd [#allocation4], %s272
      %s275 = sshll.u32 [#allocation3], 4
      %s276 = int_to_ptr.vmem [resolvable:$true] %s275
      %278 = dma.hbm_to_vmem [thread:$0]  %s101, 16, %s276, [#allocation4]
    $region205: #{tpu_custom_call.1} parent=1 // pred_fallthru
      _
    // Predicated region
    $region206: #{tpu_custom_call.1} parent=1 // pred_check
      _
    $region207: #{tpu_custom_call.1} parent=1 // pred_check_branch
      %280 = sbr.rel (0) target = $region209
    $region208: #{tpu_custom_call.1} parent=1 // pred_region
      _
    $region209: #{tpu_custom_call.1} parent=1 // pred_fallthru
      _
    // Predicated region
    $region210: #{tpu_custom_call.1} parent=1 // pred_check
      _
    $region211: #{tpu_custom_call.1} parent=1 // pred_check_branch
      %282 = sbr.rel (0) target = $region213
    $region212: #{tpu_custom_call.1} parent=1 // pred_region
      %s284 = ssub.s32 16, 16
      %285 = vsyncadd [#allocation7], %s284
      %s287 = sshll.u32 [#allocation6], 4
      %s288 = int_to_ptr.vmem [resolvable:$true] %s287
      %290 = dma.hbm_to_vmem [thread:$0]  %s105, 16, %s288, [#allocation7]
    $region213: #{tpu_custom_call.1} parent=1 // pred_fallthru
      _
    // Predicated region
    $region214: #{tpu_custom_call.1} parent=1 // pred_check
      _
    $region215: #{tpu_custom_call.1} parent=1 // pred_check_branch
      %292 = sbr.rel (0) target = $region217
    $region216: #{tpu_custom_call.1} parent=1 // pred_region
      _
    $region217: #{tpu_custom_call.1} parent=1 // pred_fallthru
      _
    // Predicated region
    $region218: #{tpu_custom_call.1} parent=1 // pred_check
      _
    $region219: #{tpu_custom_call.1} parent=1 // pred_check_branch
      %294 = sbr.rel (0) target = $region221
    $region220: #{tpu_custom_call.1} parent=1 // pred_region
      %s296 = ssub.s32 16, 16
      %297 = vsyncadd [#allocation7], %s296
      %s299 = sshll.u32 [#allocation8], 4
      %s300 = int_to_ptr.vmem [resolvable:$true] %s299
      %302 = dma.hbm_to_vmem [thread:$0]  %s109, 16, %s300, [#allocation7]
    $region221: #{tpu_custom_call.1} parent=1 // pred_fallthru
      _
    // Predicated region
    $region222: #{tpu_custom_call.1} parent=1 // pred_check
      _
    $region223: #{tpu_custom_call.1} parent=1 // pred_check_branch
      %304 = sbr.rel (0) target = $region225
    $region224: #{tpu_custom_call.1} parent=1 // pred_region
      _
    $region225: #{tpu_custom_call.1} parent=1 // pred_fallthru
      _
    // Predicated region
    $region226: #{tpu_custom_call.1} parent=1 // pred_check
      _
    $region227: #{tpu_custom_call.1} parent=1 // pred_check_branch
      %306 = sbr.rel (0) target = $region229
    $region228: #{tpu_custom_call.1} parent=1 // pred_region
      %s308 = ssub.s32 16, 16
      %309 = vsyncadd [#allocation10], %s308
      %s311 = sshll.u32 [#allocation9], 4
      %s312 = int_to_ptr.vmem [resolvable:$true] %s311
      %314 = dma.hbm_to_vmem [thread:$0]  %s113, 16, %s312, [#allocation10]
    $region229: #{tpu_custom_call.1} parent=1 // pred_fallthru
      _
    // Predicated region
    $region230: #{tpu_custom_call.1} parent=1 // pred_check
      _
    $region231: #{tpu_custom_call.1} parent=1 // pred_check_branch
      %316 = sbr.rel (0) target = $region233
    $region232: #{tpu_custom_call.1} parent=1 // pred_region
      %s318 = ssub.s32 16, 16
      %319 = vsyncadd [#allocation10], %s318
      %s321 = sshll.u32 [#allocation11], 4
      %s322 = int_to_ptr.vmem [resolvable:$true] %s321
      %324 = dma.hbm_to_vmem [thread:$0]  %s115, 16, %s322, [#allocation10]
    $region233: #{tpu_custom_call.1} parent=1 // pred_fallthru
      _
    // Predicated region
    $region234: #{tpu_custom_call.1} parent=1 // pred_check
      _
    $region235: #{tpu_custom_call.1} parent=1 // pred_check_branch
      %326 = sbr.rel (0) target = $region237
    $region236: #{tpu_custom_call.1} parent=1 // pred_region
      %s328 = ssub.s32 16, 16
      %329 = vsyncadd [#allocation13], %s328
      %s331 = sshll.u32 [#allocation12], 4
      %s332 = int_to_ptr.vmem [resolvable:$true] %s331
      %334 = dma.hbm_to_vmem [thread:$0]  %s117, 16, %s332, [#allocation13]
    $region237: #{tpu_custom_call.1} parent=1 // pred_fallthru
      _
    // Predicated region
    $region238: #{tpu_custom_call.1} parent=1 // pred_check
      _
    $region239: #{tpu_custom_call.1} parent=1 // pred_check_branch
      %336 = sbr.rel (0) target = $region241
    $region240: #{tpu_custom_call.1} parent=1 // pred_region
      %s338 = ssub.s32 16, 16
      %339 = vsyncadd [#allocation13], %s338
      %s341 = sshll.u32 [#allocation14], 4
      %s342 = int_to_ptr.vmem [resolvable:$true] %s341
      %344 = dma.hbm_to_vmem [thread:$0]  %s119, 16, %s342, [#allocation13]
    $region241: #{tpu_custom_call.1} parent=1 // pred_fallthru
      _
    // Predicated region
    $region242: #{tpu_custom_call.1} parent=1 // pred_check
      _
    $region243: #{tpu_custom_call.1} parent=1 // pred_check_branch
      %346 = sbr.rel (0) target = $region245
    $region244: #{tpu_custom_call.1} parent=1 // pred_region
      %s348 = ssub.s32 16, 16
      %349 = vsyncadd [#allocation16], %s348
      %s351 = sshll.u32 [#allocation15], 4
      %s352 = int_to_ptr.vmem [resolvable:$true] %s351
      %354 = dma.hbm_to_vmem [thread:$0]  %s121, 16, %s352, [#allocation16]
    $region245: #{tpu_custom_call.1} parent=1 // pred_fallthru
      _
    // Predicated region
    $region246: #{tpu_custom_call.1} parent=1 // pred_check
      _
    $region247: #{tpu_custom_call.1} parent=1 // pred_check_branch
      %356 = sbr.rel (0) target = $region249
    $region248: #{tpu_custom_call.1} parent=1 // pred_region
      _
    $region249: #{tpu_custom_call.1} parent=1 // pred_fallthru
      _
    // Predicated region
    $region250: #{tpu_custom_call.1} parent=1 // pred_check
      _
    $region251: #{tpu_custom_call.1} parent=1 // pred_check_branch
      %358 = sbr.rel (0) target = $region253
    $region252: #{tpu_custom_call.1} parent=1 // pred_region
      %s360 = ssub.s32 16, 16
      %361 = vsyncadd [#allocation16], %s360
      %s363 = sshll.u32 [#allocation17], 4
      %s364 = int_to_ptr.vmem [resolvable:$true] %s363
      %366 = dma.hbm_to_vmem [thread:$0]  %s125, 16, %s364, [#allocation16]
    $region253: #{tpu_custom_call.1} parent=1 // pred_fallthru
      _
    // Predicated region
    $region254: #{tpu_custom_call.1} parent=1 // pred_check
      _
    $region255: #{tpu_custom_call.1} parent=1 // pred_check_branch
      %368 = sbr.rel (0) target = $region257
    $region256: #{tpu_custom_call.1} parent=1 // pred_region
      _
    $region257: #{tpu_custom_call.1} parent=1 // pred_fallthru
      _
    // Predicated region
    $region258: #{tpu_custom_call.1} parent=1 // pred_check
      _
    $region259: #{tpu_custom_call.1} parent=1 // pred_check_branch
      %370 = sbr.rel (0) target = $region261
    $region260: #{tpu_custom_call.1} parent=1 // pred_region
      %s372 = ssub.s32 16, 16
      %373 = vsyncadd [#allocation19], %s372
      %s375 = sshll.u32 [#allocation18], 4
      %s376 = int_to_ptr.vmem [resolvable:$true] %s375
      %378 = dma.hbm_to_vmem [thread:$0]  %s129, 16, %s376, [#allocation19]
    $region261: #{tpu_custom_call.1} parent=1 // pred_fallthru
      _
    // Predicated region
    $region262: #{tpu_custom_call.1} parent=1 // pred_check
      _
    $region263: #{tpu_custom_call.1} parent=1 // pred_check_branch
      %380 = sbr.rel (0) target = $region265
    $region264: #{tpu_custom_call.1} parent=1 // pred_region
      %s382 = ssub.s32 16, 16
      %383 = vsyncadd [#allocation19], %s382
      %s385 = sshll.u32 [#allocation20], 4
      %s386 = int_to_ptr.vmem [resolvable:$true] %s385
      %388 = dma.hbm_to_vmem [thread:$0]  %s131, 16, %s386, [#allocation19]
    $region265: #{tpu_custom_call.1} parent=1 // pred_fallthru
      _
    // Predicated region
    $region266: #{tpu_custom_call.1} parent=1 // pred_check
      _
    $region267: #{tpu_custom_call.1} parent=1 // pred_check_branch
      %390 = sbr.rel (0) target = $region269
    $region268: #{tpu_custom_call.1} parent=1 // pred_region
      %s392 = ssub.s32 16, 16
      %393 = vsyncadd [#allocation22], %s392
      %s395 = sshll.u32 [#allocation21], 4
      %s396 = int_to_ptr.vmem [resolvable:$true] %s395
      %398 = dma.hbm_to_vmem [thread:$0]  %s133, 16, %s396, [#allocation22]
    $region269: #{tpu_custom_call.1} parent=1 // pred_fallthru
      _
    // Predicated region
    $region270: #{tpu_custom_call.1} parent=1 // pred_check
      _
    $region271: #{tpu_custom_call.1} parent=1 // pred_check_branch
      %400 = sbr.rel (0) target = $region273
    $region272: #{tpu_custom_call.1} parent=1 // pred_region
      %s402 = ssub.s32 16, 16
      %403 = vsyncadd [#allocation22], %s402
      %s405 = sshll.u32 [#allocation23], 4
      %s406 = int_to_ptr.vmem [resolvable:$true] %s405
      %408 = dma.hbm_to_vmem [thread:$0]  %s135, 16, %s406, [#allocation22]
    $region273: #{tpu_custom_call.1} parent=1 // pred_fallthru
      _
    // Predicated region
    $region274: #{tpu_custom_call.1} parent=1 // pred_check
      _
    $region275: #{tpu_custom_call.1} parent=1 // pred_check_branch
      %410 = sbr.rel (0) target = $region277
    $region276: #{tpu_custom_call.1} parent=1 // pred_region
      %s412 = ssub.s32 16, 16
      %413 = vsyncadd [#allocation25], %s412
      %s415 = sshll.u32 [#allocation24], 4
      %s416 = int_to_ptr.vmem [resolvable:$true] %s415
      %418 = dma.hbm_to_vmem [thread:$0]  %s137, 16, %s416, [#allocation25]
    $region277: #{tpu_custom_call.1} parent=1 // pred_fallthru
      _
    // Predicated region
    $region278: #{tpu_custom_call.1} parent=1 // pred_check
      _
    $region279: #{tpu_custom_call.1} parent=1 // pred_check_branch
      %420 = sbr.rel (0) target = $region281
    $region280: #{tpu_custom_call.1} parent=1 // pred_region
      _
    $region281: #{tpu_custom_call.1} parent=1 // pred_fallthru
      _
    // Predicated region
    $region282: #{tpu_custom_call.1} parent=1 // pred_check
      _
    $region283: #{tpu_custom_call.1} parent=1 // pred_check_branch
      %422 = sbr.rel (0) target = $region285
    $region284: #{tpu_custom_call.1} parent=1 // pred_region
      _
    $region285: #{tpu_custom_call.1} parent=1 // pred_fallthru
      _
    // Predicated region
    $region286: #{tpu_custom_call.1} parent=1 // pred_check
      _
    $region287: #{tpu_custom_call.1} parent=1 // pred_check_branch
      %424 = sbr.rel (0) target = $region289
    $region288: #{tpu_custom_call.1} parent=1 // pred_region
      _
    $region289: #{tpu_custom_call.1} parent=1 // pred_fallthru
      _
    // Predicated region
    $region290: #{tpu_custom_call.1} parent=1 // pred_check
      _
    $region291: #{tpu_custom_call.1} parent=1 // pred_check_branch
      %426 = sbr.rel (0) target = $region293
    $region292: #{tpu_custom_call.1} parent=1 // pred_region
      _
    $region293: #{tpu_custom_call.1} parent=1 // pred_fallthru
      _
    // Predicated region
    $region294: #{tpu_custom_call.1} parent=1 // pred_check
      _
    $region295: #{tpu_custom_call.1} parent=1 // pred_check_branch
      %428 = sbr.rel (0) target = $region297
    $region296: #{tpu_custom_call.1} parent=1 // pred_region
      %429 = dma.done [#allocation4], 16
    $region297: #{tpu_custom_call.1} parent=1 // pred_fallthru
      _
    // Predicated region
    $region298: #{tpu_custom_call.1} parent=1 // pred_check
      _
    $region299: #{tpu_custom_call.1} parent=1 // pred_check_branch
      %431 = sbr.rel (0) target = $region301
    $region300: #{tpu_custom_call.1} parent=1 // pred_region
      %432 = dma.done [#allocation7], 16
    $region301: #{tpu_custom_call.1} parent=1 // pred_fallthru
      _
    // Predicated region
    $region302: #{tpu_custom_call.1} parent=1 // pred_check
      _
    $region303: #{tpu_custom_call.1} parent=1 // pred_check_branch
      %434 = sbr.rel (0) target = $region305
    $region304: #{tpu_custom_call.1} parent=1 // pred_region
      %435 = dma.done [#allocation7], 16
    $region305: #{tpu_custom_call.1} parent=1 // pred_fallthru
      _
    // Predicated region
    $region306: #{tpu_custom_call.1} parent=1 // pred_check
      _
    $region307: #{tpu_custom_call.1} parent=1 // pred_check_branch
      %437 = sbr.rel (0) target = $region309
    $region308: #{tpu_custom_call.1} parent=1 // pred_region
      %438 = dma.done [#allocation10], 16
    $region309: #{tpu_custom_call.1} parent=1 // pred_fallthru
      _
    // Predicated region
    $region310: #{tpu_custom_call.1} parent=1 // pred_check
      _
    $region311: #{tpu_custom_call.1} parent=1 // pred_check_branch
      %440 = sbr.rel (0) target = $region313
    $region312: #{tpu_custom_call.1} parent=1 // pred_region
      %441 = dma.done [#allocation10], 16
    $region313: #{tpu_custom_call.1} parent=1 // pred_fallthru
      _
    // Predicated region
    $region314: #{tpu_custom_call.1} parent=1 // pred_check
      _
    $region315: #{tpu_custom_call.1} parent=1 // pred_check_branch
      %443 = sbr.rel (0) target = $region317
    $region316: #{tpu_custom_call.1} parent=1 // pred_region
      %444 = dma.done [#allocation13], 16
    $region317: #{tpu_custom_call.1} parent=1 // pred_fallthru
      _
    // Predicated region
    $region318: #{tpu_custom_call.1} parent=1 // pred_check
      _
    $region319: #{tpu_custom_call.1} parent=1 // pred_check_branch
      %446 = sbr.rel (0) target = $region321
    $region320: #{tpu_custom_call.1} parent=1 // pred_region
      %447 = dma.done [#allocation13], 16
    $region321: #{tpu_custom_call.1} parent=1 // pred_fallthru
      _
    // Predicated region
    $region322: #{tpu_custom_call.1} parent=1 // pred_check
      _
    $region323: #{tpu_custom_call.1} parent=1 // pred_check_branch
      %449 = sbr.rel (0) target = $region325
    $region324: #{tpu_custom_call.1} parent=1 // pred_region
      %450 = dma.done [#allocation16], 16
    $region325: #{tpu_custom_call.1} parent=1 // pred_fallthru
      _
    // Predicated region
    $region326: #{tpu_custom_call.1} parent=1 // pred_check
      _
    $region327: #{tpu_custom_call.1} parent=1 // pred_check_branch
      %452 = sbr.rel (0) target = $region329
    $region328: #{tpu_custom_call.1} parent=1 // pred_region
      %453 = dma.done [#allocation16], 16
    $region329: #{tpu_custom_call.1} parent=1 // pred_fallthru
      _
    // Predicated region
    $region330: #{tpu_custom_call.1} parent=1 // pred_check
      _
    $region331: #{tpu_custom_call.1} parent=1 // pred_check_branch
      %455 = sbr.rel (0) target = $region333
    $region332: #{tpu_custom_call.1} parent=1 // pred_region
      %456 = dma.done [#allocation19], 16
    $region333: #{tpu_custom_call.1} parent=1 // pred_fallthru
      _
    // Predicated region
    $region334: #{tpu_custom_call.1} parent=1 // pred_check
      _
    $region335: #{tpu_custom_call.1} parent=1 // pred_check_branch
      %458 = sbr.rel (0) target = $region337
    $region336: #{tpu_custom_call.1} parent=1 // pred_region
      %459 = dma.done [#allocation19], 16
    $region337: #{tpu_custom_call.1} parent=1 // pred_fallthru
      _
    // Predicated region
    $region338: #{tpu_custom_call.1} parent=1 // pred_check
      _
    $region339: #{tpu_custom_call.1} parent=1 // pred_check_branch
      %461 = sbr.rel (0) target = $region341
    $region340: #{tpu_custom_call.1} parent=1 // pred_region
      %462 = dma.done [#allocation22], 16
    $region341: #{tpu_custom_call.1} parent=1 // pred_fallthru
      _
    // Predicated region
    $region342: #{tpu_custom_call.1} parent=1 // pred_check
      _
    $region343: #{tpu_custom_call.1} parent=1 // pred_check_branch
      %464 = sbr.rel (0) target = $region345
    $region344: #{tpu_custom_call.1} parent=1 // pred_region
      %465 = dma.done [#allocation22], 16
    $region345: #{tpu_custom_call.1} parent=1 // pred_fallthru
      _
    // Predicated region
    $region346: #{tpu_custom_call.1} parent=1 // pred_check
      _
    $region347: #{tpu_custom_call.1} parent=1 // pred_check_branch
      %467 = sbr.rel (0) target = $region349
    $region348: #{tpu_custom_call.1} parent=1 // pred_region
      %468 = dma.done [#allocation25], 16
    $region349: #{tpu_custom_call.1} parent=1 // pred_fallthru
      _
    %v469 = vld [vmem:[%s1] sm:$0xff]
    %v470 = vld [vmem:[%s3] sm:$0xff]
    %v471 = vld [vmem:[%s3 + $0x8] sm:$0xf]
    %v472 = vld [vmem:[%s5] sm:$0xff]
    %v473 = vld [vmem:[%s7] sm:$0xff]
    %v474 = vld [vmem:[%s9] sm:$0xff]
    %v475 = vld [vmem:[%s9 + $0x8] sm:$0xf]
    %v476 = vld [vmem:[%s11] sm:$0xff]
    %v477 = vld [vmem:[%s11 + $0x8] sm:$0xf]
    %v478 = vld [vmem:[%s11 + $0x10] sm:$0xff]
    %v479 = vld [vmem:[%s11 + $0x18] sm:$0xf]
    %v480 = vld [vmem:[%s13] sm:$0xff]
    %v481 = vld [vmem:[%s13 + $0x8] sm:$0xf]
    %v482 = vld [vmem:[%s15] sm:$0xff]
    %v483 = vld [vmem:[%s15 + $0x8] sm:$0xf]
    %v484 = vld [vmem:[%s15 + $0x10] sm:$0xff]
    %v485 = vld [vmem:[%s15 + $0x18] sm:$0xf]
    %v486 = vld [vmem:[%s17] sm:$0xff]
    %v487 = vld [vmem:[%s17 + $0x8] sm:$0xf]
    %v488 = vld [vmem:[%s19] sm:$0xff]
    %v489 = vld [vmem:[%s19 + $0x8] sm:$0xf]
    %v490 = vld [vmem:[%s19 + $0x10] sm:$0xff]
    %v491 = vld [vmem:[%s19 + $0x18] sm:$0xf]
    %v492 = vld [vmem:[%s19 + $0x20] sm:$0xff]
    %v493 = vld [vmem:[%s19 + $0x28] sm:$0xf]
    %v494 = vld [vmem:[%s19 + $0x30] sm:$0xff]
    %v495 = vld [vmem:[%s19 + $0x38] sm:$0xf]
    %v496 = vld [vmem:[%s21] sm:$0xff]
    %v497 = vld [vmem:[%s21 + $0x8] sm:$0xf]
    %v498 = vld [vmem:[%s21 + $0x10] sm:$0xff]
    %v499 = vld [vmem:[%s21 + $0x18] sm:$0xf]
    %v500 = vld [vmem:[%s21 + $0x20] sm:$0xff]
    %v501 = vld [vmem:[%s21 + $0x28] sm:$0xf]
    %v502 = vld [vmem:[%s21 + $0x30] sm:$0xff]
    %v503 = vld [vmem:[%s21 + $0x38] sm:$0xf]
    %v504 = vld [vmem:[%s143] sm:$0x3f]
    %v505 = vld [vmem:[#allocation2] sm:$0x1]
    %v506 = vld [vmem:[%s23] sm:$0x3f]
    %v507 = vld [vmem:[%s25] sm:$0x1]
    %v508 = vld [vmem:[%s27] sm:$0xff]
    %v509 = vld [vmem:[%s29] sm:$0x1]
    %v510 = vld [vmem:[%s31] sm:$0x3f]
    %v511 = vld [vmem:[%s33] sm:$0x1]
    %v512 = vld [vmem:[%s35] sm:$0xff]
    %v513 = vld [vmem:[%s35 + $0x8] sm:$0xff]
    %v514 = vld [vmem:[%s35 + $0x10] sm:$0xff]
    %v515 = vld [vmem:[%s35 + $0x18] sm:$0xff]
    %v516 = vld [vmem:[%s35 + $0x20] sm:$0xff]
    %v517 = vld [vmem:[%s35 + $0x28] sm:$0xff]
    %v518 = vld [vmem:[%s37] sm:$0x1]
    %v519 = vld [vmem:[%s39] sm:$0xf]
    %v520 = vld [vmem:[%s41] sm:$0x1]
    %v521 = vld [vmem:[%s43] sm:$0xff]
    %v522 = vld [vmem:[%s45] sm:$0x1]
    %v523 = vld [vmem:[%s47] sm:$0xf]
    %v524 = vld [vmem:[%s49] sm:$0x1]
    %v525 = vld [vmem:[%s51] sm:$0xff]
    %v526 = vld [vmem:[%s51 + $0x8] sm:$0xff]
    %v527 = vld [vmem:[%s51 + $0x10] sm:$0xff]
    %v528 = vld [vmem:[%s51 + $0x18] sm:$0xff]
    %v529 = vld [vmem:[%s53] sm:$0x1]
    %v530 = vld [vmem:[%s55] sm:$0x1]
    %v531 = vld [vmem:[%s57] sm:$0x1]
    %v532 = vld [vmem:[%s59] sm:$0x1]
    %v533 = vld [vmem:[%s61] sm:$0x1]
    %v534 = vld [vmem:[%s63] sm:$0x3f]
    %v535 = vld [vmem:[%s65] sm:$0x1]
    %v536 = vld [vmem:[%s67] sm:$0xf]
    %v537 = vld [vmem:[%s69] sm:$0x1]
    %v538 = vld [vmem:[%s71] sm:$0x1]
    %v539 = vld [vmem:[%s73] sm:$0x1]
    %v540 = vld [vmem:[%s75] sm:$0x1]
    %v541 = vld [vmem:[%s77] sm:$0x1]
    %v542 = vld [vmem:[%s79] sm:$0xff]
    %v543 = vld [vmem:[%s79 + $0x8] sm:$0xf]
    %v544 = vld [vmem:[%s79 + $0x10] sm:$0xff]
    %v545 = vld [vmem:[%s79 + $0x18] sm:$0xf]
    %v546 = vld [vmem:[%s81] sm:$0xff]
    %v547 = vld [vmem:[%s81 + $0x8] sm:$0xff]
    %v549 = vlaneseq
    %v550 = vshrl.u32 %v549, 7
    %v551 = vsub.s32 0, %v550
    %v552 = vrot.slane %v507, %v551
    %vm554 = vcmask 48128
    %v556 = vsel %vm554, %v469, 0
    %vm558 = vcmask 1045504
    %v560 = vsel %vm558, %v506, 0
    %562 = vmatprep.subr.mxu0 0.0
    %563 = vmatpush1.msra.mxu0 %v560
    %564 = vmatprep.subr.mxu0 0.0
    %565 = vmatpush1.msra.mxu0 0.0
    %566 = vmatprep.subr.mxu0 0.0
    %567 = vmatpush1.msra.mxu0 0.0
    %568 = vmatprep.subr.mxu0 0.0
    %569 = vmatpush1.msra.mxu0 0.0
    %570 = vmatprep.subr.mxu0 0.0
    %571 = vmatpush1.msra.mxu0 0.0
    %572 = vmatprep.subr.mxu0 0.0
    %573 = vmatpush1.msra.mxu0 0.0
    %574 = vmatprep.subr.mxu0 0.0
    %575 = vmatpush1.msra.mxu0 0.0
    %576 = vmatprep.subr.mxu0 0.0
    %577 = vmatpush1.msra.mxu0 0.0
    %578 = vmatprep.subr.mxu0 0.0
    %579 = vmatpush1.msra.mxu0 0.0
    %580 = vmatprep.subr.mxu0 0.0
    %581 = vmatpush1.msra.mxu0 0.0
    %582 = vmatprep.subr.mxu0 0.0
    %583 = vmatpush1.msra.mxu0 0.0
    %584 = vmatprep.subr.mxu0 0.0
    %585 = vmatpush1.msra.mxu0 0.0
    %586 = vmatprep.subr.mxu0 0.0
    %587 = vmatpush1.msra.mxu0 0.0
    %588 = vmatprep.subr.mxu0 0.0
    %589 = vmatpush1.msra.mxu0 0.0
    %590 = vmatprep.subr.mxu0 0.0
    %591 = vmatpush1.msra.mxu0 0.0
    %592 = vmatprep.subr.mxu0 0.0
    %593 = vmatpush1.msra.mxu0 0.0
    %594 = vmatprep.subr.mxu0 0.0
    %595 = vmatpush1.msra.mxu0 0.0
    %596 = vmatprep.subr.mxu0 0.0
    %597 = vmatpush1.msra.mxu0 0.0
    %598 = vmatprep.subr.mxu0 0.0
    %599 = vmatpush1.msra.mxu0 0.0
    %600 = vmatprep.subr.mxu0 0.0
    %601 = vmatpush1.msra.mxu0 0.0
    %602 = vmatprep.subr.mxu0 0.0
    %603 = vmatpush1.msra.mxu0 0.0
    %604 = vmatprep.subr.mxu0 0.0
    %605 = vmatpush1.msra.mxu0 0.0
    %606 = vmatprep.subr.mxu0 0.0
    %607 = vmatpush1.msra.mxu0 0.0
    %608 = vmatprep.subr.mxu0 0.0
    %609 = vmatpush1.msra.mxu0 0.0
    %610 = vmatprep.subr.mxu0 0.0
    %611 = vmatpush1.msra.mxu0 0.0
    %612 = vmatprep.subr.mxu0 0.0
    %613 = vmatpush1.msra.mxu0 0.0
    %614 = vmatprep.subr.mxu0 0.0
    %615 = vmatpush1.msra.mxu0 0.0
    %616 = vmatprep.subr.mxu0 0.0
    %617 = vmatpush1.msra.mxu0 0.0
    %618 = vmatprep.subr.mxu0 0.0
    %619 = vmatpush1.msra.mxu0 0.0
    %620 = vmatprep.subr.mxu0 0.0
    %621 = vmatpush1.msra.mxu0 0.0
    %622 = vmatprep.subr.mxu0 0.0
    %623 = vmatpush1.msra.mxu0 0.0
    %624 = vmatprep.subr.mxu0 0.0
    %625 = vmatpush1.msra.mxu0 0.0
    %626 = vmatprep.mubr.f32.mxu0 0.0
    %627 = vmatmul.mubr.f32.gmra.mrb[0].mxu0 %v556
    %v628 = vpop.f32.mrb[0].mxu0
    %v629 = vadd.f32 %v552, %v628
    %v630 = vpop.f32.mrb[0].mxu0
    %631 = vdwg.mxu0
    %v632 = vmax.f32 %v629, 0.0
    %v634 = vlaneseq
    %v635 = vshrl.u32 %v634, 7
    %v636 = vsub.s32 0, %v635
    %v637 = vrot.slane %v509, %v636
    %vm639 = vcmask 64512
    %v641 = vsel %vm639, %v632, 0
    %643 = vmatprep.subr.mxu0 0.0
    %644 = vmatpush1.msra.mxu0 %v508
    %645 = vmatprep.subr.mxu0 0.0
    %646 = vmatpush1.msra.mxu0 0.0
    %647 = vmatprep.subr.mxu0 0.0
    %648 = vmatpush1.msra.mxu0 0.0
    %649 = vmatprep.subr.mxu0 0.0
    %650 = vmatpush1.msra.mxu0 0.0
    %651 = vmatprep.subr.mxu0 0.0
    %652 = vmatpush1.msra.mxu0 0.0
    %653 = vmatprep.subr.mxu0 0.0
    %654 = vmatpush1.msra.mxu0 0.0
    %655 = vmatprep.subr.mxu0 0.0
    %656 = vmatpush1.msra.mxu0 0.0
    %657 = vmatprep.subr.mxu0 0.0
    %658 = vmatpush1.msra.mxu0 0.0
    %659 = vmatprep.subr.mxu0 0.0
    %660 = vmatpush1.msra.mxu0 0.0
    %661 = vmatprep.subr.mxu0 0.0
    %662 = vmatpush1.msra.mxu0 0.0
    %663 = vmatprep.subr.mxu0 0.0
    %664 = vmatpush1.msra.mxu0 0.0
    %665 = vmatprep.subr.mxu0 0.0
    %666 = vmatpush1.msra.mxu0 0.0
    %667 = vmatprep.subr.mxu0 0.0
    %668 = vmatpush1.msra.mxu0 0.0
    %669 = vmatprep.subr.mxu0 0.0
    %670 = vmatpush1.msra.mxu0 0.0
    %671 = vmatprep.subr.mxu0 0.0
    %672 = vmatpush1.msra.mxu0 0.0
    %673 = vmatprep.subr.mxu0 0.0
    %674 = vmatpush1.msra.mxu0 0.0
    %675 = vmatprep.subr.mxu0 0.0
    %676 = vmatpush1.msra.mxu0 0.0
    %677 = vmatprep.subr.mxu0 0.0
    %678 = vmatpush1.msra.mxu0 0.0
    %679 = vmatprep.subr.mxu0 0.0
    %680 = vmatpush1.msra.mxu0 0.0
    %681 = vmatprep.subr.mxu0 0.0
    %682 = vmatpush1.msra.mxu0 0.0
    %683 = vmatprep.subr.mxu0 0.0
    %684 = vmatpush1.msra.mxu0 0.0
    %685 = vmatprep.subr.mxu0 0.0
    %686 = vmatpush1.msra.mxu0 0.0
    %687 = vmatprep.subr.mxu0 0.0
    %688 = vmatpush1.msra.mxu0 0.0
    %689 = vmatprep.subr.mxu0 0.0
    %690 = vmatpush1.msra.mxu0 0.0
    %691 = vmatprep.subr.mxu0 0.0
    %692 = vmatpush1.msra.mxu0 0.0
    %693 = vmatprep.subr.mxu0 0.0
    %694 = vmatpush1.msra.mxu0 0.0
    %695 = vmatprep.subr.mxu0 0.0
    %696 = vmatpush1.msra.mxu0 0.0
    %697 = vmatprep.subr.mxu0 0.0
    %698 = vmatpush1.msra.mxu0 0.0
    %699 = vmatprep.subr.mxu0 0.0
    %700 = vmatpush1.msra.mxu0 0.0
    %701 = vmatprep.subr.mxu0 0.0
    %702 = vmatpush1.msra.mxu0 0.0
    %703 = vmatprep.subr.mxu0 0.0
    %704 = vmatpush1.msra.mxu0 0.0
    %705 = vmatprep.subr.mxu0 0.0
    %706 = vmatpush1.msra.mxu0 0.0
    %707 = vmatprep.mubr.f32.mxu0 0.0
    %708 = vmatmul.mubr.f32.gmra.mrb[0].mxu0 %v641
    %v709 = vpop.f32.mrb[0].mxu0
    %v710 = vadd.f32 %v637, %v709
    %v711 = vpop.f32.mrb[0].mxu0
    %712 = vdwg.mxu0
    %v713 = vmax.f32 %v710, 0.0
    %v715 = vlaneseq
    %v716 = vshrl.u32 %v715, 7
    %v717 = vsub.s32 0, %v716
    %v718 = vrot.slane %v511, %v717
    %v721 = vsel %vm558, %v510, 0
    %723 = vmatprep.subr.mxu0 0.0
    %724 = vmatpush1.msra.mxu0 %v721
    %725 = vmatprep.subr.mxu0 0.0
    %726 = vmatpush1.msra.mxu0 0.0
    %727 = vmatprep.subr.mxu0 0.0
    %728 = vmatpush1.msra.mxu0 0.0
    %729 = vmatprep.subr.mxu0 0.0
    %730 = vmatpush1.msra.mxu0 0.0
    %731 = vmatprep.subr.mxu0 0.0
    %732 = vmatpush1.msra.mxu0 0.0
    %733 = vmatprep.subr.mxu0 0.0
    %734 = vmatpush1.msra.mxu0 0.0
    %735 = vmatprep.subr.mxu0 0.0
    %736 = vmatpush1.msra.mxu0 0.0
    %737 = vmatprep.subr.mxu0 0.0
    %738 = vmatpush1.msra.mxu0 0.0
    %739 = vmatprep.subr.mxu0 0.0
    %740 = vmatpush1.msra.mxu0 0.0
    %741 = vmatprep.subr.mxu0 0.0
    %742 = vmatpush1.msra.mxu0 0.0
    %743 = vmatprep.subr.mxu0 0.0
    %744 = vmatpush1.msra.mxu0 0.0
    %745 = vmatprep.subr.mxu0 0.0
    %746 = vmatpush1.msra.mxu0 0.0
    %747 = vmatprep.subr.mxu0 0.0
    %748 = vmatpush1.msra.mxu0 0.0
    %749 = vmatprep.subr.mxu0 0.0
    %750 = vmatpush1.msra.mxu0 0.0
    %751 = vmatprep.subr.mxu0 0.0
    %752 = vmatpush1.msra.mxu0 0.0
    %753 = vmatprep.subr.mxu0 0.0
    %754 = vmatpush1.msra.mxu0 0.0
    %755 = vmatprep.subr.mxu0 0.0
    %756 = vmatpush1.msra.mxu0 0.0
    %757 = vmatprep.subr.mxu0 0.0
    %758 = vmatpush1.msra.mxu0 0.0
    %759 = vmatprep.subr.mxu0 0.0
    %760 = vmatpush1.msra.mxu0 0.0
    %761 = vmatprep.subr.mxu0 0.0
    %762 = vmatpush1.msra.mxu0 0.0
    %763 = vmatprep.subr.mxu0 0.0
    %764 = vmatpush1.msra.mxu0 0.0
    %765 = vmatprep.subr.mxu0 0.0
    %766 = vmatpush1.msra.mxu0 0.0
    %767 = vmatprep.subr.mxu0 0.0
    %768 = vmatpush1.msra.mxu0 0.0
    %769 = vmatprep.subr.mxu0 0.0
    %770 = vmatpush1.msra.mxu0 0.0
    %771 = vmatprep.subr.mxu0 0.0
    %772 = vmatpush1.msra.mxu0 0.0
    %773 = vmatprep.subr.mxu0 0.0
    %774 = vmatpush1.msra.mxu0 0.0
    %775 = vmatprep.subr.mxu0 0.0
    %776 = vmatpush1.msra.mxu0 0.0
    %777 = vmatprep.subr.mxu0 0.0
    %778 = vmatpush1.msra.mxu0 0.0
    %779 = vmatprep.subr.mxu0 0.0
    %780 = vmatpush1.msra.mxu0 0.0
    %781 = vmatprep.subr.mxu0 0.0
    %782 = vmatpush1.msra.mxu0 0.0
    %783 = vmatprep.subr.mxu0 0.0
    %784 = vmatpush1.msra.mxu0 0.0
    %785 = vmatprep.subr.mxu0 0.0
    %786 = vmatpush1.msra.mxu0 0.0
    %787 = vmatprep.mubr.f32.mxu0 0.0
    %788 = vmatmul.mubr.f32.gmra.mrb[0].mxu0 %v556
    %v789 = vpop.f32.mrb[0].mxu0
    %v790 = vadd.f32 %v718, %v789
    %v791 = vpop.f32.mrb[0].mxu0
    %792 = vdwg.mxu0
    %v793 = vmax.f32 %v790, 0.0
    %v795 = vlaneseq
    %v796 = vshrl.u32 %v795, 7
    %v797 = vsub.s32 0, %v796
    %v798 = vrot.slane %v518, %v797
    %vm800 = vcmask 392192
    %v802 = vsel %vm800, %v793, 0
    %804 = vmatprep.subr.mxu0 0.0
    %805 = vmatpush1.msra.mxu0 %v512
    %806 = vmatprep.subr.mxu0 0.0
    %807 = vmatpush1.msra.mxu0 %v513
    %808 = vmatprep.subr.mxu0 0.0
    %809 = vmatpush1.msra.mxu0 %v514
    %810 = vmatprep.subr.mxu0 0.0
    %811 = vmatpush1.msra.mxu0 %v515
    %812 = vmatprep.subr.mxu0 0.0
    %813 = vmatpush1.msra.mxu0 %v516
    %814 = vmatprep.subr.mxu0 0.0
    %815 = vmatpush1.msra.mxu0 %v517
    %816 = vmatprep.subr.mxu0 0.0
    %817 = vmatpush1.msra.mxu0 0.0
    %818 = vmatprep.subr.mxu0 0.0
    %819 = vmatpush1.msra.mxu0 0.0
    %820 = vmatprep.subr.mxu0 0.0
    %821 = vmatpush1.msra.mxu0 0.0
    %822 = vmatprep.subr.mxu0 0.0
    %823 = vmatpush1.msra.mxu0 0.0
    %824 = vmatprep.subr.mxu0 0.0
    %825 = vmatpush1.msra.mxu0 0.0
    %826 = vmatprep.subr.mxu0 0.0
    %827 = vmatpush1.msra.mxu0 0.0
    %828 = vmatprep.subr.mxu0 0.0
    %829 = vmatpush1.msra.mxu0 0.0
    %830 = vmatprep.subr.mxu0 0.0
    %831 = vmatpush1.msra.mxu0 0.0
    %832 = vmatprep.subr.mxu0 0.0
    %833 = vmatpush1.msra.mxu0 0.0
    %834 = vmatprep.subr.mxu0 0.0
    %835 = vmatpush1.msra.mxu0 0.0
    %836 = vmatprep.subr.mxu0 0.0
    %837 = vmatpush1.msra.mxu0 0.0
    %838 = vmatprep.subr.mxu0 0.0
    %839 = vmatpush1.msra.mxu0 0.0
    %840 = vmatprep.subr.mxu0 0.0
    %841 = vmatpush1.msra.mxu0 0.0
    %842 = vmatprep.subr.mxu0 0.0
    %843 = vmatpush1.msra.mxu0 0.0
    %844 = vmatprep.subr.mxu0 0.0
    %845 = vmatpush1.msra.mxu0 0.0
    %846 = vmatprep.subr.mxu0 0.0
    %847 = vmatpush1.msra.mxu0 0.0
    %848 = vmatprep.subr.mxu0 0.0
    %849 = vmatpush1.msra.mxu0 0.0
    %850 = vmatprep.subr.mxu0 0.0
    %851 = vmatpush1.msra.mxu0 0.0
    %852 = vmatprep.subr.mxu0 0.0
    %853 = vmatpush1.msra.mxu0 0.0
    %854 = vmatprep.subr.mxu0 0.0
    %855 = vmatpush1.msra.mxu0 0.0
    %856 = vmatprep.subr.mxu0 0.0
    %857 = vmatpush1.msra.mxu0 0.0
    %858 = vmatprep.subr.mxu0 0.0
    %859 = vmatpush1.msra.mxu0 0.0
    %860 = vmatprep.subr.mxu0 0.0
    %861 = vmatpush1.msra.mxu0 0.0
    %862 = vmatprep.subr.mxu0 0.0
    %863 = vmatpush1.msra.mxu0 0.0
    %864 = vmatprep.subr.mxu0 0.0
    %865 = vmatpush1.msra.mxu0 0.0
    %866 = vmatprep.subr.mxu0 0.0
    %867 = vmatpush1.msra.mxu0 0.0
    %868 = vmatprep.mubr.f32.mxu0 0.0
    %869 = vmatmul.mubr.f32.gmra.mrb[0].mxu0 %v802
    %v870 = vpop.f32.mrb[0].mxu0
    %v871 = vadd.f32 %v798, %v870
    %v872 = vpop.f32.mrb[0].mxu0
    %873 = vdwg.mxu0
    %v874 = vmax.f32 %v871, 0.0
    %v876 = vlaneseq
    %v877 = vshrl.u32 %v876, 7
    %v878 = vsub.s32 0, %v877
    %v879 = vrot.slane %v520, %v878
    %vm881 = vcmask 31744
    %v883 = vsel %vm881, %v470, 0
    %v886 = vsel %vm881, %v471, 0
    %vm888 = vcmask 1043456
    %v890 = vsel %vm888, %v519, 0
    %892 = vmatprep.subr.mxu0 0.0
    %893 = vmatpush1.msra.mxu0 %v890
    %894 = vmatprep.subr.mxu0 0.0
    %895 = vmatpush1.msra.mxu0 0.0
    %896 = vmatprep.subr.mxu0 0.0
    %897 = vmatpush1.msra.mxu0 0.0
    %898 = vmatprep.subr.mxu0 0.0
    %899 = vmatpush1.msra.mxu0 0.0
    %900 = vmatprep.subr.mxu0 0.0
    %901 = vmatpush1.msra.mxu0 0.0
    %902 = vmatprep.subr.mxu0 0.0
    %903 = vmatpush1.msra.mxu0 0.0
    %904 = vmatprep.subr.mxu0 0.0
    %905 = vmatpush1.msra.mxu0 0.0
    %906 = vmatprep.subr.mxu0 0.0
    %907 = vmatpush1.msra.mxu0 0.0
    %908 = vmatprep.subr.mxu0 0.0
    %909 = vmatpush1.msra.mxu0 0.0
    %910 = vmatprep.subr.mxu0 0.0
    %911 = vmatpush1.msra.mxu0 0.0
    %912 = vmatprep.subr.mxu0 0.0
    %913 = vmatpush1.msra.mxu0 0.0
    %914 = vmatprep.subr.mxu0 0.0
    %915 = vmatpush1.msra.mxu0 0.0
    %916 = vmatprep.subr.mxu0 0.0
    %917 = vmatpush1.msra.mxu0 0.0
    %918 = vmatprep.subr.mxu0 0.0
    %919 = vmatpush1.msra.mxu0 0.0
    %920 = vmatprep.subr.mxu0 0.0
    %921 = vmatpush1.msra.mxu0 0.0
    %922 = vmatprep.subr.mxu0 0.0
    %923 = vmatpush1.msra.mxu0 0.0
    %924 = vmatprep.subr.mxu0 0.0
    %925 = vmatpush1.msra.mxu0 0.0
    %926 = vmatprep.subr.mxu0 0.0
    %927 = vmatpush1.msra.mxu0 0.0
    %928 = vmatprep.subr.mxu0 0.0
    %929 = vmatpush1.msra.mxu0 0.0
    %930 = vmatprep.subr.mxu0 0.0
    %931 = vmatpush1.msra.mxu0 0.0
    %932 = vmatprep.subr.mxu0 0.0
    %933 = vmatpush1.msra.mxu0 0.0
    %934 = vmatprep.subr.mxu0 0.0
    %935 = vmatpush1.msra.mxu0 0.0
    %936 = vmatprep.subr.mxu0 0.0
    %937 = vmatpush1.msra.mxu0 0.0
    %938 = vmatprep.subr.mxu0 0.0
    %939 = vmatpush1.msra.mxu0 0.0
    %940 = vmatprep.subr.mxu0 0.0
    %941 = vmatpush1.msra.mxu0 0.0
    %942 = vmatprep.subr.mxu0 0.0
    %943 = vmatpush1.msra.mxu0 0.0
    %944 = vmatprep.subr.mxu0 0.0
    %945 = vmatpush1.msra.mxu0 0.0
    %946 = vmatprep.subr.mxu0 0.0
    %947 = vmatpush1.msra.mxu0 0.0
    %948 = vmatprep.subr.mxu0 0.0
    %949 = vmatpush1.msra.mxu0 0.0
    %950 = vmatprep.subr.mxu0 0.0
    %951 = vmatpush1.msra.mxu0 0.0
    %952 = vmatprep.subr.mxu0 0.0
    %953 = vmatpush1.msra.mxu0 0.0
    %954 = vmatprep.subr.mxu0 0.0
    %955 = vmatpush1.msra.mxu0 0.0
    %956 = vmatprep.mubr.f32.mxu0 0.0
    %957 = vmatmul.mubr.f32.gmra.mrb[0].mxu0 %v883
    %v958 = vpop.f32.mrb[0].mxu0
    %v959 = vadd.f32 %v879, %v958
    %v960 = vpop.f32.mrb[0].mxu0
    %961 = vmatprep.mubr.f32.mxu0 0.0
    %962 = vmatmul.mubr.f32.gmra.mrb[0].mxu0 %v886
    %v963 = vpop.f32.mrb[0].mxu0
    %v964 = vadd.f32 %v879, %v963
    %v965 = vpop.f32.mrb[0].mxu0
    %966 = vdwg.mxu0
    %v967 = vmax.f32 %v959, 0.0
    %v968 = vmax.f32 %v964, 0.0
    %v970 = vlaneseq
    %v971 = vshrl.u32 %v970, 7
    %v972 = vsub.s32 0, %v971
    %v973 = vrot.slane %v522, %v972
    %v976 = vsel %vm639, %v967, 0
    %v979 = vsel %vm639, %v968, 0
    %981 = vmatprep.subr.mxu0 0.0
    %982 = vmatpush1.msra.mxu0 %v521
    %983 = vmatprep.subr.mxu0 0.0
    %984 = vmatpush1.msra.mxu0 0.0
    %985 = vmatprep.subr.mxu0 0.0
    %986 = vmatpush1.msra.mxu0 0.0
    %987 = vmatprep.subr.mxu0 0.0
    %988 = vmatpush1.msra.mxu0 0.0
    %989 = vmatprep.subr.mxu0 0.0
    %990 = vmatpush1.msra.mxu0 0.0
    %991 = vmatprep.subr.mxu0 0.0
    %992 = vmatpush1.msra.mxu0 0.0
    %993 = vmatprep.subr.mxu0 0.0
    %994 = vmatpush1.msra.mxu0 0.0
    %995 = vmatprep.subr.mxu0 0.0
    %996 = vmatpush1.msra.mxu0 0.0
    %997 = vmatprep.subr.mxu0 0.0
    %998 = vmatpush1.msra.mxu0 0.0
    %999 = vmatprep.subr.mxu0 0.0
    %1000 = vmatpush1.msra.mxu0 0.0
    %1001 = vmatprep.subr.mxu0 0.0
    %1002 = vmatpush1.msra.mxu0 0.0
    %1003 = vmatprep.subr.mxu0 0.0
    %1004 = vmatpush1.msra.mxu0 0.0
    %1005 = vmatprep.subr.mxu0 0.0
    %1006 = vmatpush1.msra.mxu0 0.0
    %1007 = vmatprep.subr.mxu0 0.0
    %1008 = vmatpush1.msra.mxu0 0.0
    %1009 = vmatprep.subr.mxu0 0.0
    %1010 = vmatpush1.msra.mxu0 0.0
    %1011 = vmatprep.subr.mxu0 0.0
    %1012 = vmatpush1.msra.mxu0 0.0
    %1013 = vmatprep.subr.mxu0 0.0
    %1014 = vmatpush1.msra.mxu0 0.0
    %1015 = vmatprep.subr.mxu0 0.0
    %1016 = vmatpush1.msra.mxu0 0.0
    %1017 = vmatprep.subr.mxu0 0.0
    %1018 = vmatpush1.msra.mxu0 0.0
    %1019 = vmatprep.subr.mxu0 0.0
    %1020 = vmatpush1.msra.mxu0 0.0
    %1021 = vmatprep.subr.mxu0 0.0
    %1022 = vmatpush1.msra.mxu0 0.0
    %1023 = vmatprep.subr.mxu0 0.0
    %1024 = vmatpush1.msra.mxu0 0.0
    %1025 = vmatprep.subr.mxu0 0.0
    %1026 = vmatpush1.msra.mxu0 0.0
    %1027 = vmatprep.subr.mxu0 0.0
    %1028 = vmatpush1.msra.mxu0 0.0
    %1029 = vmatprep.subr.mxu0 0.0
    %1030 = vmatpush1.msra.mxu0 0.0
    %1031 = vmatprep.subr.mxu0 0.0
    %1032 = vmatpush1.msra.mxu0 0.0
    %1033 = vmatprep.subr.mxu0 0.0
    %1034 = vmatpush1.msra.mxu0 0.0
    %1035 = vmatprep.subr.mxu0 0.0
    %1036 = vmatpush1.msra.mxu0 0.0
    %1037 = vmatprep.subr.mxu0 0.0
    %1038 = vmatpush1.msra.mxu0 0.0
    %1039 = vmatprep.subr.mxu0 0.0
    %1040 = vmatpush1.msra.mxu0 0.0
    %1041 = vmatprep.subr.mxu0 0.0
    %1042 = vmatpush1.msra.mxu0 0.0
    %1043 = vmatprep.subr.mxu0 0.0
    %1044 = vmatpush1.msra.mxu0 0.0
    %1045 = vmatprep.mubr.f32.mxu0 0.0
    %1046 = vmatmul.mubr.f32.gmra.mrb[0].mxu0 %v976
    %v1047 = vpop.f32.mrb[0].mxu0
    %v1048 = vadd.f32 %v973, %v1047
    %v1049 = vpop.f32.mrb[0].mxu0
    %1050 = vmatprep.mubr.f32.mxu0 0.0
    %1051 = vmatmul.mubr.f32.gmra.mrb[0].mxu0 %v979
    %v1052 = vpop.f32.mrb[0].mxu0
    %v1053 = vadd.f32 %v973, %v1052
    %v1054 = vpop.f32.mrb[0].mxu0
    %1055 = vdwg.mxu0
    %v1056 = vmax.f32 %v1048, 0.0
    %v1057 = vmax.f32 %v1053, 0.0
    %v1059 = vlaneseq
    %v1060 = vshrl.u32 %v1059, 7
    %v1061 = vsub.s32 0, %v1060
    %v1062 = vrot.slane %v524, %v1061
    %v1065 = vsel %vm888, %v523, 0
    %1067 = vmatprep.subr.mxu0 0.0
    %1068 = vmatpush1.msra.mxu0 %v1065
    %1069 = vmatprep.subr.mxu0 0.0
    %1070 = vmatpush1.msra.mxu0 0.0
    %1071 = vmatprep.subr.mxu0 0.0
    %1072 = vmatpush1.msra.mxu0 0.0
    %1073 = vmatprep.subr.mxu0 0.0
    %1074 = vmatpush1.msra.mxu0 0.0
    %1075 = vmatprep.subr.mxu0 0.0
    %1076 = vmatpush1.msra.mxu0 0.0
    %1077 = vmatprep.subr.mxu0 0.0
    %1078 = vmatpush1.msra.mxu0 0.0
    %1079 = vmatprep.subr.mxu0 0.0
    %1080 = vmatpush1.msra.mxu0 0.0
    %1081 = vmatprep.subr.mxu0 0.0
    %1082 = vmatpush1.msra.mxu0 0.0
    %1083 = vmatprep.subr.mxu0 0.0
    %1084 = vmatpush1.msra.mxu0 0.0
    %1085 = vmatprep.subr.mxu0 0.0
    %1086 = vmatpush1.msra.mxu0 0.0
    %1087 = vmatprep.subr.mxu0 0.0
    %1088 = vmatpush1.msra.mxu0 0.0
    %1089 = vmatprep.subr.mxu0 0.0
    %1090 = vmatpush1.msra.mxu0 0.0
    %1091 = vmatprep.subr.mxu0 0.0
    %1092 = vmatpush1.msra.mxu0 0.0
    %1093 = vmatprep.subr.mxu0 0.0
    %1094 = vmatpush1.msra.mxu0 0.0
    %1095 = vmatprep.subr.mxu0 0.0
    %1096 = vmatpush1.msra.mxu0 0.0
    %1097 = vmatprep.subr.mxu0 0.0
    %1098 = vmatpush1.msra.mxu0 0.0
    %1099 = vmatprep.subr.mxu0 0.0
    %1100 = vmatpush1.msra.mxu0 0.0
    %1101 = vmatprep.subr.mxu0 0.0
    %1102 = vmatpush1.msra.mxu0 0.0
    %1103 = vmatprep.subr.mxu0 0.0
    %1104 = vmatpush1.msra.mxu0 0.0
    %1105 = vmatprep.subr.mxu0 0.0
    %1106 = vmatpush1.msra.mxu0 0.0
    %1107 = vmatprep.subr.mxu0 0.0
    %1108 = vmatpush1.msra.mxu0 0.0
    %1109 = vmatprep.subr.mxu0 0.0
    %1110 = vmatpush1.msra.mxu0 0.0
    %1111 = vmatprep.subr.mxu0 0.0
    %1112 = vmatpush1.msra.mxu0 0.0
    %1113 = vmatprep.subr.mxu0 0.0
    %1114 = vmatpush1.msra.mxu0 0.0
    %1115 = vmatprep.subr.mxu0 0.0
    %1116 = vmatpush1.msra.mxu0 0.0
    %1117 = vmatprep.subr.mxu0 0.0
    %1118 = vmatpush1.msra.mxu0 0.0
    %1119 = vmatprep.subr.mxu0 0.0
    %1120 = vmatpush1.msra.mxu0 0.0
    %1121 = vmatprep.subr.mxu0 0.0
    %1122 = vmatpush1.msra.mxu0 0.0
    %1123 = vmatprep.subr.mxu0 0.0
    %1124 = vmatpush1.msra.mxu0 0.0
    %1125 = vmatprep.subr.mxu0 0.0
    %1126 = vmatpush1.msra.mxu0 0.0
    %1127 = vmatprep.subr.mxu0 0.0
    %1128 = vmatpush1.msra.mxu0 0.0
    %1129 = vmatprep.subr.mxu0 0.0
    %1130 = vmatpush1.msra.mxu0 0.0
    %1131 = vmatprep.mubr.f32.mxu0 0.0
    %1132 = vmatmul.mubr.f32.gmra.mrb[0].mxu0 %v883
    %v1133 = vpop.f32.mrb[0].mxu0
    %v1134 = vadd.f32 %v1062, %v1133
    %v1135 = vpop.f32.mrb[0].mxu0
    %1136 = vmatprep.mubr.f32.mxu0 0.0
    %1137 = vmatmul.mubr.f32.gmra.mrb[0].mxu0 %v886
    %v1138 = vpop.f32.mrb[0].mxu0
    %v1139 = vadd.f32 %v1062, %v1138
    %v1140 = vpop.f32.mrb[0].mxu0
    %1141 = vdwg.mxu0
    %v1142 = vmax.f32 %v1134, 0.0
    %v1143 = vmax.f32 %v1139, 0.0
    %v1145 = vlaneseq
    %v1146 = vshrl.u32 %v1145, 7
    %v1147 = vsub.s32 0, %v1146
    %v1148 = vrot.slane %v529, %v1147
    %vm1150 = vcmask 261120
    %v1152 = vsel %vm1150, %v1142, 0
    %v1155 = vsel %vm1150, %v1143, 0
    %1157 = vmatprep.subr.mxu0 0.0
    %1158 = vmatpush1.msra.mxu0 %v525
    %1159 = vmatprep.subr.mxu0 0.0
    %1160 = vmatpush1.msra.mxu0 %v526
    %1161 = vmatprep.subr.mxu0 0.0
    %1162 = vmatpush1.msra.mxu0 %v527
    %1163 = vmatprep.subr.mxu0 0.0
    %1164 = vmatpush1.msra.mxu0 %v528
    %1165 = vmatprep.subr.mxu0 0.0
    %1166 = vmatpush1.msra.mxu0 0.0
    %1167 = vmatprep.subr.mxu0 0.0
    %1168 = vmatpush1.msra.mxu0 0.0
    %1169 = vmatprep.subr.mxu0 0.0
    %1170 = vmatpush1.msra.mxu0 0.0
    %1171 = vmatprep.subr.mxu0 0.0
    %1172 = vmatpush1.msra.mxu0 0.0
    %1173 = vmatprep.subr.mxu0 0.0
    %1174 = vmatpush1.msra.mxu0 0.0
    %1175 = vmatprep.subr.mxu0 0.0
    %1176 = vmatpush1.msra.mxu0 0.0
    %1177 = vmatprep.subr.mxu0 0.0
    %1178 = vmatpush1.msra.mxu0 0.0
    %1179 = vmatprep.subr.mxu0 0.0
    %1180 = vmatpush1.msra.mxu0 0.0
    %1181 = vmatprep.subr.mxu0 0.0
    %1182 = vmatpush1.msra.mxu0 0.0
    %1183 = vmatprep.subr.mxu0 0.0
    %1184 = vmatpush1.msra.mxu0 0.0
    %1185 = vmatprep.subr.mxu0 0.0
    %1186 = vmatpush1.msra.mxu0 0.0
    %1187 = vmatprep.subr.mxu0 0.0
    %1188 = vmatpush1.msra.mxu0 0.0
    %1189 = vmatprep.subr.mxu0 0.0
    %1190 = vmatpush1.msra.mxu0 0.0
    %1191 = vmatprep.subr.mxu0 0.0
    %1192 = vmatpush1.msra.mxu0 0.0
    %1193 = vmatprep.subr.mxu0 0.0
    %1194 = vmatpush1.msra.mxu0 0.0
    %1195 = vmatprep.subr.mxu0 0.0
    %1196 = vmatpush1.msra.mxu0 0.0
    %1197 = vmatprep.subr.mxu0 0.0
    %1198 = vmatpush1.msra.mxu0 0.0
    %1199 = vmatprep.subr.mxu0 0.0
    %1200 = vmatpush1.msra.mxu0 0.0
    %1201 = vmatprep.subr.mxu0 0.0
    %1202 = vmatpush1.msra.mxu0 0.0
    %1203 = vmatprep.subr.mxu0 0.0
    %1204 = vmatpush1.msra.mxu0 0.0
    %1205 = vmatprep.subr.mxu0 0.0
    %1206 = vmatpush1.msra.mxu0 0.0
    %1207 = vmatprep.subr.mxu0 0.0
    %1208 = vmatpush1.msra.mxu0 0.0
    %1209 = vmatprep.subr.mxu0 0.0
    %1210 = vmatpush1.msra.mxu0 0.0
    %1211 = vmatprep.subr.mxu0 0.0
    %1212 = vmatpush1.msra.mxu0 0.0
    %1213 = vmatprep.subr.mxu0 0.0
    %1214 = vmatpush1.msra.mxu0 0.0
    %1215 = vmatprep.subr.mxu0 0.0
    %1216 = vmatpush1.msra.mxu0 0.0
    %1217 = vmatprep.subr.mxu0 0.0
    %1218 = vmatpush1.msra.mxu0 0.0
    %1219 = vmatprep.subr.mxu0 0.0
    %1220 = vmatpush1.msra.mxu0 0.0
    %1221 = vmatprep.mubr.f32.mxu0 0.0
    %1222 = vmatmul.mubr.f32.gmra.mrb[0].mxu0 %v1152
    %v1223 = vpop.f32.mrb[0].mxu0
    %v1224 = vadd.f32 %v1148, %v1223
    %v1225 = vpop.f32.mrb[0].mxu0
    %1226 = vmatprep.mubr.f32.mxu0 0.0
    %1227 = vmatmul.mubr.f32.gmra.mrb[0].mxu0 %v1155
    %v1228 = vpop.f32.mrb[0].mxu0
    %v1229 = vadd.f32 %v1148, %v1228
    %v1230 = vpop.f32.mrb[0].mxu0
    %1231 = vdwg.mxu0
    %v1232 = vmax.f32 %v1224, 0.0
    %v1233 = vmax.f32 %v1229, 0.0
    %v1234 = vmul.f32 %v713, 0.4082483
    %vm1235 = vcmask 15360
    %v1236 = vsel %vm1235, %v1234, -inf
    %1237 = vmax.xlane.f32.xlu0 %v1236
    %v1238 = vpop.xlane.xlu0 %1237
    %v1239 = vrot.slane %v1238, 4
    %v1240 = vmax.f32 %v1238, %v1239
    %v1241 = vrot.slane %v1240, 2
    %v1242 = vmax.f32 %v1240, %v1241
    %v1243 = vrot.slane %v1242, 1
    %v1244 = vmax.f32 %v1242, %v1243
    %v1245 = vsub.f32 %v1234, %v1244
    %v1246 = vmul.f32 %v1245, 1.442695
    %v1247 = vpow.pop %v1246
    %v1249 = vsel %vm639, %v473, 0
    %1251 = vmatprep.subr.mxu0 0.0
    %1252 = vmatpush1.msra.mxu0 %v1247
    %1253 = vmatprep.subr.mxu0 0.0
    %1254 = vmatpush1.msra.mxu0 0.0
    %1255 = vmatprep.subr.mxu0 0.0
    %1256 = vmatpush1.msra.mxu0 0.0
    %1257 = vmatprep.subr.mxu0 0.0
    %1258 = vmatpush1.msra.mxu0 0.0
    %1259 = vmatprep.subr.mxu0 0.0
    %1260 = vmatpush1.msra.mxu0 0.0
    %1261 = vmatprep.subr.mxu0 0.0
    %1262 = vmatpush1.msra.mxu0 0.0
    %1263 = vmatprep.subr.mxu0 0.0
    %1264 = vmatpush1.msra.mxu0 0.0
    %1265 = vmatprep.subr.mxu0 0.0
    %1266 = vmatpush1.msra.mxu0 0.0
    %1267 = vmatprep.subr.mxu0 0.0
    %1268 = vmatpush1.msra.mxu0 0.0
    %1269 = vmatprep.subr.mxu0 0.0
    %1270 = vmatpush1.msra.mxu0 0.0
    %1271 = vmatprep.subr.mxu0 0.0
    %1272 = vmatpush1.msra.mxu0 0.0
    %1273 = vmatprep.subr.mxu0 0.0
    %1274 = vmatpush1.msra.mxu0 0.0
    %1275 = vmatprep.subr.mxu0 0.0
    %1276 = vmatpush1.msra.mxu0 0.0
    %1277 = vmatprep.subr.mxu0 0.0
    %1278 = vmatpush1.msra.mxu0 0.0
    %1279 = vmatprep.subr.mxu0 0.0
    %1280 = vmatpush1.msra.mxu0 0.0
    %1281 = vmatprep.subr.mxu0 0.0
    %1282 = vmatpush1.msra.mxu0 0.0
    %1283 = vmatprep.subr.mxu0 0.0
    %1284 = vmatpush1.msra.mxu0 0.0
    %1285 = vmatprep.subr.mxu0 0.0
    %1286 = vmatpush1.msra.mxu0 0.0
    %1287 = vmatprep.subr.mxu0 0.0
    %1288 = vmatpush1.msra.mxu0 0.0
    %1289 = vmatprep.subr.mxu0 0.0
    %1290 = vmatpush1.msra.mxu0 0.0
    %1291 = vmatprep.subr.mxu0 0.0
    %1292 = vmatpush1.msra.mxu0 0.0
    %1293 = vmatprep.subr.mxu0 0.0
    %1294 = vmatpush1.msra.mxu0 0.0
    %1295 = vmatprep.subr.mxu0 0.0
    %1296 = vmatpush1.msra.mxu0 0.0
    %1297 = vmatprep.subr.mxu0 0.0
    %1298 = vmatpush1.msra.mxu0 0.0
    %1299 = vmatprep.subr.mxu0 0.0
    %1300 = vmatpush1.msra.mxu0 0.0
    %1301 = vmatprep.subr.mxu0 0.0
    %1302 = vmatpush1.msra.mxu0 0.0
    %1303 = vmatprep.subr.mxu0 0.0
    %1304 = vmatpush1.msra.mxu0 0.0
    %1305 = vmatprep.subr.mxu0 0.0
    %1306 = vmatpush1.msra.mxu0 0.0
    %1307 = vmatprep.subr.mxu0 0.0
    %1308 = vmatpush1.msra.mxu0 0.0
    %1309 = vmatprep.subr.mxu0 0.0
    %1310 = vmatpush1.msra.mxu0 0.0
    %1311 = vmatprep.subr.mxu0 0.0
    %1312 = vmatpush1.msra.mxu0 0.0
    %1313 = vmatprep.subr.mxu0 0.0
    %1314 = vmatpush1.msra.mxu0 0.0
    %1315 = vmatprep.mubr.f32.mxu0 0.0
    %1316 = vmatmul.mubr.f32.gmra.mrb[0].mxu0 %v1249
    %v1317 = vpop.f32.mrb[0].mxu0
    %v1318 = vadd.f32 0.0, %v1317
    %v1319 = vpop.f32.mrb[0].mxu0
    %1320 = vdwg.mxu0
    %v1321 = vsel %vm1235, %v1318, 0.0
    %1322 = vadd.xlane.f32.xlu0 %v1321
    %v1323 = vpop.xlane.xlu0 %1322
    %v1324 = vrcp.pop %v1323
    %v1325 = vmul.f32 %v1247, %v1324
    %v1326 = vmul.f32 %v1056, 0.5
    %v1327 = vmul.f32 %v1057, 0.5
    %v1328 = vsel %vm1235, %v1326, -inf
    %1329 = vmax.xlane.f32.xlu0 %v1328
    %v1330 = vpop.xlane.xlu0 %1329
    %vm1331 = vcmask 11264
    %v1332 = vsel %vm1331, %v1327, -inf
    %1333 = vmax.xlane.f32.xlu0 %v1332
    %v1334 = vpop.xlane.xlu0 %1333
    %v1335 = vsel %vm888, %v1334, -inf
    %v1336 = vmax.f32 %v1330, %v1335
    %v1337 = vrot.slane %v1336, 4
    %v1338 = vmax.f32 %v1336, %v1337
    %v1339 = vrot.slane %v1338, 2
    %v1340 = vmax.f32 %v1338, %v1339
    %v1341 = vrot.slane %v1340, 1
    %v1342 = vmax.f32 %v1340, %v1341
    %v1343 = vsub.f32 %v1326, %v1342
    %v1344 = vsub.f32 %v1327, %v1342
    %v1345 = vmul.f32 %v1343, 1.442695
    %v1346 = vpow.pop %v1345
    %v1347 = vmul.f32 %v1344, 1.442695
    %v1348 = vpow.pop %v1347
    %vm1349 = vcmask 97280
    %v1351 = vsel %vm1349, %v474, 0
    %v1354 = vsel %vm1349, %v475, 0
    %v1357 = vsel %vm888, %v1348, 0
    %1359 = vmatprep.subr.mxu0 0.0
    %1360 = vmatpush1.msra.mxu0 %v1346
    %1361 = vmatprep.subr.mxu0 0.0
    %1362 = vmatpush1.msra.mxu0 %v1357
    %1363 = vmatprep.subr.mxu0 0.0
    %1364 = vmatpush1.msra.mxu0 0.0
    %1365 = vmatprep.subr.mxu0 0.0
    %1366 = vmatpush1.msra.mxu0 0.0
    %1367 = vmatprep.subr.mxu0 0.0
    %1368 = vmatpush1.msra.mxu0 0.0
    %1369 = vmatprep.subr.mxu0 0.0
    %1370 = vmatpush1.msra.mxu0 0.0
    %1371 = vmatprep.subr.mxu0 0.0
    %1372 = vmatpush1.msra.mxu0 0.0
    %1373 = vmatprep.subr.mxu0 0.0
    %1374 = vmatpush1.msra.mxu0 0.0
    %1375 = vmatprep.subr.mxu0 0.0
    %1376 = vmatpush1.msra.mxu0 0.0
    %1377 = vmatprep.subr.mxu0 0.0
    %1378 = vmatpush1.msra.mxu0 0.0
    %1379 = vmatprep.subr.mxu0 0.0
    %1380 = vmatpush1.msra.mxu0 0.0
    %1381 = vmatprep.subr.mxu0 0.0
    %1382 = vmatpush1.msra.mxu0 0.0
    %1383 = vmatprep.subr.mxu0 0.0
    %1384 = vmatpush1.msra.mxu0 0.0
    %1385 = vmatprep.subr.mxu0 0.0
    %1386 = vmatpush1.msra.mxu0 0.0
    %1387 = vmatprep.subr.mxu0 0.0
    %1388 = vmatpush1.msra.mxu0 0.0
    %1389 = vmatprep.subr.mxu0 0.0
    %1390 = vmatpush1.msra.mxu0 0.0
    %1391 = vmatprep.subr.mxu0 0.0
    %1392 = vmatpush1.msra.mxu0 0.0
    %1393 = vmatprep.subr.mxu0 0.0
    %1394 = vmatpush1.msra.mxu0 0.0
    %1395 = vmatprep.subr.mxu0 0.0
    %1396 = vmatpush1.msra.mxu0 0.0
    %1397 = vmatprep.subr.mxu0 0.0
    %1398 = vmatpush1.msra.mxu0 0.0
    %1399 = vmatprep.subr.mxu0 0.0
    %1400 = vmatpush1.msra.mxu0 0.0
    %1401 = vmatprep.subr.mxu0 0.0
    %1402 = vmatpush1.msra.mxu0 0.0
    %1403 = vmatprep.subr.mxu0 0.0
    %1404 = vmatpush1.msra.mxu0 0.0
    %1405 = vmatprep.subr.mxu0 0.0
    %1406 = vmatpush1.msra.mxu0 0.0
    %1407 = vmatprep.subr.mxu0 0.0
    %1408 = vmatpush1.msra.mxu0 0.0
    %1409 = vmatprep.subr.mxu0 0.0
    %1410 = vmatpush1.msra.mxu0 0.0
    %1411 = vmatprep.subr.mxu0 0.0
    %1412 = vmatpush1.msra.mxu0 0.0
    %1413 = vmatprep.subr.mxu0 0.0
    %1414 = vmatpush1.msra.mxu0 0.0
    %1415 = vmatprep.subr.mxu0 0.0
    %1416 = vmatpush1.msra.mxu0 0.0
    %1417 = vmatprep.subr.mxu0 0.0
    %1418 = vmatpush1.msra.mxu0 0.0
    %1419 = vmatprep.subr.mxu0 0.0
    %1420 = vmatpush1.msra.mxu0 0.0
    %1421 = vmatprep.subr.mxu0 0.0
    %1422 = vmatpush1.msra.mxu0 0.0
    %1423 = vmatprep.mubr.f32.mxu0 0.0
    %1424 = vmatmul.mubr.f32.gmra.mrb[0].mxu0 %v1351
    %v1425 = vpop.f32.mrb[0].mxu0
    %v1426 = vadd.f32 0.0, %v1425
    %v1427 = vpop.f32.mrb[0].mxu0
    %1428 = vmatprep.mubr.f32.mxu0 0.0
    %1429 = vmatmul.mubr.f32.gmra.mrb[0].mxu0 %v1354
    %v1430 = vpop.f32.mrb[0].mxu0
    %v1431 = vadd.f32 0.0, %v1430
    %v1432 = vpop.f32.mrb[0].mxu0
    %1433 = vdwg.mxu0
    %v1434 = vsel %vm1235, %v1426, 0.0
    %1435 = vadd.xlane.f32.xlu0 %v1434
    %v1436 = vpop.xlane.xlu0 %1435
    %v1437 = vsel %vm1331, %v1431, 0.0
    %1438 = vadd.xlane.f32.xlu0 %v1437
    %v1439 = vpop.xlane.xlu0 %1438
    %v1440 = vrcp.pop %v1436
    %v1441 = vmul.f32 %v1346, %v1440
    %v1442 = vrcp.pop %v1439
    %v1443 = vmul.f32 %v1348, %v1442
    %v1445 = vsel %vm1349, %v874, 0
    %v1448 = vsel %vm888, %v543, 0
    %1450 = vmatprep.subr.mxu0 0.0
    %1451 = vmatpush1.msra.mxu0 %v542
    %1452 = vmatprep.subr.mxu0 0.0
    %1453 = vmatpush1.msra.mxu0 %v1448
    %1454 = vmatprep.subr.mxu0 0.0
    %1455 = vmatpush1.msra.mxu0 0.0
    %1456 = vmatprep.subr.mxu0 0.0
    %1457 = vmatpush1.msra.mxu0 0.0
    %1458 = vmatprep.subr.mxu0 0.0
    %1459 = vmatpush1.msra.mxu0 0.0
    %1460 = vmatprep.subr.mxu0 0.0
    %1461 = vmatpush1.msra.mxu0 0.0
    %1462 = vmatprep.subr.mxu0 0.0
    %1463 = vmatpush1.msra.mxu0 0.0
    %1464 = vmatprep.subr.mxu0 0.0
    %1465 = vmatpush1.msra.mxu0 0.0
    %1466 = vmatprep.subr.mxu0 0.0
    %1467 = vmatpush1.msra.mxu0 0.0
    %1468 = vmatprep.subr.mxu0 0.0
    %1469 = vmatpush1.msra.mxu0 0.0
    %1470 = vmatprep.subr.mxu0 0.0
    %1471 = vmatpush1.msra.mxu0 0.0
    %1472 = vmatprep.subr.mxu0 0.0
    %1473 = vmatpush1.msra.mxu0 0.0
    %1474 = vmatprep.subr.mxu0 0.0
    %1475 = vmatpush1.msra.mxu0 0.0
    %1476 = vmatprep.subr.mxu0 0.0
    %1477 = vmatpush1.msra.mxu0 0.0
    %1478 = vmatprep.subr.mxu0 0.0
    %1479 = vmatpush1.msra.mxu0 0.0
    %1480 = vmatprep.subr.mxu0 0.0
    %1481 = vmatpush1.msra.mxu0 0.0
    %1482 = vmatprep.subr.mxu0 0.0
    %1483 = vmatpush1.msra.mxu0 0.0
    %1484 = vmatprep.subr.mxu0 0.0
    %1485 = vmatpush1.msra.mxu0 0.0
    %1486 = vmatprep.subr.mxu0 0.0
    %1487 = vmatpush1.msra.mxu0 0.0
    %1488 = vmatprep.subr.mxu0 0.0
    %1489 = vmatpush1.msra.mxu0 0.0
    %1490 = vmatprep.subr.mxu0 0.0
    %1491 = vmatpush1.msra.mxu0 0.0
    %1492 = vmatprep.subr.mxu0 0.0
    %1493 = vmatpush1.msra.mxu0 0.0
    %1494 = vmatprep.subr.mxu0 0.0
    %1495 = vmatpush1.msra.mxu0 0.0
    %1496 = vmatprep.subr.mxu0 0.0
    %1497 = vmatpush1.msra.mxu0 0.0
    %1498 = vmatprep.subr.mxu0 0.0
    %1499 = vmatpush1.msra.mxu0 0.0
    %1500 = vmatprep.subr.mxu0 0.0
    %1501 = vmatpush1.msra.mxu0 0.0
    %1502 = vmatprep.subr.mxu0 0.0
    %1503 = vmatpush1.msra.mxu0 0.0
    %1504 = vmatprep.subr.mxu0 0.0
    %1505 = vmatpush1.msra.mxu0 0.0
    %1506 = vmatprep.subr.mxu0 0.0
    %1507 = vmatpush1.msra.mxu0 0.0
    %1508 = vmatprep.subr.mxu0 0.0
    %1509 = vmatpush1.msra.mxu0 0.0
    %1510 = vmatprep.subr.mxu0 0.0
    %1511 = vmatpush1.msra.mxu0 0.0
    %1512 = vmatprep.subr.mxu0 0.0
    %1513 = vmatpush1.msra.mxu0 0.0
    %1514 = vmatprep.mubr.f32.mxu0 0.0
    %1515 = vmatmul.mubr.f32.gmra.mrb[0].mxu0 %v1445
    %v1516 = vpop.f32.mrb[0].mxu0
    %v1517 = vadd.f32 0.0, %v1516
    %v1518 = vpop.f32.mrb[0].mxu0
    %1519 = vdwg.mxu0
    %v1521 = vsel %vm888, %v545, 0
    %1523 = vmatprep.subr.mxu0 0.0
    %1524 = vmatpush1.msra.mxu0 %v544
    %1525 = vmatprep.subr.mxu0 0.0
    %1526 = vmatpush1.msra.mxu0 %v1521
    %1527 = vmatprep.subr.mxu0 0.0
    %1528 = vmatpush1.msra.mxu0 0.0
    %1529 = vmatprep.subr.mxu0 0.0
    %1530 = vmatpush1.msra.mxu0 0.0
    %1531 = vmatprep.subr.mxu0 0.0
    %1532 = vmatpush1.msra.mxu0 0.0
    %1533 = vmatprep.subr.mxu0 0.0
    %1534 = vmatpush1.msra.mxu0 0.0
    %1535 = vmatprep.subr.mxu0 0.0
    %1536 = vmatpush1.msra.mxu0 0.0
    %1537 = vmatprep.subr.mxu0 0.0
    %1538 = vmatpush1.msra.mxu0 0.0
    %1539 = vmatprep.subr.mxu0 0.0
    %1540 = vmatpush1.msra.mxu0 0.0
    %1541 = vmatprep.subr.mxu0 0.0
    %1542 = vmatpush1.msra.mxu0 0.0
    %1543 = vmatprep.subr.mxu0 0.0
    %1544 = vmatpush1.msra.mxu0 0.0
    %1545 = vmatprep.subr.mxu0 0.0
    %1546 = vmatpush1.msra.mxu0 0.0
    %1547 = vmatprep.subr.mxu0 0.0
    %1548 = vmatpush1.msra.mxu0 0.0
    %1549 = vmatprep.subr.mxu0 0.0
    %1550 = vmatpush1.msra.mxu0 0.0
    %1551 = vmatprep.subr.mxu0 0.0
    %1552 = vmatpush1.msra.mxu0 0.0
    %1553 = vmatprep.subr.mxu0 0.0
    %1554 = vmatpush1.msra.mxu0 0.0
    %1555 = vmatprep.subr.mxu0 0.0
    %1556 = vmatpush1.msra.mxu0 0.0
    %1557 = vmatprep.subr.mxu0 0.0
    %1558 = vmatpush1.msra.mxu0 0.0
    %1559 = vmatprep.subr.mxu0 0.0
    %1560 = vmatpush1.msra.mxu0 0.0
    %1561 = vmatprep.subr.mxu0 0.0
    %1562 = vmatpush1.msra.mxu0 0.0
    %1563 = vmatprep.subr.mxu0 0.0
    %1564 = vmatpush1.msra.mxu0 0.0
    %1565 = vmatprep.subr.mxu0 0.0
    %1566 = vmatpush1.msra.mxu0 0.0
    %1567 = vmatprep.subr.mxu0 0.0
    %1568 = vmatpush1.msra.mxu0 0.0
    %1569 = vmatprep.subr.mxu0 0.0
    %1570 = vmatpush1.msra.mxu0 0.0
    %1571 = vmatprep.subr.mxu0 0.0
    %1572 = vmatpush1.msra.mxu0 0.0
    %1573 = vmatprep.subr.mxu0 0.0
    %1574 = vmatpush1.msra.mxu0 0.0
    %1575 = vmatprep.subr.mxu0 0.0
    %1576 = vmatpush1.msra.mxu0 0.0
    %1577 = vmatprep.subr.mxu0 0.0
    %1578 = vmatpush1.msra.mxu0 0.0
    %1579 = vmatprep.subr.mxu0 0.0
    %1580 = vmatpush1.msra.mxu0 0.0
    %1581 = vmatprep.subr.mxu0 0.0
    %1582 = vmatpush1.msra.mxu0 0.0
    %1583 = vmatprep.subr.mxu0 0.0
    %1584 = vmatpush1.msra.mxu0 0.0
    %1585 = vmatprep.subr.mxu0 0.0
    %1586 = vmatpush1.msra.mxu0 0.0
    %1587 = vmatprep.mubr.f32.mxu0 0.0
    %1588 = vmatmul.mubr.f32.gmra.mrb[0].mxu0 %v1445
    %v1589 = vpop.f32.mrb[0].mxu0
    %v1590 = vadd.f32 0.0, %v1589
    %v1591 = vpop.f32.mrb[0].mxu0
    %1592 = vdwg.mxu0
    %v1594 = vsel %vm639, %v1232, 0
    %v1597 = vsel %vm639, %v1233, 0
    %1599 = vmatprep.subr.mxu0 0.0
    %1600 = vmatpush1.msra.mxu0 %v546
    %1601 = vmatprep.subr.mxu0 0.0
    %1602 = vmatpush1.msra.mxu0 0.0
    %1603 = vmatprep.subr.mxu0 0.0
    %1604 = vmatpush1.msra.mxu0 0.0
    %1605 = vmatprep.subr.mxu0 0.0
    %1606 = vmatpush1.msra.mxu0 0.0
    %1607 = vmatprep.subr.mxu0 0.0
    %1608 = vmatpush1.msra.mxu0 0.0
    %1609 = vmatprep.subr.mxu0 0.0
    %1610 = vmatpush1.msra.mxu0 0.0
    %1611 = vmatprep.subr.mxu0 0.0
    %1612 = vmatpush1.msra.mxu0 0.0
    %1613 = vmatprep.subr.mxu0 0.0
    %1614 = vmatpush1.msra.mxu0 0.0
    %1615 = vmatprep.subr.mxu0 0.0
    %1616 = vmatpush1.msra.mxu0 0.0
    %1617 = vmatprep.subr.mxu0 0.0
    %1618 = vmatpush1.msra.mxu0 0.0
    %1619 = vmatprep.subr.mxu0 0.0
    %1620 = vmatpush1.msra.mxu0 0.0
    %1621 = vmatprep.subr.mxu0 0.0
    %1622 = vmatpush1.msra.mxu0 0.0
    %1623 = vmatprep.subr.mxu0 0.0
    %1624 = vmatpush1.msra.mxu0 0.0
    %1625 = vmatprep.subr.mxu0 0.0
    %1626 = vmatpush1.msra.mxu0 0.0
    %1627 = vmatprep.subr.mxu0 0.0
    %1628 = vmatpush1.msra.mxu0 0.0
    %1629 = vmatprep.subr.mxu0 0.0
    %1630 = vmatpush1.msra.mxu0 0.0
    %1631 = vmatprep.subr.mxu0 0.0
    %1632 = vmatpush1.msra.mxu0 0.0
    %1633 = vmatprep.subr.mxu0 0.0
    %1634 = vmatpush1.msra.mxu0 0.0
    %1635 = vmatprep.subr.mxu0 0.0
    %1636 = vmatpush1.msra.mxu0 0.0
    %1637 = vmatprep.subr.mxu0 0.0
    %1638 = vmatpush1.msra.mxu0 0.0
    %1639 = vmatprep.subr.mxu0 0.0
    %1640 = vmatpush1.msra.mxu0 0.0
    %1641 = vmatprep.subr.mxu0 0.0
    %1642 = vmatpush1.msra.mxu0 0.0
    %1643 = vmatprep.subr.mxu0 0.0
    %1644 = vmatpush1.msra.mxu0 0.0
    %1645 = vmatprep.subr.mxu0 0.0
    %1646 = vmatpush1.msra.mxu0 0.0
    %1647 = vmatprep.subr.mxu0 0.0
    %1648 = vmatpush1.msra.mxu0 0.0
    %1649 = vmatprep.subr.mxu0 0.0
    %1650 = vmatpush1.msra.mxu0 0.0
    %1651 = vmatprep.subr.mxu0 0.0
    %1652 = vmatpush1.msra.mxu0 0.0
    %1653 = vmatprep.subr.mxu0 0.0
    %1654 = vmatpush1.msra.mxu0 0.0
    %1655 = vmatprep.subr.mxu0 0.0
    %1656 = vmatpush1.msra.mxu0 0.0
    %1657 = vmatprep.subr.mxu0 0.0
    %1658 = vmatpush1.msra.mxu0 0.0
    %1659 = vmatprep.subr.mxu0 0.0
    %1660 = vmatpush1.msra.mxu0 0.0
    %1661 = vmatprep.subr.mxu0 0.0
    %1662 = vmatpush1.msra.mxu0 0.0
    %1663 = vmatprep.mubr.f32.mxu0 0.0
    %1664 = vmatmul.mubr.f32.gmra.mrb[0].mxu0 %v1594
    %v1665 = vpop.f32.mrb[0].mxu0
    %v1666 = vadd.f32 0.0, %v1665
    %v1667 = vpop.f32.mrb[0].mxu0
    %1668 = vmatprep.mubr.f32.mxu0 0.0
    %1669 = vmatmul.mubr.f32.gmra.mrb[0].mxu0 %v1597
    %v1670 = vpop.f32.mrb[0].mxu0
    %v1671 = vadd.f32 0.0, %v1670
    %v1672 = vpop.f32.mrb[0].mxu0
    %1673 = vdwg.mxu0
    %1674 = vmatprep.subr.mxu0 0.0
    %1675 = vmatpush1.msra.mxu0 %v547
    %1676 = vmatprep.subr.mxu0 0.0
    %1677 = vmatpush1.msra.mxu0 0.0
    %1678 = vmatprep.subr.mxu0 0.0
    %1679 = vmatpush1.msra.mxu0 0.0
    %1680 = vmatprep.subr.mxu0 0.0
    %1681 = vmatpush1.msra.mxu0 0.0
    %1682 = vmatprep.subr.mxu0 0.0
    %1683 = vmatpush1.msra.mxu0 0.0
    %1684 = vmatprep.subr.mxu0 0.0
    %1685 = vmatpush1.msra.mxu0 0.0
    %1686 = vmatprep.subr.mxu0 0.0
    %1687 = vmatpush1.msra.mxu0 0.0
    %1688 = vmatprep.subr.mxu0 0.0
    %1689 = vmatpush1.msra.mxu0 0.0
    %1690 = vmatprep.subr.mxu0 0.0
    %1691 = vmatpush1.msra.mxu0 0.0
    %1692 = vmatprep.subr.mxu0 0.0
    %1693 = vmatpush1.msra.mxu0 0.0
    %1694 = vmatprep.subr.mxu0 0.0
    %1695 = vmatpush1.msra.mxu0 0.0
    %1696 = vmatprep.subr.mxu0 0.0
    %1697 = vmatpush1.msra.mxu0 0.0
    %1698 = vmatprep.subr.mxu0 0.0
    %1699 = vmatpush1.msra.mxu0 0.0
    %1700 = vmatprep.subr.mxu0 0.0
    %1701 = vmatpush1.msra.mxu0 0.0
    %1702 = vmatprep.subr.mxu0 0.0
    %1703 = vmatpush1.msra.mxu0 0.0
    %1704 = vmatprep.subr.mxu0 0.0
    %1705 = vmatpush1.msra.mxu0 0.0
    %1706 = vmatprep.subr.mxu0 0.0
    %1707 = vmatpush1.msra.mxu0 0.0
    %1708 = vmatprep.subr.mxu0 0.0
    %1709 = vmatpush1.msra.mxu0 0.0
    %1710 = vmatprep.subr.mxu0 0.0
    %1711 = vmatpush1.msra.mxu0 0.0
    %1712 = vmatprep.subr.mxu0 0.0
    %1713 = vmatpush1.msra.mxu0 0.0
    %1714 = vmatprep.subr.mxu0 0.0
    %1715 = vmatpush1.msra.mxu0 0.0
    %1716 = vmatprep.subr.mxu0 0.0
    %1717 = vmatpush1.msra.mxu0 0.0
    %1718 = vmatprep.subr.mxu0 0.0
    %1719 = vmatpush1.msra.mxu0 0.0
    %1720 = vmatprep.subr.mxu0 0.0
    %1721 = vmatpush1.msra.mxu0 0.0
    %1722 = vmatprep.subr.mxu0 0.0
    %1723 = vmatpush1.msra.mxu0 0.0
    %1724 = vmatprep.subr.mxu0 0.0
    %1725 = vmatpush1.msra.mxu0 0.0
    %1726 = vmatprep.subr.mxu0 0.0
    %1727 = vmatpush1.msra.mxu0 0.0
    %1728 = vmatprep.subr.mxu0 0.0
    %1729 = vmatpush1.msra.mxu0 0.0
    %1730 = vmatprep.subr.mxu0 0.0
    %1731 = vmatpush1.msra.mxu0 0.0
    %1732 = vmatprep.subr.mxu0 0.0
    %1733 = vmatpush1.msra.mxu0 0.0
    %1734 = vmatprep.subr.mxu0 0.0
    %1735 = vmatpush1.msra.mxu0 0.0
    %1736 = vmatprep.subr.mxu0 0.0
    %1737 = vmatpush1.msra.mxu0 0.0
    %1738 = vmatprep.mubr.f32.mxu0 0.0
    %1739 = vmatmul.mubr.f32.gmra.mrb[0].mxu0 %v1594
    %v1740 = vpop.f32.mrb[0].mxu0
    %v1741 = vadd.f32 0.0, %v1740
    %v1742 = vpop.f32.mrb[0].mxu0
    %1743 = vmatprep.mubr.f32.mxu0 0.0
    %1744 = vmatmul.mubr.f32.gmra.mrb[0].mxu0 %v1597
    %v1745 = vpop.f32.mrb[0].mxu0
    %v1746 = vadd.f32 0.0, %v1745
    %v1747 = vpop.f32.mrb[0].mxu0
    %1748 = vdwg.mxu0
    %v1750 = vsel %vm1349, %v482, 0
    %v1753 = vsel %vm1349, %v483, 0
    %v1756 = vsel %vm888, %v1443, 0
    %1758 = vmatprep.subr.mxu0 0.0
    %1759 = vmatpush1.msra.mxu0 %v1441
    %1760 = vmatprep.subr.mxu0 0.0
    %1761 = vmatpush1.msra.mxu0 %v1756
    %1762 = vmatprep.subr.mxu0 0.0
    %1763 = vmatpush1.msra.mxu0 0.0
    %1764 = vmatprep.subr.mxu0 0.0
    %1765 = vmatpush1.msra.mxu0 0.0
    %1766 = vmatprep.subr.mxu0 0.0
    %1767 = vmatpush1.msra.mxu0 0.0
    %1768 = vmatprep.subr.mxu0 0.0
    %1769 = vmatpush1.msra.mxu0 0.0
    %1770 = vmatprep.subr.mxu0 0.0
    %1771 = vmatpush1.msra.mxu0 0.0
    %1772 = vmatprep.subr.mxu0 0.0
    %1773 = vmatpush1.msra.mxu0 0.0
    %1774 = vmatprep.subr.mxu0 0.0
    %1775 = vmatpush1.msra.mxu0 0.0
    %1776 = vmatprep.subr.mxu0 0.0
    %1777 = vmatpush1.msra.mxu0 0.0
    %1778 = vmatprep.subr.mxu0 0.0
    %1779 = vmatpush1.msra.mxu0 0.0
    %1780 = vmatprep.subr.mxu0 0.0
    %1781 = vmatpush1.msra.mxu0 0.0
    %1782 = vmatprep.subr.mxu0 0.0
    %1783 = vmatpush1.msra.mxu0 0.0
    %1784 = vmatprep.subr.mxu0 0.0
    %1785 = vmatpush1.msra.mxu0 0.0
    %1786 = vmatprep.subr.mxu0 0.0
    %1787 = vmatpush1.msra.mxu0 0.0
    %1788 = vmatprep.subr.mxu0 0.0
    %1789 = vmatpush1.msra.mxu0 0.0
    %1790 = vmatprep.subr.mxu0 0.0
    %1791 = vmatpush1.msra.mxu0 0.0
    %1792 = vmatprep.subr.mxu0 0.0
    %1793 = vmatpush1.msra.mxu0 0.0
    %1794 = vmatprep.subr.mxu0 0.0
    %1795 = vmatpush1.msra.mxu0 0.0
    %1796 = vmatprep.subr.mxu0 0.0
    %1797 = vmatpush1.msra.mxu0 0.0
    %1798 = vmatprep.subr.mxu0 0.0
    %1799 = vmatpush1.msra.mxu0 0.0
    %1800 = vmatprep.subr.mxu0 0.0
    %1801 = vmatpush1.msra.mxu0 0.0
    %1802 = vmatprep.subr.mxu0 0.0
    %1803 = vmatpush1.msra.mxu0 0.0
    %1804 = vmatprep.subr.mxu0 0.0
    %1805 = vmatpush1.msra.mxu0 0.0
    %1806 = vmatprep.subr.mxu0 0.0
    %1807 = vmatpush1.msra.mxu0 0.0
    %1808 = vmatprep.subr.mxu0 0.0
    %1809 = vmatpush1.msra.mxu0 0.0
    %1810 = vmatprep.subr.mxu0 0.0
    %1811 = vmatpush1.msra.mxu0 0.0
    %1812 = vmatprep.subr.mxu0 0.0
    %1813 = vmatpush1.msra.mxu0 0.0
    %1814 = vmatprep.subr.mxu0 0.0
    %1815 = vmatpush1.msra.mxu0 0.0
    %1816 = vmatprep.subr.mxu0 0.0
    %1817 = vmatpush1.msra.mxu0 0.0
    %1818 = vmatprep.subr.mxu0 0.0
    %1819 = vmatpush1.msra.mxu0 0.0
    %1820 = vmatprep.subr.mxu0 0.0
    %1821 = vmatpush1.msra.mxu0 0.0
    %1822 = vmatprep.mubr.f32.mxu0 0.0
    %1823 = vmatmul.mubr.f32.gmra.mrb[0].mxu0 %v1750
    %v1824 = vpop.f32.mrb[0].mxu0
    %v1825 = vadd.f32 0.0, %v1824
    %v1826 = vpop.f32.mrb[0].mxu0
    %1827 = vmatprep.mubr.f32.mxu0 0.0
    %1828 = vmatmul.mubr.f32.gmra.mrb[0].mxu0 %v1753
    %v1829 = vpop.f32.mrb[0].mxu0
    %v1830 = vadd.f32 0.0, %v1829
    %v1831 = vpop.f32.mrb[0].mxu0
    %1832 = vdwg.mxu0
    %v1833 = vmul.f32 %v1825, %v486
    %v1834 = vmul.f32 %v1830, %v487
    %v1835 = vsel %vm1235, %v1833, 0.0
    %1836 = vadd.xlane.f32.xlu0 %v1835
    %v1837 = vpop.xlane.xlu0 %1836
    %v1838 = vsel %vm1331, %v1834, 0.0
    %1839 = vadd.xlane.f32.xlu0 %v1838
    %v1840 = vpop.xlane.xlu0 %1839
    %v1842 = vsel %vm639, %v476, 0
    %v1845 = vsel %vm639, %v477, 0
    %1847 = vmatprep.subr.mxu0 0.0
    %1848 = vmatpush1.msra.mxu0 %v1325
    %1849 = vmatprep.subr.mxu0 0.0
    %1850 = vmatpush1.msra.mxu0 0.0
    %1851 = vmatprep.subr.mxu0 0.0
    %1852 = vmatpush1.msra.mxu0 0.0
    %1853 = vmatprep.subr.mxu0 0.0
    %1854 = vmatpush1.msra.mxu0 0.0
    %1855 = vmatprep.subr.mxu0 0.0
    %1856 = vmatpush1.msra.mxu0 0.0
    %1857 = vmatprep.subr.mxu0 0.0
    %1858 = vmatpush1.msra.mxu0 0.0
    %1859 = vmatprep.subr.mxu0 0.0
    %1860 = vmatpush1.msra.mxu0 0.0
    %1861 = vmatprep.subr.mxu0 0.0
    %1862 = vmatpush1.msra.mxu0 0.0
    %1863 = vmatprep.subr.mxu0 0.0
    %1864 = vmatpush1.msra.mxu0 0.0
    %1865 = vmatprep.subr.mxu0 0.0
    %1866 = vmatpush1.msra.mxu0 0.0
    %1867 = vmatprep.subr.mxu0 0.0
    %1868 = vmatpush1.msra.mxu0 0.0
    %1869 = vmatprep.subr.mxu0 0.0
    %1870 = vmatpush1.msra.mxu0 0.0
    %1871 = vmatprep.subr.mxu0 0.0
    %1872 = vmatpush1.msra.mxu0 0.0
    %1873 = vmatprep.subr.mxu0 0.0
    %1874 = vmatpush1.msra.mxu0 0.0
    %1875 = vmatprep.subr.mxu0 0.0
    %1876 = vmatpush1.msra.mxu0 0.0
    %1877 = vmatprep.subr.mxu0 0.0
    %1878 = vmatpush1.msra.mxu0 0.0
    %1879 = vmatprep.subr.mxu0 0.0
    %1880 = vmatpush1.msra.mxu0 0.0
    %1881 = vmatprep.subr.mxu0 0.0
    %1882 = vmatpush1.msra.mxu0 0.0
    %1883 = vmatprep.subr.mxu0 0.0
    %1884 = vmatpush1.msra.mxu0 0.0
    %1885 = vmatprep.subr.mxu0 0.0
    %1886 = vmatpush1.msra.mxu0 0.0
    %1887 = vmatprep.subr.mxu0 0.0
    %1888 = vmatpush1.msra.mxu0 0.0
    %1889 = vmatprep.subr.mxu0 0.0
    %1890 = vmatpush1.msra.mxu0 0.0
    %1891 = vmatprep.subr.mxu0 0.0
    %1892 = vmatpush1.msra.mxu0 0.0
    %1893 = vmatprep.subr.mxu0 0.0
    %1894 = vmatpush1.msra.mxu0 0.0
    %1895 = vmatprep.subr.mxu0 0.0
    %1896 = vmatpush1.msra.mxu0 0.0
    %1897 = vmatprep.subr.mxu0 0.0
    %1898 = vmatpush1.msra.mxu0 0.0
    %1899 = vmatprep.subr.mxu0 0.0
    %1900 = vmatpush1.msra.mxu0 0.0
    %1901 = vmatprep.subr.mxu0 0.0
    %1902 = vmatpush1.msra.mxu0 0.0
    %1903 = vmatprep.subr.mxu0 0.0
    %1904 = vmatpush1.msra.mxu0 0.0
    %1905 = vmatprep.subr.mxu0 0.0
    %1906 = vmatpush1.msra.mxu0 0.0
    %1907 = vmatprep.subr.mxu0 0.0
    %1908 = vmatpush1.msra.mxu0 0.0
    %1909 = vmatprep.subr.mxu0 0.0
    %1910 = vmatpush1.msra.mxu0 0.0
    %1911 = vmatprep.mubr.f32.mxu0 0.0
    %1912 = vmatmul.mubr.f32.gmra.mrb[0].mxu0 %v1842
    %v1913 = vpop.f32.mrb[0].mxu0
    %v1914 = vadd.f32 0.0, %v1913
    %v1915 = vpop.f32.mrb[0].mxu0
    %1916 = vmatprep.mubr.f32.mxu0 0.0
    %1917 = vmatmul.mubr.f32.gmra.mrb[0].mxu0 %v1845
    %v1918 = vpop.f32.mrb[0].mxu0
    %v1919 = vadd.f32 0.0, %v1918
    %v1920 = vpop.f32.mrb[0].mxu0
    %1921 = vdwg.mxu0
    %v1922 = vmul.f32 %v1914, %v480
    %v1923 = vmul.f32 %v1919, %v481
    %v1924 = vsel %vm1235, %v1922, 0.0
    %1925 = vadd.xlane.f32.xlu0 %v1924
    %v1926 = vpop.xlane.xlu0 %1925
    %v1927 = vsel %vm1331, %v1923, 0.0
    %1928 = vadd.xlane.f32.xlu0 %v1927
    %v1929 = vpop.xlane.xlu0 %1928
    %v1931 = vsel %vm639, %v490, 0
    %v1934 = vsel %vm639, %v491, 0
    %1936 = vmatprep.subr.mxu0 0.0
    %1937 = vmatpush1.msra.mxu0 %v1590
    %1938 = vmatprep.subr.mxu0 0.0
    %1939 = vmatpush1.msra.mxu0 0.0
    %1940 = vmatprep.subr.mxu0 0.0
    %1941 = vmatpush1.msra.mxu0 0.0
    %1942 = vmatprep.subr.mxu0 0.0
    %1943 = vmatpush1.msra.mxu0 0.0
    %1944 = vmatprep.subr.mxu0 0.0
    %1945 = vmatpush1.msra.mxu0 0.0
    %1946 = vmatprep.subr.mxu0 0.0
    %1947 = vmatpush1.msra.mxu0 0.0
    %1948 = vmatprep.subr.mxu0 0.0
    %1949 = vmatpush1.msra.mxu0 0.0
    %1950 = vmatprep.subr.mxu0 0.0
    %1951 = vmatpush1.msra.mxu0 0.0
    %1952 = vmatprep.subr.mxu0 0.0
    %1953 = vmatpush1.msra.mxu0 0.0
    %1954 = vmatprep.subr.mxu0 0.0
    %1955 = vmatpush1.msra.mxu0 0.0
    %1956 = vmatprep.subr.mxu0 0.0
    %1957 = vmatpush1.msra.mxu0 0.0
    %1958 = vmatprep.subr.mxu0 0.0
    %1959 = vmatpush1.msra.mxu0 0.0
    %1960 = vmatprep.subr.mxu0 0.0
    %1961 = vmatpush1.msra.mxu0 0.0
    %1962 = vmatprep.subr.mxu0 0.0
    %1963 = vmatpush1.msra.mxu0 0.0
    %1964 = vmatprep.subr.mxu0 0.0
    %1965 = vmatpush1.msra.mxu0 0.0
    %1966 = vmatprep.subr.mxu0 0.0
    %1967 = vmatpush1.msra.mxu0 0.0
    %1968 = vmatprep.subr.mxu0 0.0
    %1969 = vmatpush1.msra.mxu0 0.0
    %1970 = vmatprep.subr.mxu0 0.0
    %1971 = vmatpush1.msra.mxu0 0.0
    %1972 = vmatprep.subr.mxu0 0.0
    %1973 = vmatpush1.msra.mxu0 0.0
    %1974 = vmatprep.subr.mxu0 0.0
    %1975 = vmatpush1.msra.mxu0 0.0
    %1976 = vmatprep.subr.mxu0 0.0
    %1977 = vmatpush1.msra.mxu0 0.0
    %1978 = vmatprep.subr.mxu0 0.0
    %1979 = vmatpush1.msra.mxu0 0.0
    %1980 = vmatprep.subr.mxu0 0.0
    %1981 = vmatpush1.msra.mxu0 0.0
    %1982 = vmatprep.subr.mxu0 0.0
    %1983 = vmatpush1.msra.mxu0 0.0
    %1984 = vmatprep.subr.mxu0 0.0
    %1985 = vmatpush1.msra.mxu0 0.0
    %1986 = vmatprep.subr.mxu0 0.0
    %1987 = vmatpush1.msra.mxu0 0.0
    %1988 = vmatprep.subr.mxu0 0.0
    %1989 = vmatpush1.msra.mxu0 0.0
    %1990 = vmatprep.subr.mxu0 0.0
    %1991 = vmatpush1.msra.mxu0 0.0
    %1992 = vmatprep.subr.mxu0 0.0
    %1993 = vmatpush1.msra.mxu0 0.0
    %1994 = vmatprep.subr.mxu0 0.0
    %1995 = vmatpush1.msra.mxu0 0.0
    %1996 = vmatprep.subr.mxu0 0.0
    %1997 = vmatpush1.msra.mxu0 0.0
    %1998 = vmatprep.subr.mxu0 0.0
    %1999 = vmatpush1.msra.mxu0 0.0
    %2000 = vmatprep.mubr.f32.mxu0 0.0
    %2001 = vmatmul.mubr.f32.gmra.mrb[0].mxu0 %v1931
    %v2002 = vpop.f32.mrb[0].mxu0
    %v2003 = vadd.f32 0.0, %v2002
    %v2004 = vpop.f32.mrb[0].mxu0
    %2005 = vmatprep.mubr.f32.mxu0 0.0
    %2006 = vmatmul.mubr.f32.gmra.mrb[0].mxu0 %v1934
    %v2007 = vpop.f32.mrb[0].mxu0
    %v2008 = vadd.f32 0.0, %v2007
    %v2009 = vpop.f32.mrb[0].mxu0
    %2010 = vdwg.mxu0
    %v2012 = vsel %vm639, %v488, 0
    %v2015 = vsel %vm639, %v489, 0
    %2017 = vmatprep.subr.mxu0 0.0
    %2018 = vmatpush1.msra.mxu0 %v1517
    %2019 = vmatprep.subr.mxu0 0.0
    %2020 = vmatpush1.msra.mxu0 0.0
    %2021 = vmatprep.subr.mxu0 0.0
    %2022 = vmatpush1.msra.mxu0 0.0
    %2023 = vmatprep.subr.mxu0 0.0
    %2024 = vmatpush1.msra.mxu0 0.0
    %2025 = vmatprep.subr.mxu0 0.0
    %2026 = vmatpush1.msra.mxu0 0.0
    %2027 = vmatprep.subr.mxu0 0.0
    %2028 = vmatpush1.msra.mxu0 0.0
    %2029 = vmatprep.subr.mxu0 0.0
    %2030 = vmatpush1.msra.mxu0 0.0
    %2031 = vmatprep.subr.mxu0 0.0
    %2032 = vmatpush1.msra.mxu0 0.0
    %2033 = vmatprep.subr.mxu0 0.0
    %2034 = vmatpush1.msra.mxu0 0.0
    %2035 = vmatprep.subr.mxu0 0.0
    %2036 = vmatpush1.msra.mxu0 0.0
    %2037 = vmatprep.subr.mxu0 0.0
    %2038 = vmatpush1.msra.mxu0 0.0
    %2039 = vmatprep.subr.mxu0 0.0
    %2040 = vmatpush1.msra.mxu0 0.0
    %2041 = vmatprep.subr.mxu0 0.0
    %2042 = vmatpush1.msra.mxu0 0.0
    %2043 = vmatprep.subr.mxu0 0.0
    %2044 = vmatpush1.msra.mxu0 0.0
    %2045 = vmatprep.subr.mxu0 0.0
    %2046 = vmatpush1.msra.mxu0 0.0
    %2047 = vmatprep.subr.mxu0 0.0
    %2048 = vmatpush1.msra.mxu0 0.0
    %2049 = vmatprep.subr.mxu0 0.0
    %2050 = vmatpush1.msra.mxu0 0.0
    %2051 = vmatprep.subr.mxu0 0.0
    %2052 = vmatpush1.msra.mxu0 0.0
    %2053 = vmatprep.subr.mxu0 0.0
    %2054 = vmatpush1.msra.mxu0 0.0
    %2055 = vmatprep.subr.mxu0 0.0
    %2056 = vmatpush1.msra.mxu0 0.0
    %2057 = vmatprep.subr.mxu0 0.0
    %2058 = vmatpush1.msra.mxu0 0.0
    %2059 = vmatprep.subr.mxu0 0.0
    %2060 = vmatpush1.msra.mxu0 0.0
    %2061 = vmatprep.subr.mxu0 0.0
    %2062 = vmatpush1.msra.mxu0 0.0
    %2063 = vmatprep.subr.mxu0 0.0
    %2064 = vmatpush1.msra.mxu0 0.0
    %2065 = vmatprep.subr.mxu0 0.0
    %2066 = vmatpush1.msra.mxu0 0.0
    %2067 = vmatprep.subr.mxu0 0.0
    %2068 = vmatpush1.msra.mxu0 0.0
    %2069 = vmatprep.subr.mxu0 0.0
    %2070 = vmatpush1.msra.mxu0 0.0
    %2071 = vmatprep.subr.mxu0 0.0
    %2072 = vmatpush1.msra.mxu0 0.0
    %2073 = vmatprep.subr.mxu0 0.0
    %2074 = vmatpush1.msra.mxu0 0.0
    %2075 = vmatprep.subr.mxu0 0.0
    %2076 = vmatpush1.msra.mxu0 0.0
    %2077 = vmatprep.subr.mxu0 0.0
    %2078 = vmatpush1.msra.mxu0 0.0
    %2079 = vmatprep.subr.mxu0 0.0
    %2080 = vmatpush1.msra.mxu0 0.0
    %2081 = vmatprep.mubr.f32.mxu0 0.0
    %2082 = vmatmul.mubr.f32.gmra.mrb[0].mxu0 %v2012
    %v2083 = vpop.f32.mrb[0].mxu0
    %v2084 = vadd.f32 %v2003, %v2083
    %v2085 = vpop.f32.mrb[0].mxu0
    %2086 = vmatprep.mubr.f32.mxu0 0.0
    %2087 = vmatmul.mubr.f32.gmra.mrb[0].mxu0 %v2015
    %v2088 = vpop.f32.mrb[0].mxu0
    %v2089 = vadd.f32 %v2008, %v2088
    %v2090 = vpop.f32.mrb[0].mxu0
    %2091 = vdwg.mxu0
    %v2093 = vsel %vm1349, %v498, 0
    %v2096 = vsel %vm1349, %v499, 0
    %v2099 = vsel %vm888, %v1746, 0
    %2101 = vmatprep.subr.mxu0 0.0
    %2102 = vmatpush1.msra.mxu0 %v1741
    %2103 = vmatprep.subr.mxu0 0.0
    %2104 = vmatpush1.msra.mxu0 %v2099
    %2105 = vmatprep.subr.mxu0 0.0
    %2106 = vmatpush1.msra.mxu0 0.0
    %2107 = vmatprep.subr.mxu0 0.0
    %2108 = vmatpush1.msra.mxu0 0.0
    %2109 = vmatprep.subr.mxu0 0.0
    %2110 = vmatpush1.msra.mxu0 0.0
    %2111 = vmatprep.subr.mxu0 0.0
    %2112 = vmatpush1.msra.mxu0 0.0
    %2113 = vmatprep.subr.mxu0 0.0
    %2114 = vmatpush1.msra.mxu0 0.0
    %2115 = vmatprep.subr.mxu0 0.0
    %2116 = vmatpush1.msra.mxu0 0.0
    %2117 = vmatprep.subr.mxu0 0.0
    %2118 = vmatpush1.msra.mxu0 0.0
    %2119 = vmatprep.subr.mxu0 0.0
    %2120 = vmatpush1.msra.mxu0 0.0
    %2121 = vmatprep.subr.mxu0 0.0
    %2122 = vmatpush1.msra.mxu0 0.0
    %2123 = vmatprep.subr.mxu0 0.0
    %2124 = vmatpush1.msra.mxu0 0.0
    %2125 = vmatprep.subr.mxu0 0.0
    %2126 = vmatpush1.msra.mxu0 0.0
    %2127 = vmatprep.subr.mxu0 0.0
    %2128 = vmatpush1.msra.mxu0 0.0
    %2129 = vmatprep.subr.mxu0 0.0
    %2130 = vmatpush1.msra.mxu0 0.0
    %2131 = vmatprep.subr.mxu0 0.0
    %2132 = vmatpush1.msra.mxu0 0.0
    %2133 = vmatprep.subr.mxu0 0.0
    %2134 = vmatpush1.msra.mxu0 0.0
    %2135 = vmatprep.subr.mxu0 0.0
    %2136 = vmatpush1.msra.mxu0 0.0
    %2137 = vmatprep.subr.mxu0 0.0
    %2138 = vmatpush1.msra.mxu0 0.0
    %2139 = vmatprep.subr.mxu0 0.0
    %2140 = vmatpush1.msra.mxu0 0.0
    %2141 = vmatprep.subr.mxu0 0.0
    %2142 = vmatpush1.msra.mxu0 0.0
    %2143 = vmatprep.subr.mxu0 0.0
    %2144 = vmatpush1.msra.mxu0 0.0
    %2145 = vmatprep.subr.mxu0 0.0
    %2146 = vmatpush1.msra.mxu0 0.0
    %2147 = vmatprep.subr.mxu0 0.0
    %2148 = vmatpush1.msra.mxu0 0.0
    %2149 = vmatprep.subr.mxu0 0.0
    %2150 = vmatpush1.msra.mxu0 0.0
    %2151 = vmatprep.subr.mxu0 0.0
    %2152 = vmatpush1.msra.mxu0 0.0
    %2153 = vmatprep.subr.mxu0 0.0
    %2154 = vmatpush1.msra.mxu0 0.0
    %2155 = vmatprep.subr.mxu0 0.0
    %2156 = vmatpush1.msra.mxu0 0.0
    %2157 = vmatprep.subr.mxu0 0.0
    %2158 = vmatpush1.msra.mxu0 0.0
    %2159 = vmatprep.subr.mxu0 0.0
    %2160 = vmatpush1.msra.mxu0 0.0
    %2161 = vmatprep.subr.mxu0 0.0
    %2162 = vmatpush1.msra.mxu0 0.0
    %2163 = vmatprep.subr.mxu0 0.0
    %2164 = vmatpush1.msra.mxu0 0.0
    %2165 = vmatprep.mubr.f32.mxu0 0.0
    %2166 = vmatmul.mubr.f32.gmra.mrb[0].mxu0 %v2093
    %v2167 = vpop.f32.mrb[0].mxu0
    %v2168 = vadd.f32 0.0, %v2167
    %v2169 = vpop.f32.mrb[0].mxu0
    %2170 = vmatprep.mubr.f32.mxu0 0.0
    %2171 = vmatmul.mubr.f32.gmra.mrb[0].mxu0 %v2096
    %v2172 = vpop.f32.mrb[0].mxu0
    %v2173 = vadd.f32 0.0, %v2172
    %v2174 = vpop.f32.mrb[0].mxu0
    %2175 = vdwg.mxu0
    %v2177 = vsel %vm1349, %v496, 0
    %v2180 = vsel %vm1349, %v497, 0
    %v2183 = vsel %vm888, %v1671, 0
    %2185 = vmatprep.subr.mxu0 0.0
    %2186 = vmatpush1.msra.mxu0 %v1666
    %2187 = vmatprep.subr.mxu0 0.0
    %2188 = vmatpush1.msra.mxu0 %v2183
    %2189 = vmatprep.subr.mxu0 0.0
    %2190 = vmatpush1.msra.mxu0 0.0
    %2191 = vmatprep.subr.mxu0 0.0
    %2192 = vmatpush1.msra.mxu0 0.0
    %2193 = vmatprep.subr.mxu0 0.0
    %2194 = vmatpush1.msra.mxu0 0.0
    %2195 = vmatprep.subr.mxu0 0.0
    %2196 = vmatpush1.msra.mxu0 0.0
    %2197 = vmatprep.subr.mxu0 0.0
    %2198 = vmatpush1.msra.mxu0 0.0
    %2199 = vmatprep.subr.mxu0 0.0
    %2200 = vmatpush1.msra.mxu0 0.0
    %2201 = vmatprep.subr.mxu0 0.0
    %2202 = vmatpush1.msra.mxu0 0.0
    %2203 = vmatprep.subr.mxu0 0.0
    %2204 = vmatpush1.msra.mxu0 0.0
    %2205 = vmatprep.subr.mxu0 0.0
    %2206 = vmatpush1.msra.mxu0 0.0
    %2207 = vmatprep.subr.mxu0 0.0
    %2208 = vmatpush1.msra.mxu0 0.0
    %2209 = vmatprep.subr.mxu0 0.0
    %2210 = vmatpush1.msra.mxu0 0.0
    %2211 = vmatprep.subr.mxu0 0.0
    %2212 = vmatpush1.msra.mxu0 0.0
    %2213 = vmatprep.subr.mxu0 0.0
    %2214 = vmatpush1.msra.mxu0 0.0
    %2215 = vmatprep.subr.mxu0 0.0
    %2216 = vmatpush1.msra.mxu0 0.0
    %2217 = vmatprep.subr.mxu0 0.0
    %2218 = vmatpush1.msra.mxu0 0.0
    %2219 = vmatprep.subr.mxu0 0.0
    %2220 = vmatpush1.msra.mxu0 0.0
    %2221 = vmatprep.subr.mxu0 0.0
    %2222 = vmatpush1.msra.mxu0 0.0
    %2223 = vmatprep.subr.mxu0 0.0
    %2224 = vmatpush1.msra.mxu0 0.0
    %2225 = vmatprep.subr.mxu0 0.0
    %2226 = vmatpush1.msra.mxu0 0.0
    %2227 = vmatprep.subr.mxu0 0.0
    %2228 = vmatpush1.msra.mxu0 0.0
    %2229 = vmatprep.subr.mxu0 0.0
    %2230 = vmatpush1.msra.mxu0 0.0
    %2231 = vmatprep.subr.mxu0 0.0
    %2232 = vmatpush1.msra.mxu0 0.0
    %2233 = vmatprep.subr.mxu0 0.0
    %2234 = vmatpush1.msra.mxu0 0.0
    %2235 = vmatprep.subr.mxu0 0.0
    %2236 = vmatpush1.msra.mxu0 0.0
    %2237 = vmatprep.subr.mxu0 0.0
    %2238 = vmatpush1.msra.mxu0 0.0
    %2239 = vmatprep.subr.mxu0 0.0
    %2240 = vmatpush1.msra.mxu0 0.0
    %2241 = vmatprep.subr.mxu0 0.0
    %2242 = vmatpush1.msra.mxu0 0.0
    %2243 = vmatprep.subr.mxu0 0.0
    %2244 = vmatpush1.msra.mxu0 0.0
    %2245 = vmatprep.subr.mxu0 0.0
    %2246 = vmatpush1.msra.mxu0 0.0
    %2247 = vmatprep.subr.mxu0 0.0
    %2248 = vmatpush1.msra.mxu0 0.0
    %2249 = vmatprep.mubr.f32.mxu0 0.0
    %2250 = vmatmul.mubr.f32.gmra.mrb[0].mxu0 %v2177
    %v2251 = vpop.f32.mrb[0].mxu0
    %v2252 = vadd.f32 %v2168, %v2251
    %v2253 = vpop.f32.mrb[0].mxu0
    %2254 = vmatprep.mubr.f32.mxu0 0.0
    %2255 = vmatmul.mubr.f32.gmra.mrb[0].mxu0 %v2180
    %v2256 = vpop.f32.mrb[0].mxu0
    %v2257 = vadd.f32 %v2173, %v2256
    %v2258 = vpop.f32.mrb[0].mxu0
    %2259 = vdwg.mxu0
    %v2260 = vmul.f32 %v1837, %v2084
    %v2261 = vmul.f32 %v1840, %v2089
    %v2262 = vmul.f32 %v1926, %v2252
    %v2263 = vmul.f32 %v1929, %v2257
    %v2264 = vadd.f32 %v2262, 0.0
    %v2265 = vadd.f32 %v2263, 0.0
    %v2267 = vsel %vm1349, %v484, 0
    %v2270 = vsel %vm1349, %v485, 0
    %2272 = vmatprep.subr.mxu0 0.0
    %2273 = vmatpush1.msra.mxu0 %v1441
    %2274 = vmatprep.subr.mxu0 0.0
    %2275 = vmatpush1.msra.mxu0 %v1756
    %2276 = vmatprep.subr.mxu0 0.0
    %2277 = vmatpush1.msra.mxu0 0.0
    %2278 = vmatprep.subr.mxu0 0.0
    %2279 = vmatpush1.msra.mxu0 0.0
    %2280 = vmatprep.subr.mxu0 0.0
    %2281 = vmatpush1.msra.mxu0 0.0
    %2282 = vmatprep.subr.mxu0 0.0
    %2283 = vmatpush1.msra.mxu0 0.0
    %2284 = vmatprep.subr.mxu0 0.0
    %2285 = vmatpush1.msra.mxu0 0.0
    %2286 = vmatprep.subr.mxu0 0.0
    %2287 = vmatpush1.msra.mxu0 0.0
    %2288 = vmatprep.subr.mxu0 0.0
    %2289 = vmatpush1.msra.mxu0 0.0
    %2290 = vmatprep.subr.mxu0 0.0
    %2291 = vmatpush1.msra.mxu0 0.0
    %2292 = vmatprep.subr.mxu0 0.0
    %2293 = vmatpush1.msra.mxu0 0.0
    %2294 = vmatprep.subr.mxu0 0.0
    %2295 = vmatpush1.msra.mxu0 0.0
    %2296 = vmatprep.subr.mxu0 0.0
    %2297 = vmatpush1.msra.mxu0 0.0
    %2298 = vmatprep.subr.mxu0 0.0
    %2299 = vmatpush1.msra.mxu0 0.0
    %2300 = vmatprep.subr.mxu0 0.0
    %2301 = vmatpush1.msra.mxu0 0.0
    %2302 = vmatprep.subr.mxu0 0.0
    %2303 = vmatpush1.msra.mxu0 0.0
    %2304 = vmatprep.subr.mxu0 0.0
    %2305 = vmatpush1.msra.mxu0 0.0
    %2306 = vmatprep.subr.mxu0 0.0
    %2307 = vmatpush1.msra.mxu0 0.0
    %2308 = vmatprep.subr.mxu0 0.0
    %2309 = vmatpush1.msra.mxu0 0.0
    %2310 = vmatprep.subr.mxu0 0.0
    %2311 = vmatpush1.msra.mxu0 0.0
    %2312 = vmatprep.subr.mxu0 0.0
    %2313 = vmatpush1.msra.mxu0 0.0
    %2314 = vmatprep.subr.mxu0 0.0
    %2315 = vmatpush1.msra.mxu0 0.0
    %2316 = vmatprep.subr.mxu0 0.0
    %2317 = vmatpush1.msra.mxu0 0.0
    %2318 = vmatprep.subr.mxu0 0.0
    %2319 = vmatpush1.msra.mxu0 0.0
    %2320 = vmatprep.subr.mxu0 0.0
    %2321 = vmatpush1.msra.mxu0 0.0
    %2322 = vmatprep.subr.mxu0 0.0
    %2323 = vmatpush1.msra.mxu0 0.0
    %2324 = vmatprep.subr.mxu0 0.0
    %2325 = vmatpush1.msra.mxu0 0.0
    %2326 = vmatprep.subr.mxu0 0.0
    %2327 = vmatpush1.msra.mxu0 0.0
    %2328 = vmatprep.subr.mxu0 0.0
    %2329 = vmatpush1.msra.mxu0 0.0
    %2330 = vmatprep.subr.mxu0 0.0
    %2331 = vmatpush1.msra.mxu0 0.0
    %2332 = vmatprep.subr.mxu0 0.0
    %2333 = vmatpush1.msra.mxu0 0.0
    %2334 = vmatprep.subr.mxu0 0.0
    %2335 = vmatpush1.msra.mxu0 0.0
    %2336 = vmatprep.mubr.f32.mxu0 0.0
    %2337 = vmatmul.mubr.f32.gmra.mrb[0].mxu0 %v2267
    %v2338 = vpop.f32.mrb[0].mxu0
    %v2339 = vadd.f32 0.0, %v2338
    %v2340 = vpop.f32.mrb[0].mxu0
    %2341 = vmatprep.mubr.f32.mxu0 0.0
    %2342 = vmatmul.mubr.f32.gmra.mrb[0].mxu0 %v2270
    %v2343 = vpop.f32.mrb[0].mxu0
    %v2344 = vadd.f32 0.0, %v2343
    %v2345 = vpop.f32.mrb[0].mxu0
    %2346 = vdwg.mxu0
    %v2347 = vmul.f32 %v2339, %v486
    %v2348 = vmul.f32 %v2344, %v487
    %v2349 = vsel %vm1235, %v2347, 0.0
    %2350 = vadd.xlane.f32.xlu0 %v2349
    %v2351 = vpop.xlane.xlu0 %2350
    %v2352 = vsel %vm1331, %v2348, 0.0
    %2353 = vadd.xlane.f32.xlu0 %v2352
    %v2354 = vpop.xlane.xlu0 %2353
    %v2356 = vsel %vm639, %v478, 0
    %v2359 = vsel %vm639, %v479, 0
    %2361 = vmatprep.subr.mxu0 0.0
    %2362 = vmatpush1.msra.mxu0 %v1325
    %2363 = vmatprep.subr.mxu0 0.0
    %2364 = vmatpush1.msra.mxu0 0.0
    %2365 = vmatprep.subr.mxu0 0.0
    %2366 = vmatpush1.msra.mxu0 0.0
    %2367 = vmatprep.subr.mxu0 0.0
    %2368 = vmatpush1.msra.mxu0 0.0
    %2369 = vmatprep.subr.mxu0 0.0
    %2370 = vmatpush1.msra.mxu0 0.0
    %2371 = vmatprep.subr.mxu0 0.0
    %2372 = vmatpush1.msra.mxu0 0.0
    %2373 = vmatprep.subr.mxu0 0.0
    %2374 = vmatpush1.msra.mxu0 0.0
    %2375 = vmatprep.subr.mxu0 0.0
    %2376 = vmatpush1.msra.mxu0 0.0
    %2377 = vmatprep.subr.mxu0 0.0
    %2378 = vmatpush1.msra.mxu0 0.0
    %2379 = vmatprep.subr.mxu0 0.0
    %2380 = vmatpush1.msra.mxu0 0.0
    %2381 = vmatprep.subr.mxu0 0.0
    %2382 = vmatpush1.msra.mxu0 0.0
    %2383 = vmatprep.subr.mxu0 0.0
    %2384 = vmatpush1.msra.mxu0 0.0
    %2385 = vmatprep.subr.mxu0 0.0
    %2386 = vmatpush1.msra.mxu0 0.0
    %2387 = vmatprep.subr.mxu0 0.0
    %2388 = vmatpush1.msra.mxu0 0.0
    %2389 = vmatprep.subr.mxu0 0.0
    %2390 = vmatpush1.msra.mxu0 0.0
    %2391 = vmatprep.subr.mxu0 0.0
    %2392 = vmatpush1.msra.mxu0 0.0
    %2393 = vmatprep.subr.mxu0 0.0
    %2394 = vmatpush1.msra.mxu0 0.0
    %2395 = vmatprep.subr.mxu0 0.0
    %2396 = vmatpush1.msra.mxu0 0.0
    %2397 = vmatprep.subr.mxu0 0.0
    %2398 = vmatpush1.msra.mxu0 0.0
    %2399 = vmatprep.subr.mxu0 0.0
    %2400 = vmatpush1.msra.mxu0 0.0
    %2401 = vmatprep.subr.mxu0 0.0
    %2402 = vmatpush1.msra.mxu0 0.0
    %2403 = vmatprep.subr.mxu0 0.0
    %2404 = vmatpush1.msra.mxu0 0.0
    %2405 = vmatprep.subr.mxu0 0.0
    %2406 = vmatpush1.msra.mxu0 0.0
    %2407 = vmatprep.subr.mxu0 0.0
    %2408 = vmatpush1.msra.mxu0 0.0
    %2409 = vmatprep.subr.mxu0 0.0
    %2410 = vmatpush1.msra.mxu0 0.0
    %2411 = vmatprep.subr.mxu0 0.0
    %2412 = vmatpush1.msra.mxu0 0.0
    %2413 = vmatprep.subr.mxu0 0.0
    %2414 = vmatpush1.msra.mxu0 0.0
    %2415 = vmatprep.subr.mxu0 0.0
    %2416 = vmatpush1.msra.mxu0 0.0
    %2417 = vmatprep.subr.mxu0 0.0
    %2418 = vmatpush1.msra.mxu0 0.0
    %2419 = vmatprep.subr.mxu0 0.0
    %2420 = vmatpush1.msra.mxu0 0.0
    %2421 = vmatprep.subr.mxu0 0.0
    %2422 = vmatpush1.msra.mxu0 0.0
    %2423 = vmatprep.subr.mxu0 0.0
    %2424 = vmatpush1.msra.mxu0 0.0
    %2425 = vmatprep.mubr.f32.mxu0 0.0
    %2426 = vmatmul.mubr.f32.gmra.mrb[0].mxu0 %v2356
    %v2427 = vpop.f32.mrb[0].mxu0
    %v2428 = vadd.f32 0.0, %v2427
    %v2429 = vpop.f32.mrb[0].mxu0
    %2430 = vmatprep.mubr.f32.mxu0 0.0
    %2431 = vmatmul.mubr.f32.gmra.mrb[0].mxu0 %v2359
    %v2432 = vpop.f32.mrb[0].mxu0
    %v2433 = vadd.f32 0.0, %v2432
    %v2434 = vpop.f32.mrb[0].mxu0
    %2435 = vdwg.mxu0
    %v2436 = vmul.f32 %v2428, %v480
    %v2437 = vmul.f32 %v2433, %v481
    %v2438 = vsel %vm1235, %v2436, 0.0
    %2439 = vadd.xlane.f32.xlu0 %v2438
    %v2440 = vpop.xlane.xlu0 %2439
    %v2441 = vsel %vm1331, %v2437, 0.0
    %2442 = vadd.xlane.f32.xlu0 %v2441
    %v2443 = vpop.xlane.xlu0 %2442
    %v2445 = vsel %vm639, %v494, 0
    %v2448 = vsel %vm639, %v495, 0
    %2450 = vmatprep.subr.mxu0 0.0
    %2451 = vmatpush1.msra.mxu0 %v1590
    %2452 = vmatprep.subr.mxu0 0.0
    %2453 = vmatpush1.msra.mxu0 0.0
    %2454 = vmatprep.subr.mxu0 0.0
    %2455 = vmatpush1.msra.mxu0 0.0
    %2456 = vmatprep.subr.mxu0 0.0
    %2457 = vmatpush1.msra.mxu0 0.0
    %2458 = vmatprep.subr.mxu0 0.0
    %2459 = vmatpush1.msra.mxu0 0.0
    %2460 = vmatprep.subr.mxu0 0.0
    %2461 = vmatpush1.msra.mxu0 0.0
    %2462 = vmatprep.subr.mxu0 0.0
    %2463 = vmatpush1.msra.mxu0 0.0
    %2464 = vmatprep.subr.mxu0 0.0
    %2465 = vmatpush1.msra.mxu0 0.0
    %2466 = vmatprep.subr.mxu0 0.0
    %2467 = vmatpush1.msra.mxu0 0.0
    %2468 = vmatprep.subr.mxu0 0.0
    %2469 = vmatpush1.msra.mxu0 0.0
    %2470 = vmatprep.subr.mxu0 0.0
    %2471 = vmatpush1.msra.mxu0 0.0
    %2472 = vmatprep.subr.mxu0 0.0
    %2473 = vmatpush1.msra.mxu0 0.0
    %2474 = vmatprep.subr.mxu0 0.0
    %2475 = vmatpush1.msra.mxu0 0.0
    %2476 = vmatprep.subr.mxu0 0.0
    %2477 = vmatpush1.msra.mxu0 0.0
    %2478 = vmatprep.subr.mxu0 0.0
    %2479 = vmatpush1.msra.mxu0 0.0
    %2480 = vmatprep.subr.mxu0 0.0
    %2481 = vmatpush1.msra.mxu0 0.0
    %2482 = vmatprep.subr.mxu0 0.0
    %2483 = vmatpush1.msra.mxu0 0.0
    %2484 = vmatprep.subr.mxu0 0.0
    %2485 = vmatpush1.msra.mxu0 0.0
    %2486 = vmatprep.subr.mxu0 0.0
    %2487 = vmatpush1.msra.mxu0 0.0
    %2488 = vmatprep.subr.mxu0 0.0
    %2489 = vmatpush1.msra.mxu0 0.0
    %2490 = vmatprep.subr.mxu0 0.0
    %2491 = vmatpush1.msra.mxu0 0.0
    %2492 = vmatprep.subr.mxu0 0.0
    %2493 = vmatpush1.msra.mxu0 0.0
    %2494 = vmatprep.subr.mxu0 0.0
    %2495 = vmatpush1.msra.mxu0 0.0
    %2496 = vmatprep.subr.mxu0 0.0
    %2497 = vmatpush1.msra.mxu0 0.0
    %2498 = vmatprep.subr.mxu0 0.0
    %2499 = vmatpush1.msra.mxu0 0.0
    %2500 = vmatprep.subr.mxu0 0.0
    %2501 = vmatpush1.msra.mxu0 0.0
    %2502 = vmatprep.subr.mxu0 0.0
    %2503 = vmatpush1.msra.mxu0 0.0
    %2504 = vmatprep.subr.mxu0 0.0
    %2505 = vmatpush1.msra.mxu0 0.0
    %2506 = vmatprep.subr.mxu0 0.0
    %2507 = vmatpush1.msra.mxu0 0.0
    %2508 = vmatprep.subr.mxu0 0.0
    %2509 = vmatpush1.msra.mxu0 0.0
    %2510 = vmatprep.subr.mxu0 0.0
    %2511 = vmatpush1.msra.mxu0 0.0
    %2512 = vmatprep.subr.mxu0 0.0
    %2513 = vmatpush1.msra.mxu0 0.0
    %2514 = vmatprep.mubr.f32.mxu0 0.0
    %2515 = vmatmul.mubr.f32.gmra.mrb[0].mxu0 %v2445
    %v2516 = vpop.f32.mrb[0].mxu0
    %v2517 = vadd.f32 0.0, %v2516
    %v2518 = vpop.f32.mrb[0].mxu0
    %2519 = vmatprep.mubr.f32.mxu0 0.0
    %2520 = vmatmul.mubr.f32.gmra.mrb[0].mxu0 %v2448
    %v2521 = vpop.f32.mrb[0].mxu0
    %v2522 = vadd.f32 0.0, %v2521
    %v2523 = vpop.f32.mrb[0].mxu0
    %2524 = vdwg.mxu0
    %v2526 = vsel %vm639, %v492, 0
    %v2529 = vsel %vm639, %v493, 0
    %2531 = vmatprep.subr.mxu0 0.0
    %2532 = vmatpush1.msra.mxu0 %v1517
    %2533 = vmatprep.subr.mxu0 0.0
    %2534 = vmatpush1.msra.mxu0 0.0
    %2535 = vmatprep.subr.mxu0 0.0
    %2536 = vmatpush1.msra.mxu0 0.0
    %2537 = vmatprep.subr.mxu0 0.0
    %2538 = vmatpush1.msra.mxu0 0.0
    %2539 = vmatprep.subr.mxu0 0.0
    %2540 = vmatpush1.msra.mxu0 0.0
    %2541 = vmatprep.subr.mxu0 0.0
    %2542 = vmatpush1.msra.mxu0 0.0
    %2543 = vmatprep.subr.mxu0 0.0
    %2544 = vmatpush1.msra.mxu0 0.0
    %2545 = vmatprep.subr.mxu0 0.0
    %2546 = vmatpush1.msra.mxu0 0.0
    %2547 = vmatprep.subr.mxu0 0.0
    %2548 = vmatpush1.msra.mxu0 0.0
    %2549 = vmatprep.subr.mxu0 0.0
    %2550 = vmatpush1.msra.mxu0 0.0
    %2551 = vmatprep.subr.mxu0 0.0
    %2552 = vmatpush1.msra.mxu0 0.0
    %2553 = vmatprep.subr.mxu0 0.0
    %2554 = vmatpush1.msra.mxu0 0.0
    %2555 = vmatprep.subr.mxu0 0.0
    %2556 = vmatpush1.msra.mxu0 0.0
    %2557 = vmatprep.subr.mxu0 0.0
    %2558 = vmatpush1.msra.mxu0 0.0
    %2559 = vmatprep.subr.mxu0 0.0
    %2560 = vmatpush1.msra.mxu0 0.0
    %2561 = vmatprep.subr.mxu0 0.0
    %2562 = vmatpush1.msra.mxu0 0.0
    %2563 = vmatprep.subr.mxu0 0.0
    %2564 = vmatpush1.msra.mxu0 0.0
    %2565 = vmatprep.subr.mxu0 0.0
    %2566 = vmatpush1.msra.mxu0 0.0
    %2567 = vmatprep.subr.mxu0 0.0
    %2568 = vmatpush1.msra.mxu0 0.0
    %2569 = vmatprep.subr.mxu0 0.0
    %2570 = vmatpush1.msra.mxu0 0.0
    %2571 = vmatprep.subr.mxu0 0.0
    %2572 = vmatpush1.msra.mxu0 0.0
    %2573 = vmatprep.subr.mxu0 0.0
    %2574 = vmatpush1.msra.mxu0 0.0
    %2575 = vmatprep.subr.mxu0 0.0
    %2576 = vmatpush1.msra.mxu0 0.0
    %2577 = vmatprep.subr.mxu0 0.0
    %2578 = vmatpush1.msra.mxu0 0.0
    %2579 = vmatprep.subr.mxu0 0.0
    %2580 = vmatpush1.msra.mxu0 0.0
    %2581 = vmatprep.subr.mxu0 0.0
    %2582 = vmatpush1.msra.mxu0 0.0
    %2583 = vmatprep.subr.mxu0 0.0
    %2584 = vmatpush1.msra.mxu0 0.0
    %2585 = vmatprep.subr.mxu0 0.0
    %2586 = vmatpush1.msra.mxu0 0.0
    %2587 = vmatprep.subr.mxu0 0.0
    %2588 = vmatpush1.msra.mxu0 0.0
    %2589 = vmatprep.subr.mxu0 0.0
    %2590 = vmatpush1.msra.mxu0 0.0
    %2591 = vmatprep.subr.mxu0 0.0
    %2592 = vmatpush1.msra.mxu0 0.0
    %2593 = vmatprep.subr.mxu0 0.0
    %2594 = vmatpush1.msra.mxu0 0.0
    %2595 = vmatprep.mubr.f32.mxu0 0.0
    %2596 = vmatmul.mubr.f32.gmra.mrb[0].mxu0 %v2526
    %v2597 = vpop.f32.mrb[0].mxu0
    %v2598 = vadd.f32 %v2517, %v2597
    %v2599 = vpop.f32.mrb[0].mxu0
    %2600 = vmatprep.mubr.f32.mxu0 0.0
    %2601 = vmatmul.mubr.f32.gmra.mrb[0].mxu0 %v2529
    %v2602 = vpop.f32.mrb[0].mxu0
    %v2603 = vadd.f32 %v2522, %v2602
    %v2604 = vpop.f32.mrb[0].mxu0
    %2605 = vdwg.mxu0
    %v2607 = vsel %vm1349, %v502, 0
    %v2610 = vsel %vm1349, %v503, 0
    %2612 = vmatprep.subr.mxu0 0.0
    %2613 = vmatpush1.msra.mxu0 %v1741
    %2614 = vmatprep.subr.mxu0 0.0
    %2615 = vmatpush1.msra.mxu0 %v2099
    %2616 = vmatprep.subr.mxu0 0.0
    %2617 = vmatpush1.msra.mxu0 0.0
    %2618 = vmatprep.subr.mxu0 0.0
    %2619 = vmatpush1.msra.mxu0 0.0
    %2620 = vmatprep.subr.mxu0 0.0
    %2621 = vmatpush1.msra.mxu0 0.0
    %2622 = vmatprep.subr.mxu0 0.0
    %2623 = vmatpush1.msra.mxu0 0.0
    %2624 = vmatprep.subr.mxu0 0.0
    %2625 = vmatpush1.msra.mxu0 0.0
    %2626 = vmatprep.subr.mxu0 0.0
    %2627 = vmatpush1.msra.mxu0 0.0
    %2628 = vmatprep.subr.mxu0 0.0
    %2629 = vmatpush1.msra.mxu0 0.0
    %2630 = vmatprep.subr.mxu0 0.0
    %2631 = vmatpush1.msra.mxu0 0.0
    %2632 = vmatprep.subr.mxu0 0.0
    %2633 = vmatpush1.msra.mxu0 0.0
    %2634 = vmatprep.subr.mxu0 0.0
    %2635 = vmatpush1.msra.mxu0 0.0
    %2636 = vmatprep.subr.mxu0 0.0
    %2637 = vmatpush1.msra.mxu0 0.0
    %2638 = vmatprep.subr.mxu0 0.0
    %2639 = vmatpush1.msra.mxu0 0.0
    %2640 = vmatprep.subr.mxu0 0.0
    %2641 = vmatpush1.msra.mxu0 0.0
    %2642 = vmatprep.subr.mxu0 0.0
    %2643 = vmatpush1.msra.mxu0 0.0
    %2644 = vmatprep.subr.mxu0 0.0
    %2645 = vmatpush1.msra.mxu0 0.0
    %2646 = vmatprep.subr.mxu0 0.0
    %2647 = vmatpush1.msra.mxu0 0.0
    %2648 = vmatprep.subr.mxu0 0.0
    %2649 = vmatpush1.msra.mxu0 0.0
    %2650 = vmatprep.subr.mxu0 0.0
    %2651 = vmatpush1.msra.mxu0 0.0
    %2652 = vmatprep.subr.mxu0 0.0
    %2653 = vmatpush1.msra.mxu0 0.0
    %2654 = vmatprep.subr.mxu0 0.0
    %2655 = vmatpush1.msra.mxu0 0.0
    %2656 = vmatprep.subr.mxu0 0.0
    %2657 = vmatpush1.msra.mxu0 0.0
    %2658 = vmatprep.subr.mxu0 0.0
    %2659 = vmatpush1.msra.mxu0 0.0
    %2660 = vmatprep.subr.mxu0 0.0
    %2661 = vmatpush1.msra.mxu0 0.0
    %2662 = vmatprep.subr.mxu0 0.0
    %2663 = vmatpush1.msra.mxu0 0.0
    %2664 = vmatprep.subr.mxu0 0.0
    %2665 = vmatpush1.msra.mxu0 0.0
    %2666 = vmatprep.subr.mxu0 0.0
    %2667 = vmatpush1.msra.mxu0 0.0
    %2668 = vmatprep.subr.mxu0 0.0
    %2669 = vmatpush1.msra.mxu0 0.0
    %2670 = vmatprep.subr.mxu0 0.0
    %2671 = vmatpush1.msra.mxu0 0.0
    %2672 = vmatprep.subr.mxu0 0.0
    %2673 = vmatpush1.msra.mxu0 0.0
    %2674 = vmatprep.subr.mxu0 0.0
    %2675 = vmatpush1.msra.mxu0 0.0
    %2676 = vmatprep.mubr.f32.mxu0 0.0
    %2677 = vmatmul.mubr.f32.gmra.mrb[0].mxu0 %v2607
    %v2678 = vpop.f32.mrb[0].mxu0
    %v2679 = vadd.f32 0.0, %v2678
    %v2680 = vpop.f32.mrb[0].mxu0
    %2681 = vmatprep.mubr.f32.mxu0 0.0
    %2682 = vmatmul.mubr.f32.gmra.mrb[0].mxu0 %v2610
    %v2683 = vpop.f32.mrb[0].mxu0
    %v2684 = vadd.f32 0.0, %v2683
    %v2685 = vpop.f32.mrb[0].mxu0
    %2686 = vdwg.mxu0
    %v2688 = vsel %vm1349, %v500, 0
    %v2691 = vsel %vm1349, %v501, 0
    %2693 = vmatprep.subr.mxu0 0.0
    %2694 = vmatpush1.msra.mxu0 %v1666
    %2695 = vmatprep.subr.mxu0 0.0
    %2696 = vmatpush1.msra.mxu0 %v2183
    %2697 = vmatprep.subr.mxu0 0.0
    %2698 = vmatpush1.msra.mxu0 0.0
    %2699 = vmatprep.subr.mxu0 0.0
    %2700 = vmatpush1.msra.mxu0 0.0
    %2701 = vmatprep.subr.mxu0 0.0
    %2702 = vmatpush1.msra.mxu0 0.0
    %2703 = vmatprep.subr.mxu0 0.0
    %2704 = vmatpush1.msra.mxu0 0.0
    %2705 = vmatprep.subr.mxu0 0.0
    %2706 = vmatpush1.msra.mxu0 0.0
    %2707 = vmatprep.subr.mxu0 0.0
    %2708 = vmatpush1.msra.mxu0 0.0
    %2709 = vmatprep.subr.mxu0 0.0
    %2710 = vmatpush1.msra.mxu0 0.0
    %2711 = vmatprep.subr.mxu0 0.0
    %2712 = vmatpush1.msra.mxu0 0.0
    %2713 = vmatprep.subr.mxu0 0.0
    %2714 = vmatpush1.msra.mxu0 0.0
    %2715 = vmatprep.subr.mxu0 0.0
    %2716 = vmatpush1.msra.mxu0 0.0
    %2717 = vmatprep.subr.mxu0 0.0
    %2718 = vmatpush1.msra.mxu0 0.0
    %2719 = vmatprep.subr.mxu0 0.0
    %2720 = vmatpush1.msra.mxu0 0.0
    %2721 = vmatprep.subr.mxu0 0.0
    %2722 = vmatpush1.msra.mxu0 0.0
    %2723 = vmatprep.subr.mxu0 0.0
    %2724 = vmatpush1.msra.mxu0 0.0
    %2725 = vmatprep.subr.mxu0 0.0
    %2726 = vmatpush1.msra.mxu0 0.0
    %2727 = vmatprep.subr.mxu0 0.0
    %2728 = vmatpush1.msra.mxu0 0.0
    %2729 = vmatprep.subr.mxu0 0.0
    %2730 = vmatpush1.msra.mxu0 0.0
    %2731 = vmatprep.subr.mxu0 0.0
    %2732 = vmatpush1.msra.mxu0 0.0
    %2733 = vmatprep.subr.mxu0 0.0
    %2734 = vmatpush1.msra.mxu0 0.0
    %2735 = vmatprep.subr.mxu0 0.0
    %2736 = vmatpush1.msra.mxu0 0.0
    %2737 = vmatprep.subr.mxu0 0.0
    %2738 = vmatpush1.msra.mxu0 0.0
    %2739 = vmatprep.subr.mxu0 0.0
    %2740 = vmatpush1.msra.mxu0 0.0
    %2741 = vmatprep.subr.mxu0 0.0
    %2742 = vmatpush1.msra.mxu0 0.0
    %2743 = vmatprep.subr.mxu0 0.0
    %2744 = vmatpush1.msra.mxu0 0.0
    %2745 = vmatprep.subr.mxu0 0.0
    %2746 = vmatpush1.msra.mxu0 0.0
    %2747 = vmatprep.subr.mxu0 0.0
    %2748 = vmatpush1.msra.mxu0 0.0
    %2749 = vmatprep.subr.mxu0 0.0
    %2750 = vmatpush1.msra.mxu0 0.0
    %2751 = vmatprep.subr.mxu0 0.0
    %2752 = vmatpush1.msra.mxu0 0.0
    %2753 = vmatprep.subr.mxu0 0.0
    %2754 = vmatpush1.msra.mxu0 0.0
    %2755 = vmatprep.subr.mxu0 0.0
    %2756 = vmatpush1.msra.mxu0 0.0
    %2757 = vmatprep.mubr.f32.mxu0 0.0
    %2758 = vmatmul.mubr.f32.gmra.mrb[0].mxu0 %v2688
    %v2759 = vpop.f32.mrb[0].mxu0
    %v2760 = vadd.f32 %v2679, %v2759
    %v2761 = vpop.f32.mrb[0].mxu0
    %2762 = vmatprep.mubr.f32.mxu0 0.0
    %2763 = vmatmul.mubr.f32.gmra.mrb[0].mxu0 %v2691
    %v2764 = vpop.f32.mrb[0].mxu0
    %v2765 = vadd.f32 %v2684, %v2764
    %v2766 = vpop.f32.mrb[0].mxu0
    %2767 = vdwg.mxu0
    %v2768 = vmul.f32 %v2351, %v2598
    %v2769 = vmul.f32 %v2354, %v2603
    %v2771 = vsel %vm1349, %v472, 0
    %v2774 = vsel %vm888, %v2769, 0
    %2776 = vmatprep.subr.mxu0 0.0
    %2777 = vmatpush1.msra.mxu0 %v2768
    %2778 = vmatprep.subr.mxu0 0.0
    %2779 = vmatpush1.msra.mxu0 %v2774
    %2780 = vmatprep.subr.mxu0 0.0
    %2781 = vmatpush1.msra.mxu0 0.0
    %2782 = vmatprep.subr.mxu0 0.0
    %2783 = vmatpush1.msra.mxu0 0.0
    %2784 = vmatprep.subr.mxu0 0.0
    %2785 = vmatpush1.msra.mxu0 0.0
    %2786 = vmatprep.subr.mxu0 0.0
    %2787 = vmatpush1.msra.mxu0 0.0
    %2788 = vmatprep.subr.mxu0 0.0
    %2789 = vmatpush1.msra.mxu0 0.0
    %2790 = vmatprep.subr.mxu0 0.0
    %2791 = vmatpush1.msra.mxu0 0.0
    %2792 = vmatprep.subr.mxu0 0.0
    %2793 = vmatpush1.msra.mxu0 0.0
    %2794 = vmatprep.subr.mxu0 0.0
    %2795 = vmatpush1.msra.mxu0 0.0
    %2796 = vmatprep.subr.mxu0 0.0
    %2797 = vmatpush1.msra.mxu0 0.0
    %2798 = vmatprep.subr.mxu0 0.0
    %2799 = vmatpush1.msra.mxu0 0.0
    %2800 = vmatprep.subr.mxu0 0.0
    %2801 = vmatpush1.msra.mxu0 0.0
    %2802 = vmatprep.subr.mxu0 0.0
    %2803 = vmatpush1.msra.mxu0 0.0
    %2804 = vmatprep.subr.mxu0 0.0
    %2805 = vmatpush1.msra.mxu0 0.0
    %2806 = vmatprep.subr.mxu0 0.0
    %2807 = vmatpush1.msra.mxu0 0.0
    %2808 = vmatprep.subr.mxu0 0.0
    %2809 = vmatpush1.msra.mxu0 0.0
    %2810 = vmatprep.subr.mxu0 0.0
    %2811 = vmatpush1.msra.mxu0 0.0
    %2812 = vmatprep.subr.mxu0 0.0
    %2813 = vmatpush1.msra.mxu0 0.0
    %2814 = vmatprep.subr.mxu0 0.0
    %2815 = vmatpush1.msra.mxu0 0.0
    %2816 = vmatprep.subr.mxu0 0.0
    %2817 = vmatpush1.msra.mxu0 0.0
    %2818 = vmatprep.subr.mxu0 0.0
    %2819 = vmatpush1.msra.mxu0 0.0
    %2820 = vmatprep.subr.mxu0 0.0
    %2821 = vmatpush1.msra.mxu0 0.0
    %2822 = vmatprep.subr.mxu0 0.0
    %2823 = vmatpush1.msra.mxu0 0.0
    %2824 = vmatprep.subr.mxu0 0.0
    %2825 = vmatpush1.msra.mxu0 0.0
    %2826 = vmatprep.subr.mxu0 0.0
    %2827 = vmatpush1.msra.mxu0 0.0
    %2828 = vmatprep.subr.mxu0 0.0
    %2829 = vmatpush1.msra.mxu0 0.0
    %2830 = vmatprep.subr.mxu0 0.0
    %2831 = vmatpush1.msra.mxu0 0.0
    %2832 = vmatprep.subr.mxu0 0.0
    %2833 = vmatpush1.msra.mxu0 0.0
    %2834 = vmatprep.subr.mxu0 0.0
    %2835 = vmatpush1.msra.mxu0 0.0
    %2836 = vmatprep.subr.mxu0 0.0
    %2837 = vmatpush1.msra.mxu0 0.0
    %2838 = vmatprep.subr.mxu0 0.0
    %2839 = vmatpush1.msra.mxu0 0.0
    %2840 = vmatprep.mubr.f32.mxu0 0.0
    %2841 = vmatmul.mubr.f32.gmra.mrb[0].mxu0 %v2771
    %v2842 = vpop.f32.mrb[0].mxu0
    %v2843 = vadd.f32 0.0, %v2842
    %v2844 = vpop.f32.mrb[0].mxu0
    %2845 = vdwg.mxu0
    %v2847 = vsel %vm888, %v2261, 0
    %2849 = vmatprep.subr.mxu0 0.0
    %2850 = vmatpush1.msra.mxu0 %v2260
    %2851 = vmatprep.subr.mxu0 0.0
    %2852 = vmatpush1.msra.mxu0 %v2847
    %2853 = vmatprep.subr.mxu0 0.0
    %2854 = vmatpush1.msra.mxu0 0.0
    %2855 = vmatprep.subr.mxu0 0.0
    %2856 = vmatpush1.msra.mxu0 0.0
    %2857 = vmatprep.subr.mxu0 0.0
    %2858 = vmatpush1.msra.mxu0 0.0
    %2859 = vmatprep.subr.mxu0 0.0
    %2860 = vmatpush1.msra.mxu0 0.0
    %2861 = vmatprep.subr.mxu0 0.0
    %2862 = vmatpush1.msra.mxu0 0.0
    %2863 = vmatprep.subr.mxu0 0.0
    %2864 = vmatpush1.msra.mxu0 0.0
    %2865 = vmatprep.subr.mxu0 0.0
    %2866 = vmatpush1.msra.mxu0 0.0
    %2867 = vmatprep.subr.mxu0 0.0
    %2868 = vmatpush1.msra.mxu0 0.0
    %2869 = vmatprep.subr.mxu0 0.0
    %2870 = vmatpush1.msra.mxu0 0.0
    %2871 = vmatprep.subr.mxu0 0.0
    %2872 = vmatpush1.msra.mxu0 0.0
    %2873 = vmatprep.subr.mxu0 0.0
    %2874 = vmatpush1.msra.mxu0 0.0
    %2875 = vmatprep.subr.mxu0 0.0
    %2876 = vmatpush1.msra.mxu0 0.0
    %2877 = vmatprep.subr.mxu0 0.0
    %2878 = vmatpush1.msra.mxu0 0.0
    %2879 = vmatprep.subr.mxu0 0.0
    %2880 = vmatpush1.msra.mxu0 0.0
    %2881 = vmatprep.subr.mxu0 0.0
    %2882 = vmatpush1.msra.mxu0 0.0
    %2883 = vmatprep.subr.mxu0 0.0
    %2884 = vmatpush1.msra.mxu0 0.0
    %2885 = vmatprep.subr.mxu0 0.0
    %2886 = vmatpush1.msra.mxu0 0.0
    %2887 = vmatprep.subr.mxu0 0.0
    %2888 = vmatpush1.msra.mxu0 0.0
    %2889 = vmatprep.subr.mxu0 0.0
    %2890 = vmatpush1.msra.mxu0 0.0
    %2891 = vmatprep.subr.mxu0 0.0
    %2892 = vmatpush1.msra.mxu0 0.0
    %2893 = vmatprep.subr.mxu0 0.0
    %2894 = vmatpush1.msra.mxu0 0.0
    %2895 = vmatprep.subr.mxu0 0.0
    %2896 = vmatpush1.msra.mxu0 0.0
    %2897 = vmatprep.subr.mxu0 0.0
    %2898 = vmatpush1.msra.mxu0 0.0
    %2899 = vmatprep.subr.mxu0 0.0
    %2900 = vmatpush1.msra.mxu0 0.0
    %2901 = vmatprep.subr.mxu0 0.0
    %2902 = vmatpush1.msra.mxu0 0.0
    %2903 = vmatprep.subr.mxu0 0.0
    %2904 = vmatpush1.msra.mxu0 0.0
    %2905 = vmatprep.subr.mxu0 0.0
    %2906 = vmatpush1.msra.mxu0 0.0
    %2907 = vmatprep.subr.mxu0 0.0
    %2908 = vmatpush1.msra.mxu0 0.0
    %2909 = vmatprep.subr.mxu0 0.0
    %2910 = vmatpush1.msra.mxu0 0.0
    %2911 = vmatprep.subr.mxu0 0.0
    %2912 = vmatpush1.msra.mxu0 0.0
    %2913 = vmatprep.mubr.f32.mxu0 0.0
    %2914 = vmatmul.mubr.f32.gmra.mrb[0].mxu0 %v2771
    %v2915 = vpop.f32.mrb[0].mxu0
    %v2916 = vadd.f32 %v2843, %v2915
    %v2917 = vpop.f32.mrb[0].mxu0
    %2918 = vdwg.mxu0
    %v2919 = vmul.f32 %v2440, %v2760
    %v2920 = vmul.f32 %v2443, %v2765
    %v2921 = vadd.f32 %v2264, %v2919
    %v2922 = vadd.f32 %v2265, %v2920
    %v2923 = vadd.f32 %v2916, %v469
    %v2924 = vsel %vm554, %v2923, 0.0
    %2925 = vadd.xlane.f32.xlu0 %v2924
    %v2926 = vpop.xlane.xlu0 %2925
    %v2927 = vrcp.pop 6.0
    %v2928 = vmul.f32 %v2926, %v2927
    %v2929 = vsub.f32 %v2923, %v2928
    %v2930 = vmul.f32 %v2929, %v2929
    %v2931 = vsel %vm554, %v2930, 0.0
    %2932 = vadd.xlane.f32.xlu0 %v2931
    %v2933 = vpop.xlane.xlu0 %2932
    %v2934 = vmul.f32 %v2933, %v2927
    %v2935 = vadd.f32 %v2934, 1e-05
    %v2936 = vrsqrt.pop %v2935
    %v2937 = vmul.f32 %v2929, %v2936
    %v2939 = vlaneseq
    %v2940 = vshrl.u32 %v2939, 7
    %v2941 = vsub.s32 0, %v2940
    %v2942 = vrot.slane %v530, %v2941
    %v2944 = vmul.f32 %v2937, %v2942
    %v2946 = vlaneseq
    %v2947 = vshrl.u32 %v2946, 7
    %v2948 = vsub.s32 0, %v2947
    %v2949 = vrot.slane %v531, %v2948
    %v2951 = vadd.f32 %v2944, %v2949
    %v2952 = vadd.f32 %v2921, %v470
    %v2953 = vadd.f32 %v2922, %v471
    %v2954 = vsel %vm881, %v2952, 0.0
    %2955 = vadd.xlane.f32.xlu0 %v2954
    %v2956 = vpop.xlane.xlu0 %2955
    %vm2957 = vcmask 27648
    %v2958 = vsel %vm2957, %v2953, 0.0
    %2959 = vadd.xlane.f32.xlu0 %v2958
    %v2960 = vpop.xlane.xlu0 %2959
    %v2961 = vrcp.pop 4.0
    %v2962 = vmul.f32 %v2956, %v2961
    %v2963 = vmul.f32 %v2960, %v2961
    %v2964 = vsub.f32 %v2952, %v2962
    %v2965 = vsub.f32 %v2953, %v2963
    %v2966 = vmul.f32 %v2964, %v2964
    %v2967 = vmul.f32 %v2965, %v2965
    %v2968 = vsel %vm881, %v2966, 0.0
    %2969 = vadd.xlane.f32.xlu0 %v2968
    %v2970 = vpop.xlane.xlu0 %2969
    %v2971 = vsel %vm2957, %v2967, 0.0
    %2972 = vadd.xlane.f32.xlu0 %v2971
    %v2973 = vpop.xlane.xlu0 %2972
    %v2974 = vmul.f32 %v2970, %v2961
    %v2975 = vmul.f32 %v2973, %v2961
    %v2976 = vadd.f32 %v2974, 1e-05
    %v2977 = vadd.f32 %v2975, 1e-05
    %v2978 = vrsqrt.pop %v2976
    %v2979 = vrsqrt.pop %v2977
    %v2980 = vmul.f32 %v2964, %v2978
    %v2981 = vmul.f32 %v2965, %v2979
    %v2983 = vlaneseq
    %v2984 = vshrl.u32 %v2983, 7
    %v2985 = vsub.s32 0, %v2984
    %v2986 = vrot.slane %v532, %v2985
    %v2988 = vmul.f32 %v2980, %v2986
    %v2989 = vmul.f32 %v2981, %v2986
    %v2991 = vlaneseq
    %v2992 = vshrl.u32 %v2991, 7
    %v2993 = vsub.s32 0, %v2992
    %v2994 = vrot.slane %v533, %v2993
    %v2996 = vadd.f32 %v2988, %v2994
    %v2997 = vadd.f32 %v2989, %v2994
    %v2999 = vlaneseq
    %v3000 = vshrl.u32 %v2999, 7
    %v3001 = vsub.s32 0, %v3000
    %v3002 = vrot.slane %v535, %v3001
    %v3005 = vsel %vm554, %v2951, 0
    %v3008 = vsel %vm558, %v534, 0
    %3010 = vmatprep.subr.mxu0 0.0
    %3011 = vmatpush1.msra.mxu0 %v3008
    %3012 = vmatprep.subr.mxu0 0.0
    %3013 = vmatpush1.msra.mxu0 0.0
    %3014 = vmatprep.subr.mxu0 0.0
    %3015 = vmatpush1.msra.mxu0 0.0
    %3016 = vmatprep.subr.mxu0 0.0
    %3017 = vmatpush1.msra.mxu0 0.0
    %3018 = vmatprep.subr.mxu0 0.0
    %3019 = vmatpush1.msra.mxu0 0.0
    %3020 = vmatprep.subr.mxu0 0.0
    %3021 = vmatpush1.msra.mxu0 0.0
    %3022 = vmatprep.subr.mxu0 0.0
    %3023 = vmatpush1.msra.mxu0 0.0
    %3024 = vmatprep.subr.mxu0 0.0
    %3025 = vmatpush1.msra.mxu0 0.0
    %3026 = vmatprep.subr.mxu0 0.0
    %3027 = vmatpush1.msra.mxu0 0.0
    %3028 = vmatprep.subr.mxu0 0.0
    %3029 = vmatpush1.msra.mxu0 0.0
    %3030 = vmatprep.subr.mxu0 0.0
    %3031 = vmatpush1.msra.mxu0 0.0
    %3032 = vmatprep.subr.mxu0 0.0
    %3033 = vmatpush1.msra.mxu0 0.0
    %3034 = vmatprep.subr.mxu0 0.0
    %3035 = vmatpush1.msra.mxu0 0.0
    %3036 = vmatprep.subr.mxu0 0.0
    %3037 = vmatpush1.msra.mxu0 0.0
    %3038 = vmatprep.subr.mxu0 0.0
    %3039 = vmatpush1.msra.mxu0 0.0
    %3040 = vmatprep.subr.mxu0 0.0
    %3041 = vmatpush1.msra.mxu0 0.0
    %3042 = vmatprep.subr.mxu0 0.0
    %3043 = vmatpush1.msra.mxu0 0.0
    %3044 = vmatprep.subr.mxu0 0.0
    %3045 = vmatpush1.msra.mxu0 0.0
    %3046 = vmatprep.subr.mxu0 0.0
    %3047 = vmatpush1.msra.mxu0 0.0
    %3048 = vmatprep.subr.mxu0 0.0
    %3049 = vmatpush1.msra.mxu0 0.0
    %3050 = vmatprep.subr.mxu0 0.0
    %3051 = vmatpush1.msra.mxu0 0.0
    %3052 = vmatprep.subr.mxu0 0.0
    %3053 = vmatpush1.msra.mxu0 0.0
    %3054 = vmatprep.subr.mxu0 0.0
    %3055 = vmatpush1.msra.mxu0 0.0
    %3056 = vmatprep.subr.mxu0 0.0
    %3057 = vmatpush1.msra.mxu0 0.0
    %3058 = vmatprep.subr.mxu0 0.0
    %3059 = vmatpush1.msra.mxu0 0.0
    %3060 = vmatprep.subr.mxu0 0.0
    %3061 = vmatpush1.msra.mxu0 0.0
    %3062 = vmatprep.subr.mxu0 0.0
    %3063 = vmatpush1.msra.mxu0 0.0
    %3064 = vmatprep.subr.mxu0 0.0
    %3065 = vmatpush1.msra.mxu0 0.0
    %3066 = vmatprep.subr.mxu0 0.0
    %3067 = vmatpush1.msra.mxu0 0.0
    %3068 = vmatprep.subr.mxu0 0.0
    %3069 = vmatpush1.msra.mxu0 0.0
    %3070 = vmatprep.subr.mxu0 0.0
    %3071 = vmatpush1.msra.mxu0 0.0
    %3072 = vmatprep.subr.mxu0 0.0
    %3073 = vmatpush1.msra.mxu0 0.0
    %3074 = vmatprep.mubr.f32.mxu0 0.0
    %3075 = vmatmul.mubr.f32.gmra.mrb[0].mxu0 %v3005
    %v3076 = vpop.f32.mrb[0].mxu0
    %v3077 = vadd.f32 %v3002, %v3076
    %v3078 = vpop.f32.mrb[0].mxu0
    %3079 = vdwg.mxu0
    %v3080 = vmax.f32 %v3077, 0.0
    %v3082 = vlaneseq
    %v3083 = vshrl.u32 %v3082, 7
    %v3084 = vsub.s32 0, %v3083
    %v3085 = vrot.slane %v537, %v3084
    %v3088 = vsel %vm881, %v2996, 0
    %v3091 = vsel %vm881, %v2997, 0
    %v3094 = vsel %vm888, %v536, 0
    %3096 = vmatprep.subr.mxu0 0.0
    %3097 = vmatpush1.msra.mxu0 %v3094
    %3098 = vmatprep.subr.mxu0 0.0
    %3099 = vmatpush1.msra.mxu0 0.0
    %3100 = vmatprep.subr.mxu0 0.0
    %3101 = vmatpush1.msra.mxu0 0.0
    %3102 = vmatprep.subr.mxu0 0.0
    %3103 = vmatpush1.msra.mxu0 0.0
    %3104 = vmatprep.subr.mxu0 0.0
    %3105 = vmatpush1.msra.mxu0 0.0
    %3106 = vmatprep.subr.mxu0 0.0
    %3107 = vmatpush1.msra.mxu0 0.0
    %3108 = vmatprep.subr.mxu0 0.0
    %3109 = vmatpush1.msra.mxu0 0.0
    %3110 = vmatprep.subr.mxu0 0.0
    %3111 = vmatpush1.msra.mxu0 0.0
    %3112 = vmatprep.subr.mxu0 0.0
    %3113 = vmatpush1.msra.mxu0 0.0
    %3114 = vmatprep.subr.mxu0 0.0
    %3115 = vmatpush1.msra.mxu0 0.0
    %3116 = vmatprep.subr.mxu0 0.0
    %3117 = vmatpush1.msra.mxu0 0.0
    %3118 = vmatprep.subr.mxu0 0.0
    %3119 = vmatpush1.msra.mxu0 0.0
    %3120 = vmatprep.subr.mxu0 0.0
    %3121 = vmatpush1.msra.mxu0 0.0
    %3122 = vmatprep.subr.mxu0 0.0
    %3123 = vmatpush1.msra.mxu0 0.0
    %3124 = vmatprep.subr.mxu0 0.0
    %3125 = vmatpush1.msra.mxu0 0.0
    %3126 = vmatprep.subr.mxu0 0.0
    %3127 = vmatpush1.msra.mxu0 0.0
    %3128 = vmatprep.subr.mxu0 0.0
    %3129 = vmatpush1.msra.mxu0 0.0
    %3130 = vmatprep.subr.mxu0 0.0
    %3131 = vmatpush1.msra.mxu0 0.0
    %3132 = vmatprep.subr.mxu0 0.0
    %3133 = vmatpush1.msra.mxu0 0.0
    %3134 = vmatprep.subr.mxu0 0.0
    %3135 = vmatpush1.msra.mxu0 0.0
    %3136 = vmatprep.subr.mxu0 0.0
    %3137 = vmatpush1.msra.mxu0 0.0
    %3138 = vmatprep.subr.mxu0 0.0
    %3139 = vmatpush1.msra.mxu0 0.0
    %3140 = vmatprep.subr.mxu0 0.0
    %3141 = vmatpush1.msra.mxu0 0.0
    %3142 = vmatprep.subr.mxu0 0.0
    %3143 = vmatpush1.msra.mxu0 0.0
    %3144 = vmatprep.subr.mxu0 0.0
    %3145 = vmatpush1.msra.mxu0 0.0
    %3146 = vmatprep.subr.mxu0 0.0
    %3147 = vmatpush1.msra.mxu0 0.0
    %3148 = vmatprep.subr.mxu0 0.0
    %3149 = vmatpush1.msra.mxu0 0.0
    %3150 = vmatprep.subr.mxu0 0.0
    %3151 = vmatpush1.msra.mxu0 0.0
    %3152 = vmatprep.subr.mxu0 0.0
    %3153 = vmatpush1.msra.mxu0 0.0
    %3154 = vmatprep.subr.mxu0 0.0
    %3155 = vmatpush1.msra.mxu0 0.0
    %3156 = vmatprep.subr.mxu0 0.0
    %3157 = vmatpush1.msra.mxu0 0.0
    %3158 = vmatprep.subr.mxu0 0.0
    %3159 = vmatpush1.msra.mxu0 0.0
    %3160 = vmatprep.mubr.f32.mxu0 0.0
    %3161 = vmatmul.mubr.f32.gmra.mrb[0].mxu0 %v3088
    %v3162 = vpop.f32.mrb[0].mxu0
    %v3163 = vadd.f32 %v3085, %v3162
    %v3164 = vpop.f32.mrb[0].mxu0
    %3165 = vmatprep.mubr.f32.mxu0 0.0
    %3166 = vmatmul.mubr.f32.gmra.mrb[0].mxu0 %v3091
    %v3167 = vpop.f32.mrb[0].mxu0
    %v3168 = vadd.f32 %v3085, %v3167
    %v3169 = vpop.f32.mrb[0].mxu0
    %3170 = vdwg.mxu0
    %v3171 = vmax.f32 %v3163, 0.0
    %v3172 = vmax.f32 %v3168, 0.0
    %v3173 = vsel %vm639, %v3080, 0.0
    %3174 = vadd.xlane.f32.xlu0 %v3173
    %v3175 = vpop.xlane.xlu0 %3174
    %v3176 = vrcp.pop 8.0
    %v3177 = vmul.f32 %v3175, %v3176
    %v3178 = vsub.f32 %v3080, %v3177
    %v3179 = vmul.f32 %v3178, %v3178
    %v3180 = vsel %vm639, %v3179, 0.0
    %3181 = vadd.xlane.f32.xlu0 %v3180
    %v3182 = vpop.xlane.xlu0 %3181
    %v3183 = vmul.f32 %v3182, %v3176
    %v3184 = vadd.f32 %v3183, 1e-05
    %v3185 = vrsqrt.pop %v3184
    %v3186 = vmul.f32 %v3178, %v3185
    %v3188 = vlaneseq
    %v3189 = vshrl.u32 %v3188, 7
    %v3190 = vsub.s32 0, %v3189
    %v3191 = vrot.slane %v538, %v3190
    %v3193 = vmul.f32 %v3186, %v3191
    %v3195 = vlaneseq
    %v3196 = vshrl.u32 %v3195, 7
    %v3197 = vsub.s32 0, %v3196
    %v3198 = vrot.slane %v539, %v3197
    %v3200 = vadd.f32 %v3193, %v3198
    %v3201 = vsel %vm639, %v3171, 0.0
    %3202 = vadd.xlane.f32.xlu0 %v3201
    %v3203 = vpop.xlane.xlu0 %3202
    %vm3204 = vcmask 60416
    %v3205 = vsel %vm3204, %v3172, 0.0
    %3206 = vadd.xlane.f32.xlu0 %v3205
    %v3207 = vpop.xlane.xlu0 %3206
    %v3208 = vmul.f32 %v3203, %v3176
    %v3209 = vmul.f32 %v3207, %v3176
    %v3210 = vsub.f32 %v3171, %v3208
    %v3211 = vsub.f32 %v3172, %v3209
    %v3212 = vmul.f32 %v3210, %v3210
    %v3213 = vmul.f32 %v3211, %v3211
    %v3214 = vsel %vm639, %v3212, 0.0
    %3215 = vadd.xlane.f32.xlu0 %v3214
    %v3216 = vpop.xlane.xlu0 %3215
    %v3217 = vsel %vm3204, %v3213, 0.0
    %3218 = vadd.xlane.f32.xlu0 %v3217
    %v3219 = vpop.xlane.xlu0 %3218
    %v3220 = vmul.f32 %v3216, %v3176
    %v3221 = vmul.f32 %v3219, %v3176
    %v3222 = vadd.f32 %v3220, 1e-05
    %v3223 = vadd.f32 %v3221, 1e-05
    %v3224 = vrsqrt.pop %v3222
    %v3225 = vrsqrt.pop %v3223
    %v3226 = vmul.f32 %v3210, %v3224
    %v3227 = vmul.f32 %v3211, %v3225
    %v3229 = vlaneseq
    %v3230 = vshrl.u32 %v3229, 7
    %v3231 = vsub.s32 0, %v3230
    %v3232 = vrot.slane %v540, %v3231
    %v3234 = vmul.f32 %v3226, %v3232
    %v3235 = vmul.f32 %v3227, %v3232
    %v3237 = vlaneseq
    %v3238 = vshrl.u32 %v3237, 7
    %v3239 = vsub.s32 0, %v3238
    %v3240 = vrot.slane %v541, %v3239
    %v3242 = vadd.f32 %v3234, %v3240
    %v3243 = vadd.f32 %v3235, %v3240
    %v3244 = vld [vmem:[%s83] sm:$0xff]
    %v3245 = vld [vmem:[%s85] sm:$0x1]
    %v3246 = vld [vmem:[%s87] sm:$0xff]
    %v3247 = vld [vmem:[%s89] sm:$0x1]
    %v3248 = vld [vmem:[%s91] sm:$0xff]
    %v3249 = vld [vmem:[%s93] sm:$0x1]
    %v3250 = vld [vmem:[%s95] sm:$0xff]
    %v3251 = vld [vmem:[%s95 + $0x8] sm:$0xff]
    %v3252 = vld [vmem:[%s95 + $0x10] sm:$0xff]
    %v3253 = vld [vmem:[%s95 + $0x18] sm:$0xff]
    %v3254 = vld [vmem:[%s95 + $0x20] sm:$0xff]
    %v3255 = vld [vmem:[%s95 + $0x28] sm:$0xff]
    %v3256 = vld [vmem:[%s95 + $0x30] sm:$0xff]
    %v3257 = vld [vmem:[%s95 + $0x38] sm:$0xff]
    %v3258 = vld [vmem:[%s97] sm:$0x1]
    %v3259 = vld [vmem:[%s99] sm:$0xff]
    %v3260 = vld [vmem:[#allocation3] sm:$0x1]
    %v3261 = vld [vmem:[%s103] sm:$0xff]
    %v3262 = vld [vmem:[#allocation6] sm:$0x1]
    %v3263 = vld [vmem:[%s107] sm:$0xff]
    %v3264 = vld [vmem:[#allocation8] sm:$0x1]
    %v3265 = vld [vmem:[%s111] sm:$0xff]
    %v3266 = vld [vmem:[%s111 + $0x8] sm:$0xff]
    %v3267 = vld [vmem:[%s111 + $0x10] sm:$0xff]
    %v3268 = vld [vmem:[%s111 + $0x18] sm:$0xff]
    %v3269 = vld [vmem:[%s111 + $0x20] sm:$0xff]
    %v3270 = vld [vmem:[%s111 + $0x28] sm:$0xff]
    %v3271 = vld [vmem:[%s111 + $0x30] sm:$0xff]
    %v3272 = vld [vmem:[%s111 + $0x38] sm:$0xff]
    %v3273 = vld [vmem:[#allocation9] sm:$0x1]
    %v3274 = vld [vmem:[#allocation11] sm:$0x1]
    %v3275 = vld [vmem:[#allocation12] sm:$0x1]
    %v3276 = vld [vmem:[#allocation14] sm:$0x1]
    %v3277 = vld [vmem:[#allocation15] sm:$0x1]
    %v3278 = vld [vmem:[%s123] sm:$0xff]
    %v3279 = vld [vmem:[#allocation17] sm:$0x1]
    %v3280 = vld [vmem:[%s127] sm:$0xff]
    %v3281 = vld [vmem:[#allocation18] sm:$0x1]
    %v3282 = vld [vmem:[#allocation20] sm:$0x1]
    %v3283 = vld [vmem:[#allocation21] sm:$0x1]
    %v3284 = vld [vmem:[#allocation23] sm:$0x1]
    %v3285 = vld [vmem:[#allocation24] sm:$0x1]
    %v3286 = vld [vmem:[%s139] sm:$0xff]
    %v3287 = vld [vmem:[%s139 + $0x8] sm:$0xff]
    %v3288 = vld [vmem:[%s139 + $0x10] sm:$0xff]
    %v3289 = vld [vmem:[%s139 + $0x18] sm:$0xff]
    %v3290 = vld [vmem:[%s141] sm:$0xff]
    %v3291 = vld [vmem:[%s141 + $0x8] sm:$0xff]
    %v3292 = vld [vmem:[%s141 + $0x10] sm:$0xff]
    %v3293 = vld [vmem:[%s141 + $0x18] sm:$0xff]
    %v3295 = vlaneseq
    %v3296 = vshrl.u32 %v3295, 7
    %v3297 = vsub.s32 0, %v3296
    %v3298 = vrot.slane %v3245, %v3297
    %v3301 = vsel %vm639, %v3200, 0
    %3303 = vmatprep.subr.mxu0 0.0
    %3304 = vmatpush1.msra.mxu0 %v3244
    %3305 = vmatprep.subr.mxu0 0.0
    %3306 = vmatpush1.msra.mxu0 0.0
    %3307 = vmatprep.subr.mxu0 0.0
    %3308 = vmatpush1.msra.mxu0 0.0
    %3309 = vmatprep.subr.mxu0 0.0
    %3310 = vmatpush1.msra.mxu0 0.0
    %3311 = vmatprep.subr.mxu0 0.0
    %3312 = vmatpush1.msra.mxu0 0.0
    %3313 = vmatprep.subr.mxu0 0.0
    %3314 = vmatpush1.msra.mxu0 0.0
    %3315 = vmatprep.subr.mxu0 0.0
    %3316 = vmatpush1.msra.mxu0 0.0
    %3317 = vmatprep.subr.mxu0 0.0
    %3318 = vmatpush1.msra.mxu0 0.0
    %3319 = vmatprep.subr.mxu0 0.0
    %3320 = vmatpush1.msra.mxu0 0.0
    %3321 = vmatprep.subr.mxu0 0.0
    %3322 = vmatpush1.msra.mxu0 0.0
    %3323 = vmatprep.subr.mxu0 0.0
    %3324 = vmatpush1.msra.mxu0 0.0
    %3325 = vmatprep.subr.mxu0 0.0
    %3326 = vmatpush1.msra.mxu0 0.0
    %3327 = vmatprep.subr.mxu0 0.0
    %3328 = vmatpush1.msra.mxu0 0.0
    %3329 = vmatprep.subr.mxu0 0.0
    %3330 = vmatpush1.msra.mxu0 0.0
    %3331 = vmatprep.subr.mxu0 0.0
    %3332 = vmatpush1.msra.mxu0 0.0
    %3333 = vmatprep.subr.mxu0 0.0
    %3334 = vmatpush1.msra.mxu0 0.0
    %3335 = vmatprep.subr.mxu0 0.0
    %3336 = vmatpush1.msra.mxu0 0.0
    %3337 = vmatprep.subr.mxu0 0.0
    %3338 = vmatpush1.msra.mxu0 0.0
    %3339 = vmatprep.subr.mxu0 0.0
    %3340 = vmatpush1.msra.mxu0 0.0
    %3341 = vmatprep.subr.mxu0 0.0
    %3342 = vmatpush1.msra.mxu0 0.0
    %3343 = vmatprep.subr.mxu0 0.0
    %3344 = vmatpush1.msra.mxu0 0.0
    %3345 = vmatprep.subr.mxu0 0.0
    %3346 = vmatpush1.msra.mxu0 0.0
    %3347 = vmatprep.subr.mxu0 0.0
    %3348 = vmatpush1.msra.mxu0 0.0
    %3349 = vmatprep.subr.mxu0 0.0
    %3350 = vmatpush1.msra.mxu0 0.0
    %3351 = vmatprep.subr.mxu0 0.0
    %3352 = vmatpush1.msra.mxu0 0.0
    %3353 = vmatprep.subr.mxu0 0.0
    %3354 = vmatpush1.msra.mxu0 0.0
    %3355 = vmatprep.subr.mxu0 0.0
    %3356 = vmatpush1.msra.mxu0 0.0
    %3357 = vmatprep.subr.mxu0 0.0
    %3358 = vmatpush1.msra.mxu0 0.0
    %3359 = vmatprep.subr.mxu0 0.0
    %3360 = vmatpush1.msra.mxu0 0.0
    %3361 = vmatprep.subr.mxu0 0.0
    %3362 = vmatpush1.msra.mxu0 0.0
    %3363 = vmatprep.subr.mxu0 0.0
    %3364 = vmatpush1.msra.mxu0 0.0
    %3365 = vmatprep.subr.mxu0 0.0
    %3366 = vmatpush1.msra.mxu0 0.0
    %3367 = vmatprep.mubr.f32.mxu0 0.0
    %3368 = vmatmul.mubr.f32.gmra.mrb[0].mxu0 %v3301
    %v3369 = vpop.f32.mrb[0].mxu0
    %v3370 = vadd.f32 %v3298, %v3369
    %v3371 = vpop.f32.mrb[0].mxu0
    %3372 = vdwg.mxu0
    %v3373 = vmax.f32 %v3370, 0.0
    %v3375 = vlaneseq
    %v3376 = vshrl.u32 %v3375, 7
    %v3377 = vsub.s32 0, %v3376
    %v3378 = vrot.slane %v3247, %v3377
    %v3381 = vsel %vm639, %v3373, 0
    %3383 = vmatprep.subr.mxu0 0.0
    %3384 = vmatpush1.msra.mxu0 %v3246
    %3385 = vmatprep.subr.mxu0 0.0
    %3386 = vmatpush1.msra.mxu0 0.0
    %3387 = vmatprep.subr.mxu0 0.0
    %3388 = vmatpush1.msra.mxu0 0.0
    %3389 = vmatprep.subr.mxu0 0.0
    %3390 = vmatpush1.msra.mxu0 0.0
    %3391 = vmatprep.subr.mxu0 0.0
    %3392 = vmatpush1.msra.mxu0 0.0
    %3393 = vmatprep.subr.mxu0 0.0
    %3394 = vmatpush1.msra.mxu0 0.0
    %3395 = vmatprep.subr.mxu0 0.0
    %3396 = vmatpush1.msra.mxu0 0.0
    %3397 = vmatprep.subr.mxu0 0.0
    %3398 = vmatpush1.msra.mxu0 0.0
    %3399 = vmatprep.subr.mxu0 0.0
    %3400 = vmatpush1.msra.mxu0 0.0
    %3401 = vmatprep.subr.mxu0 0.0
    %3402 = vmatpush1.msra.mxu0 0.0
    %3403 = vmatprep.subr.mxu0 0.0
    %3404 = vmatpush1.msra.mxu0 0.0
    %3405 = vmatprep.subr.mxu0 0.0
    %3406 = vmatpush1.msra.mxu0 0.0
    %3407 = vmatprep.subr.mxu0 0.0
    %3408 = vmatpush1.msra.mxu0 0.0
    %3409 = vmatprep.subr.mxu0 0.0
    %3410 = vmatpush1.msra.mxu0 0.0
    %3411 = vmatprep.subr.mxu0 0.0
    %3412 = vmatpush1.msra.mxu0 0.0
    %3413 = vmatprep.subr.mxu0 0.0
    %3414 = vmatpush1.msra.mxu0 0.0
    %3415 = vmatprep.subr.mxu0 0.0
    %3416 = vmatpush1.msra.mxu0 0.0
    %3417 = vmatprep.subr.mxu0 0.0
    %3418 = vmatpush1.msra.mxu0 0.0
    %3419 = vmatprep.subr.mxu0 0.0
    %3420 = vmatpush1.msra.mxu0 0.0
    %3421 = vmatprep.subr.mxu0 0.0
    %3422 = vmatpush1.msra.mxu0 0.0
    %3423 = vmatprep.subr.mxu0 0.0
    %3424 = vmatpush1.msra.mxu0 0.0
    %3425 = vmatprep.subr.mxu0 0.0
    %3426 = vmatpush1.msra.mxu0 0.0
    %3427 = vmatprep.subr.mxu0 0.0
    %3428 = vmatpush1.msra.mxu0 0.0
    %3429 = vmatprep.subr.mxu0 0.0
    %3430 = vmatpush1.msra.mxu0 0.0
    %3431 = vmatprep.subr.mxu0 0.0
    %3432 = vmatpush1.msra.mxu0 0.0
    %3433 = vmatprep.subr.mxu0 0.0
    %3434 = vmatpush1.msra.mxu0 0.0
    %3435 = vmatprep.subr.mxu0 0.0
    %3436 = vmatpush1.msra.mxu0 0.0
    %3437 = vmatprep.subr.mxu0 0.0
    %3438 = vmatpush1.msra.mxu0 0.0
    %3439 = vmatprep.subr.mxu0 0.0
    %3440 = vmatpush1.msra.mxu0 0.0
    %3441 = vmatprep.subr.mxu0 0.0
    %3442 = vmatpush1.msra.mxu0 0.0
    %3443 = vmatprep.subr.mxu0 0.0
    %3444 = vmatpush1.msra.mxu0 0.0
    %3445 = vmatprep.subr.mxu0 0.0
    %3446 = vmatpush1.msra.mxu0 0.0
    %3447 = vmatprep.mubr.f32.mxu0 0.0
    %3448 = vmatmul.mubr.f32.gmra.mrb[0].mxu0 %v3381
    %v3449 = vpop.f32.mrb[0].mxu0
    %v3450 = vadd.f32 %v3378, %v3449
    %v3451 = vpop.f32.mrb[0].mxu0
    %3452 = vdwg.mxu0
    %v3453 = vmax.f32 %v3450, 0.0
    %v3455 = vlaneseq
    %v3456 = vshrl.u32 %v3455, 7
    %v3457 = vsub.s32 0, %v3456
    %v3458 = vrot.slane %v3249, %v3457
    %3460 = vmatprep.subr.mxu0 0.0
    %3461 = vmatpush1.msra.mxu0 %v3248
    %3462 = vmatprep.subr.mxu0 0.0
    %3463 = vmatpush1.msra.mxu0 0.0
    %3464 = vmatprep.subr.mxu0 0.0
    %3465 = vmatpush1.msra.mxu0 0.0
    %3466 = vmatprep.subr.mxu0 0.0
    %3467 = vmatpush1.msra.mxu0 0.0
    %3468 = vmatprep.subr.mxu0 0.0
    %3469 = vmatpush1.msra.mxu0 0.0
    %3470 = vmatprep.subr.mxu0 0.0
    %3471 = vmatpush1.msra.mxu0 0.0
    %3472 = vmatprep.subr.mxu0 0.0
    %3473 = vmatpush1.msra.mxu0 0.0
    %3474 = vmatprep.subr.mxu0 0.0
    %3475 = vmatpush1.msra.mxu0 0.0
    %3476 = vmatprep.subr.mxu0 0.0
    %3477 = vmatpush1.msra.mxu0 0.0
    %3478 = vmatprep.subr.mxu0 0.0
    %3479 = vmatpush1.msra.mxu0 0.0
    %3480 = vmatprep.subr.mxu0 0.0
    %3481 = vmatpush1.msra.mxu0 0.0
    %3482 = vmatprep.subr.mxu0 0.0
    %3483 = vmatpush1.msra.mxu0 0.0
    %3484 = vmatprep.subr.mxu0 0.0
    %3485 = vmatpush1.msra.mxu0 0.0
    %3486 = vmatprep.subr.mxu0 0.0
    %3487 = vmatpush1.msra.mxu0 0.0
    %3488 = vmatprep.subr.mxu0 0.0
    %3489 = vmatpush1.msra.mxu0 0.0
    %3490 = vmatprep.subr.mxu0 0.0
    %3491 = vmatpush1.msra.mxu0 0.0
    %3492 = vmatprep.subr.mxu0 0.0
    %3493 = vmatpush1.msra.mxu0 0.0
    %3494 = vmatprep.subr.mxu0 0.0
    %3495 = vmatpush1.msra.mxu0 0.0
    %3496 = vmatprep.subr.mxu0 0.0
    %3497 = vmatpush1.msra.mxu0 0.0
    %3498 = vmatprep.subr.mxu0 0.0
    %3499 = vmatpush1.msra.mxu0 0.0
    %3500 = vmatprep.subr.mxu0 0.0
    %3501 = vmatpush1.msra.mxu0 0.0
    %3502 = vmatprep.subr.mxu0 0.0
    %3503 = vmatpush1.msra.mxu0 0.0
    %3504 = vmatprep.subr.mxu0 0.0
    %3505 = vmatpush1.msra.mxu0 0.0
    %3506 = vmatprep.subr.mxu0 0.0
    %3507 = vmatpush1.msra.mxu0 0.0
    %3508 = vmatprep.subr.mxu0 0.0
    %3509 = vmatpush1.msra.mxu0 0.0
    %3510 = vmatprep.subr.mxu0 0.0
    %3511 = vmatpush1.msra.mxu0 0.0
    %3512 = vmatprep.subr.mxu0 0.0
    %3513 = vmatpush1.msra.mxu0 0.0
    %3514 = vmatprep.subr.mxu0 0.0
    %3515 = vmatpush1.msra.mxu0 0.0
    %3516 = vmatprep.subr.mxu0 0.0
    %3517 = vmatpush1.msra.mxu0 0.0
    %3518 = vmatprep.subr.mxu0 0.0
    %3519 = vmatpush1.msra.mxu0 0.0
    %3520 = vmatprep.subr.mxu0 0.0
    %3521 = vmatpush1.msra.mxu0 0.0
    %3522 = vmatprep.subr.mxu0 0.0
    %3523 = vmatpush1.msra.mxu0 0.0
    %3524 = vmatprep.mubr.f32.mxu0 0.0
    %3525 = vmatmul.mubr.f32.gmra.mrb[0].mxu0 %v3301
    %v3526 = vpop.f32.mrb[0].mxu0
    %v3527 = vadd.f32 %v3458, %v3526
    %v3528 = vpop.f32.mrb[0].mxu0
    %3529 = vdwg.mxu0
    %v3530 = vmax.f32 %v3527, 0.0
    %v3532 = vlaneseq
    %v3533 = vshrl.u32 %v3532, 7
    %v3534 = vsub.s32 0, %v3533
    %v3535 = vrot.slane %v3258, %v3534
    %vm3537 = vcmask 523264
    %v3539 = vsel %vm3537, %v3530, 0
    %3541 = vmatprep.subr.mxu0 0.0
    %3542 = vmatpush1.msra.mxu0 %v3250
    %3543 = vmatprep.subr.mxu0 0.0
    %3544 = vmatpush1.msra.mxu0 %v3251
    %3545 = vmatprep.subr.mxu0 0.0
    %3546 = vmatpush1.msra.mxu0 %v3252
    %3547 = vmatprep.subr.mxu0 0.0
    %3548 = vmatpush1.msra.mxu0 %v3253
    %3549 = vmatprep.subr.mxu0 0.0
    %3550 = vmatpush1.msra.mxu0 %v3254
    %3551 = vmatprep.subr.mxu0 0.0
    %3552 = vmatpush1.msra.mxu0 %v3255
    %3553 = vmatprep.subr.mxu0 0.0
    %3554 = vmatpush1.msra.mxu0 %v3256
    %3555 = vmatprep.subr.mxu0 0.0
    %3556 = vmatpush1.msra.mxu0 %v3257
    %3557 = vmatprep.subr.mxu0 0.0
    %3558 = vmatpush1.msra.mxu0 0.0
    %3559 = vmatprep.subr.mxu0 0.0
    %3560 = vmatpush1.msra.mxu0 0.0
    %3561 = vmatprep.subr.mxu0 0.0
    %3562 = vmatpush1.msra.mxu0 0.0
    %3563 = vmatprep.subr.mxu0 0.0
    %3564 = vmatpush1.msra.mxu0 0.0
    %3565 = vmatprep.subr.mxu0 0.0
    %3566 = vmatpush1.msra.mxu0 0.0
    %3567 = vmatprep.subr.mxu0 0.0
    %3568 = vmatpush1.msra.mxu0 0.0
    %3569 = vmatprep.subr.mxu0 0.0
    %3570 = vmatpush1.msra.mxu0 0.0
    %3571 = vmatprep.subr.mxu0 0.0
    %3572 = vmatpush1.msra.mxu0 0.0
    %3573 = vmatprep.subr.mxu0 0.0
    %3574 = vmatpush1.msra.mxu0 0.0
    %3575 = vmatprep.subr.mxu0 0.0
    %3576 = vmatpush1.msra.mxu0 0.0
    %3577 = vmatprep.subr.mxu0 0.0
    %3578 = vmatpush1.msra.mxu0 0.0
    %3579 = vmatprep.subr.mxu0 0.0
    %3580 = vmatpush1.msra.mxu0 0.0
    %3581 = vmatprep.subr.mxu0 0.0
    %3582 = vmatpush1.msra.mxu0 0.0
    %3583 = vmatprep.subr.mxu0 0.0
    %3584 = vmatpush1.msra.mxu0 0.0
    %3585 = vmatprep.subr.mxu0 0.0
    %3586 = vmatpush1.msra.mxu0 0.0
    %3587 = vmatprep.subr.mxu0 0.0
    %3588 = vmatpush1.msra.mxu0 0.0
    %3589 = vmatprep.subr.mxu0 0.0
    %3590 = vmatpush1.msra.mxu0 0.0
    %3591 = vmatprep.subr.mxu0 0.0
    %3592 = vmatpush1.msra.mxu0 0.0
    %3593 = vmatprep.subr.mxu0 0.0
    %3594 = vmatpush1.msra.mxu0 0.0
    %3595 = vmatprep.subr.mxu0 0.0
    %3596 = vmatpush1.msra.mxu0 0.0
    %3597 = vmatprep.subr.mxu0 0.0
    %3598 = vmatpush1.msra.mxu0 0.0
    %3599 = vmatprep.subr.mxu0 0.0
    %3600 = vmatpush1.msra.mxu0 0.0
    %3601 = vmatprep.subr.mxu0 0.0
    %3602 = vmatpush1.msra.mxu0 0.0
    %3603 = vmatprep.subr.mxu0 0.0
    %3604 = vmatpush1.msra.mxu0 0.0
    %3605 = vmatprep.mubr.f32.mxu0 0.0
    %3606 = vmatmul.mubr.f32.gmra.mrb[0].mxu0 %v3539
    %v3607 = vpop.f32.mrb[0].mxu0
    %v3608 = vadd.f32 %v3535, %v3607
    %v3609 = vpop.f32.mrb[0].mxu0
    %3610 = vdwg.mxu0
    %v3611 = vmax.f32 %v3608, 0.0
    %v3613 = vlaneseq
    %v3614 = vshrl.u32 %v3613, 7
    %v3615 = vsub.s32 0, %v3614
    %v3616 = vrot.slane %v3260, %v3615
    %v3619 = vsel %vm639, %v3242, 0
    %v3622 = vsel %vm639, %v3243, 0
    %3624 = vmatprep.subr.mxu0 0.0
    %3625 = vmatpush1.msra.mxu0 %v3259
    %3626 = vmatprep.subr.mxu0 0.0
    %3627 = vmatpush1.msra.mxu0 0.0
    %3628 = vmatprep.subr.mxu0 0.0
    %3629 = vmatpush1.msra.mxu0 0.0
    %3630 = vmatprep.subr.mxu0 0.0
    %3631 = vmatpush1.msra.mxu0 0.0
    %3632 = vmatprep.subr.mxu0 0.0
    %3633 = vmatpush1.msra.mxu0 0.0
    %3634 = vmatprep.subr.mxu0 0.0
    %3635 = vmatpush1.msra.mxu0 0.0
    %3636 = vmatprep.subr.mxu0 0.0
    %3637 = vmatpush1.msra.mxu0 0.0
    %3638 = vmatprep.subr.mxu0 0.0
    %3639 = vmatpush1.msra.mxu0 0.0
    %3640 = vmatprep.subr.mxu0 0.0
    %3641 = vmatpush1.msra.mxu0 0.0
    %3642 = vmatprep.subr.mxu0 0.0
    %3643 = vmatpush1.msra.mxu0 0.0
    %3644 = vmatprep.subr.mxu0 0.0
    %3645 = vmatpush1.msra.mxu0 0.0
    %3646 = vmatprep.subr.mxu0 0.0
    %3647 = vmatpush1.msra.mxu0 0.0
    %3648 = vmatprep.subr.mxu0 0.0
    %3649 = vmatpush1.msra.mxu0 0.0
    %3650 = vmatprep.subr.mxu0 0.0
    %3651 = vmatpush1.msra.mxu0 0.0
    %3652 = vmatprep.subr.mxu0 0.0
    %3653 = vmatpush1.msra.mxu0 0.0
    %3654 = vmatprep.subr.mxu0 0.0
    %3655 = vmatpush1.msra.mxu0 0.0
    %3656 = vmatprep.subr.mxu0 0.0
    %3657 = vmatpush1.msra.mxu0 0.0
    %3658 = vmatprep.subr.mxu0 0.0
    %3659 = vmatpush1.msra.mxu0 0.0
    %3660 = vmatprep.subr.mxu0 0.0
    %3661 = vmatpush1.msra.mxu0 0.0
    %3662 = vmatprep.subr.mxu0 0.0
    %3663 = vmatpush1.msra.mxu0 0.0
    %3664 = vmatprep.subr.mxu0 0.0
    %3665 = vmatpush1.msra.mxu0 0.0
    %3666 = vmatprep.subr.mxu0 0.0
    %3667 = vmatpush1.msra.mxu0 0.0
    %3668 = vmatprep.subr.mxu0 0.0
    %3669 = vmatpush1.msra.mxu0 0.0
    %3670 = vmatprep.subr.mxu0 0.0
    %3671 = vmatpush1.msra.mxu0 0.0
    %3672 = vmatprep.subr.mxu0 0.0
    %3673 = vmatpush1.msra.mxu0 0.0
    %3674 = vmatprep.subr.mxu0 0.0
    %3675 = vmatpush1.msra.mxu0 0.0
    %3676 = vmatprep.subr.mxu0 0.0
    %3677 = vmatpush1.msra.mxu0 0.0
    %3678 = vmatprep.subr.mxu0 0.0
    %3679 = vmatpush1.msra.mxu0 0.0
    %3680 = vmatprep.subr.mxu0 0.0
    %3681 = vmatpush1.msra.mxu0 0.0
    %3682 = vmatprep.subr.mxu0 0.0
    %3683 = vmatpush1.msra.mxu0 0.0
    %3684 = vmatprep.subr.mxu0 0.0
    %3685 = vmatpush1.msra.mxu0 0.0
    %3686 = vmatprep.subr.mxu0 0.0
    %3687 = vmatpush1.msra.mxu0 0.0
    %3688 = vmatprep.mubr.f32.mxu0 0.0
    %3689 = vmatmul.mubr.f32.gmra.mrb[0].mxu0 %v3619
    %v3690 = vpop.f32.mrb[0].mxu0
    %v3691 = vadd.f32 %v3616, %v3690
    %v3692 = vpop.f32.mrb[0].mxu0
    %3693 = vmatprep.mubr.f32.mxu0 0.0
    %3694 = vmatmul.mubr.f32.gmra.mrb[0].mxu0 %v3622
    %v3695 = vpop.f32.mrb[0].mxu0
    %v3696 = vadd.f32 %v3616, %v3695
    %v3697 = vpop.f32.mrb[0].mxu0
    %3698 = vdwg.mxu0
    %v3699 = vmax.f32 %v3691, 0.0
    %v3700 = vmax.f32 %v3696, 0.0
    %v3702 = vlaneseq
    %v3703 = vshrl.u32 %v3702, 7
    %v3704 = vsub.s32 0, %v3703
    %v3705 = vrot.slane %v3262, %v3704
    %v3708 = vsel %vm639, %v3699, 0
    %v3711 = vsel %vm639, %v3700, 0
    %3713 = vmatprep.subr.mxu0 0.0
    %3714 = vmatpush1.msra.mxu0 %v3261
    %3715 = vmatprep.subr.mxu0 0.0
    %3716 = vmatpush1.msra.mxu0 0.0
    %3717 = vmatprep.subr.mxu0 0.0
    %3718 = vmatpush1.msra.mxu0 0.0
    %3719 = vmatprep.subr.mxu0 0.0
    %3720 = vmatpush1.msra.mxu0 0.0
    %3721 = vmatprep.subr.mxu0 0.0
    %3722 = vmatpush1.msra.mxu0 0.0
    %3723 = vmatprep.subr.mxu0 0.0
    %3724 = vmatpush1.msra.mxu0 0.0
    %3725 = vmatprep.subr.mxu0 0.0
    %3726 = vmatpush1.msra.mxu0 0.0
    %3727 = vmatprep.subr.mxu0 0.0
    %3728 = vmatpush1.msra.mxu0 0.0
    %3729 = vmatprep.subr.mxu0 0.0
    %3730 = vmatpush1.msra.mxu0 0.0
    %3731 = vmatprep.subr.mxu0 0.0
    %3732 = vmatpush1.msra.mxu0 0.0
    %3733 = vmatprep.subr.mxu0 0.0
    %3734 = vmatpush1.msra.mxu0 0.0
    %3735 = vmatprep.subr.mxu0 0.0
    %3736 = vmatpush1.msra.mxu0 0.0
    %3737 = vmatprep.subr.mxu0 0.0
    %3738 = vmatpush1.msra.mxu0 0.0
    %3739 = vmatprep.subr.mxu0 0.0
    %3740 = vmatpush1.msra.mxu0 0.0
    %3741 = vmatprep.subr.mxu0 0.0
    %3742 = vmatpush1.msra.mxu0 0.0
    %3743 = vmatprep.subr.mxu0 0.0
    %3744 = vmatpush1.msra.mxu0 0.0
    %3745 = vmatprep.subr.mxu0 0.0
    %3746 = vmatpush1.msra.mxu0 0.0
    %3747 = vmatprep.subr.mxu0 0.0
    %3748 = vmatpush1.msra.mxu0 0.0
    %3749 = vmatprep.subr.mxu0 0.0
    %3750 = vmatpush1.msra.mxu0 0.0
    %3751 = vmatprep.subr.mxu0 0.0
    %3752 = vmatpush1.msra.mxu0 0.0
    %3753 = vmatprep.subr.mxu0 0.0
    %3754 = vmatpush1.msra.mxu0 0.0
    %3755 = vmatprep.subr.mxu0 0.0
    %3756 = vmatpush1.msra.mxu0 0.0
    %3757 = vmatprep.subr.mxu0 0.0
    %3758 = vmatpush1.msra.mxu0 0.0
    %3759 = vmatprep.subr.mxu0 0.0
    %3760 = vmatpush1.msra.mxu0 0.0
    %3761 = vmatprep.subr.mxu0 0.0
    %3762 = vmatpush1.msra.mxu0 0.0
    %3763 = vmatprep.subr.mxu0 0.0
    %3764 = vmatpush1.msra.mxu0 0.0
    %3765 = vmatprep.subr.mxu0 0.0
    %3766 = vmatpush1.msra.mxu0 0.0
    %3767 = vmatprep.subr.mxu0 0.0
    %3768 = vmatpush1.msra.mxu0 0.0
    %3769 = vmatprep.subr.mxu0 0.0
    %3770 = vmatpush1.msra.mxu0 0.0
    %3771 = vmatprep.subr.mxu0 0.0
    %3772 = vmatpush1.msra.mxu0 0.0
    %3773 = vmatprep.subr.mxu0 0.0
    %3774 = vmatpush1.msra.mxu0 0.0
    %3775 = vmatprep.subr.mxu0 0.0
    %3776 = vmatpush1.msra.mxu0 0.0
    %3777 = vmatprep.mubr.f32.mxu0 0.0
    %3778 = vmatmul.mubr.f32.gmra.mrb[0].mxu0 %v3708
    %v3779 = vpop.f32.mrb[0].mxu0
    %v3780 = vadd.f32 %v3705, %v3779
    %v3781 = vpop.f32.mrb[0].mxu0
    %3782 = vmatprep.mubr.f32.mxu0 0.0
    %3783 = vmatmul.mubr.f32.gmra.mrb[0].mxu0 %v3711
    %v3784 = vpop.f32.mrb[0].mxu0
    %v3785 = vadd.f32 %v3705, %v3784
    %v3786 = vpop.f32.mrb[0].mxu0
    %3787 = vdwg.mxu0
    %v3788 = vmax.f32 %v3780, 0.0
    %v3789 = vmax.f32 %v3785, 0.0
    %v3791 = vlaneseq
    %v3792 = vshrl.u32 %v3791, 7
    %v3793 = vsub.s32 0, %v3792
    %v3794 = vrot.slane %v3264, %v3793
    %3796 = vmatprep.subr.mxu0 0.0
    %3797 = vmatpush1.msra.mxu0 %v3263
    %3798 = vmatprep.subr.mxu0 0.0
    %3799 = vmatpush1.msra.mxu0 0.0
    %3800 = vmatprep.subr.mxu0 0.0
    %3801 = vmatpush1.msra.mxu0 0.0
    %3802 = vmatprep.subr.mxu0 0.0
    %3803 = vmatpush1.msra.mxu0 0.0
    %3804 = vmatprep.subr.mxu0 0.0
    %3805 = vmatpush1.msra.mxu0 0.0
    %3806 = vmatprep.subr.mxu0 0.0
    %3807 = vmatpush1.msra.mxu0 0.0
    %3808 = vmatprep.subr.mxu0 0.0
    %3809 = vmatpush1.msra.mxu0 0.0
    %3810 = vmatprep.subr.mxu0 0.0
    %3811 = vmatpush1.msra.mxu0 0.0
    %3812 = vmatprep.subr.mxu0 0.0
    %3813 = vmatpush1.msra.mxu0 0.0
    %3814 = vmatprep.subr.mxu0 0.0
    %3815 = vmatpush1.msra.mxu0 0.0
    %3816 = vmatprep.subr.mxu0 0.0
    %3817 = vmatpush1.msra.mxu0 0.0
    %3818 = vmatprep.subr.mxu0 0.0
    %3819 = vmatpush1.msra.mxu0 0.0
    %3820 = vmatprep.subr.mxu0 0.0
    %3821 = vmatpush1.msra.mxu0 0.0
    %3822 = vmatprep.subr.mxu0 0.0
    %3823 = vmatpush1.msra.mxu0 0.0
    %3824 = vmatprep.subr.mxu0 0.0
    %3825 = vmatpush1.msra.mxu0 0.0
    %3826 = vmatprep.subr.mxu0 0.0
    %3827 = vmatpush1.msra.mxu0 0.0
    %3828 = vmatprep.subr.mxu0 0.0
    %3829 = vmatpush1.msra.mxu0 0.0
    %3830 = vmatprep.subr.mxu0 0.0
    %3831 = vmatpush1.msra.mxu0 0.0
    %3832 = vmatprep.subr.mxu0 0.0
    %3833 = vmatpush1.msra.mxu0 0.0
    %3834 = vmatprep.subr.mxu0 0.0
    %3835 = vmatpush1.msra.mxu0 0.0
    %3836 = vmatprep.subr.mxu0 0.0
    %3837 = vmatpush1.msra.mxu0 0.0
    %3838 = vmatprep.subr.mxu0 0.0
    %3839 = vmatpush1.msra.mxu0 0.0
    %3840 = vmatprep.subr.mxu0 0.0
    %3841 = vmatpush1.msra.mxu0 0.0
    %3842 = vmatprep.subr.mxu0 0.0
    %3843 = vmatpush1.msra.mxu0 0.0
    %3844 = vmatprep.subr.mxu0 0.0
    %3845 = vmatpush1.msra.mxu0 0.0
    %3846 = vmatprep.subr.mxu0 0.0
    %3847 = vmatpush1.msra.mxu0 0.0
    %3848 = vmatprep.subr.mxu0 0.0
    %3849 = vmatpush1.msra.mxu0 0.0
    %3850 = vmatprep.subr.mxu0 0.0
    %3851 = vmatpush1.msra.mxu0 0.0
    %3852 = vmatprep.subr.mxu0 0.0
    %3853 = vmatpush1.msra.mxu0 0.0
    %3854 = vmatprep.subr.mxu0 0.0
    %3855 = vmatpush1.msra.mxu0 0.0
    %3856 = vmatprep.subr.mxu0 0.0
    %3857 = vmatpush1.msra.mxu0 0.0
    %3858 = vmatprep.subr.mxu0 0.0
    %3859 = vmatpush1.msra.mxu0 0.0
    %3860 = vmatprep.mubr.f32.mxu0 0.0
    %3861 = vmatmul.mubr.f32.gmra.mrb[0].mxu0 %v3619
    %v3862 = vpop.f32.mrb[0].mxu0
    %v3863 = vadd.f32 %v3794, %v3862
    %v3864 = vpop.f32.mrb[0].mxu0
    %3865 = vmatprep.mubr.f32.mxu0 0.0
    %3866 = vmatmul.mubr.f32.gmra.mrb[0].mxu0 %v3622
    %v3867 = vpop.f32.mrb[0].mxu0
    %v3868 = vadd.f32 %v3794, %v3867
    %v3869 = vpop.f32.mrb[0].mxu0
    %3870 = vdwg.mxu0
    %v3871 = vmax.f32 %v3863, 0.0
    %v3872 = vmax.f32 %v3868, 0.0
    %v3874 = vlaneseq
    %v3875 = vshrl.u32 %v3874, 7
    %v3876 = vsub.s32 0, %v3875
    %v3877 = vrot.slane %v3273, %v3876
    %v3880 = vsel %vm3537, %v3871, 0
    %v3883 = vsel %vm3537, %v3872, 0
    %3885 = vmatprep.subr.mxu0 0.0
    %3886 = vmatpush1.msra.mxu0 %v3265
    %3887 = vmatprep.subr.mxu0 0.0
    %3888 = vmatpush1.msra.mxu0 %v3266
    %3889 = vmatprep.subr.mxu0 0.0
    %3890 = vmatpush1.msra.mxu0 %v3267
    %3891 = vmatprep.subr.mxu0 0.0
    %3892 = vmatpush1.msra.mxu0 %v3268
    %3893 = vmatprep.subr.mxu0 0.0
    %3894 = vmatpush1.msra.mxu0 %v3269
    %3895 = vmatprep.subr.mxu0 0.0
    %3896 = vmatpush1.msra.mxu0 %v3270
    %3897 = vmatprep.subr.mxu0 0.0
    %3898 = vmatpush1.msra.mxu0 %v3271
    %3899 = vmatprep.subr.mxu0 0.0
    %3900 = vmatpush1.msra.mxu0 %v3272
    %3901 = vmatprep.subr.mxu0 0.0
    %3902 = vmatpush1.msra.mxu0 0.0
    %3903 = vmatprep.subr.mxu0 0.0
    %3904 = vmatpush1.msra.mxu0 0.0
    %3905 = vmatprep.subr.mxu0 0.0
    %3906 = vmatpush1.msra.mxu0 0.0
    %3907 = vmatprep.subr.mxu0 0.0
    %3908 = vmatpush1.msra.mxu0 0.0
    %3909 = vmatprep.subr.mxu0 0.0
    %3910 = vmatpush1.msra.mxu0 0.0
    %3911 = vmatprep.subr.mxu0 0.0
    %3912 = vmatpush1.msra.mxu0 0.0
    %3913 = vmatprep.subr.mxu0 0.0
    %3914 = vmatpush1.msra.mxu0 0.0
    %3915 = vmatprep.subr.mxu0 0.0
    %3916 = vmatpush1.msra.mxu0 0.0
    %3917 = vmatprep.subr.mxu0 0.0
    %3918 = vmatpush1.msra.mxu0 0.0
    %3919 = vmatprep.subr.mxu0 0.0
    %3920 = vmatpush1.msra.mxu0 0.0
    %3921 = vmatprep.subr.mxu0 0.0
    %3922 = vmatpush1.msra.mxu0 0.0
    %3923 = vmatprep.subr.mxu0 0.0
    %3924 = vmatpush1.msra.mxu0 0.0
    %3925 = vmatprep.subr.mxu0 0.0
    %3926 = vmatpush1.msra.mxu0 0.0
    %3927 = vmatprep.subr.mxu0 0.0
    %3928 = vmatpush1.msra.mxu0 0.0
    %3929 = vmatprep.subr.mxu0 0.0
    %3930 = vmatpush1.msra.mxu0 0.0
    %3931 = vmatprep.subr.mxu0 0.0
    %3932 = vmatpush1.msra.mxu0 0.0
    %3933 = vmatprep.subr.mxu0 0.0
    %3934 = vmatpush1.msra.mxu0 0.0
    %3935 = vmatprep.subr.mxu0 0.0
    %3936 = vmatpush1.msra.mxu0 0.0
    %3937 = vmatprep.subr.mxu0 0.0
    %3938 = vmatpush1.msra.mxu0 0.0
    %3939 = vmatprep.subr.mxu0 0.0
    %3940 = vmatpush1.msra.mxu0 0.0
    %3941 = vmatprep.subr.mxu0 0.0
    %3942 = vmatpush1.msra.mxu0 0.0
    %3943 = vmatprep.subr.mxu0 0.0
    %3944 = vmatpush1.msra.mxu0 0.0
    %3945 = vmatprep.subr.mxu0 0.0
    %3946 = vmatpush1.msra.mxu0 0.0
    %3947 = vmatprep.subr.mxu0 0.0
    %3948 = vmatpush1.msra.mxu0 0.0
    %3949 = vmatprep.mubr.f32.mxu0 0.0
    %3950 = vmatmul.mubr.f32.gmra.mrb[0].mxu0 %v3880
    %v3951 = vpop.f32.mrb[0].mxu0
    %v3952 = vadd.f32 %v3877, %v3951
    %v3953 = vpop.f32.mrb[0].mxu0
    %3954 = vmatprep.mubr.f32.mxu0 0.0
    %3955 = vmatmul.mubr.f32.gmra.mrb[0].mxu0 %v3883
    %v3956 = vpop.f32.mrb[0].mxu0
    %v3957 = vadd.f32 %v3877, %v3956
    %v3958 = vpop.f32.mrb[0].mxu0
    %3959 = vdwg.mxu0
    %v3960 = vmax.f32 %v3952, 0.0
    %v3961 = vmax.f32 %v3957, 0.0
    %v3962 = vmul.f32 %v3453, 0.35355338
    %v3963 = vsel %vm1235, %v3962, -inf
    %3964 = vmax.xlane.f32.xlu0 %v3963
    %v3965 = vpop.xlane.xlu0 %3964
    %v3966 = vrot.slane %v3965, 4
    %v3967 = vmax.f32 %v3965, %v3966
    %v3968 = vrot.slane %v3967, 2
    %v3969 = vmax.f32 %v3967, %v3968
    %v3970 = vrot.slane %v3969, 1
    %v3971 = vmax.f32 %v3969, %v3970
    %v3972 = vsub.f32 %v3962, %v3971
    %v3973 = vmul.f32 %v3972, 1.442695
    %v3974 = vpow.pop %v3973
    %3975 = vmatprep.subr.mxu0 0.0
    %3976 = vmatpush1.msra.mxu0 %v3974
    %3977 = vmatprep.subr.mxu0 0.0
    %3978 = vmatpush1.msra.mxu0 0.0
    %3979 = vmatprep.subr.mxu0 0.0
    %3980 = vmatpush1.msra.mxu0 0.0
    %3981 = vmatprep.subr.mxu0 0.0
    %3982 = vmatpush1.msra.mxu0 0.0
    %3983 = vmatprep.subr.mxu0 0.0
    %3984 = vmatpush1.msra.mxu0 0.0
    %3985 = vmatprep.subr.mxu0 0.0
    %3986 = vmatpush1.msra.mxu0 0.0
    %3987 = vmatprep.subr.mxu0 0.0
    %3988 = vmatpush1.msra.mxu0 0.0
    %3989 = vmatprep.subr.mxu0 0.0
    %3990 = vmatpush1.msra.mxu0 0.0
    %3991 = vmatprep.subr.mxu0 0.0
    %3992 = vmatpush1.msra.mxu0 0.0
    %3993 = vmatprep.subr.mxu0 0.0
    %3994 = vmatpush1.msra.mxu0 0.0
    %3995 = vmatprep.subr.mxu0 0.0
    %3996 = vmatpush1.msra.mxu0 0.0
    %3997 = vmatprep.subr.mxu0 0.0
    %3998 = vmatpush1.msra.mxu0 0.0
    %3999 = vmatprep.subr.mxu0 0.0
    %4000 = vmatpush1.msra.mxu0 0.0
    %4001 = vmatprep.subr.mxu0 0.0
    %4002 = vmatpush1.msra.mxu0 0.0
    %4003 = vmatprep.subr.mxu0 0.0
    %4004 = vmatpush1.msra.mxu0 0.0
    %4005 = vmatprep.subr.mxu0 0.0
    %4006 = vmatpush1.msra.mxu0 0.0
    %4007 = vmatprep.subr.mxu0 0.0
    %4008 = vmatpush1.msra.mxu0 0.0
    %4009 = vmatprep.subr.mxu0 0.0
    %4010 = vmatpush1.msra.mxu0 0.0
    %4011 = vmatprep.subr.mxu0 0.0
    %4012 = vmatpush1.msra.mxu0 0.0
    %4013 = vmatprep.subr.mxu0 0.0
    %4014 = vmatpush1.msra.mxu0 0.0
    %4015 = vmatprep.subr.mxu0 0.0
    %4016 = vmatpush1.msra.mxu0 0.0
    %4017 = vmatprep.subr.mxu0 0.0
    %4018 = vmatpush1.msra.mxu0 0.0
    %4019 = vmatprep.subr.mxu0 0.0
    %4020 = vmatpush1.msra.mxu0 0.0
    %4021 = vmatprep.subr.mxu0 0.0
    %4022 = vmatpush1.msra.mxu0 0.0
    %4023 = vmatprep.subr.mxu0 0.0
    %4024 = vmatpush1.msra.mxu0 0.0
    %4025 = vmatprep.subr.mxu0 0.0
    %4026 = vmatpush1.msra.mxu0 0.0
    %4027 = vmatprep.subr.mxu0 0.0
    %4028 = vmatpush1.msra.mxu0 0.0
    %4029 = vmatprep.subr.mxu0 0.0
    %4030 = vmatpush1.msra.mxu0 0.0
    %4031 = vmatprep.subr.mxu0 0.0
    %4032 = vmatpush1.msra.mxu0 0.0
    %4033 = vmatprep.subr.mxu0 0.0
    %4034 = vmatpush1.msra.mxu0 0.0
    %4035 = vmatprep.subr.mxu0 0.0
    %4036 = vmatpush1.msra.mxu0 0.0
    %4037 = vmatprep.subr.mxu0 0.0
    %4038 = vmatpush1.msra.mxu0 0.0
    %4039 = vmatprep.mubr.f32.mxu0 0.0
    %4040 = vmatmul.mubr.f32.gmra.mrb[0].mxu0 %v1249
    %v4041 = vpop.f32.mrb[0].mxu0
    %v4042 = vadd.f32 0.0, %v4041
    %v4043 = vpop.f32.mrb[0].mxu0
    %4044 = vdwg.mxu0
    %v4045 = vsel %vm1235, %v4042, 0.0
    %4046 = vadd.xlane.f32.xlu0 %v4045
    %v4047 = vpop.xlane.xlu0 %4046
    %v4048 = vrcp.pop %v4047
    %v4049 = vmul.f32 %v3974, %v4048
    %v4050 = vmul.f32 %v3788, 0.35355338
    %v4051 = vmul.f32 %v3789, 0.35355338
    %v4052 = vsel %vm1235, %v4050, -inf
    %4053 = vmax.xlane.f32.xlu0 %v4052
    %v4054 = vpop.xlane.xlu0 %4053
    %v4055 = vsel %vm1331, %v4051, -inf
    %4056 = vmax.xlane.f32.xlu0 %v4055
    %v4057 = vpop.xlane.xlu0 %4056
    %v4058 = vsel %vm888, %v4057, -inf
    %v4059 = vmax.f32 %v4054, %v4058
    %v4060 = vrot.slane %v4059, 4
    %v4061 = vmax.f32 %v4059, %v4060
    %v4062 = vrot.slane %v4061, 2
    %v4063 = vmax.f32 %v4061, %v4062
    %v4064 = vrot.slane %v4063, 1
    %v4065 = vmax.f32 %v4063, %v4064
    %v4066 = vsub.f32 %v4050, %v4065
    %v4067 = vsub.f32 %v4051, %v4065
    %v4068 = vmul.f32 %v4066, 1.442695
    %v4069 = vpow.pop %v4068
    %v4070 = vmul.f32 %v4067, 1.442695
    %v4071 = vpow.pop %v4070
    %v4073 = vsel %vm888, %v4071, 0
    %4075 = vmatprep.subr.mxu0 0.0
    %4076 = vmatpush1.msra.mxu0 %v4069
    %4077 = vmatprep.subr.mxu0 0.0
    %4078 = vmatpush1.msra.mxu0 %v4073
    %4079 = vmatprep.subr.mxu0 0.0
    %4080 = vmatpush1.msra.mxu0 0.0
    %4081 = vmatprep.subr.mxu0 0.0
    %4082 = vmatpush1.msra.mxu0 0.0
    %4083 = vmatprep.subr.mxu0 0.0
    %4084 = vmatpush1.msra.mxu0 0.0
    %4085 = vmatprep.subr.mxu0 0.0
    %4086 = vmatpush1.msra.mxu0 0.0
    %4087 = vmatprep.subr.mxu0 0.0
    %4088 = vmatpush1.msra.mxu0 0.0
    %4089 = vmatprep.subr.mxu0 0.0
    %4090 = vmatpush1.msra.mxu0 0.0
    %4091 = vmatprep.subr.mxu0 0.0
    %4092 = vmatpush1.msra.mxu0 0.0
    %4093 = vmatprep.subr.mxu0 0.0
    %4094 = vmatpush1.msra.mxu0 0.0
    %4095 = vmatprep.subr.mxu0 0.0
    %4096 = vmatpush1.msra.mxu0 0.0
    %4097 = vmatprep.subr.mxu0 0.0
    %4098 = vmatpush1.msra.mxu0 0.0
    %4099 = vmatprep.subr.mxu0 0.0
    %4100 = vmatpush1.msra.mxu0 0.0
    %4101 = vmatprep.subr.mxu0 0.0
    %4102 = vmatpush1.msra.mxu0 0.0
    %4103 = vmatprep.subr.mxu0 0.0
    %4104 = vmatpush1.msra.mxu0 0.0
    %4105 = vmatprep.subr.mxu0 0.0
    %4106 = vmatpush1.msra.mxu0 0.0
    %4107 = vmatprep.subr.mxu0 0.0
    %4108 = vmatpush1.msra.mxu0 0.0
    %4109 = vmatprep.subr.mxu0 0.0
    %4110 = vmatpush1.msra.mxu0 0.0
    %4111 = vmatprep.subr.mxu0 0.0
    %4112 = vmatpush1.msra.mxu0 0.0
    %4113 = vmatprep.subr.mxu0 0.0
    %4114 = vmatpush1.msra.mxu0 0.0
    %4115 = vmatprep.subr.mxu0 0.0
    %4116 = vmatpush1.msra.mxu0 0.0
    %4117 = vmatprep.subr.mxu0 0.0
    %4118 = vmatpush1.msra.mxu0 0.0
    %4119 = vmatprep.subr.mxu0 0.0
    %4120 = vmatpush1.msra.mxu0 0.0
    %4121 = vmatprep.subr.mxu0 0.0
    %4122 = vmatpush1.msra.mxu0 0.0
    %4123 = vmatprep.subr.mxu0 0.0
    %4124 = vmatpush1.msra.mxu0 0.0
    %4125 = vmatprep.subr.mxu0 0.0
    %4126 = vmatpush1.msra.mxu0 0.0
    %4127 = vmatprep.subr.mxu0 0.0
    %4128 = vmatpush1.msra.mxu0 0.0
    %4129 = vmatprep.subr.mxu0 0.0
    %4130 = vmatpush1.msra.mxu0 0.0
    %4131 = vmatprep.subr.mxu0 0.0
    %4132 = vmatpush1.msra.mxu0 0.0
    %4133 = vmatprep.subr.mxu0 0.0
    %4134 = vmatpush1.msra.mxu0 0.0
    %4135 = vmatprep.subr.mxu0 0.0
    %4136 = vmatpush1.msra.mxu0 0.0
    %4137 = vmatprep.subr.mxu0 0.0
    %4138 = vmatpush1.msra.mxu0 0.0
    %4139 = vmatprep.mubr.f32.mxu0 0.0
    %4140 = vmatmul.mubr.f32.gmra.mrb[0].mxu0 %v1351
    %v4141 = vpop.f32.mrb[0].mxu0
    %v4142 = vadd.f32 0.0, %v4141
    %v4143 = vpop.f32.mrb[0].mxu0
    %4144 = vmatprep.mubr.f32.mxu0 0.0
    %4145 = vmatmul.mubr.f32.gmra.mrb[0].mxu0 %v1354
    %v4146 = vpop.f32.mrb[0].mxu0
    %v4147 = vadd.f32 0.0, %v4146
    %v4148 = vpop.f32.mrb[0].mxu0
    %4149 = vdwg.mxu0
    %v4150 = vsel %vm1235, %v4142, 0.0
    %4151 = vadd.xlane.f32.xlu0 %v4150
    %v4152 = vpop.xlane.xlu0 %4151
    %v4153 = vsel %vm1331, %v4147, 0.0
    %4154 = vadd.xlane.f32.xlu0 %v4153
    %v4155 = vpop.xlane.xlu0 %4154
    %v4156 = vrcp.pop %v4152
    %v4157 = vmul.f32 %v4069, %v4156
    %v4158 = vrcp.pop %v4155
    %v4159 = vmul.f32 %v4071, %v4158
    %vm4160 = vcmask 130048
    %v4162 = vsel %vm4160, %v3611, 0
    %4164 = vmatprep.subr.mxu0 0.0
    %4165 = vmatpush1.msra.mxu0 %v3286
    %4166 = vmatprep.subr.mxu0 0.0
    %4167 = vmatpush1.msra.mxu0 %v3287
    %4168 = vmatprep.subr.mxu0 0.0
    %4169 = vmatpush1.msra.mxu0 0.0
    %4170 = vmatprep.subr.mxu0 0.0
    %4171 = vmatpush1.msra.mxu0 0.0
    %4172 = vmatprep.subr.mxu0 0.0
    %4173 = vmatpush1.msra.mxu0 0.0
    %4174 = vmatprep.subr.mxu0 0.0
    %4175 = vmatpush1.msra.mxu0 0.0
    %4176 = vmatprep.subr.mxu0 0.0
    %4177 = vmatpush1.msra.mxu0 0.0
    %4178 = vmatprep.subr.mxu0 0.0
    %4179 = vmatpush1.msra.mxu0 0.0
    %4180 = vmatprep.subr.mxu0 0.0
    %4181 = vmatpush1.msra.mxu0 0.0
    %4182 = vmatprep.subr.mxu0 0.0
    %4183 = vmatpush1.msra.mxu0 0.0
    %4184 = vmatprep.subr.mxu0 0.0
    %4185 = vmatpush1.msra.mxu0 0.0
    %4186 = vmatprep.subr.mxu0 0.0
    %4187 = vmatpush1.msra.mxu0 0.0
    %4188 = vmatprep.subr.mxu0 0.0
    %4189 = vmatpush1.msra.mxu0 0.0
    %4190 = vmatprep.subr.mxu0 0.0
    %4191 = vmatpush1.msra.mxu0 0.0
    %4192 = vmatprep.subr.mxu0 0.0
    %4193 = vmatpush1.msra.mxu0 0.0
    %4194 = vmatprep.subr.mxu0 0.0
    %4195 = vmatpush1.msra.mxu0 0.0
    %4196 = vmatprep.subr.mxu0 0.0
    %4197 = vmatpush1.msra.mxu0 0.0
    %4198 = vmatprep.subr.mxu0 0.0
    %4199 = vmatpush1.msra.mxu0 0.0
    %4200 = vmatprep.subr.mxu0 0.0
    %4201 = vmatpush1.msra.mxu0 0.0
    %4202 = vmatprep.subr.mxu0 0.0
    %4203 = vmatpush1.msra.mxu0 0.0
    %4204 = vmatprep.subr.mxu0 0.0
    %4205 = vmatpush1.msra.mxu0 0.0
    %4206 = vmatprep.subr.mxu0 0.0
    %4207 = vmatpush1.msra.mxu0 0.0
    %4208 = vmatprep.subr.mxu0 0.0
    %4209 = vmatpush1.msra.mxu0 0.0
    %4210 = vmatprep.subr.mxu0 0.0
    %4211 = vmatpush1.msra.mxu0 0.0
    %4212 = vmatprep.subr.mxu0 0.0
    %4213 = vmatpush1.msra.mxu0 0.0
    %4214 = vmatprep.subr.mxu0 0.0
    %4215 = vmatpush1.msra.mxu0 0.0
    %4216 = vmatprep.subr.mxu0 0.0
    %4217 = vmatpush1.msra.mxu0 0.0
    %4218 = vmatprep.subr.mxu0 0.0
    %4219 = vmatpush1.msra.mxu0 0.0
    %4220 = vmatprep.subr.mxu0 0.0
    %4221 = vmatpush1.msra.mxu0 0.0
    %4222 = vmatprep.subr.mxu0 0.0
    %4223 = vmatpush1.msra.mxu0 0.0
    %4224 = vmatprep.subr.mxu0 0.0
    %4225 = vmatpush1.msra.mxu0 0.0
    %4226 = vmatprep.subr.mxu0 0.0
    %4227 = vmatpush1.msra.mxu0 0.0
    %4228 = vmatprep.mubr.f32.mxu0 0.0
    %4229 = vmatmul.mubr.f32.gmra.mrb[0].mxu0 %v4162
    %v4230 = vpop.f32.mrb[0].mxu0
    %v4231 = vadd.f32 0.0, %v4230
    %v4232 = vpop.f32.mrb[0].mxu0
    %4233 = vdwg.mxu0
    %4234 = vmatprep.subr.mxu0 0.0
    %4235 = vmatpush1.msra.mxu0 %v3288
    %4236 = vmatprep.subr.mxu0 0.0
    %4237 = vmatpush1.msra.mxu0 %v3289
    %4238 = vmatprep.subr.mxu0 0.0
    %4239 = vmatpush1.msra.mxu0 0.0
    %4240 = vmatprep.subr.mxu0 0.0
    %4241 = vmatpush1.msra.mxu0 0.0
    %4242 = vmatprep.subr.mxu0 0.0
    %4243 = vmatpush1.msra.mxu0 0.0
    %4244 = vmatprep.subr.mxu0 0.0
    %4245 = vmatpush1.msra.mxu0 0.0
    %4246 = vmatprep.subr.mxu0 0.0
    %4247 = vmatpush1.msra.mxu0 0.0
    %4248 = vmatprep.subr.mxu0 0.0
    %4249 = vmatpush1.msra.mxu0 0.0
    %4250 = vmatprep.subr.mxu0 0.0
    %4251 = vmatpush1.msra.mxu0 0.0
    %4252 = vmatprep.subr.mxu0 0.0
    %4253 = vmatpush1.msra.mxu0 0.0
    %4254 = vmatprep.subr.mxu0 0.0
    %4255 = vmatpush1.msra.mxu0 0.0
    %4256 = vmatprep.subr.mxu0 0.0
    %4257 = vmatpush1.msra.mxu0 0.0
    %4258 = vmatprep.subr.mxu0 0.0
    %4259 = vmatpush1.msra.mxu0 0.0
    %4260 = vmatprep.subr.mxu0 0.0
    %4261 = vmatpush1.msra.mxu0 0.0
    %4262 = vmatprep.subr.mxu0 0.0
    %4263 = vmatpush1.msra.mxu0 0.0
    %4264 = vmatprep.subr.mxu0 0.0
    %4265 = vmatpush1.msra.mxu0 0.0
    %4266 = vmatprep.subr.mxu0 0.0
    %4267 = vmatpush1.msra.mxu0 0.0
    %4268 = vmatprep.subr.mxu0 0.0
    %4269 = vmatpush1.msra.mxu0 0.0
    %4270 = vmatprep.subr.mxu0 0.0
    %4271 = vmatpush1.msra.mxu0 0.0
    %4272 = vmatprep.subr.mxu0 0.0
    %4273 = vmatpush1.msra.mxu0 0.0
    %4274 = vmatprep.subr.mxu0 0.0
    %4275 = vmatpush1.msra.mxu0 0.0
    %4276 = vmatprep.subr.mxu0 0.0
    %4277 = vmatpush1.msra.mxu0 0.0
    %4278 = vmatprep.subr.mxu0 0.0
    %4279 = vmatpush1.msra.mxu0 0.0
    %4280 = vmatprep.subr.mxu0 0.0
    %4281 = vmatpush1.msra.mxu0 0.0
    %4282 = vmatprep.subr.mxu0 0.0
    %4283 = vmatpush1.msra.mxu0 0.0
    %4284 = vmatprep.subr.mxu0 0.0
    %4285 = vmatpush1.msra.mxu0 0.0
    %4286 = vmatprep.subr.mxu0 0.0
    %4287 = vmatpush1.msra.mxu0 0.0
    %4288 = vmatprep.subr.mxu0 0.0
    %4289 = vmatpush1.msra.mxu0 0.0
    %4290 = vmatprep.subr.mxu0 0.0
    %4291 = vmatpush1.msra.mxu0 0.0
    %4292 = vmatprep.subr.mxu0 0.0
    %4293 = vmatpush1.msra.mxu0 0.0
    %4294 = vmatprep.subr.mxu0 0.0
    %4295 = vmatpush1.msra.mxu0 0.0
    %4296 = vmatprep.subr.mxu0 0.0
    %4297 = vmatpush1.msra.mxu0 0.0
    %4298 = vmatprep.mubr.f32.mxu0 0.0
    %4299 = vmatmul.mubr.f32.gmra.mrb[0].mxu0 %v4162
    %v4300 = vpop.f32.mrb[0].mxu0
    %v4301 = vadd.f32 0.0, %v4300
    %v4302 = vpop.f32.mrb[0].mxu0
    %4303 = vdwg.mxu0
    %v4305 = vsel %vm4160, %v3960, 0
    %v4308 = vsel %vm4160, %v3961, 0
    %4310 = vmatprep.subr.mxu0 0.0
    %4311 = vmatpush1.msra.mxu0 %v3290
    %4312 = vmatprep.subr.mxu0 0.0
    %4313 = vmatpush1.msra.mxu0 %v3291
    %4314 = vmatprep.subr.mxu0 0.0
    %4315 = vmatpush1.msra.mxu0 0.0
    %4316 = vmatprep.subr.mxu0 0.0
    %4317 = vmatpush1.msra.mxu0 0.0
    %4318 = vmatprep.subr.mxu0 0.0
    %4319 = vmatpush1.msra.mxu0 0.0
    %4320 = vmatprep.subr.mxu0 0.0
    %4321 = vmatpush1.msra.mxu0 0.0
    %4322 = vmatprep.subr.mxu0 0.0
    %4323 = vmatpush1.msra.mxu0 0.0
    %4324 = vmatprep.subr.mxu0 0.0
    %4325 = vmatpush1.msra.mxu0 0.0
    %4326 = vmatprep.subr.mxu0 0.0
    %4327 = vmatpush1.msra.mxu0 0.0
    %4328 = vmatprep.subr.mxu0 0.0
    %4329 = vmatpush1.msra.mxu0 0.0
    %4330 = vmatprep.subr.mxu0 0.0
    %4331 = vmatpush1.msra.mxu0 0.0
    %4332 = vmatprep.subr.mxu0 0.0
    %4333 = vmatpush1.msra.mxu0 0.0
    %4334 = vmatprep.subr.mxu0 0.0
    %4335 = vmatpush1.msra.mxu0 0.0
    %4336 = vmatprep.subr.mxu0 0.0
    %4337 = vmatpush1.msra.mxu0 0.0
    %4338 = vmatprep.subr.mxu0 0.0
    %4339 = vmatpush1.msra.mxu0 0.0
    %4340 = vmatprep.subr.mxu0 0.0
    %4341 = vmatpush1.msra.mxu0 0.0
    %4342 = vmatprep.subr.mxu0 0.0
    %4343 = vmatpush1.msra.mxu0 0.0
    %4344 = vmatprep.subr.mxu0 0.0
    %4345 = vmatpush1.msra.mxu0 0.0
    %4346 = vmatprep.subr.mxu0 0.0
    %4347 = vmatpush1.msra.mxu0 0.0
    %4348 = vmatprep.subr.mxu0 0.0
    %4349 = vmatpush1.msra.mxu0 0.0
    %4350 = vmatprep.subr.mxu0 0.0
    %4351 = vmatpush1.msra.mxu0 0.0
    %4352 = vmatprep.subr.mxu0 0.0
    %4353 = vmatpush1.msra.mxu0 0.0
    %4354 = vmatprep.subr.mxu0 0.0
    %4355 = vmatpush1.msra.mxu0 0.0
    %4356 = vmatprep.subr.mxu0 0.0
    %4357 = vmatpush1.msra.mxu0 0.0
    %4358 = vmatprep.subr.mxu0 0.0
    %4359 = vmatpush1.msra.mxu0 0.0
    %4360 = vmatprep.subr.mxu0 0.0
    %4361 = vmatpush1.msra.mxu0 0.0
    %4362 = vmatprep.subr.mxu0 0.0
    %4363 = vmatpush1.msra.mxu0 0.0
    %4364 = vmatprep.subr.mxu0 0.0
    %4365 = vmatpush1.msra.mxu0 0.0
    %4366 = vmatprep.subr.mxu0 0.0
    %4367 = vmatpush1.msra.mxu0 0.0
    %4368 = vmatprep.subr.mxu0 0.0
    %4369 = vmatpush1.msra.mxu0 0.0
    %4370 = vmatprep.subr.mxu0 0.0
    %4371 = vmatpush1.msra.mxu0 0.0
    %4372 = vmatprep.subr.mxu0 0.0
    %4373 = vmatpush1.msra.mxu0 0.0
    %4374 = vmatprep.mubr.f32.mxu0 0.0
    %4375 = vmatmul.mubr.f32.gmra.mrb[0].mxu0 %v4305
    %v4376 = vpop.f32.mrb[0].mxu0
    %v4377 = vadd.f32 0.0, %v4376
    %v4378 = vpop.f32.mrb[0].mxu0
    %4379 = vmatprep.mubr.f32.mxu0 0.0
    %4380 = vmatmul.mubr.f32.gmra.mrb[0].mxu0 %v4308
    %v4381 = vpop.f32.mrb[0].mxu0
    %v4382 = vadd.f32 0.0, %v4381
    %v4383 = vpop.f32.mrb[0].mxu0
    %4384 = vdwg.mxu0
    %4385 = vmatprep.subr.mxu0 0.0
    %4386 = vmatpush1.msra.mxu0 %v3292
    %4387 = vmatprep.subr.mxu0 0.0
    %4388 = vmatpush1.msra.mxu0 %v3293
    %4389 = vmatprep.subr.mxu0 0.0
    %4390 = vmatpush1.msra.mxu0 0.0
    %4391 = vmatprep.subr.mxu0 0.0
    %4392 = vmatpush1.msra.mxu0 0.0
    %4393 = vmatprep.subr.mxu0 0.0
    %4394 = vmatpush1.msra.mxu0 0.0
    %4395 = vmatprep.subr.mxu0 0.0
    %4396 = vmatpush1.msra.mxu0 0.0
    %4397 = vmatprep.subr.mxu0 0.0
    %4398 = vmatpush1.msra.mxu0 0.0
    %4399 = vmatprep.subr.mxu0 0.0
    %4400 = vmatpush1.msra.mxu0 0.0
    %4401 = vmatprep.subr.mxu0 0.0
    %4402 = vmatpush1.msra.mxu0 0.0
    %4403 = vmatprep.subr.mxu0 0.0
    %4404 = vmatpush1.msra.mxu0 0.0
    %4405 = vmatprep.subr.mxu0 0.0
    %4406 = vmatpush1.msra.mxu0 0.0
    %4407 = vmatprep.subr.mxu0 0.0
    %4408 = vmatpush1.msra.mxu0 0.0
    %4409 = vmatprep.subr.mxu0 0.0
    %4410 = vmatpush1.msra.mxu0 0.0
    %4411 = vmatprep.subr.mxu0 0.0
    %4412 = vmatpush1.msra.mxu0 0.0
    %4413 = vmatprep.subr.mxu0 0.0
    %4414 = vmatpush1.msra.mxu0 0.0
    %4415 = vmatprep.subr.mxu0 0.0
    %4416 = vmatpush1.msra.mxu0 0.0
    %4417 = vmatprep.subr.mxu0 0.0
    %4418 = vmatpush1.msra.mxu0 0.0
    %4419 = vmatprep.subr.mxu0 0.0
    %4420 = vmatpush1.msra.mxu0 0.0
    %4421 = vmatprep.subr.mxu0 0.0
    %4422 = vmatpush1.msra.mxu0 0.0
    %4423 = vmatprep.subr.mxu0 0.0
    %4424 = vmatpush1.msra.mxu0 0.0
    %4425 = vmatprep.subr.mxu0 0.0
    %4426 = vmatpush1.msra.mxu0 0.0
    %4427 = vmatprep.subr.mxu0 0.0
    %4428 = vmatpush1.msra.mxu0 0.0
    %4429 = vmatprep.subr.mxu0 0.0
    %4430 = vmatpush1.msra.mxu0 0.0
    %4431 = vmatprep.subr.mxu0 0.0
    %4432 = vmatpush1.msra.mxu0 0.0
    %4433 = vmatprep.subr.mxu0 0.0
    %4434 = vmatpush1.msra.mxu0 0.0
    %4435 = vmatprep.subr.mxu0 0.0
    %4436 = vmatpush1.msra.mxu0 0.0
    %4437 = vmatprep.subr.mxu0 0.0
    %4438 = vmatpush1.msra.mxu0 0.0
    %4439 = vmatprep.subr.mxu0 0.0
    %4440 = vmatpush1.msra.mxu0 0.0
    %4441 = vmatprep.subr.mxu0 0.0
    %4442 = vmatpush1.msra.mxu0 0.0
    %4443 = vmatprep.subr.mxu0 0.0
    %4444 = vmatpush1.msra.mxu0 0.0
    %4445 = vmatprep.subr.mxu0 0.0
    %4446 = vmatpush1.msra.mxu0 0.0
    %4447 = vmatprep.subr.mxu0 0.0
    %4448 = vmatpush1.msra.mxu0 0.0
    %4449 = vmatprep.mubr.f32.mxu0 0.0
    %4450 = vmatmul.mubr.f32.gmra.mrb[0].mxu0 %v4305
    %v4451 = vpop.f32.mrb[0].mxu0
    %v4452 = vadd.f32 0.0, %v4451
    %v4453 = vpop.f32.mrb[0].mxu0
    %4454 = vmatprep.mubr.f32.mxu0 0.0
    %4455 = vmatmul.mubr.f32.gmra.mrb[0].mxu0 %v4308
    %v4456 = vpop.f32.mrb[0].mxu0
    %v4457 = vadd.f32 0.0, %v4456
    %v4458 = vpop.f32.mrb[0].mxu0
    %4459 = vdwg.mxu0
    %v4461 = vsel %vm888, %v4159, 0
    %4463 = vmatprep.subr.mxu0 0.0
    %4464 = vmatpush1.msra.mxu0 %v4157
    %4465 = vmatprep.subr.mxu0 0.0
    %4466 = vmatpush1.msra.mxu0 %v4461
    %4467 = vmatprep.subr.mxu0 0.0
    %4468 = vmatpush1.msra.mxu0 0.0
    %4469 = vmatprep.subr.mxu0 0.0
    %4470 = vmatpush1.msra.mxu0 0.0
    %4471 = vmatprep.subr.mxu0 0.0
    %4472 = vmatpush1.msra.mxu0 0.0
    %4473 = vmatprep.subr.mxu0 0.0
    %4474 = vmatpush1.msra.mxu0 0.0
    %4475 = vmatprep.subr.mxu0 0.0
    %4476 = vmatpush1.msra.mxu0 0.0
    %4477 = vmatprep.subr.mxu0 0.0
    %4478 = vmatpush1.msra.mxu0 0.0
    %4479 = vmatprep.subr.mxu0 0.0
    %4480 = vmatpush1.msra.mxu0 0.0
    %4481 = vmatprep.subr.mxu0 0.0
    %4482 = vmatpush1.msra.mxu0 0.0
    %4483 = vmatprep.subr.mxu0 0.0
    %4484 = vmatpush1.msra.mxu0 0.0
    %4485 = vmatprep.subr.mxu0 0.0
    %4486 = vmatpush1.msra.mxu0 0.0
    %4487 = vmatprep.subr.mxu0 0.0
    %4488 = vmatpush1.msra.mxu0 0.0
    %4489 = vmatprep.subr.mxu0 0.0
    %4490 = vmatpush1.msra.mxu0 0.0
    %4491 = vmatprep.subr.mxu0 0.0
    %4492 = vmatpush1.msra.mxu0 0.0
    %4493 = vmatprep.subr.mxu0 0.0
    %4494 = vmatpush1.msra.mxu0 0.0
    %4495 = vmatprep.subr.mxu0 0.0
    %4496 = vmatpush1.msra.mxu0 0.0
    %4497 = vmatprep.subr.mxu0 0.0
    %4498 = vmatpush1.msra.mxu0 0.0
    %4499 = vmatprep.subr.mxu0 0.0
    %4500 = vmatpush1.msra.mxu0 0.0
    %4501 = vmatprep.subr.mxu0 0.0
    %4502 = vmatpush1.msra.mxu0 0.0
    %4503 = vmatprep.subr.mxu0 0.0
    %4504 = vmatpush1.msra.mxu0 0.0
    %4505 = vmatprep.subr.mxu0 0.0
    %4506 = vmatpush1.msra.mxu0 0.0
    %4507 = vmatprep.subr.mxu0 0.0
    %4508 = vmatpush1.msra.mxu0 0.0
    %4509 = vmatprep.subr.mxu0 0.0
    %4510 = vmatpush1.msra.mxu0 0.0
    %4511 = vmatprep.subr.mxu0 0.0
    %4512 = vmatpush1.msra.mxu0 0.0
    %4513 = vmatprep.subr.mxu0 0.0
    %4514 = vmatpush1.msra.mxu0 0.0
    %4515 = vmatprep.subr.mxu0 0.0
    %4516 = vmatpush1.msra.mxu0 0.0
    %4517 = vmatprep.subr.mxu0 0.0
    %4518 = vmatpush1.msra.mxu0 0.0
    %4519 = vmatprep.subr.mxu0 0.0
    %4520 = vmatpush1.msra.mxu0 0.0
    %4521 = vmatprep.subr.mxu0 0.0
    %4522 = vmatpush1.msra.mxu0 0.0
    %4523 = vmatprep.subr.mxu0 0.0
    %4524 = vmatpush1.msra.mxu0 0.0
    %4525 = vmatprep.subr.mxu0 0.0
    %4526 = vmatpush1.msra.mxu0 0.0
    %4527 = vmatprep.mubr.f32.mxu0 0.0
    %4528 = vmatmul.mubr.f32.gmra.mrb[0].mxu0 %v1750
    %v4529 = vpop.f32.mrb[0].mxu0
    %v4530 = vadd.f32 0.0, %v4529
    %v4531 = vpop.f32.mrb[0].mxu0
    %4532 = vmatprep.mubr.f32.mxu0 0.0
    %4533 = vmatmul.mubr.f32.gmra.mrb[0].mxu0 %v1753
    %v4534 = vpop.f32.mrb[0].mxu0
    %v4535 = vadd.f32 0.0, %v4534
    %v4536 = vpop.f32.mrb[0].mxu0
    %4537 = vdwg.mxu0
    %v4538 = vmul.f32 %v4530, %v486
    %v4539 = vmul.f32 %v4535, %v487
    %v4540 = vsel %vm1235, %v4538, 0.0
    %4541 = vadd.xlane.f32.xlu0 %v4540
    %v4542 = vpop.xlane.xlu0 %4541
    %v4543 = vsel %vm1331, %v4539, 0.0
    %4544 = vadd.xlane.f32.xlu0 %v4543
    %v4545 = vpop.xlane.xlu0 %4544
    %4546 = vmatprep.subr.mxu0 0.0
    %4547 = vmatpush1.msra.mxu0 %v4049
    %4548 = vmatprep.subr.mxu0 0.0
    %4549 = vmatpush1.msra.mxu0 0.0
    %4550 = vmatprep.subr.mxu0 0.0
    %4551 = vmatpush1.msra.mxu0 0.0
    %4552 = vmatprep.subr.mxu0 0.0
    %4553 = vmatpush1.msra.mxu0 0.0
    %4554 = vmatprep.subr.mxu0 0.0
    %4555 = vmatpush1.msra.mxu0 0.0
    %4556 = vmatprep.subr.mxu0 0.0
    %4557 = vmatpush1.msra.mxu0 0.0
    %4558 = vmatprep.subr.mxu0 0.0
    %4559 = vmatpush1.msra.mxu0 0.0
    %4560 = vmatprep.subr.mxu0 0.0
    %4561 = vmatpush1.msra.mxu0 0.0
    %4562 = vmatprep.subr.mxu0 0.0
    %4563 = vmatpush1.msra.mxu0 0.0
    %4564 = vmatprep.subr.mxu0 0.0
    %4565 = vmatpush1.msra.mxu0 0.0
    %4566 = vmatprep.subr.mxu0 0.0
    %4567 = vmatpush1.msra.mxu0 0.0
    %4568 = vmatprep.subr.mxu0 0.0
    %4569 = vmatpush1.msra.mxu0 0.0
    %4570 = vmatprep.subr.mxu0 0.0
    %4571 = vmatpush1.msra.mxu0 0.0
    %4572 = vmatprep.subr.mxu0 0.0
    %4573 = vmatpush1.msra.mxu0 0.0
    %4574 = vmatprep.subr.mxu0 0.0
    %4575 = vmatpush1.msra.mxu0 0.0
    %4576 = vmatprep.subr.mxu0 0.0
    %4577 = vmatpush1.msra.mxu0 0.0
    %4578 = vmatprep.subr.mxu0 0.0
    %4579 = vmatpush1.msra.mxu0 0.0
    %4580 = vmatprep.subr.mxu0 0.0
    %4581 = vmatpush1.msra.mxu0 0.0
    %4582 = vmatprep.subr.mxu0 0.0
    %4583 = vmatpush1.msra.mxu0 0.0
    %4584 = vmatprep.subr.mxu0 0.0
    %4585 = vmatpush1.msra.mxu0 0.0
    %4586 = vmatprep.subr.mxu0 0.0
    %4587 = vmatpush1.msra.mxu0 0.0
    %4588 = vmatprep.subr.mxu0 0.0
    %4589 = vmatpush1.msra.mxu0 0.0
    %4590 = vmatprep.subr.mxu0 0.0
    %4591 = vmatpush1.msra.mxu0 0.0
    %4592 = vmatprep.subr.mxu0 0.0
    %4593 = vmatpush1.msra.mxu0 0.0
    %4594 = vmatprep.subr.mxu0 0.0
    %4595 = vmatpush1.msra.mxu0 0.0
    %4596 = vmatprep.subr.mxu0 0.0
    %4597 = vmatpush1.msra.mxu0 0.0
    %4598 = vmatprep.subr.mxu0 0.0
    %4599 = vmatpush1.msra.mxu0 0.0
    %4600 = vmatprep.subr.mxu0 0.0
    %4601 = vmatpush1.msra.mxu0 0.0
    %4602 = vmatprep.subr.mxu0 0.0
    %4603 = vmatpush1.msra.mxu0 0.0
    %4604 = vmatprep.subr.mxu0 0.0
    %4605 = vmatpush1.msra.mxu0 0.0
    %4606 = vmatprep.subr.mxu0 0.0
    %4607 = vmatpush1.msra.mxu0 0.0
    %4608 = vmatprep.subr.mxu0 0.0
    %4609 = vmatpush1.msra.mxu0 0.0
    %4610 = vmatprep.mubr.f32.mxu0 0.0
    %4611 = vmatmul.mubr.f32.gmra.mrb[0].mxu0 %v1842
    %v4612 = vpop.f32.mrb[0].mxu0
    %v4613 = vadd.f32 0.0, %v4612
    %v4614 = vpop.f32.mrb[0].mxu0
    %4615 = vmatprep.mubr.f32.mxu0 0.0
    %4616 = vmatmul.mubr.f32.gmra.mrb[0].mxu0 %v1845
    %v4617 = vpop.f32.mrb[0].mxu0
    %v4618 = vadd.f32 0.0, %v4617
    %v4619 = vpop.f32.mrb[0].mxu0
    %4620 = vdwg.mxu0
    %v4621 = vmul.f32 %v4613, %v480
    %v4622 = vmul.f32 %v4618, %v481
    %v4623 = vsel %vm1235, %v4621, 0.0
    %4624 = vadd.xlane.f32.xlu0 %v4623
    %v4625 = vpop.xlane.xlu0 %4624
    %v4626 = vsel %vm1331, %v4622, 0.0
    %4627 = vadd.xlane.f32.xlu0 %v4626
    %v4628 = vpop.xlane.xlu0 %4627
    %4629 = vmatprep.subr.mxu0 0.0
    %4630 = vmatpush1.msra.mxu0 %v4301
    %4631 = vmatprep.subr.mxu0 0.0
    %4632 = vmatpush1.msra.mxu0 0.0
    %4633 = vmatprep.subr.mxu0 0.0
    %4634 = vmatpush1.msra.mxu0 0.0
    %4635 = vmatprep.subr.mxu0 0.0
    %4636 = vmatpush1.msra.mxu0 0.0
    %4637 = vmatprep.subr.mxu0 0.0
    %4638 = vmatpush1.msra.mxu0 0.0
    %4639 = vmatprep.subr.mxu0 0.0
    %4640 = vmatpush1.msra.mxu0 0.0
    %4641 = vmatprep.subr.mxu0 0.0
    %4642 = vmatpush1.msra.mxu0 0.0
    %4643 = vmatprep.subr.mxu0 0.0
    %4644 = vmatpush1.msra.mxu0 0.0
    %4645 = vmatprep.subr.mxu0 0.0
    %4646 = vmatpush1.msra.mxu0 0.0
    %4647 = vmatprep.subr.mxu0 0.0
    %4648 = vmatpush1.msra.mxu0 0.0
    %4649 = vmatprep.subr.mxu0 0.0
    %4650 = vmatpush1.msra.mxu0 0.0
    %4651 = vmatprep.subr.mxu0 0.0
    %4652 = vmatpush1.msra.mxu0 0.0
    %4653 = vmatprep.subr.mxu0 0.0
    %4654 = vmatpush1.msra.mxu0 0.0
    %4655 = vmatprep.subr.mxu0 0.0
    %4656 = vmatpush1.msra.mxu0 0.0
    %4657 = vmatprep.subr.mxu0 0.0
    %4658 = vmatpush1.msra.mxu0 0.0
    %4659 = vmatprep.subr.mxu0 0.0
    %4660 = vmatpush1.msra.mxu0 0.0
    %4661 = vmatprep.subr.mxu0 0.0
    %4662 = vmatpush1.msra.mxu0 0.0
    %4663 = vmatprep.subr.mxu0 0.0
    %4664 = vmatpush1.msra.mxu0 0.0
    %4665 = vmatprep.subr.mxu0 0.0
    %4666 = vmatpush1.msra.mxu0 0.0
    %4667 = vmatprep.subr.mxu0 0.0
    %4668 = vmatpush1.msra.mxu0 0.0
    %4669 = vmatprep.subr.mxu0 0.0
    %4670 = vmatpush1.msra.mxu0 0.0
    %4671 = vmatprep.subr.mxu0 0.0
    %4672 = vmatpush1.msra.mxu0 0.0
    %4673 = vmatprep.subr.mxu0 0.0
    %4674 = vmatpush1.msra.mxu0 0.0
    %4675 = vmatprep.subr.mxu0 0.0
    %4676 = vmatpush1.msra.mxu0 0.0
    %4677 = vmatprep.subr.mxu0 0.0
    %4678 = vmatpush1.msra.mxu0 0.0
    %4679 = vmatprep.subr.mxu0 0.0
    %4680 = vmatpush1.msra.mxu0 0.0
    %4681 = vmatprep.subr.mxu0 0.0
    %4682 = vmatpush1.msra.mxu0 0.0
    %4683 = vmatprep.subr.mxu0 0.0
    %4684 = vmatpush1.msra.mxu0 0.0
    %4685 = vmatprep.subr.mxu0 0.0
    %4686 = vmatpush1.msra.mxu0 0.0
    %4687 = vmatprep.subr.mxu0 0.0
    %4688 = vmatpush1.msra.mxu0 0.0
    %4689 = vmatprep.subr.mxu0 0.0
    %4690 = vmatpush1.msra.mxu0 0.0
    %4691 = vmatprep.subr.mxu0 0.0
    %4692 = vmatpush1.msra.mxu0 0.0
    %4693 = vmatprep.mubr.f32.mxu0 0.0
    %4694 = vmatmul.mubr.f32.gmra.mrb[0].mxu0 %v1931
    %v4695 = vpop.f32.mrb[0].mxu0
    %v4696 = vadd.f32 0.0, %v4695
    %v4697 = vpop.f32.mrb[0].mxu0
    %4698 = vmatprep.mubr.f32.mxu0 0.0
    %4699 = vmatmul.mubr.f32.gmra.mrb[0].mxu0 %v1934
    %v4700 = vpop.f32.mrb[0].mxu0
    %v4701 = vadd.f32 0.0, %v4700
    %v4702 = vpop.f32.mrb[0].mxu0
    %4703 = vdwg.mxu0
    %4704 = vmatprep.subr.mxu0 0.0
    %4705 = vmatpush1.msra.mxu0 %v4231
    %4706 = vmatprep.subr.mxu0 0.0
    %4707 = vmatpush1.msra.mxu0 0.0
    %4708 = vmatprep.subr.mxu0 0.0
    %4709 = vmatpush1.msra.mxu0 0.0
    %4710 = vmatprep.subr.mxu0 0.0
    %4711 = vmatpush1.msra.mxu0 0.0
    %4712 = vmatprep.subr.mxu0 0.0
    %4713 = vmatpush1.msra.mxu0 0.0
    %4714 = vmatprep.subr.mxu0 0.0
    %4715 = vmatpush1.msra.mxu0 0.0
    %4716 = vmatprep.subr.mxu0 0.0
    %4717 = vmatpush1.msra.mxu0 0.0
    %4718 = vmatprep.subr.mxu0 0.0
    %4719 = vmatpush1.msra.mxu0 0.0
    %4720 = vmatprep.subr.mxu0 0.0
    %4721 = vmatpush1.msra.mxu0 0.0
    %4722 = vmatprep.subr.mxu0 0.0
    %4723 = vmatpush1.msra.mxu0 0.0
    %4724 = vmatprep.subr.mxu0 0.0
    %4725 = vmatpush1.msra.mxu0 0.0
    %4726 = vmatprep.subr.mxu0 0.0
    %4727 = vmatpush1.msra.mxu0 0.0
    %4728 = vmatprep.subr.mxu0 0.0
    %4729 = vmatpush1.msra.mxu0 0.0
    %4730 = vmatprep.subr.mxu0 0.0
    %4731 = vmatpush1.msra.mxu0 0.0
    %4732 = vmatprep.subr.mxu0 0.0
    %4733 = vmatpush1.msra.mxu0 0.0
    %4734 = vmatprep.subr.mxu0 0.0
    %4735 = vmatpush1.msra.mxu0 0.0
    %4736 = vmatprep.subr.mxu0 0.0
    %4737 = vmatpush1.msra.mxu0 0.0
    %4738 = vmatprep.subr.mxu0 0.0
    %4739 = vmatpush1.msra.mxu0 0.0
    %4740 = vmatprep.subr.mxu0 0.0
    %4741 = vmatpush1.msra.mxu0 0.0
    %4742 = vmatprep.subr.mxu0 0.0
    %4743 = vmatpush1.msra.mxu0 0.0
    %4744 = vmatprep.subr.mxu0 0.0
    %4745 = vmatpush1.msra.mxu0 0.0
    %4746 = vmatprep.subr.mxu0 0.0
    %4747 = vmatpush1.msra.mxu0 0.0
    %4748 = vmatprep.subr.mxu0 0.0
    %4749 = vmatpush1.msra.mxu0 0.0
    %4750 = vmatprep.subr.mxu0 0.0
    %4751 = vmatpush1.msra.mxu0 0.0
    %4752 = vmatprep.subr.mxu0 0.0
    %4753 = vmatpush1.msra.mxu0 0.0
    %4754 = vmatprep.subr.mxu0 0.0
    %4755 = vmatpush1.msra.mxu0 0.0
    %4756 = vmatprep.subr.mxu0 0.0
    %4757 = vmatpush1.msra.mxu0 0.0
    %4758 = vmatprep.subr.mxu0 0.0
    %4759 = vmatpush1.msra.mxu0 0.0
    %4760 = vmatprep.subr.mxu0 0.0
    %4761 = vmatpush1.msra.mxu0 0.0
    %4762 = vmatprep.subr.mxu0 0.0
    %4763 = vmatpush1.msra.mxu0 0.0
    %4764 = vmatprep.subr.mxu0 0.0
    %4765 = vmatpush1.msra.mxu0 0.0
    %4766 = vmatprep.subr.mxu0 0.0
    %4767 = vmatpush1.msra.mxu0 0.0
    %4768 = vmatprep.mubr.f32.mxu0 0.0
    %4769 = vmatmul.mubr.f32.gmra.mrb[0].mxu0 %v2012
    %v4770 = vpop.f32.mrb[0].mxu0
    %v4771 = vadd.f32 %v4696, %v4770
    %v4772 = vpop.f32.mrb[0].mxu0
    %4773 = vmatprep.mubr.f32.mxu0 0.0
    %4774 = vmatmul.mubr.f32.gmra.mrb[0].mxu0 %v2015
    %v4775 = vpop.f32.mrb[0].mxu0
    %v4776 = vadd.f32 %v4701, %v4775
    %v4777 = vpop.f32.mrb[0].mxu0
    %4778 = vdwg.mxu0
    %v4780 = vsel %vm888, %v4457, 0
    %4782 = vmatprep.subr.mxu0 0.0
    %4783 = vmatpush1.msra.mxu0 %v4452
    %4784 = vmatprep.subr.mxu0 0.0
    %4785 = vmatpush1.msra.mxu0 %v4780
    %4786 = vmatprep.subr.mxu0 0.0
    %4787 = vmatpush1.msra.mxu0 0.0
    %4788 = vmatprep.subr.mxu0 0.0
    %4789 = vmatpush1.msra.mxu0 0.0
    %4790 = vmatprep.subr.mxu0 0.0
    %4791 = vmatpush1.msra.mxu0 0.0
    %4792 = vmatprep.subr.mxu0 0.0
    %4793 = vmatpush1.msra.mxu0 0.0
    %4794 = vmatprep.subr.mxu0 0.0
    %4795 = vmatpush1.msra.mxu0 0.0
    %4796 = vmatprep.subr.mxu0 0.0
    %4797 = vmatpush1.msra.mxu0 0.0
    %4798 = vmatprep.subr.mxu0 0.0
    %4799 = vmatpush1.msra.mxu0 0.0
    %4800 = vmatprep.subr.mxu0 0.0
    %4801 = vmatpush1.msra.mxu0 0.0
    %4802 = vmatprep.subr.mxu0 0.0
    %4803 = vmatpush1.msra.mxu0 0.0
    %4804 = vmatprep.subr.mxu0 0.0
    %4805 = vmatpush1.msra.mxu0 0.0
    %4806 = vmatprep.subr.mxu0 0.0
    %4807 = vmatpush1.msra.mxu0 0.0
    %4808 = vmatprep.subr.mxu0 0.0
    %4809 = vmatpush1.msra.mxu0 0.0
    %4810 = vmatprep.subr.mxu0 0.0
    %4811 = vmatpush1.msra.mxu0 0.0
    %4812 = vmatprep.subr.mxu0 0.0
    %4813 = vmatpush1.msra.mxu0 0.0
    %4814 = vmatprep.subr.mxu0 0.0
    %4815 = vmatpush1.msra.mxu0 0.0
    %4816 = vmatprep.subr.mxu0 0.0
    %4817 = vmatpush1.msra.mxu0 0.0
    %4818 = vmatprep.subr.mxu0 0.0
    %4819 = vmatpush1.msra.mxu0 0.0
    %4820 = vmatprep.subr.mxu0 0.0
    %4821 = vmatpush1.msra.mxu0 0.0
    %4822 = vmatprep.subr.mxu0 0.0
    %4823 = vmatpush1.msra.mxu0 0.0
    %4824 = vmatprep.subr.mxu0 0.0
    %4825 = vmatpush1.msra.mxu0 0.0
    %4826 = vmatprep.subr.mxu0 0.0
    %4827 = vmatpush1.msra.mxu0 0.0
    %4828 = vmatprep.subr.mxu0 0.0
    %4829 = vmatpush1.msra.mxu0 0.0
    %4830 = vmatprep.subr.mxu0 0.0
    %4831 = vmatpush1.msra.mxu0 0.0
    %4832 = vmatprep.subr.mxu0 0.0
    %4833 = vmatpush1.msra.mxu0 0.0
    %4834 = vmatprep.subr.mxu0 0.0
    %4835 = vmatpush1.msra.mxu0 0.0
    %4836 = vmatprep.subr.mxu0 0.0
    %4837 = vmatpush1.msra.mxu0 0.0
    %4838 = vmatprep.subr.mxu0 0.0
    %4839 = vmatpush1.msra.mxu0 0.0
    %4840 = vmatprep.subr.mxu0 0.0
    %4841 = vmatpush1.msra.mxu0 0.0
    %4842 = vmatprep.subr.mxu0 0.0
    %4843 = vmatpush1.msra.mxu0 0.0
    %4844 = vmatprep.subr.mxu0 0.0
    %4845 = vmatpush1.msra.mxu0 0.0
    %4846 = vmatprep.mubr.f32.mxu0 0.0
    %4847 = vmatmul.mubr.f32.gmra.mrb[0].mxu0 %v2093
    %v4848 = vpop.f32.mrb[0].mxu0
    %v4849 = vadd.f32 0.0, %v4848
    %v4850 = vpop.f32.mrb[0].mxu0
    %4851 = vmatprep.mubr.f32.mxu0 0.0
    %4852 = vmatmul.mubr.f32.gmra.mrb[0].mxu0 %v2096
    %v4853 = vpop.f32.mrb[0].mxu0
    %v4854 = vadd.f32 0.0, %v4853
    %v4855 = vpop.f32.mrb[0].mxu0
    %4856 = vdwg.mxu0
    %v4858 = vsel %vm888, %v4382, 0
    %4860 = vmatprep.subr.mxu0 0.0
    %4861 = vmatpush1.msra.mxu0 %v4377
    %4862 = vmatprep.subr.mxu0 0.0
    %4863 = vmatpush1.msra.mxu0 %v4858
    %4864 = vmatprep.subr.mxu0 0.0
    %4865 = vmatpush1.msra.mxu0 0.0
    %4866 = vmatprep.subr.mxu0 0.0
    %4867 = vmatpush1.msra.mxu0 0.0
    %4868 = vmatprep.subr.mxu0 0.0
    %4869 = vmatpush1.msra.mxu0 0.0
    %4870 = vmatprep.subr.mxu0 0.0
    %4871 = vmatpush1.msra.mxu0 0.0
    %4872 = vmatprep.subr.mxu0 0.0
    %4873 = vmatpush1.msra.mxu0 0.0
    %4874 = vmatprep.subr.mxu0 0.0
    %4875 = vmatpush1.msra.mxu0 0.0
    %4876 = vmatprep.subr.mxu0 0.0
    %4877 = vmatpush1.msra.mxu0 0.0
    %4878 = vmatprep.subr.mxu0 0.0
    %4879 = vmatpush1.msra.mxu0 0.0
    %4880 = vmatprep.subr.mxu0 0.0
    %4881 = vmatpush1.msra.mxu0 0.0
    %4882 = vmatprep.subr.mxu0 0.0
    %4883 = vmatpush1.msra.mxu0 0.0
    %4884 = vmatprep.subr.mxu0 0.0
    %4885 = vmatpush1.msra.mxu0 0.0
    %4886 = vmatprep.subr.mxu0 0.0
    %4887 = vmatpush1.msra.mxu0 0.0
    %4888 = vmatprep.subr.mxu0 0.0
    %4889 = vmatpush1.msra.mxu0 0.0
    %4890 = vmatprep.subr.mxu0 0.0
    %4891 = vmatpush1.msra.mxu0 0.0
    %4892 = vmatprep.subr.mxu0 0.0
    %4893 = vmatpush1.msra.mxu0 0.0
    %4894 = vmatprep.subr.mxu0 0.0
    %4895 = vmatpush1.msra.mxu0 0.0
    %4896 = vmatprep.subr.mxu0 0.0
    %4897 = vmatpush1.msra.mxu0 0.0
    %4898 = vmatprep.subr.mxu0 0.0
    %4899 = vmatpush1.msra.mxu0 0.0
    %4900 = vmatprep.subr.mxu0 0.0
    %4901 = vmatpush1.msra.mxu0 0.0
    %4902 = vmatprep.subr.mxu0 0.0
    %4903 = vmatpush1.msra.mxu0 0.0
    %4904 = vmatprep.subr.mxu0 0.0
    %4905 = vmatpush1.msra.mxu0 0.0
    %4906 = vmatprep.subr.mxu0 0.0
    %4907 = vmatpush1.msra.mxu0 0.0
    %4908 = vmatprep.subr.mxu0 0.0
    %4909 = vmatpush1.msra.mxu0 0.0
    %4910 = vmatprep.subr.mxu0 0.0
    %4911 = vmatpush1.msra.mxu0 0.0
    %4912 = vmatprep.subr.mxu0 0.0
    %4913 = vmatpush1.msra.mxu0 0.0
    %4914 = vmatprep.subr.mxu0 0.0
    %4915 = vmatpush1.msra.mxu0 0.0
    %4916 = vmatprep.subr.mxu0 0.0
    %4917 = vmatpush1.msra.mxu0 0.0
    %4918 = vmatprep.subr.mxu0 0.0
    %4919 = vmatpush1.msra.mxu0 0.0
    %4920 = vmatprep.subr.mxu0 0.0
    %4921 = vmatpush1.msra.mxu0 0.0
    %4922 = vmatprep.subr.mxu0 0.0
    %4923 = vmatpush1.msra.mxu0 0.0
    %4924 = vmatprep.mubr.f32.mxu0 0.0
    %4925 = vmatmul.mubr.f32.gmra.mrb[0].mxu0 %v2177
    %v4926 = vpop.f32.mrb[0].mxu0
    %v4927 = vadd.f32 %v4849, %v4926
    %v4928 = vpop.f32.mrb[0].mxu0
    %4929 = vmatprep.mubr.f32.mxu0 0.0
    %4930 = vmatmul.mubr.f32.gmra.mrb[0].mxu0 %v2180
    %v4931 = vpop.f32.mrb[0].mxu0
    %v4932 = vadd.f32 %v4854, %v4931
    %v4933 = vpop.f32.mrb[0].mxu0
    %4934 = vdwg.mxu0
    %v4935 = vmul.f32 %v4542, %v4771
    %v4936 = vmul.f32 %v4545, %v4776
    %v4937 = vmul.f32 %v4625, %v4927
    %v4938 = vmul.f32 %v4628, %v4932
    %v4939 = vadd.f32 %v4937, 0.0
    %v4940 = vadd.f32 %v4938, 0.0
    %4941 = vmatprep.subr.mxu0 0.0
    %4942 = vmatpush1.msra.mxu0 %v4157
    %4943 = vmatprep.subr.mxu0 0.0
    %4944 = vmatpush1.msra.mxu0 %v4461
    %4945 = vmatprep.subr.mxu0 0.0
    %4946 = vmatpush1.msra.mxu0 0.0
    %4947 = vmatprep.subr.mxu0 0.0
    %4948 = vmatpush1.msra.mxu0 0.0
    %4949 = vmatprep.subr.mxu0 0.0
    %4950 = vmatpush1.msra.mxu0 0.0
    %4951 = vmatprep.subr.mxu0 0.0
    %4952 = vmatpush1.msra.mxu0 0.0
    %4953 = vmatprep.subr.mxu0 0.0
    %4954 = vmatpush1.msra.mxu0 0.0
    %4955 = vmatprep.subr.mxu0 0.0
    %4956 = vmatpush1.msra.mxu0 0.0
    %4957 = vmatprep.subr.mxu0 0.0
    %4958 = vmatpush1.msra.mxu0 0.0
    %4959 = vmatprep.subr.mxu0 0.0
    %4960 = vmatpush1.msra.mxu0 0.0
    %4961 = vmatprep.subr.mxu0 0.0
    %4962 = vmatpush1.msra.mxu0 0.0
    %4963 = vmatprep.subr.mxu0 0.0
    %4964 = vmatpush1.msra.mxu0 0.0
    %4965 = vmatprep.subr.mxu0 0.0
    %4966 = vmatpush1.msra.mxu0 0.0
    %4967 = vmatprep.subr.mxu0 0.0
    %4968 = vmatpush1.msra.mxu0 0.0
    %4969 = vmatprep.subr.mxu0 0.0
    %4970 = vmatpush1.msra.mxu0 0.0
    %4971 = vmatprep.subr.mxu0 0.0
    %4972 = vmatpush1.msra.mxu0 0.0
    %4973 = vmatprep.subr.mxu0 0.0
    %4974 = vmatpush1.msra.mxu0 0.0
    %4975 = vmatprep.subr.mxu0 0.0
    %4976 = vmatpush1.msra.mxu0 0.0
    %4977 = vmatprep.subr.mxu0 0.0
    %4978 = vmatpush1.msra.mxu0 0.0
    %4979 = vmatprep.subr.mxu0 0.0
    %4980 = vmatpush1.msra.mxu0 0.0
    %4981 = vmatprep.subr.mxu0 0.0
    %4982 = vmatpush1.msra.mxu0 0.0
    %4983 = vmatprep.subr.mxu0 0.0
    %4984 = vmatpush1.msra.mxu0 0.0
    %4985 = vmatprep.subr.mxu0 0.0
    %4986 = vmatpush1.msra.mxu0 0.0
    %4987 = vmatprep.subr.mxu0 0.0
    %4988 = vmatpush1.msra.mxu0 0.0
    %4989 = vmatprep.subr.mxu0 0.0
    %4990 = vmatpush1.msra.mxu0 0.0
    %4991 = vmatprep.subr.mxu0 0.0
    %4992 = vmatpush1.msra.mxu0 0.0
    %4993 = vmatprep.subr.mxu0 0.0
    %4994 = vmatpush1.msra.mxu0 0.0
    %4995 = vmatprep.subr.mxu0 0.0
    %4996 = vmatpush1.msra.mxu0 0.0
    %4997 = vmatprep.subr.mxu0 0.0
    %4998 = vmatpush1.msra.mxu0 0.0
    %4999 = vmatprep.subr.mxu0 0.0
    %5000 = vmatpush1.msra.mxu0 0.0
    %5001 = vmatprep.subr.mxu0 0.0
    %5002 = vmatpush1.msra.mxu0 0.0
    %5003 = vmatprep.subr.mxu0 0.0
    %5004 = vmatpush1.msra.mxu0 0.0
    %5005 = vmatprep.mubr.f32.mxu0 0.0
    %5006 = vmatmul.mubr.f32.gmra.mrb[0].mxu0 %v2267
    %v5007 = vpop.f32.mrb[0].mxu0
    %v5008 = vadd.f32 0.0, %v5007
    %v5009 = vpop.f32.mrb[0].mxu0
    %5010 = vmatprep.mubr.f32.mxu0 0.0
    %5011 = vmatmul.mubr.f32.gmra.mrb[0].mxu0 %v2270
    %v5012 = vpop.f32.mrb[0].mxu0
    %v5013 = vadd.f32 0.0, %v5012
    %v5014 = vpop.f32.mrb[0].mxu0
    %5015 = vdwg.mxu0
    %v5016 = vmul.f32 %v5008, %v486
    %v5017 = vmul.f32 %v5013, %v487
    %v5018 = vsel %vm1235, %v5016, 0.0
    %5019 = vadd.xlane.f32.xlu0 %v5018
    %v5020 = vpop.xlane.xlu0 %5019
    %v5021 = vsel %vm1331, %v5017, 0.0
    %5022 = vadd.xlane.f32.xlu0 %v5021
    %v5023 = vpop.xlane.xlu0 %5022
    %5024 = vmatprep.subr.mxu0 0.0
    %5025 = vmatpush1.msra.mxu0 %v4049
    %5026 = vmatprep.subr.mxu0 0.0
    %5027 = vmatpush1.msra.mxu0 0.0
    %5028 = vmatprep.subr.mxu0 0.0
    %5029 = vmatpush1.msra.mxu0 0.0
    %5030 = vmatprep.subr.mxu0 0.0
    %5031 = vmatpush1.msra.mxu0 0.0
    %5032 = vmatprep.subr.mxu0 0.0
    %5033 = vmatpush1.msra.mxu0 0.0
    %5034 = vmatprep.subr.mxu0 0.0
    %5035 = vmatpush1.msra.mxu0 0.0
    %5036 = vmatprep.subr.mxu0 0.0
    %5037 = vmatpush1.msra.mxu0 0.0
    %5038 = vmatprep.subr.mxu0 0.0
    %5039 = vmatpush1.msra.mxu0 0.0
    %5040 = vmatprep.subr.mxu0 0.0
    %5041 = vmatpush1.msra.mxu0 0.0
    %5042 = vmatprep.subr.mxu0 0.0
    %5043 = vmatpush1.msra.mxu0 0.0
    %5044 = vmatprep.subr.mxu0 0.0
    %5045 = vmatpush1.msra.mxu0 0.0
    %5046 = vmatprep.subr.mxu0 0.0
    %5047 = vmatpush1.msra.mxu0 0.0
    %5048 = vmatprep.subr.mxu0 0.0
    %5049 = vmatpush1.msra.mxu0 0.0
    %5050 = vmatprep.subr.mxu0 0.0
    %5051 = vmatpush1.msra.mxu0 0.0
    %5052 = vmatprep.subr.mxu0 0.0
    %5053 = vmatpush1.msra.mxu0 0.0
    %5054 = vmatprep.subr.mxu0 0.0
    %5055 = vmatpush1.msra.mxu0 0.0
    %5056 = vmatprep.subr.mxu0 0.0
    %5057 = vmatpush1.msra.mxu0 0.0
    %5058 = vmatprep.subr.mxu0 0.0
    %5059 = vmatpush1.msra.mxu0 0.0
    %5060 = vmatprep.subr.mxu0 0.0
    %5061 = vmatpush1.msra.mxu0 0.0
    %5062 = vmatprep.subr.mxu0 0.0
    %5063 = vmatpush1.msra.mxu0 0.0
    %5064 = vmatprep.subr.mxu0 0.0
    %5065 = vmatpush1.msra.mxu0 0.0
    %5066 = vmatprep.subr.mxu0 0.0
    %5067 = vmatpush1.msra.mxu0 0.0
    %5068 = vmatprep.subr.mxu0 0.0
    %5069 = vmatpush1.msra.mxu0 0.0
    %5070 = vmatprep.subr.mxu0 0.0
    %5071 = vmatpush1.msra.mxu0 0.0
    %5072 = vmatprep.subr.mxu0 0.0
    %5073 = vmatpush1.msra.mxu0 0.0
    %5074 = vmatprep.subr.mxu0 0.0
    %5075 = vmatpush1.msra.mxu0 0.0
    %5076 = vmatprep.subr.mxu0 0.0
    %5077 = vmatpush1.msra.mxu0 0.0
    %5078 = vmatprep.subr.mxu0 0.0
    %5079 = vmatpush1.msra.mxu0 0.0
    %5080 = vmatprep.subr.mxu0 0.0
    %5081 = vmatpush1.msra.mxu0 0.0
    %5082 = vmatprep.subr.mxu0 0.0
    %5083 = vmatpush1.msra.mxu0 0.0
    %5084 = vmatprep.subr.mxu0 0.0
    %5085 = vmatpush1.msra.mxu0 0.0
    %5086 = vmatprep.subr.mxu0 0.0
    %5087 = vmatpush1.msra.mxu0 0.0
    %5088 = vmatprep.mubr.f32.mxu0 0.0
    %5089 = vmatmul.mubr.f32.gmra.mrb[0].mxu0 %v2356
    %v5090 = vpop.f32.mrb[0].mxu0
    %v5091 = vadd.f32 0.0, %v5090
    %v5092 = vpop.f32.mrb[0].mxu0
    %5093 = vmatprep.mubr.f32.mxu0 0.0
    %5094 = vmatmul.mubr.f32.gmra.mrb[0].mxu0 %v2359
    %v5095 = vpop.f32.mrb[0].mxu0
    %v5096 = vadd.f32 0.0, %v5095
    %v5097 = vpop.f32.mrb[0].mxu0
    %5098 = vdwg.mxu0
    %v5099 = vmul.f32 %v5091, %v480
    %v5100 = vmul.f32 %v5096, %v481
    %v5101 = vsel %vm1235, %v5099, 0.0
    %5102 = vadd.xlane.f32.xlu0 %v5101
    %v5103 = vpop.xlane.xlu0 %5102
    %v5104 = vsel %vm1331, %v5100, 0.0
    %5105 = vadd.xlane.f32.xlu0 %v5104
    %v5106 = vpop.xlane.xlu0 %5105
    %5107 = vmatprep.subr.mxu0 0.0
    %5108 = vmatpush1.msra.mxu0 %v4301
    %5109 = vmatprep.subr.mxu0 0.0
    %5110 = vmatpush1.msra.mxu0 0.0
    %5111 = vmatprep.subr.mxu0 0.0
    %5112 = vmatpush1.msra.mxu0 0.0
    %5113 = vmatprep.subr.mxu0 0.0
    %5114 = vmatpush1.msra.mxu0 0.0
    %5115 = vmatprep.subr.mxu0 0.0
    %5116 = vmatpush1.msra.mxu0 0.0
    %5117 = vmatprep.subr.mxu0 0.0
    %5118 = vmatpush1.msra.mxu0 0.0
    %5119 = vmatprep.subr.mxu0 0.0
    %5120 = vmatpush1.msra.mxu0 0.0
    %5121 = vmatprep.subr.mxu0 0.0
    %5122 = vmatpush1.msra.mxu0 0.0
    %5123 = vmatprep.subr.mxu0 0.0
    %5124 = vmatpush1.msra.mxu0 0.0
    %5125 = vmatprep.subr.mxu0 0.0
    %5126 = vmatpush1.msra.mxu0 0.0
    %5127 = vmatprep.subr.mxu0 0.0
    %5128 = vmatpush1.msra.mxu0 0.0
    %5129 = vmatprep.subr.mxu0 0.0
    %5130 = vmatpush1.msra.mxu0 0.0
    %5131 = vmatprep.subr.mxu0 0.0
    %5132 = vmatpush1.msra.mxu0 0.0
    %5133 = vmatprep.subr.mxu0 0.0
    %5134 = vmatpush1.msra.mxu0 0.0
    %5135 = vmatprep.subr.mxu0 0.0
    %5136 = vmatpush1.msra.mxu0 0.0
    %5137 = vmatprep.subr.mxu0 0.0
    %5138 = vmatpush1.msra.mxu0 0.0
    %5139 = vmatprep.subr.mxu0 0.0
    %5140 = vmatpush1.msra.mxu0 0.0
    %5141 = vmatprep.subr.mxu0 0.0
    %5142 = vmatpush1.msra.mxu0 0.0
    %5143 = vmatprep.subr.mxu0 0.0
    %5144 = vmatpush1.msra.mxu0 0.0
    %5145 = vmatprep.subr.mxu0 0.0
    %5146 = vmatpush1.msra.mxu0 0.0
    %5147 = vmatprep.subr.mxu0 0.0
    %5148 = vmatpush1.msra.mxu0 0.0
    %5149 = vmatprep.subr.mxu0 0.0
    %5150 = vmatpush1.msra.mxu0 0.0
    %5151 = vmatprep.subr.mxu0 0.0
    %5152 = vmatpush1.msra.mxu0 0.0
    %5153 = vmatprep.subr.mxu0 0.0
    %5154 = vmatpush1.msra.mxu0 0.0
    %5155 = vmatprep.subr.mxu0 0.0
    %5156 = vmatpush1.msra.mxu0 0.0
    %5157 = vmatprep.subr.mxu0 0.0
    %5158 = vmatpush1.msra.mxu0 0.0
    %5159 = vmatprep.subr.mxu0 0.0
    %5160 = vmatpush1.msra.mxu0 0.0
    %5161 = vmatprep.subr.mxu0 0.0
    %5162 = vmatpush1.msra.mxu0 0.0
    %5163 = vmatprep.subr.mxu0 0.0
    %5164 = vmatpush1.msra.mxu0 0.0
    %5165 = vmatprep.subr.mxu0 0.0
    %5166 = vmatpush1.msra.mxu0 0.0
    %5167 = vmatprep.subr.mxu0 0.0
    %5168 = vmatpush1.msra.mxu0 0.0
    %5169 = vmatprep.subr.mxu0 0.0
    %5170 = vmatpush1.msra.mxu0 0.0
    %5171 = vmatprep.mubr.f32.mxu0 0.0
    %5172 = vmatmul.mubr.f32.gmra.mrb[0].mxu0 %v2445
    %v5173 = vpop.f32.mrb[0].mxu0
    %v5174 = vadd.f32 0.0, %v5173
    %v5175 = vpop.f32.mrb[0].mxu0
    %5176 = vmatprep.mubr.f32.mxu0 0.0
    %5177 = vmatmul.mubr.f32.gmra.mrb[0].mxu0 %v2448
    %v5178 = vpop.f32.mrb[0].mxu0
    %v5179 = vadd.f32 0.0, %v5178
    %v5180 = vpop.f32.mrb[0].mxu0
    %5181 = vdwg.mxu0
    %5182 = vmatprep.subr.mxu0 0.0
    %5183 = vmatpush1.msra.mxu0 %v4231
    %5184 = vmatprep.subr.mxu0 0.0
    %5185 = vmatpush1.msra.mxu0 0.0
    %5186 = vmatprep.subr.mxu0 0.0
    %5187 = vmatpush1.msra.mxu0 0.0
    %5188 = vmatprep.subr.mxu0 0.0
    %5189 = vmatpush1.msra.mxu0 0.0
    %5190 = vmatprep.subr.mxu0 0.0
    %5191 = vmatpush1.msra.mxu0 0.0
    %5192 = vmatprep.subr.mxu0 0.0
    %5193 = vmatpush1.msra.mxu0 0.0
    %5194 = vmatprep.subr.mxu0 0.0
    %5195 = vmatpush1.msra.mxu0 0.0
    %5196 = vmatprep.subr.mxu0 0.0
    %5197 = vmatpush1.msra.mxu0 0.0
    %5198 = vmatprep.subr.mxu0 0.0
    %5199 = vmatpush1.msra.mxu0 0.0
    %5200 = vmatprep.subr.mxu0 0.0
    %5201 = vmatpush1.msra.mxu0 0.0
    %5202 = vmatprep.subr.mxu0 0.0
    %5203 = vmatpush1.msra.mxu0 0.0
    %5204 = vmatprep.subr.mxu0 0.0
    %5205 = vmatpush1.msra.mxu0 0.0
    %5206 = vmatprep.subr.mxu0 0.0
    %5207 = vmatpush1.msra.mxu0 0.0
    %5208 = vmatprep.subr.mxu0 0.0
    %5209 = vmatpush1.msra.mxu0 0.0
    %5210 = vmatprep.subr.mxu0 0.0
    %5211 = vmatpush1.msra.mxu0 0.0
    %5212 = vmatprep.subr.mxu0 0.0
    %5213 = vmatpush1.msra.mxu0 0.0
    %5214 = vmatprep.subr.mxu0 0.0
    %5215 = vmatpush1.msra.mxu0 0.0
    %5216 = vmatprep.subr.mxu0 0.0
    %5217 = vmatpush1.msra.mxu0 0.0
    %5218 = vmatprep.subr.mxu0 0.0
    %5219 = vmatpush1.msra.mxu0 0.0
    %5220 = vmatprep.subr.mxu0 0.0
    %5221 = vmatpush1.msra.mxu0 0.0
    %5222 = vmatprep.subr.mxu0 0.0
    %5223 = vmatpush1.msra.mxu0 0.0
    %5224 = vmatprep.subr.mxu0 0.0
    %5225 = vmatpush1.msra.mxu0 0.0
    %5226 = vmatprep.subr.mxu0 0.0
    %5227 = vmatpush1.msra.mxu0 0.0
    %5228 = vmatprep.subr.mxu0 0.0
    %5229 = vmatpush1.msra.mxu0 0.0
    %5230 = vmatprep.subr.mxu0 0.0
    %5231 = vmatpush1.msra.mxu0 0.0
    %5232 = vmatprep.subr.mxu0 0.0
    %5233 = vmatpush1.msra.mxu0 0.0
    %5234 = vmatprep.subr.mxu0 0.0
    %5235 = vmatpush1.msra.mxu0 0.0
    %5236 = vmatprep.subr.mxu0 0.0
    %5237 = vmatpush1.msra.mxu0 0.0
    %5238 = vmatprep.subr.mxu0 0.0
    %5239 = vmatpush1.msra.mxu0 0.0
    %5240 = vmatprep.subr.mxu0 0.0
    %5241 = vmatpush1.msra.mxu0 0.0
    %5242 = vmatprep.subr.mxu0 0.0
    %5243 = vmatpush1.msra.mxu0 0.0
    %5244 = vmatprep.subr.mxu0 0.0
    %5245 = vmatpush1.msra.mxu0 0.0
    %5246 = vmatprep.mubr.f32.mxu0 0.0
    %5247 = vmatmul.mubr.f32.gmra.mrb[0].mxu0 %v2526
    %v5248 = vpop.f32.mrb[0].mxu0
    %v5249 = vadd.f32 %v5174, %v5248
    %v5250 = vpop.f32.mrb[0].mxu0
    %5251 = vmatprep.mubr.f32.mxu0 0.0
    %5252 = vmatmul.mubr.f32.gmra.mrb[0].mxu0 %v2529
    %v5253 = vpop.f32.mrb[0].mxu0
    %v5254 = vadd.f32 %v5179, %v5253
    %v5255 = vpop.f32.mrb[0].mxu0
    %5256 = vdwg.mxu0
    %5257 = vmatprep.subr.mxu0 0.0
    %5258 = vmatpush1.msra.mxu0 %v4452
    %5259 = vmatprep.subr.mxu0 0.0
    %5260 = vmatpush1.msra.mxu0 %v4780
    %5261 = vmatprep.subr.mxu0 0.0
    %5262 = vmatpush1.msra.mxu0 0.0
    %5263 = vmatprep.subr.mxu0 0.0
    %5264 = vmatpush1.msra.mxu0 0.0
    %5265 = vmatprep.subr.mxu0 0.0
    %5266 = vmatpush1.msra.mxu0 0.0
    %5267 = vmatprep.subr.mxu0 0.0
    %5268 = vmatpush1.msra.mxu0 0.0
    %5269 = vmatprep.subr.mxu0 0.0
    %5270 = vmatpush1.msra.mxu0 0.0
    %5271 = vmatprep.subr.mxu0 0.0
    %5272 = vmatpush1.msra.mxu0 0.0
    %5273 = vmatprep.subr.mxu0 0.0
    %5274 = vmatpush1.msra.mxu0 0.0
    %5275 = vmatprep.subr.mxu0 0.0
    %5276 = vmatpush1.msra.mxu0 0.0
    %5277 = vmatprep.subr.mxu0 0.0
    %5278 = vmatpush1.msra.mxu0 0.0
    %5279 = vmatprep.subr.mxu0 0.0
    %5280 = vmatpush1.msra.mxu0 0.0
    %5281 = vmatprep.subr.mxu0 0.0
    %5282 = vmatpush1.msra.mxu0 0.0
    %5283 = vmatprep.subr.mxu0 0.0
    %5284 = vmatpush1.msra.mxu0 0.0
    %5285 = vmatprep.subr.mxu0 0.0
    %5286 = vmatpush1.msra.mxu0 0.0
    %5287 = vmatprep.subr.mxu0 0.0
    %5288 = vmatpush1.msra.mxu0 0.0
    %5289 = vmatprep.subr.mxu0 0.0
    %5290 = vmatpush1.msra.mxu0 0.0
    %5291 = vmatprep.subr.mxu0 0.0
    %5292 = vmatpush1.msra.mxu0 0.0
    %5293 = vmatprep.subr.mxu0 0.0
    %5294 = vmatpush1.msra.mxu0 0.0
    %5295 = vmatprep.subr.mxu0 0.0
    %5296 = vmatpush1.msra.mxu0 0.0
    %5297 = vmatprep.subr.mxu0 0.0
    %5298 = vmatpush1.msra.mxu0 0.0
    %5299 = vmatprep.subr.mxu0 0.0
    %5300 = vmatpush1.msra.mxu0 0.0
    %5301 = vmatprep.subr.mxu0 0.0
    %5302 = vmatpush1.msra.mxu0 0.0
    %5303 = vmatprep.subr.mxu0 0.0
    %5304 = vmatpush1.msra.mxu0 0.0
    %5305 = vmatprep.subr.mxu0 0.0
    %5306 = vmatpush1.msra.mxu0 0.0
    %5307 = vmatprep.subr.mxu0 0.0
    %5308 = vmatpush1.msra.mxu0 0.0
    %5309 = vmatprep.subr.mxu0 0.0
    %5310 = vmatpush1.msra.mxu0 0.0
    %5311 = vmatprep.subr.mxu0 0.0
    %5312 = vmatpush1.msra.mxu0 0.0
    %5313 = vmatprep.subr.mxu0 0.0
    %5314 = vmatpush1.msra.mxu0 0.0
    %5315 = vmatprep.subr.mxu0 0.0
    %5316 = vmatpush1.msra.mxu0 0.0
    %5317 = vmatprep.subr.mxu0 0.0
    %5318 = vmatpush1.msra.mxu0 0.0
    %5319 = vmatprep.subr.mxu0 0.0
    %5320 = vmatpush1.msra.mxu0 0.0
    %5321 = vmatprep.mubr.f32.mxu0 0.0
    %5322 = vmatmul.mubr.f32.gmra.mrb[0].mxu0 %v2607
    %v5323 = vpop.f32.mrb[0].mxu0
    %v5324 = vadd.f32 0.0, %v5323
    %v5325 = vpop.f32.mrb[0].mxu0
    %5326 = vmatprep.mubr.f32.mxu0 0.0
    %5327 = vmatmul.mubr.f32.gmra.mrb[0].mxu0 %v2610
    %v5328 = vpop.f32.mrb[0].mxu0
    %v5329 = vadd.f32 0.0, %v5328
    %v5330 = vpop.f32.mrb[0].mxu0
    %5331 = vdwg.mxu0
    %5332 = vmatprep.subr.mxu0 0.0
    %5333 = vmatpush1.msra.mxu0 %v4377
    %5334 = vmatprep.subr.mxu0 0.0
    %5335 = vmatpush1.msra.mxu0 %v4858
    %5336 = vmatprep.subr.mxu0 0.0
    %5337 = vmatpush1.msra.mxu0 0.0
    %5338 = vmatprep.subr.mxu0 0.0
    %5339 = vmatpush1.msra.mxu0 0.0
    %5340 = vmatprep.subr.mxu0 0.0
    %5341 = vmatpush1.msra.mxu0 0.0
    %5342 = vmatprep.subr.mxu0 0.0
    %5343 = vmatpush1.msra.mxu0 0.0
    %5344 = vmatprep.subr.mxu0 0.0
    %5345 = vmatpush1.msra.mxu0 0.0
    %5346 = vmatprep.subr.mxu0 0.0
    %5347 = vmatpush1.msra.mxu0 0.0
    %5348 = vmatprep.subr.mxu0 0.0
    %5349 = vmatpush1.msra.mxu0 0.0
    %5350 = vmatprep.subr.mxu0 0.0
    %5351 = vmatpush1.msra.mxu0 0.0
    %5352 = vmatprep.subr.mxu0 0.0
    %5353 = vmatpush1.msra.mxu0 0.0
    %5354 = vmatprep.subr.mxu0 0.0
    %5355 = vmatpush1.msra.mxu0 0.0
    %5356 = vmatprep.subr.mxu0 0.0
    %5357 = vmatpush1.msra.mxu0 0.0
    %5358 = vmatprep.subr.mxu0 0.0
    %5359 = vmatpush1.msra.mxu0 0.0
    %5360 = vmatprep.subr.mxu0 0.0
    %5361 = vmatpush1.msra.mxu0 0.0
    %5362 = vmatprep.subr.mxu0 0.0
    %5363 = vmatpush1.msra.mxu0 0.0
    %5364 = vmatprep.subr.mxu0 0.0
    %5365 = vmatpush1.msra.mxu0 0.0
    %5366 = vmatprep.subr.mxu0 0.0
    %5367 = vmatpush1.msra.mxu0 0.0
    %5368 = vmatprep.subr.mxu0 0.0
    %5369 = vmatpush1.msra.mxu0 0.0
    %5370 = vmatprep.subr.mxu0 0.0
    %5371 = vmatpush1.msra.mxu0 0.0
    %5372 = vmatprep.subr.mxu0 0.0
    %5373 = vmatpush1.msra.mxu0 0.0
    %5374 = vmatprep.subr.mxu0 0.0
    %5375 = vmatpush1.msra.mxu0 0.0
    %5376 = vmatprep.subr.mxu0 0.0
    %5377 = vmatpush1.msra.mxu0 0.0
    %5378 = vmatprep.subr.mxu0 0.0
    %5379 = vmatpush1.msra.mxu0 0.0
    %5380 = vmatprep.subr.mxu0 0.0
    %5381 = vmatpush1.msra.mxu0 0.0
    %5382 = vmatprep.subr.mxu0 0.0
    %5383 = vmatpush1.msra.mxu0 0.0
    %5384 = vmatprep.subr.mxu0 0.0
    %5385 = vmatpush1.msra.mxu0 0.0
    %5386 = vmatprep.subr.mxu0 0.0
    %5387 = vmatpush1.msra.mxu0 0.0
    %5388 = vmatprep.subr.mxu0 0.0
    %5389 = vmatpush1.msra.mxu0 0.0
    %5390 = vmatprep.subr.mxu0 0.0
    %5391 = vmatpush1.msra.mxu0 0.0
    %5392 = vmatprep.subr.mxu0 0.0
    %5393 = vmatpush1.msra.mxu0 0.0
    %5394 = vmatprep.subr.mxu0 0.0
    %5395 = vmatpush1.msra.mxu0 0.0
    %5396 = vmatprep.mubr.f32.mxu0 0.0
    %5397 = vmatmul.mubr.f32.gmra.mrb[0].mxu0 %v2688
    %v5398 = vpop.f32.mrb[0].mxu0
    %v5399 = vadd.f32 %v5324, %v5398
    %v5400 = vpop.f32.mrb[0].mxu0
    %5401 = vmatprep.mubr.f32.mxu0 0.0
    %5402 = vmatmul.mubr.f32.gmra.mrb[0].mxu0 %v2691
    %v5403 = vpop.f32.mrb[0].mxu0
    %v5404 = vadd.f32 %v5329, %v5403
    %v5405 = vpop.f32.mrb[0].mxu0
    %5406 = vdwg.mxu0
    %v5407 = vmul.f32 %v5020, %v5249
    %v5408 = vmul.f32 %v5023, %v5254
    %v5410 = vsel %vm888, %v5408, 0
    %5412 = vmatprep.subr.mxu0 0.0
    %5413 = vmatpush1.msra.mxu0 %v5407
    %5414 = vmatprep.subr.mxu0 0.0
    %5415 = vmatpush1.msra.mxu0 %v5410
    %5416 = vmatprep.subr.mxu0 0.0
    %5417 = vmatpush1.msra.mxu0 0.0
    %5418 = vmatprep.subr.mxu0 0.0
    %5419 = vmatpush1.msra.mxu0 0.0
    %5420 = vmatprep.subr.mxu0 0.0
    %5421 = vmatpush1.msra.mxu0 0.0
    %5422 = vmatprep.subr.mxu0 0.0
    %5423 = vmatpush1.msra.mxu0 0.0
    %5424 = vmatprep.subr.mxu0 0.0
    %5425 = vmatpush1.msra.mxu0 0.0
    %5426 = vmatprep.subr.mxu0 0.0
    %5427 = vmatpush1.msra.mxu0 0.0
    %5428 = vmatprep.subr.mxu0 0.0
    %5429 = vmatpush1.msra.mxu0 0.0
    %5430 = vmatprep.subr.mxu0 0.0
    %5431 = vmatpush1.msra.mxu0 0.0
    %5432 = vmatprep.subr.mxu0 0.0
    %5433 = vmatpush1.msra.mxu0 0.0
    %5434 = vmatprep.subr.mxu0 0.0
    %5435 = vmatpush1.msra.mxu0 0.0
    %5436 = vmatprep.subr.mxu0 0.0
    %5437 = vmatpush1.msra.mxu0 0.0
    %5438 = vmatprep.subr.mxu0 0.0
    %5439 = vmatpush1.msra.mxu0 0.0
    %5440 = vmatprep.subr.mxu0 0.0
    %5441 = vmatpush1.msra.mxu0 0.0
    %5442 = vmatprep.subr.mxu0 0.0
    %5443 = vmatpush1.msra.mxu0 0.0
    %5444 = vmatprep.subr.mxu0 0.0
    %5445 = vmatpush1.msra.mxu0 0.0
    %5446 = vmatprep.subr.mxu0 0.0
    %5447 = vmatpush1.msra.mxu0 0.0
    %5448 = vmatprep.subr.mxu0 0.0
    %5449 = vmatpush1.msra.mxu0 0.0
    %5450 = vmatprep.subr.mxu0 0.0
    %5451 = vmatpush1.msra.mxu0 0.0
    %5452 = vmatprep.subr.mxu0 0.0
    %5453 = vmatpush1.msra.mxu0 0.0
    %5454 = vmatprep.subr.mxu0 0.0
    %5455 = vmatpush1.msra.mxu0 0.0
    %5456 = vmatprep.subr.mxu0 0.0
    %5457 = vmatpush1.msra.mxu0 0.0
    %5458 = vmatprep.subr.mxu0 0.0
    %5459 = vmatpush1.msra.mxu0 0.0
    %5460 = vmatprep.subr.mxu0 0.0
    %5461 = vmatpush1.msra.mxu0 0.0
    %5462 = vmatprep.subr.mxu0 0.0
    %5463 = vmatpush1.msra.mxu0 0.0
    %5464 = vmatprep.subr.mxu0 0.0
    %5465 = vmatpush1.msra.mxu0 0.0
    %5466 = vmatprep.subr.mxu0 0.0
    %5467 = vmatpush1.msra.mxu0 0.0
    %5468 = vmatprep.subr.mxu0 0.0
    %5469 = vmatpush1.msra.mxu0 0.0
    %5470 = vmatprep.subr.mxu0 0.0
    %5471 = vmatpush1.msra.mxu0 0.0
    %5472 = vmatprep.subr.mxu0 0.0
    %5473 = vmatpush1.msra.mxu0 0.0
    %5474 = vmatprep.subr.mxu0 0.0
    %5475 = vmatpush1.msra.mxu0 0.0
    %5476 = vmatprep.mubr.f32.mxu0 0.0
    %5477 = vmatmul.mubr.f32.gmra.mrb[0].mxu0 %v2771
    %v5478 = vpop.f32.mrb[0].mxu0
    %v5479 = vadd.f32 0.0, %v5478
    %v5480 = vpop.f32.mrb[0].mxu0
    %5481 = vdwg.mxu0
    %v5483 = vsel %vm888, %v4936, 0
    %5485 = vmatprep.subr.mxu0 0.0
    %5486 = vmatpush1.msra.mxu0 %v4935
    %5487 = vmatprep.subr.mxu0 0.0
    %5488 = vmatpush1.msra.mxu0 %v5483
    %5489 = vmatprep.subr.mxu0 0.0
    %5490 = vmatpush1.msra.mxu0 0.0
    %5491 = vmatprep.subr.mxu0 0.0
    %5492 = vmatpush1.msra.mxu0 0.0
    %5493 = vmatprep.subr.mxu0 0.0
    %5494 = vmatpush1.msra.mxu0 0.0
    %5495 = vmatprep.subr.mxu0 0.0
    %5496 = vmatpush1.msra.mxu0 0.0
    %5497 = vmatprep.subr.mxu0 0.0
    %5498 = vmatpush1.msra.mxu0 0.0
    %5499 = vmatprep.subr.mxu0 0.0
    %5500 = vmatpush1.msra.mxu0 0.0
    %5501 = vmatprep.subr.mxu0 0.0
    %5502 = vmatpush1.msra.mxu0 0.0
    %5503 = vmatprep.subr.mxu0 0.0
    %5504 = vmatpush1.msra.mxu0 0.0
    %5505 = vmatprep.subr.mxu0 0.0
    %5506 = vmatpush1.msra.mxu0 0.0
    %5507 = vmatprep.subr.mxu0 0.0
    %5508 = vmatpush1.msra.mxu0 0.0
    %5509 = vmatprep.subr.mxu0 0.0
    %5510 = vmatpush1.msra.mxu0 0.0
    %5511 = vmatprep.subr.mxu0 0.0
    %5512 = vmatpush1.msra.mxu0 0.0
    %5513 = vmatprep.subr.mxu0 0.0
    %5514 = vmatpush1.msra.mxu0 0.0
    %5515 = vmatprep.subr.mxu0 0.0
    %5516 = vmatpush1.msra.mxu0 0.0
    %5517 = vmatprep.subr.mxu0 0.0
    %5518 = vmatpush1.msra.mxu0 0.0
    %5519 = vmatprep.subr.mxu0 0.0
    %5520 = vmatpush1.msra.mxu0 0.0
    %5521 = vmatprep.subr.mxu0 0.0
    %5522 = vmatpush1.msra.mxu0 0.0
    %5523 = vmatprep.subr.mxu0 0.0
    %5524 = vmatpush1.msra.mxu0 0.0
    %5525 = vmatprep.subr.mxu0 0.0
    %5526 = vmatpush1.msra.mxu0 0.0
    %5527 = vmatprep.subr.mxu0 0.0
    %5528 = vmatpush1.msra.mxu0 0.0
    %5529 = vmatprep.subr.mxu0 0.0
    %5530 = vmatpush1.msra.mxu0 0.0
    %5531 = vmatprep.subr.mxu0 0.0
    %5532 = vmatpush1.msra.mxu0 0.0
    %5533 = vmatprep.subr.mxu0 0.0
    %5534 = vmatpush1.msra.mxu0 0.0
    %5535 = vmatprep.subr.mxu0 0.0
    %5536 = vmatpush1.msra.mxu0 0.0
    %5537 = vmatprep.subr.mxu0 0.0
    %5538 = vmatpush1.msra.mxu0 0.0
    %5539 = vmatprep.subr.mxu0 0.0
    %5540 = vmatpush1.msra.mxu0 0.0
    %5541 = vmatprep.subr.mxu0 0.0
    %5542 = vmatpush1.msra.mxu0 0.0
    %5543 = vmatprep.subr.mxu0 0.0
    %5544 = vmatpush1.msra.mxu0 0.0
    %5545 = vmatprep.subr.mxu0 0.0
    %5546 = vmatpush1.msra.mxu0 0.0
    %5547 = vmatprep.subr.mxu0 0.0
    %5548 = vmatpush1.msra.mxu0 0.0
    %5549 = vmatprep.mubr.f32.mxu0 0.0
    %5550 = vmatmul.mubr.f32.gmra.mrb[0].mxu0 %v2771
    %v5551 = vpop.f32.mrb[0].mxu0
    %v5552 = vadd.f32 %v5479, %v5551
    %v5553 = vpop.f32.mrb[0].mxu0
    %5554 = vdwg.mxu0
    %v5555 = vmul.f32 %v5103, %v5399
    %v5556 = vmul.f32 %v5106, %v5404
    %v5557 = vadd.f32 %v4939, %v5555
    %v5558 = vadd.f32 %v4940, %v5556
    %v5559 = vadd.f32 %v5552, %v3200
    %v5560 = vsel %vm639, %v5559, 0.0
    %5561 = vadd.xlane.f32.xlu0 %v5560
    %v5562 = vpop.xlane.xlu0 %5561
    %v5563 = vmul.f32 %v5562, %v3176
    %v5564 = vsub.f32 %v5559, %v5563
    %v5565 = vmul.f32 %v5564, %v5564
    %v5566 = vsel %vm639, %v5565, 0.0
    %5567 = vadd.xlane.f32.xlu0 %v5566
    %v5568 = vpop.xlane.xlu0 %5567
    %v5569 = vmul.f32 %v5568, %v3176
    %v5570 = vadd.f32 %v5569, 1e-05
    %v5571 = vrsqrt.pop %v5570
    %v5572 = vmul.f32 %v5564, %v5571
    %v5574 = vlaneseq
    %v5575 = vshrl.u32 %v5574, 7
    %v5576 = vsub.s32 0, %v5575
    %v5577 = vrot.slane %v3274, %v5576
    %v5579 = vmul.f32 %v5572, %v5577
    %v5581 = vlaneseq
    %v5582 = vshrl.u32 %v5581, 7
    %v5583 = vsub.s32 0, %v5582
    %v5584 = vrot.slane %v3275, %v5583
    %v5586 = vadd.f32 %v5579, %v5584
    %v5587 = vadd.f32 %v5557, %v3242
    %v5588 = vadd.f32 %v5558, %v3243
    %v5589 = vsel %vm639, %v5587, 0.0
    %5590 = vadd.xlane.f32.xlu0 %v5589
    %v5591 = vpop.xlane.xlu0 %5590
    %v5592 = vsel %vm3204, %v5588, 0.0
    %5593 = vadd.xlane.f32.xlu0 %v5592
    %v5594 = vpop.xlane.xlu0 %5593
    %v5595 = vmul.f32 %v5591, %v3176
    %v5596 = vmul.f32 %v5594, %v3176
    %v5597 = vsub.f32 %v5587, %v5595
    %v5598 = vsub.f32 %v5588, %v5596
    %v5599 = vmul.f32 %v5597, %v5597
    %v5600 = vmul.f32 %v5598, %v5598
    %v5601 = vsel %vm639, %v5599, 0.0
    %5602 = vadd.xlane.f32.xlu0 %v5601
    %v5603 = vpop.xlane.xlu0 %5602
    %v5604 = vsel %vm3204, %v5600, 0.0
    %5605 = vadd.xlane.f32.xlu0 %v5604
    %v5606 = vpop.xlane.xlu0 %5605
    %v5607 = vmul.f32 %v5603, %v3176
    %v5608 = vmul.f32 %v5606, %v3176
    %v5609 = vadd.f32 %v5607, 1e-05
    %v5610 = vadd.f32 %v5608, 1e-05
    %v5611 = vrsqrt.pop %v5609
    %v5612 = vrsqrt.pop %v5610
    %v5613 = vmul.f32 %v5597, %v5611
    %v5614 = vmul.f32 %v5598, %v5612
    %v5616 = vlaneseq
    %v5617 = vshrl.u32 %v5616, 7
    %v5618 = vsub.s32 0, %v5617
    %v5619 = vrot.slane %v3276, %v5618
    %v5621 = vmul.f32 %v5613, %v5619
    %v5622 = vmul.f32 %v5614, %v5619
    %v5624 = vlaneseq
    %v5625 = vshrl.u32 %v5624, 7
    %v5626 = vsub.s32 0, %v5625
    %v5627 = vrot.slane %v3277, %v5626
    %v5629 = vadd.f32 %v5621, %v5627
    %v5630 = vadd.f32 %v5622, %v5627
    %v5632 = vlaneseq
    %v5633 = vshrl.u32 %v5632, 7
    %v5634 = vsub.s32 0, %v5633
    %v5635 = vrot.slane %v3279, %v5634
    %v5638 = vsel %vm639, %v5586, 0
    %5640 = vmatprep.subr.mxu0 0.0
    %5641 = vmatpush1.msra.mxu0 %v3278
    %5642 = vmatprep.subr.mxu0 0.0
    %5643 = vmatpush1.msra.mxu0 0.0
    %5644 = vmatprep.subr.mxu0 0.0
    %5645 = vmatpush1.msra.mxu0 0.0
    %5646 = vmatprep.subr.mxu0 0.0
    %5647 = vmatpush1.msra.mxu0 0.0
    %5648 = vmatprep.subr.mxu0 0.0
    %5649 = vmatpush1.msra.mxu0 0.0
    %5650 = vmatprep.subr.mxu0 0.0
    %5651 = vmatpush1.msra.mxu0 0.0
    %5652 = vmatprep.subr.mxu0 0.0
    %5653 = vmatpush1.msra.mxu0 0.0
    %5654 = vmatprep.subr.mxu0 0.0
    %5655 = vmatpush1.msra.mxu0 0.0
    %5656 = vmatprep.subr.mxu0 0.0
    %5657 = vmatpush1.msra.mxu0 0.0
    %5658 = vmatprep.subr.mxu0 0.0
    %5659 = vmatpush1.msra.mxu0 0.0
    %5660 = vmatprep.subr.mxu0 0.0
    %5661 = vmatpush1.msra.mxu0 0.0
    %5662 = vmatprep.subr.mxu0 0.0
    %5663 = vmatpush1.msra.mxu0 0.0
    %5664 = vmatprep.subr.mxu0 0.0
    %5665 = vmatpush1.msra.mxu0 0.0
    %5666 = vmatprep.subr.mxu0 0.0
    %5667 = vmatpush1.msra.mxu0 0.0
    %5668 = vmatprep.subr.mxu0 0.0
    %5669 = vmatpush1.msra.mxu0 0.0
    %5670 = vmatprep.subr.mxu0 0.0
    %5671 = vmatpush1.msra.mxu0 0.0
    %5672 = vmatprep.subr.mxu0 0.0
    %5673 = vmatpush1.msra.mxu0 0.0
    %5674 = vmatprep.subr.mxu0 0.0
    %5675 = vmatpush1.msra.mxu0 0.0
    %5676 = vmatprep.subr.mxu0 0.0
    %5677 = vmatpush1.msra.mxu0 0.0
    %5678 = vmatprep.subr.mxu0 0.0
    %5679 = vmatpush1.msra.mxu0 0.0
    %5680 = vmatprep.subr.mxu0 0.0
    %5681 = vmatpush1.msra.mxu0 0.0
    %5682 = vmatprep.subr.mxu0 0.0
    %5683 = vmatpush1.msra.mxu0 0.0
    %5684 = vmatprep.subr.mxu0 0.0
    %5685 = vmatpush1.msra.mxu0 0.0
    %5686 = vmatprep.subr.mxu0 0.0
    %5687 = vmatpush1.msra.mxu0 0.0
    %5688 = vmatprep.subr.mxu0 0.0
    %5689 = vmatpush1.msra.mxu0 0.0
    %5690 = vmatprep.subr.mxu0 0.0
    %5691 = vmatpush1.msra.mxu0 0.0
    %5692 = vmatprep.subr.mxu0 0.0
    %5693 = vmatpush1.msra.mxu0 0.0
    %5694 = vmatprep.subr.mxu0 0.0
    %5695 = vmatpush1.msra.mxu0 0.0
    %5696 = vmatprep.subr.mxu0 0.0
    %5697 = vmatpush1.msra.mxu0 0.0
    %5698 = vmatprep.subr.mxu0 0.0
    %5699 = vmatpush1.msra.mxu0 0.0
    %5700 = vmatprep.subr.mxu0 0.0
    %5701 = vmatpush1.msra.mxu0 0.0
    %5702 = vmatprep.subr.mxu0 0.0
    %5703 = vmatpush1.msra.mxu0 0.0
    %5704 = vmatprep.mubr.f32.mxu0 0.0
    %5705 = vmatmul.mubr.f32.gmra.mrb[0].mxu0 %v5638
    %v5706 = vpop.f32.mrb[0].mxu0
    %v5707 = vadd.f32 %v5635, %v5706
    %v5708 = vpop.f32.mrb[0].mxu0
    %5709 = vdwg.mxu0
    %v5710 = vmax.f32 %v5707, 0.0
    %v5712 = vlaneseq
    %v5713 = vshrl.u32 %v5712, 7
    %v5714 = vsub.s32 0, %v5713
    %v5715 = vrot.slane %v3281, %v5714
    %v5718 = vsel %vm639, %v5629, 0
    %v5721 = vsel %vm639, %v5630, 0
    %5723 = vmatprep.subr.mxu0 0.0
    %5724 = vmatpush1.msra.mxu0 %v3280
    %5725 = vmatprep.subr.mxu0 0.0
    %5726 = vmatpush1.msra.mxu0 0.0
    %5727 = vmatprep.subr.mxu0 0.0
    %5728 = vmatpush1.msra.mxu0 0.0
    %5729 = vmatprep.subr.mxu0 0.0
    %5730 = vmatpush1.msra.mxu0 0.0
    %5731 = vmatprep.subr.mxu0 0.0
    %5732 = vmatpush1.msra.mxu0 0.0
    %5733 = vmatprep.subr.mxu0 0.0
    %5734 = vmatpush1.msra.mxu0 0.0
    %5735 = vmatprep.subr.mxu0 0.0
    %5736 = vmatpush1.msra.mxu0 0.0
    %5737 = vmatprep.subr.mxu0 0.0
    %5738 = vmatpush1.msra.mxu0 0.0
    %5739 = vmatprep.subr.mxu0 0.0
    %5740 = vmatpush1.msra.mxu0 0.0
    %5741 = vmatprep.subr.mxu0 0.0
    %5742 = vmatpush1.msra.mxu0 0.0
    %5743 = vmatprep.subr.mxu0 0.0
    %5744 = vmatpush1.msra.mxu0 0.0
    %5745 = vmatprep.subr.mxu0 0.0
    %5746 = vmatpush1.msra.mxu0 0.0
    %5747 = vmatprep.subr.mxu0 0.0
    %5748 = vmatpush1.msra.mxu0 0.0
    %5749 = vmatprep.subr.mxu0 0.0
    %5750 = vmatpush1.msra.mxu0 0.0
    %5751 = vmatprep.subr.mxu0 0.0
    %5752 = vmatpush1.msra.mxu0 0.0
    %5753 = vmatprep.subr.mxu0 0.0
    %5754 = vmatpush1.msra.mxu0 0.0
    %5755 = vmatprep.subr.mxu0 0.0
    %5756 = vmatpush1.msra.mxu0 0.0
    %5757 = vmatprep.subr.mxu0 0.0
    %5758 = vmatpush1.msra.mxu0 0.0
    %5759 = vmatprep.subr.mxu0 0.0
    %5760 = vmatpush1.msra.mxu0 0.0
    %5761 = vmatprep.subr.mxu0 0.0
    %5762 = vmatpush1.msra.mxu0 0.0
    %5763 = vmatprep.subr.mxu0 0.0
    %5764 = vmatpush1.msra.mxu0 0.0
    %5765 = vmatprep.subr.mxu0 0.0
    %5766 = vmatpush1.msra.mxu0 0.0
    %5767 = vmatprep.subr.mxu0 0.0
    %5768 = vmatpush1.msra.mxu0 0.0
    %5769 = vmatprep.subr.mxu0 0.0
    %5770 = vmatpush1.msra.mxu0 0.0
    %5771 = vmatprep.subr.mxu0 0.0
    %5772 = vmatpush1.msra.mxu0 0.0
    %5773 = vmatprep.subr.mxu0 0.0
    %5774 = vmatpush1.msra.mxu0 0.0
    %5775 = vmatprep.subr.mxu0 0.0
    %5776 = vmatpush1.msra.mxu0 0.0
    %5777 = vmatprep.subr.mxu0 0.0
    %5778 = vmatpush1.msra.mxu0 0.0
    %5779 = vmatprep.subr.mxu0 0.0
    %5780 = vmatpush1.msra.mxu0 0.0
    %5781 = vmatprep.subr.mxu0 0.0
    %5782 = vmatpush1.msra.mxu0 0.0
    %5783 = vmatprep.subr.mxu0 0.0
    %5784 = vmatpush1.msra.mxu0 0.0
    %5785 = vmatprep.subr.mxu0 0.0
    %5786 = vmatpush1.msra.mxu0 0.0
    %5787 = vmatprep.mubr.f32.mxu0 0.0
    %5788 = vmatmul.mubr.f32.gmra.mrb[0].mxu0 %v5718
    %v5789 = vpop.f32.mrb[0].mxu0
    %v5790 = vadd.f32 %v5715, %v5789
    %v5791 = vpop.f32.mrb[0].mxu0
    %5792 = vmatprep.mubr.f32.mxu0 0.0
    %5793 = vmatmul.mubr.f32.gmra.mrb[0].mxu0 %v5721
    %v5794 = vpop.f32.mrb[0].mxu0
    %v5795 = vadd.f32 %v5715, %v5794
    %v5796 = vpop.f32.mrb[0].mxu0
    %5797 = vdwg.mxu0
    %v5798 = vmax.f32 %v5790, 0.0
    %v5799 = vmax.f32 %v5795, 0.0
    %v5800 = vsel %vm554, %v5710, 0.0
    %5801 = vadd.xlane.f32.xlu0 %v5800
    %v5802 = vpop.xlane.xlu0 %5801
    %v5803 = vmul.f32 %v5802, %v2927
    %v5804 = vsub.f32 %v5710, %v5803
    %v5805 = vmul.f32 %v5804, %v5804
    %v5806 = vsel %vm554, %v5805, 0.0
    %5807 = vadd.xlane.f32.xlu0 %v5806
    %v5808 = vpop.xlane.xlu0 %5807
    %v5809 = vmul.f32 %v5808, %v2927
    %v5810 = vadd.f32 %v5809, 1e-05
    %v5811 = vrsqrt.pop %v5810
    %v5812 = vmul.f32 %v5804, %v5811
    %v5814 = vlaneseq
    %v5815 = vshrl.u32 %v5814, 7
    %v5816 = vsub.s32 0, %v5815
    %v5817 = vrot.slane %v3282, %v5816
    %v5819 = vmul.f32 %v5812, %v5817
    %v5821 = vlaneseq
    %v5822 = vshrl.u32 %v5821, 7
    %v5823 = vsub.s32 0, %v5822
    %v5824 = vrot.slane %v3283, %v5823
    %v5826 = vadd.f32 %v5819, %v5824
    %v5827 = vsel %vm881, %v5798, 0.0
    %5828 = vadd.xlane.f32.xlu0 %v5827
    %v5829 = vpop.xlane.xlu0 %5828
    %v5830 = vsel %vm2957, %v5799, 0.0
    %5831 = vadd.xlane.f32.xlu0 %v5830
    %v5832 = vpop.xlane.xlu0 %5831
    %v5833 = vmul.f32 %v5829, %v2961
    %v5834 = vmul.f32 %v5832, %v2961
    %v5835 = vsub.f32 %v5798, %v5833
    %v5836 = vsub.f32 %v5799, %v5834
    %v5837 = vmul.f32 %v5835, %v5835
    %v5838 = vmul.f32 %v5836, %v5836
    %v5839 = vsel %vm881, %v5837, 0.0
    %5840 = vadd.xlane.f32.xlu0 %v5839
    %v5841 = vpop.xlane.xlu0 %5840
    %v5842 = vsel %vm2957, %v5838, 0.0
    %5843 = vadd.xlane.f32.xlu0 %v5842
    %v5844 = vpop.xlane.xlu0 %5843
    %v5845 = vmul.f32 %v5841, %v2961
    %v5846 = vmul.f32 %v5844, %v2961
    %v5847 = vadd.f32 %v5845, 1e-05
    %v5848 = vadd.f32 %v5846, 1e-05
    %v5849 = vrsqrt.pop %v5847
    %v5850 = vrsqrt.pop %v5848
    %v5851 = vmul.f32 %v5835, %v5849
    %v5852 = vmul.f32 %v5836, %v5850
    %v5854 = vlaneseq
    %v5855 = vshrl.u32 %v5854, 7
    %v5856 = vsub.s32 0, %v5855
    %v5857 = vrot.slane %v3284, %v5856
    %v5859 = vmul.f32 %v5851, %v5857
    %v5860 = vmul.f32 %v5852, %v5857
    %v5862 = vlaneseq
    %v5863 = vshrl.u32 %v5862, 7
    %v5864 = vsub.s32 0, %v5863
    %v5865 = vrot.slane %v3285, %v5864
    %v5867 = vadd.f32 %v5859, %v5865
    %v5868 = vadd.f32 %v5860, %v5865
    %v5869 = vsel %vm554, %v5826, 0.0
    %v5870 = vrot.slane %v5869, 4
    %v5871 = vadd.f32 %v5869, %v5870
    %v5872 = vrot.slane %v5871, 2
    %v5873 = vadd.f32 %v5871, %v5872
    %v5874 = vrot.slane %v5873, 1
    %v5875 = vadd.f32 %v5873, %v5874
    %v5876 = vsel %vm881, %v5867, 0.0
    %v5877 = vsel %vm2957, %v5868, 0.0
    %v5878 = vadd.f32 %v5876, %v5877
    %v5879 = vrot.slane %v5878, 4
    %v5880 = vadd.f32 %v5878, %v5879
    %v5881 = vrot.slane %v5880, 2
    %v5882 = vadd.f32 %v5880, %v5881
    %v5883 = vrot.slane %v5882, 1
    %v5884 = vadd.f32 %v5882, %v5883
    %v5886 = vsel %vm554, %v5875, 0
    %v5889 = vsel %vm558, %v504, 0
    %5891 = vmatprep.subr.mxu0 0.0
    %5892 = vmatpush1.msra.mxu0 %v5889
    %5893 = vmatprep.subr.mxu0 0.0
    %5894 = vmatpush1.msra.mxu0 0.0
    %5895 = vmatprep.subr.mxu0 0.0
    %5896 = vmatpush1.msra.mxu0 0.0
    %5897 = vmatprep.subr.mxu0 0.0
    %5898 = vmatpush1.msra.mxu0 0.0
    %5899 = vmatprep.subr.mxu0 0.0
    %5900 = vmatpush1.msra.mxu0 0.0
    %5901 = vmatprep.subr.mxu0 0.0
    %5902 = vmatpush1.msra.mxu0 0.0
    %5903 = vmatprep.subr.mxu0 0.0
    %5904 = vmatpush1.msra.mxu0 0.0
    %5905 = vmatprep.subr.mxu0 0.0
    %5906 = vmatpush1.msra.mxu0 0.0
    %5907 = vmatprep.subr.mxu0 0.0
    %5908 = vmatpush1.msra.mxu0 0.0
    %5909 = vmatprep.subr.mxu0 0.0
    %5910 = vmatpush1.msra.mxu0 0.0
    %5911 = vmatprep.subr.mxu0 0.0
    %5912 = vmatpush1.msra.mxu0 0.0
    %5913 = vmatprep.subr.mxu0 0.0
    %5914 = vmatpush1.msra.mxu0 0.0
    %5915 = vmatprep.subr.mxu0 0.0
    %5916 = vmatpush1.msra.mxu0 0.0
    %5917 = vmatprep.subr.mxu0 0.0
    %5918 = vmatpush1.msra.mxu0 0.0
    %5919 = vmatprep.subr.mxu0 0.0
    %5920 = vmatpush1.msra.mxu0 0.0
    %5921 = vmatprep.subr.mxu0 0.0
    %5922 = vmatpush1.msra.mxu0 0.0
    %5923 = vmatprep.subr.mxu0 0.0
    %5924 = vmatpush1.msra.mxu0 0.0
    %5925 = vmatprep.subr.mxu0 0.0
    %5926 = vmatpush1.msra.mxu0 0.0
    %5927 = vmatprep.subr.mxu0 0.0
    %5928 = vmatpush1.msra.mxu0 0.0
    %5929 = vmatprep.subr.mxu0 0.0
    %5930 = vmatpush1.msra.mxu0 0.0
    %5931 = vmatprep.subr.mxu0 0.0
    %5932 = vmatpush1.msra.mxu0 0.0
    %5933 = vmatprep.subr.mxu0 0.0
    %5934 = vmatpush1.msra.mxu0 0.0
    %5935 = vmatprep.subr.mxu0 0.0
    %5936 = vmatpush1.msra.mxu0 0.0
    %5937 = vmatprep.subr.mxu0 0.0
    %5938 = vmatpush1.msra.mxu0 0.0
    %5939 = vmatprep.subr.mxu0 0.0
    %5940 = vmatpush1.msra.mxu0 0.0
    %5941 = vmatprep.subr.mxu0 0.0
    %5942 = vmatpush1.msra.mxu0 0.0
    %5943 = vmatprep.subr.mxu0 0.0
    %5944 = vmatpush1.msra.mxu0 0.0
    %5945 = vmatprep.subr.mxu0 0.0
    %5946 = vmatpush1.msra.mxu0 0.0
    %5947 = vmatprep.subr.mxu0 0.0
    %5948 = vmatpush1.msra.mxu0 0.0
    %5949 = vmatprep.subr.mxu0 0.0
    %5950 = vmatpush1.msra.mxu0 0.0
    %5951 = vmatprep.subr.mxu0 0.0
    %5952 = vmatpush1.msra.mxu0 0.0
    %5953 = vmatprep.subr.mxu0 0.0
    %5954 = vmatpush1.msra.mxu0 0.0
    %5955 = vmatprep.mubr.f32.mxu0 0.0
    %5956 = vmatmul.mubr.f32.gmra.mrb[0].mxu0 %v5886
    %v5957 = vpop.f32.mrb[0].mxu0
    %v5958 = vadd.f32 0.0, %v5957
    %v5959 = vpop.f32.mrb[0].mxu0
    %5960 = vdwg.mxu0
    %v5961 = vmul.f32 %v5958, %v5884
    %vm5962 = vcmask 24576
    %v5963 = vsel %vm5962, %v5961, 0.0
    %5964 = vadd.xlane.f32.xlu0 %v5963
    %v5965 = vpop.xlane.xlu0 %5964
    %v5966 = vadd.f32 %v5965, %v505
    %v5967 = vsub.f32 0.0, %v5966
    %v5968 = vmul.f32 %v5967, 1.442695
    %v5969 = vpow.pop %v5968
    %v5970 = vadd.f32 %v5969, 1.0
    %v5971 = vrcp.pop %v5970
    %v5972 = vmul.f32 1.0, %v5971
    %vm5973 = vcmask 0
    %5974 = vst.msk [vmem:[#allocation26] sm:$0x1] %vm5973, %v5972
    %5975 = vst.msk [vmem:[#allocation27] sm:$0xff] %vm554, %v5826
    %5976 = vst.msk [vmem:[%s151] sm:$0xff] %vm881, %v5867
    %5977 = vst.msk [vmem:[%s151 + $0x8] sm:$0xf] %vm2957, %v5868
    // Predicated region
    $region350: #{tpu_custom_call.1} parent=1 // pred_check
      _
    $region351: #{tpu_custom_call.1} parent=1 // pred_check_branch
      %5979 = sbr.rel (0) target = $region353
    $region352: #{tpu_custom_call.1} parent=1 // pred_region
      %s5981 = ssub.s32 16, 16
      %5982 = vsyncadd [#allocation5], %s5981
      %s5984 = sshll.u32 [#allocation26], 4
      %s5985 = int_to_ptr.vmem [resolvable:$true] %s5984
      %5987 = dma.vmem_to_hbm [thread:$0]  %s5985, 16, %s147, [#allocation5]
    $region353: #{tpu_custom_call.1} parent=1 // pred_fallthru
      _
    // Predicated region
    $region354: #{tpu_custom_call.1} parent=1 // pred_check
      _
    $region355: #{tpu_custom_call.1} parent=1 // pred_check_branch
      %5989 = sbr.rel (0) target = $region357
    $region356: #{tpu_custom_call.1} parent=1 // pred_region
      %s5991 = ssub.s32 128, 128
      %5992 = vsyncadd [#allocation28], %s5991
      %s5994 = sshll.u32 [#allocation27], 4
      %s5995 = int_to_ptr.vmem [resolvable:$true] %s5994
      %5997 = dma.vmem_to_hbm [thread:$0]  %s5995, 128, %s149, [#allocation28]
    $region357: #{tpu_custom_call.1} parent=1 // pred_fallthru
      _
    // Predicated region
    $region358: #{tpu_custom_call.1} parent=1 // pred_check
      _
    $region359: #{tpu_custom_call.1} parent=1 // pred_check_branch
      %5999 = sbr.rel (0) target = $region361
    $region360: #{tpu_custom_call.1} parent=1 // pred_region
      _
    $region361: #{tpu_custom_call.1} parent=1 // pred_fallthru
      _
    // Predicated region
    $region362: #{tpu_custom_call.1} parent=1 // pred_check
      _
    $region363: #{tpu_custom_call.1} parent=1 // pred_check_branch
      %6001 = sbr.rel (0) target = $region365
    $region364: #{tpu_custom_call.1} parent=1 // pred_region
      %6002 = dma.done [#allocation5], 16
    $region365: #{tpu_custom_call.1} parent=1 // pred_fallthru
      _
    // Predicated region
    $region366: #{tpu_custom_call.1} parent=1 // pred_check
      _
    $region367: #{tpu_custom_call.1} parent=1 // pred_check_branch
      %6004 = sbr.rel (0) target = $region369
    $region368: #{tpu_custom_call.1} parent=1 // pred_region
      %6005 = dma.done [#allocation28], 128
    $region369: #{tpu_custom_call.1} parent=1 // pred_fallthru
      _
    // Predicated region
    $region370: #{tpu_custom_call.1} parent=1 // pred_check
      _
    $region371: #{tpu_custom_call.1} parent=1 // pred_check_branch
      %6007 = sbr.rel (0) target = $region373
    $region372: #{tpu_custom_call.1} parent=1 // pred_region
      _
    $region373: #{tpu_custom_call.1} parent=1 // pred_fallthru
      _
    %6008 = vsyncpa [#allocation4], 1
    %6009 = vsyncpa [#allocation7], 1
    %6010 = vsyncpa [#allocation10], 1
    %6011 = vsyncpa [#allocation13], 1
    %6012 = vsyncpa [#allocation16], 1
    %6013 = vsyncpa [#allocation19], 1
    %6014 = vsyncpa [#allocation22], 1
    %6015 = vsyncpa [#allocation25], 1
    %6016 = vsyncpa [#allocation5], 1
    %6017 = vsyncpa [#allocation28], 1

</llo_original>
